<compile_context>
chip_gen: v7x
topology: tpu7x:2x2x1
jax: 0.10.0
libtpu: 0.0.40
codegen_flags: <defaults>
</compile_context>

<pallas_src>
import functools
import math

import numpy as np
import jax
import jax.numpy as jnp
from jax.experimental import pallas as pl
from jax.experimental.pallas import tpu as pltpu

SQRT2 = math.sqrt(2.0)
_BLUR_1D = (1.0 / 8.0, 3.0 / 8.0, 3.0 / 8.0, 1.0 / 8.0)     # separable [1,3,3,1] / 8


def _scaled_leaky_relu(y):
    # ScaledLeakyReLU(0.2): leaky_relu * sqrt(2); kept in f32 (v5e has no bf16 VPU).
    return jnp.where(y >= 0.0, y, 0.2 * y) * SQRT2


# ------------------------------ fused ResBlock kernel ------------------------------

def _resblock_kernel(x_ref, w1_ref, w2_ref, ws_ref, o_ref,
                     o1pad_ref, b1pad_ref, hbuf_ref, ores_ref, *im_scratch,
                     H, W, Cin, Cout, pack):
    f32, bf16 = jnp.float32, jnp.bfloat16
    im_ref = im_scratch[0] if pack else None
    Wp = W + 2                      # padded row width of every flat buffer
    Ho, Wo = H // 2, W // 2
    PLEN = (H + 4) * Wp             # flat padded length (+2 safety rows for shifted reads)
    L1 = H * Wp                     # conv1 output rows  (wrap-garbage cols w in {W, W+1})
    LH = (H + 2) * Wp               # conv1-blur horizontal-pass rows
    LB = (H - 1) * Wp               # blur(conv1) rows   (garbage cols j in {W-1, W, W+1})
    LO = Ho * Wp                    # stride-2 stage rows (garbage cols j >= Wo)
    LHX = (H + 3) * Wp              # skip-blur horizontal-pass rows

    # ---- re-zero ONLY the halo row ranges of the padded scratch buffers ----------------
    # Interiors (including the masked wrap columns) are fully rewritten every grid step,
    # so per-step halo zeroing keeps scratch consistent regardless of how the parallel
    # batch axis is split across cores.
    def zero_rows(ref, start, stop):
        ref[pl.ds(start, stop - start), :] = jnp.zeros((stop - start, Cin), f32)

    zero_rows(o1pad_ref, 0, Wp + 1)
    zero_rows(o1pad_ref, Wp + 1 + L1, PLEN)
    zero_rows(b1pad_ref, 0, Wp + 1)
    zero_rows(b1pad_ref, Wp + 1 + LB, PLEN)

    # ---- 3x3 conv as MXU matmuls; taps K-packed into one (M, 9*Cin) im2col tile --------
    def conv3x3(tap, w_ref, M):
        if pack:                                      # Cin < 128: one K = 9*Cin matmul
            for t in range(9):
                im_ref[0:M, t * Cin:(t + 1) * Cin] = tap(t)
            return jnp.dot(im_ref[0:M, :].astype(bf16), w_ref[...],
                           preferred_element_type=f32)
        acc = jnp.zeros((M, w_ref.shape[1]), f32)     # Cin >= 128: per-tap K = Cin matmuls
        for t in range(9):
            acc = acc + jnp.dot(tap(t).astype(bf16), w_ref[pl.ds(t * Cin, Cin), :],
                                preferred_element_type=f32)
        return acc

    # ---- conv1: 3x3 s1 p1 + ScaledLeakyReLU; mask wrap garbage; re-pad into o1pad ------
    a1 = conv3x3(lambda t: x_ref[pl.ds((t // 3) * Wp + (t % 3), L1), :], w1_ref, L1)
    o1 = _scaled_leaky_relu(a1)
    col1 = jax.lax.broadcasted_iota(jnp.int32, (L1, 1), 0) % Wp
    o1pad_ref[pl.ds(Wp + 1, L1), :] = jnp.where(col1 < W, o1, 0.0)

    # ---- blur(conv1): separable [1,3,3,1]/8; horizontal pass staged through hbuf -------
    hb = _BLUR_1D[0] * o1pad_ref[pl.ds(0, LH), :]
    for k in range(1, 4):
        hb = hb + _BLUR_1D[k] * o1pad_ref[pl.ds(k, LH), :]
    hbuf_ref[0:LH, :] = hb
    b1 = _BLUR_1D[0] * hbuf_ref[pl.ds(0, LB), :]
    for k in range(1, 4):
        b1 = b1 + _BLUR_1D[k] * hbuf_ref[pl.ds(k * Wp, LB), :]
    colb = jax.lax.broadcasted_iota(jnp.int32, (LB, 1), 0) % Wp
    b1pad_ref[pl.ds(Wp + 1, LB), :] = jnp.where(colb < W - 1, b1, 0.0)

    # ---- conv2: 3x3 s2 p1 via stride-2 sublane tap loads + ScaledLeakyReLU -------------
    a2 = conv3x3(lambda t: b1pad_ref[pl.ds((t // 3) * Wp + (t % 3), LO, stride=2), :],
                 w2_ref, LO)
    o2 = _scaled_leaky_relu(a2)

    # ---- skip: separable blur(x) (horizontal at full res, vertical fused with the
    #      stride-2 decimation -> only 4 strided gathers), then 1x1 stride-2 conv ---------
    hx = _BLUR_1D[0] * x_ref[pl.ds(0, LHX), :]
    for k in range(1, 4):
        hx = hx + _BLUR_1D[k] * x_ref[pl.ds(k, LHX), :]
    hbuf_ref[0:LHX, :] = hx                           # hb already consumed; reuse hbuf
    sk = _BLUR_1D[0] * hbuf_ref[pl.ds(0, LO, stride=2), :]
    for k in range(1, 4):
        sk = sk + _BLUR_1D[k] * hbuf_ref[pl.ds(k * Wp, LO, stride=2), :]
    skip = jnp.dot(sk.astype(bf16), ws_ref[...], preferred_element_type=f32)

    # ---- residual merge; assemble a lane-dense (Ho, Wo*Cout) output block --------------
    ores_ref[...] = (o2 + skip) * (1.0 / SQRT2)
    for j in range(Wo):
        o_ref[:, j * Cout:(j + 1) * Cout] = ores_ref[pl.ds(j, Ho, stride=Wp), :]


# ------------------------------------ wrapper ---------------------------------------

def resblock_forward(x_nchw, w1, w2, ws):
    """ResBlock forward.  x_nchw: (N, Cin, H, W); weights in PyTorch OIHW layout."""
    N, Cin, H, W = x_nchw.shape
    Cout = w2.shape[0]
    assert H % 2 == 0 and W % 2 == 0, "even spatial dims expected"
    Wp, Ho, Wo = W + 2, H // 2, W // 2
    PLEN = (H + 4) * Wp
    pack = Cin < 128                 # K-pack the 9 taps when the MXU contraction dim is tiny

    # NHWC, zero-padded (pad = 1) and flattened to the kernel's flat (row*Wp + col, C)
    # layout with a 2*Wp-row zero tail so every shifted tap read stays in bounds.
    # (Layout plumbing only -- no compute is hoisted out of the kernel.)
    xf = jnp.transpose(x_nchw, (0, 2, 3, 1)).astype(jnp.float32)
    xf = jnp.pad(xf, ((0, 0), (1, 1), (1, 1), (0, 0))).reshape(N, (H + 2) * Wp, Cin)
    xf = jnp.pad(xf, ((0, 0), (0, 2 * Wp), (0, 0)))                    # (N, PLEN, Cin)

    # EqualConv2d scales; weights flattened per-tap and pre-cast to bf16 (MXU operands).
    s1 = 1.0 / math.sqrt(Cin * 9)
    s2 = 1.0 / math.sqrt(Cin * 9)
    ssk = 1.0 / math.sqrt(Cin)
    w1f = jnp.transpose(w1 * s1, (2, 3, 1, 0)).reshape(9 * Cin, Cin).astype(jnp.bfloat16)
    w2f = jnp.transpose(w2 * s2, (2, 3, 1, 0)).reshape(9 * Cin, Cout).astype(jnp.bfloat16)
    wsf = jnp.transpose((ws * ssk).reshape(Cout, Cin), (1, 0)).astype(jnp.bfloat16)

    scratch = [
        pltpu.VMEM((PLEN, Cin), jnp.float32),            # zero-padded conv1 output
        pltpu.VMEM((PLEN, Cin), jnp.float32),            # zero-padded blur(conv1) output
        pltpu.VMEM(((H + 3) * Wp, Cin), jnp.float32),    # horizontal-blur staging buffer
        pltpu.VMEM((Ho * Wp, Cout), jnp.float32),        # flat residual-merged result
    ]
    if pack:
        scratch.append(pltpu.VMEM((H * Wp, 9 * Cin), jnp.float32))  # packed im2col tile

    kernel = functools.partial(_resblock_kernel, H=H, W=W, Cin=Cin, Cout=Cout, pack=pack)
    out = pl.pallas_call(
        kernel,
        out_shape=jax.ShapeDtypeStruct((N, Ho, Wo * Cout), jnp.float32),
        grid=(N,),                                       # N >= 2 -> both v7x TCs get work
        in_specs=[
            pl.BlockSpec((None, PLEN, Cin), lambda n: (n, 0, 0)),
            pl.BlockSpec((9 * Cin, Cin), lambda n: (0, 0)),
            pl.BlockSpec((9 * Cin, Cout), lambda n: (0, 0)),
            pl.BlockSpec((Cin, Cout), lambda n: (0, 0)),
        ],
        out_specs=pl.BlockSpec((None, Ho, Wo * Cout), lambda n: (n, 0, 0)),
        scratch_shapes=scratch,
        compiler_params=pltpu.CompilerParams(
            dimension_semantics=("parallel",),
            vmem_limit_bytes=32 * 1024 * 1024),
    )(xf, w1f, w2f, wsf)

    return jnp.transpose(out.reshape(N, Ho, Wo, Cout), (0, 3, 1, 2))   # back to NCHW


# ------------------------------ pure-JAX f32 reference -------------------------------

def _conv_ref(x, w, stride, pad, groups=1):
    return jax.lax.conv_general_dilated(
        x, w, window_strides=(stride, stride), padding=((pad, pad), (pad, pad)),
        dimension_numbers=("NCHW", "OIHW", "NCHW"), feature_group_count=groups)


def resblock_ref(x, w1, w2, ws):
    N, Cin, H, W = x.shape
    act = lambda y: jnp.where(y >= 0.0, y, 0.2 * y) * SQRT2
    s1 = 1.0 / math.sqrt(Cin * 9)
    s2 = 1.0 / math.sqrt(Cin * 9)
    ssk = 1.0 / math.sqrt(Cin)
    blur2d = np.outer([1.0, 3.0, 3.0, 1.0], [1.0, 3.0, 3.0, 1.0])
    blur2d = (blur2d / blur2d.sum()).astype(np.float32)
    bkw = jnp.broadcast_to(jnp.asarray(blur2d)[None, None], (Cin, 1, 4, 4))
    o = act(_conv_ref(x, w1 * s1, 1, 1))
    b1 = _conv_ref(o, bkw, 1, 1, groups=Cin)
    o2 = act(_conv_ref(b1, w2 * s2, 2, 1))
    b2 = _conv_ref(x, bkw, 1, 1, groups=Cin)
    sk = _conv_ref(b2, ws * ssk, 2, 0)
    return (o2 + sk) / SQRT2


# -------------------------------------- main -----------------------------------------

if __name__ == "__main__":
    N, Cin, Cout, H, W = 2, 4, 8, 16, 16

    key = jax.random.PRNGKey(0)
    kx, k1, k2, k3 = jax.random.split(key, 4)
    x = jax.random.normal(kx, (N, Cin, H, W), dtype=jnp.float32)
    w1 = jax.random.normal(k1, (Cin, Cin, 3, 3), dtype=jnp.float32)   # conv1 weight
    w2 = jax.random.normal(k2, (Cout, Cin, 3, 3), dtype=jnp.float32)  # conv2 weight
    ws = jax.random.normal(k3, (Cout, Cin, 1, 1), dtype=jnp.float32)  # skip  weight
    # (EqualConv2d biases are disabled everywhere in ResBlock: bias=False)

    fwd = jax.jit(resblock_forward)
    out = jax.block_until_ready(fwd(x, w1, w2, ws))
    assert out.shape == (N, Cout, H // 2, W // 2), out.shape

    ref = jax.block_until_ready(resblock_ref(x, w1, w2, ws))
    # bf16 MXU operands with f32 accumulation -> a few-percent tolerance vs the f32 reference.
    np.testing.assert_allclose(np.asarray(out), np.asarray(ref), rtol=5e-2, atol=5e-2)

    print("KERNEL_OK")
</pallas_src>

<mosaic_0001>
module attributes {stable_mosaic.version = 11 : i64} {
  func.func @_resblock_kernel(%arg0: i32, %arg1: memref<1x360x4xf32, #tpu.memory_space<vmem>>, %arg2: memref<36x4xbf16, #tpu.memory_space<vmem>>, %arg3: memref<36x8xbf16, #tpu.memory_space<vmem>>, %arg4: memref<4x8xbf16, #tpu.memory_space<vmem>>, %arg5: memref<1x8x64xf32, #tpu.memory_space<vmem>>, %arg6: memref<360x4xf32, #tpu.memory_space<vmem>>, %arg7: memref<360x4xf32, #tpu.memory_space<vmem>>, %arg8: memref<342x4xf32, #tpu.memory_space<vmem>>, %arg9: memref<144x8xf32, #tpu.memory_space<vmem>>, %arg10: memref<288x36xf32, #tpu.memory_space<vmem>>) attributes {dimension_semantics = [#tpu.dimension_semantics<parallel>], iteration_bounds = array<i64: 2>, scalar_prefetch = 0 : i64, scratch_operands = 5 : i64, tpu.core_type = #tpu.core_type<tc>, window_params = [{transform_indices = @transform_0, window_bounds = array<i64: 1, 360, 4>}, {pipeline_mode = #tpu.pipeline_mode<synchronous>, transform_indices = @transform_1, window_bounds = array<i64: 36, 4>}, {pipeline_mode = #tpu.pipeline_mode<synchronous>, transform_indices = @transform_2, window_bounds = array<i64: 36, 8>}, {pipeline_mode = #tpu.pipeline_mode<synchronous>, transform_indices = @transform_3, window_bounds = array<i64: 4, 8>}, {transform_indices = @transform_4, window_bounds = array<i64: 1, 8, 64>}]} {
    %cst = arith.constant 0.000000e+00 : f32
    %0 = vector.broadcast %cst : f32 to vector<19x4xf32>
    %c0 = arith.constant 0 : index
    %c0_0 = arith.constant 0 : index
    %1 = vector.load %arg6[%c0, %c0_0] : memref<360x4xf32, #tpu.memory_space<vmem>>, vector<19x4xf32>
    tpu.vector_store %arg6[%c0, %c0_0], %0 {strides = array<i32>} : memref<360x4xf32, #tpu.memory_space<vmem>>, vector<19x4xf32>,
    %cst_1 = arith.constant 0.000000e+00 : f32
    %2 = vector.broadcast %cst_1 : f32 to vector<53x4xf32>
    %c307 = arith.constant 307 : index
    %c0_2 = arith.constant 0 : index
    %3 = vector.load %arg6[%c307, %c0_2] : memref<360x4xf32, #tpu.memory_space<vmem>>, vector<53x4xf32>
    tpu.vector_store %arg6[%c307, %c0_2], %2 {strides = array<i32>} : memref<360x4xf32, #tpu.memory_space<vmem>>, vector<53x4xf32>,
    %cst_3 = arith.constant 0.000000e+00 : f32
    %4 = vector.broadcast %cst_3 : f32 to vector<19x4xf32>
    %c0_4 = arith.constant 0 : index
    %c0_5 = arith.constant 0 : index
    %5 = vector.load %arg7[%c0_4, %c0_5] : memref<360x4xf32, #tpu.memory_space<vmem>>, vector<19x4xf32>
    tpu.vector_store %arg7[%c0_4, %c0_5], %4 {strides = array<i32>} : memref<360x4xf32, #tpu.memory_space<vmem>>, vector<19x4xf32>,
    %cst_6 = arith.constant 0.000000e+00 : f32
    %6 = vector.broadcast %cst_6 : f32 to vector<71x4xf32>
    %c289 = arith.constant 289 : index
    %c0_7 = arith.constant 0 : index
    %7 = vector.load %arg7[%c289, %c0_7] : memref<360x4xf32, #tpu.memory_space<vmem>>, vector<71x4xf32>
    tpu.vector_store %arg7[%c289, %c0_7], %6 {strides = array<i32>} : memref<360x4xf32, #tpu.memory_space<vmem>>, vector<71x4xf32>,
    %c0_8 = arith.constant 0 : index
    %c0_9 = arith.constant 0 : index
    %c0_10 = arith.constant 0 : index
    %8 = vector.load %arg1[%c0_8, %c0_9, %c0_10] : memref<1x360x4xf32, #tpu.memory_space<vmem>>, vector<1x288x4xf32>
    %9 = vector.shape_cast %8 : vector<1x288x4xf32> to vector<288x4xf32>
    %c0_11 = arith.constant 0 : index
    %c0_12 = arith.constant 0 : index
    %10 = vector.load %arg10[%c0_11, %c0_12] : memref<288x36xf32, #tpu.memory_space<vmem>>, vector<288x4xf32>
    tpu.vector_store %arg10[%c0_11, %c0_12], %9 {strides = array<i32>} : memref<288x36xf32, #tpu.memory_space<vmem>>, vector<288x4xf32>,
    %c0_13 = arith.constant 0 : index
    %c1 = arith.constant 1 : index
    %c0_14 = arith.constant 0 : index
    %11 = vector.load %arg1[%c0_13, %c1, %c0_14] : memref<1x360x4xf32, #tpu.memory_space<vmem>>, vector<1x288x4xf32>
    %12 = vector.shape_cast %11 : vector<1x288x4xf32> to vector<288x4xf32>
    %c0_15 = arith.constant 0 : index
    %c4 = arith.constant 4 : index
    %13 = vector.load %arg10[%c0_15, %c4] : memref<288x36xf32, #tpu.memory_space<vmem>>, vector<288x4xf32>
    tpu.vector_store %arg10[%c0_15, %c4], %12 {strides = array<i32>} : memref<288x36xf32, #tpu.memory_space<vmem>>, vector<288x4xf32>,
    %c0_16 = arith.constant 0 : index
    %c2 = arith.constant 2 : index
    %c0_17 = arith.constant 0 : index
    %14 = vector.load %arg1[%c0_16, %c2, %c0_17] : memref<1x360x4xf32, #tpu.memory_space<vmem>>, vector<1x288x4xf32>
    %15 = vector.shape_cast %14 : vector<1x288x4xf32> to vector<288x4xf32>
    %c0_18 = arith.constant 0 : index
    %c8 = arith.constant 8 : index
    %16 = vector.load %arg10[%c0_18, %c8] : memref<288x36xf32, #tpu.memory_space<vmem>>, vector<288x4xf32>
    tpu.vector_store %arg10[%c0_18, %c8], %15 {strides = array<i32>} : memref<288x36xf32, #tpu.memory_space<vmem>>, vector<288x4xf32>,
    %c0_19 = arith.constant 0 : index
    %c18 = arith.constant 18 : index
    %c0_20 = arith.constant 0 : index
    %17 = vector.load %arg1[%c0_19, %c18, %c0_20] : memref<1x360x4xf32, #tpu.memory_space<vmem>>, vector<1x288x4xf32>
    %18 = vector.shape_cast %17 : vector<1x288x4xf32> to vector<288x4xf32>
    %c0_21 = arith.constant 0 : index
    %c12 = arith.constant 12 : index
    %19 = vector.load %arg10[%c0_21, %c12] : memref<288x36xf32, #tpu.memory_space<vmem>>, vector<288x4xf32>
    tpu.vector_store %arg10[%c0_21, %c12], %18 {strides = array<i32>} : memref<288x36xf32, #tpu.memory_space<vmem>>, vector<288x4xf32>,
    %c0_22 = arith.constant 0 : index
    %c19 = arith.constant 19 : index
    %c0_23 = arith.constant 0 : index
    %20 = vector.load %arg1[%c0_22, %c19, %c0_23] : memref<1x360x4xf32, #tpu.memory_space<vmem>>, vector<1x288x4xf32>
    %21 = vector.shape_cast %20 : vector<1x288x4xf32> to vector<288x4xf32>
    %c0_24 = arith.constant 0 : index
    %c16 = arith.constant 16 : index
    %22 = vector.load %arg10[%c0_24, %c16] : memref<288x36xf32, #tpu.memory_space<vmem>>, vector<288x4xf32>
    tpu.vector_store %arg10[%c0_24, %c16], %21 {strides = array<i32>} : memref<288x36xf32, #tpu.memory_space<vmem>>, vector<288x4xf32>,
    %c0_25 = arith.constant 0 : index
    %c20 = arith.constant 20 : index
    %c0_26 = arith.constant 0 : index
    %23 = vector.load %arg1[%c0_25, %c20, %c0_26] : memref<1x360x4xf32, #tpu.memory_space<vmem>>, vector<1x288x4xf32>
    %24 = vector.shape_cast %23 : vector<1x288x4xf32> to vector<288x4xf32>
    %c0_27 = arith.constant 0 : index
    %c20_28 = arith.constant 20 : index
    %25 = vector.load %arg10[%c0_27, %c20_28] : memref<288x36xf32, #tpu.memory_space<vmem>>, vector<288x4xf32>
    tpu.vector_store %arg10[%c0_27, %c20_28], %24 {strides = array<i32>} : memref<288x36xf32, #tpu.memory_space<vmem>>, vector<288x4xf32>,
    %c0_29 = arith.constant 0 : index
    %c36 = arith.constant 36 : index
    %c0_30 = arith.constant 0 : index
    %26 = vector.load %arg1[%c0_29, %c36, %c0_30] : memref<1x360x4xf32, #tpu.memory_space<vmem>>, vector<1x288x4xf32>
    %27 = vector.shape_cast %26 : vector<1x288x4xf32> to vector<288x4xf32>
    %c0_31 = arith.constant 0 : index
    %c24 = arith.constant 24 : index
    %28 = vector.load %arg10[%c0_31, %c24] : memref<288x36xf32, #tpu.memory_space<vmem>>, vector<288x4xf32>
    tpu.vector_store %arg10[%c0_31, %c24], %27 {strides = array<i32>} : memref<288x36xf32, #tpu.memory_space<vmem>>, vector<288x4xf32>,
    %c0_32 = arith.constant 0 : index
    %c37 = arith.constant 37 : index
    %c0_33 = arith.constant 0 : index
    %29 = vector.load %arg1[%c0_32, %c37, %c0_33] : memref<1x360x4xf32, #tpu.memory_space<vmem>>, vector<1x288x4xf32>
    %30 = vector.shape_cast %29 : vector<1x288x4xf32> to vector<288x4xf32>
    %c0_34 = arith.constant 0 : index
    %c28 = arith.constant 28 : index
    %31 = vector.load %arg10[%c0_34, %c28] : memref<288x36xf32, #tpu.memory_space<vmem>>, vector<288x4xf32>
    tpu.vector_store %arg10[%c0_34, %c28], %30 {strides = array<i32>} : memref<288x36xf32, #tpu.memory_space<vmem>>, vector<288x4xf32>,
    %c0_35 = arith.constant 0 : index
    %c38 = arith.constant 38 : index
    %c0_36 = arith.constant 0 : index
    %32 = vector.load %arg1[%c0_35, %c38, %c0_36] : memref<1x360x4xf32, #tpu.memory_space<vmem>>, vector<1x288x4xf32>
    %33 = vector.shape_cast %32 : vector<1x288x4xf32> to vector<288x4xf32>
    %c0_37 = arith.constant 0 : index
    %c32 = arith.constant 32 : index
    %34 = vector.load %arg10[%c0_37, %c32] : memref<288x36xf32, #tpu.memory_space<vmem>>, vector<288x4xf32>
    tpu.vector_store %arg10[%c0_37, %c32], %33 {strides = array<i32>} : memref<288x36xf32, #tpu.memory_space<vmem>>, vector<288x4xf32>,
    %c0_38 = arith.constant 0 : index
    %c0_39 = arith.constant 0 : index
    %35 = vector.load %arg10[%c0_38, %c0_39] : memref<288x36xf32, #tpu.memory_space<vmem>>, vector<288x36xf32>
    %36 = arith.truncf %35 : vector<288x36xf32> to vector<288x36xbf16>
    %c0_40 = arith.constant 0 : index
    %c0_41 = arith.constant 0 : index
    %37 = vector.load %arg2[%c0_40, %c0_41] : memref<36x4xbf16, #tpu.memory_space<vmem>>, vector<36x4xbf16>
    %cst_42 = arith.constant dense<0.000000e+00> : vector<288x4xf32>
    %38 = tpu.matmul %36, %37, %cst_42 {dimension_numbers = #tpu.dot_dimension_numbers<[1], [0], [0], [1], [0, 0, 1, 1], [], []>} : vector<288x36xbf16>, vector<36x4xbf16>, vector<288x4xf32> -> vector<288x4xf32>
    %cst_43 = arith.constant 0.000000e+00 : f32
    %39 = vector.broadcast %cst_43 : f32 to vector<288x4xf32>
    %40 = arith.cmpf oge, %38, %39 : vector<288x4xf32>
    %cst_44 = arith.constant 2.000000e-01 : f32
    %41 = vector.broadcast %cst_44 : f32 to vector<288x4xf32>
    %42 = arith.mulf %41, %38 : vector<288x4xf32>
    %43 = arith.select %40, %38, %42 : vector<288x4xi1>, vector<288x4xf32>
    %cst_45 = arith.constant 1.41421354 : f32
    %44 = vector.broadcast %cst_45 : f32 to vector<288x4xf32>
    %45 = arith.mulf %43, %44 : vector<288x4xf32>
    %46 = tpu.iota {dimensions = array<i32: 0>} : vector<288x1xi32>
    %c18_i32 = arith.constant 18 : i32
    %c0_i32 = arith.constant 0 : i32
    %47 = arith.cmpi eq, %c18_i32, %c0_i32 : i32
    %c1_i32 = arith.constant 1 : i32
    %48 = arith.select %47, %c1_i32, %c18_i32 : i32
    %49 = vector.broadcast %48 : i32 to vector<288x1xi32>
    %50 = arith.remsi %46, %49 : vector<288x1xi32>
    %c0_i32_46 = arith.constant 0 : i32
    %51 = vector.broadcast %c0_i32_46 : i32 to vector<288x1xi32>
    %52 = arith.cmpi ne, %50, %51 : vector<288x1xi32>
    %c0_i32_47 = arith.constant 0 : i32
    %53 = vector.broadcast %c0_i32_47 : i32 to vector<288x1xi32>
    %54 = arith.cmpi slt, %50, %53 : vector<288x1xi32>
    %c0_i32_48 = arith.constant 0 : i32
    %55 = arith.cmpi slt, %48, %c0_i32_48 : i32
    %56 = vector.broadcast %55 : i1 to vector<288x1xi1>
    %57 = vector.broadcast %56 : vector<288x1xi1> to vector<288x1xi1>
    %58 = arith.xori %54, %57 : vector<288x1xi1>
    %59 = arith.andi %58, %52 : vector<288x1xi1>
    %60 = vector.broadcast %48 : i32 to vector<288x1xi32>
    %61 = arith.addi %50, %60 : vector<288x1xi32>
    %62 = arith.select %59, %61, %50 : vector<288x1xi1>, vector<288x1xi32>
    %c16_i32 = arith.constant 16 : i32
    %63 = vector.broadcast %c16_i32 : i32 to vector<288x1xi32>
    %64 = arith.cmpi slt, %62, %63 : vector<288x1xi32>
    %cst_49 = arith.constant 0.000000e+00 : f32
    %65 = vector.shape_cast %64 : vector<288x1xi1> to vector<288x1xi1>
    %66 = vector.broadcast %65 : vector<288x1xi1> to vector<288x4xi1>
    %67 = vector.broadcast %cst_49 : f32 to vector<288x4xf32>
    %68 = arith.select %66, %45, %67 : vector<288x4xi1>, vector<288x4xf32>
    %c19_50 = arith.constant 19 : index
    %c0_51 = arith.constant 0 : index
    %69 = vector.load %arg6[%c19_50, %c0_51] : memref<360x4xf32, #tpu.memory_space<vmem>>, vector<288x4xf32>
    tpu.vector_store %arg6[%c19_50, %c0_51], %68 {strides = array<i32>} : memref<360x4xf32, #tpu.memory_space<vmem>>, vector<288x4xf32>,
    %c0_52 = arith.constant 0 : index
    %c0_53 = arith.constant 0 : index
    %70 = vector.load %arg6[%c0_52, %c0_53] : memref<360x4xf32, #tpu.memory_space<vmem>>, vector<324x4xf32>
    %cst_54 = arith.constant 1.250000e-01 : f32
    %71 = vector.broadcast %cst_54 : f32 to vector<324x4xf32>
    %72 = arith.mulf %71, %70 : vector<324x4xf32>
    %c1_55 = arith.constant 1 : index
    %c0_56 = arith.constant 0 : index
    %73 = vector.load %arg6[%c1_55, %c0_56] : memref<360x4xf32, #tpu.memory_space<vmem>>, vector<324x4xf32>
    %cst_57 = arith.constant 3.750000e-01 : f32
    %74 = vector.broadcast %cst_57 : f32 to vector<324x4xf32>
    %75 = arith.mulf %74, %73 : vector<324x4xf32>
    %76 = arith.addf %72, %75 : vector<324x4xf32>
    %c2_58 = arith.constant 2 : index
    %c0_59 = arith.constant 0 : index
    %77 = vector.load %arg6[%c2_58, %c0_59] : memref<360x4xf32, #tpu.memory_space<vmem>>, vector<324x4xf32>
    %cst_60 = arith.constant 3.750000e-01 : f32
    %78 = vector.broadcast %cst_60 : f32 to vector<324x4xf32>
    %79 = arith.mulf %78, %77 : vector<324x4xf32>
    %80 = arith.addf %76, %79 : vector<324x4xf32>
    %c3 = arith.constant 3 : index
    %c0_61 = arith.constant 0 : index
    %81 = vector.load %arg6[%c3, %c0_61] : memref<360x4xf32, #tpu.memory_space<vmem>>, vector<324x4xf32>
    %cst_62 = arith.constant 1.250000e-01 : f32
    %82 = vector.broadcast %cst_62 : f32 to vector<324x4xf32>
    %83 = arith.mulf %82, %81 : vector<324x4xf32>
    %84 = arith.addf %80, %83 : vector<324x4xf32>
    %c0_63 = arith.constant 0 : index
    %c0_64 = arith.constant 0 : index
    %85 = vector.load %arg8[%c0_63, %c0_64] : memref<342x4xf32, #tpu.memory_space<vmem>>, vector<324x4xf32>
    tpu.vector_store %arg8[%c0_63, %c0_64], %84 {strides = array<i32>} : memref<342x4xf32, #tpu.memory_space<vmem>>, vector<324x4xf32>,
    %c0_65 = arith.constant 0 : index
    %c0_66 = arith.constant 0 : index
    %86 = vector.load %arg8[%c0_65, %c0_66] : memref<342x4xf32, #tpu.memory_space<vmem>>, vector<270x4xf32>
    %cst_67 = arith.constant 1.250000e-01 : f32
    %87 = vector.broadcast %cst_67 : f32 to vector<270x4xf32>
    %88 = arith.mulf %87, %86 : vector<270x4xf32>
    %c18_68 = arith.constant 18 : index
    %c0_69 = arith.constant 0 : index
    %89 = vector.load %arg8[%c18_68, %c0_69] : memref<342x4xf32, #tpu.memory_space<vmem>>, vector<270x4xf32>
    %cst_70 = arith.constant 3.750000e-01 : f32
    %90 = vector.broadcast %cst_70 : f32 to vector<270x4xf32>
    %91 = arith.mulf %90, %89 : vector<270x4xf32>
    %92 = arith.addf %88, %91 : vector<270x4xf32>
    %c36_71 = arith.constant 36 : index
    %c0_72 = arith.constant 0 : index
    %93 = vector.load %arg8[%c36_71, %c0_72] : memref<342x4xf32, #tpu.memory_space<vmem>>, vector<270x4xf32>
    %cst_73 = arith.constant 3.750000e-01 : f32
    %94 = vector.broadcast %cst_73 : f32 to vector<270x4xf32>
    %95 = arith.mulf %94, %93 : vector<270x4xf32>
    %96 = arith.addf %92, %95 : vector<270x4xf32>
    %c54 = arith.constant 54 : index
    %c0_74 = arith.constant 0 : index
    %97 = vector.load %arg8[%c54, %c0_74] : memref<342x4xf32, #tpu.memory_space<vmem>>, vector<270x4xf32>
    %cst_75 = arith.constant 1.250000e-01 : f32
    %98 = vector.broadcast %cst_75 : f32 to vector<270x4xf32>
    %99 = arith.mulf %98, %97 : vector<270x4xf32>
    %100 = arith.addf %96, %99 : vector<270x4xf32>
    %101 = tpu.iota {dimensions = array<i32: 0>} : vector<270x1xi32>
    %c18_i32_76 = arith.constant 18 : i32
    %c0_i32_77 = arith.constant 0 : i32
    %102 = arith.cmpi eq, %c18_i32_76, %c0_i32_77 : i32
    %c1_i32_78 = arith.constant 1 : i32
    %103 = arith.select %102, %c1_i32_78, %c18_i32_76 : i32
    %104 = vector.broadcast %103 : i32 to vector<270x1xi32>
    %105 = arith.remsi %101, %104 : vector<270x1xi32>
    %c0_i32_79 = arith.constant 0 : i32
    %106 = vector.broadcast %c0_i32_79 : i32 to vector<270x1xi32>
    %107 = arith.cmpi ne, %105, %106 : vector<270x1xi32>
    %c0_i32_80 = arith.constant 0 : i32
    %108 = vector.broadcast %c0_i32_80 : i32 to vector<270x1xi32>
    %109 = arith.cmpi slt, %105, %108 : vector<270x1xi32>
    %c0_i32_81 = arith.constant 0 : i32
    %110 = arith.cmpi slt, %103, %c0_i32_81 : i32
    %111 = vector.broadcast %110 : i1 to vector<270x1xi1>
    %112 = vector.broadcast %111 : vector<270x1xi1> to vector<270x1xi1>
    %113 = arith.xori %109, %112 : vector<270x1xi1>
    %114 = arith.andi %113, %107 : vector<270x1xi1>
    %115 = vector.broadcast %103 : i32 to vector<270x1xi32>
    %116 = arith.addi %105, %115 : vector<270x1xi32>
    %117 = arith.select %114, %116, %105 : vector<270x1xi1>, vector<270x1xi32>
    %c15_i32 = arith.constant 15 : i32
    %118 = vector.broadcast %c15_i32 : i32 to vector<270x1xi32>
    %119 = arith.cmpi slt, %117, %118 : vector<270x1xi32>
    %cst_82 = arith.constant 0.000000e+00 : f32
    %120 = vector.shape_cast %119 : vector<270x1xi1> to vector<270x1xi1>
    %121 = vector.broadcast %120 : vector<270x1xi1> to vector<270x4xi1>
    %122 = vector.broadcast %cst_82 : f32 to vector<270x4xf32>
    %123 = arith.select %121, %100, %122 : vector<270x4xi1>, vector<270x4xf32>
    %c19_83 = arith.constant 19 : index
    %c0_84 = arith.constant 0 : index
    %124 = vector.load %arg7[%c19_83, %c0_84] : memref<360x4xf32, #tpu.memory_space<vmem>>, vector<270x4xf32>
    tpu.vector_store %arg7[%c19_83, %c0_84], %123 {strides = array<i32>} : memref<360x4xf32, #tpu.memory_space<vmem>>, vector<270x4xf32>,
    %c0_85 = arith.constant 0 : index
    %c0_86 = arith.constant 0 : index
    %125 = tpu.strided_load %arg7[%c0_85, %c0_86] {strides = array<i32: 2, 1>} : memref<360x4xf32, #tpu.memory_space<vmem>>, vector<144x4xf32>
    %c0_87 = arith.constant 0 : index
    %c0_88 = arith.constant 0 : index
    %126 = vector.load %arg10[%c0_87, %c0_88] : memref<288x36xf32, #tpu.memory_space<vmem>>, vector<144x4xf32>
    tpu.vector_store %arg10[%c0_87, %c0_88], %125 {strides = array<i32>} : memref<288x36xf32, #tpu.memory_space<vmem>>, vector<144x4xf32>,
    %c1_89 = arith.constant 1 : index
    %c0_90 = arith.constant 0 : index
    %127 = tpu.strided_load %arg7[%c1_89, %c0_90] {strides = array<i32: 2, 1>} : memref<360x4xf32, #tpu.memory_space<vmem>>, vector<144x4xf32>
    %c0_91 = arith.constant 0 : index
    %c4_92 = arith.constant 4 : index
    %128 = vector.load %arg10[%c0_91, %c4_92] : memref<288x36xf32, #tpu.memory_space<vmem>>, vector<144x4xf32>
    tpu.vector_store %arg10[%c0_91, %c4_92], %127 {strides = array<i32>} : memref<288x36xf32, #tpu.memory_space<vmem>>, vector<144x4xf32>,
    %c2_93 = arith.constant 2 : index
    %c0_94 = arith.constant 0 : index
    %129 = tpu.strided_load %arg7[%c2_93, %c0_94] {strides = array<i32: 2, 1>} : memref<360x4xf32, #tpu.memory_space<vmem>>, vector<144x4xf32>
    %c0_95 = arith.constant 0 : index
    %c8_96 = arith.constant 8 : index
    %130 = vector.load %arg10[%c0_95, %c8_96] : memref<288x36xf32, #tpu.memory_space<vmem>>, vector<144x4xf32>
    tpu.vector_store %arg10[%c0_95, %c8_96], %129 {strides = array<i32>} : memref<288x36xf32, #tpu.memory_space<vmem>>, vector<144x4xf32>,
    %c18_97 = arith.constant 18 : index
    %c0_98 = arith.constant 0 : index
    %131 = tpu.strided_load %arg7[%c18_97, %c0_98] {strides = array<i32: 2, 1>} : memref<360x4xf32, #tpu.memory_space<vmem>>, vector<144x4xf32>
    %c0_99 = arith.constant 0 : index
    %c12_100 = arith.constant 12 : index
    %132 = vector.load %arg10[%c0_99, %c12_100] : memref<288x36xf32, #tpu.memory_space<vmem>>, vector<144x4xf32>
    tpu.vector_store %arg10[%c0_99, %c12_100], %131 {strides = array<i32>} : memref<288x36xf32, #tpu.memory_space<vmem>>, vector<144x4xf32>,
    %c19_101 = arith.constant 19 : index
    %c0_102 = arith.constant 0 : index
    %133 = tpu.strided_load %arg7[%c19_101, %c0_102] {strides = array<i32: 2, 1>} : memref<360x4xf32, #tpu.memory_space<vmem>>, vector<144x4xf32>
    %c0_103 = arith.constant 0 : index
    %c16_104 = arith.constant 16 : index
    %134 = vector.load %arg10[%c0_103, %c16_104] : memref<288x36xf32, #tpu.memory_space<vmem>>, vector<144x4xf32>
    tpu.vector_store %arg10[%c0_103, %c16_104], %133 {strides = array<i32>} : memref<288x36xf32, #tpu.memory_space<vmem>>, vector<144x4xf32>,
    %c20_105 = arith.constant 20 : index
    %c0_106 = arith.constant 0 : index
    %135 = tpu.strided_load %arg7[%c20_105, %c0_106] {strides = array<i32: 2, 1>} : memref<360x4xf32, #tpu.memory_space<vmem>>, vector<144x4xf32>
    %c0_107 = arith.constant 0 : index
    %c20_108 = arith.constant 20 : index
    %136 = vector.load %arg10[%c0_107, %c20_108] : memref<288x36xf32, #tpu.memory_space<vmem>>, vector<144x4xf32>
    tpu.vector_store %arg10[%c0_107, %c20_108], %135 {strides = array<i32>} : memref<288x36xf32, #tpu.memory_space<vmem>>, vector<144x4xf32>,
    %c36_109 = arith.constant 36 : index
    %c0_110 = arith.constant 0 : index
    %137 = tpu.strided_load %arg7[%c36_109, %c0_110] {strides = array<i32: 2, 1>} : memref<360x4xf32, #tpu.memory_space<vmem>>, vector<144x4xf32>
    %c0_111 = arith.constant 0 : index
    %c24_112 = arith.constant 24 : index
    %138 = vector.load %arg10[%c0_111, %c24_112] : memref<288x36xf32, #tpu.memory_space<vmem>>, vector<144x4xf32>
    tpu.vector_store %arg10[%c0_111, %c24_112], %137 {strides = array<i32>} : memref<288x36xf32, #tpu.memory_space<vmem>>, vector<144x4xf32>,
    %c37_113 = arith.constant 37 : index
    %c0_114 = arith.constant 0 : index
    %139 = tpu.strided_load %arg7[%c37_113, %c0_114] {strides = array<i32: 2, 1>} : memref<360x4xf32, #tpu.memory_space<vmem>>, vector<144x4xf32>
    %c0_115 = arith.constant 0 : index
    %c28_116 = arith.constant 28 : index
    %140 = vector.load %arg10[%c0_115, %c28_116] : memref<288x36xf32, #tpu.memory_space<vmem>>, vector<144x4xf32>
    tpu.vector_store %arg10[%c0_115, %c28_116], %139 {strides = array<i32>} : memref<288x36xf32, #tpu.memory_space<vmem>>, vector<144x4xf32>,
    %c38_117 = arith.constant 38 : index
    %c0_118 = arith.constant 0 : index
    %141 = tpu.strided_load %arg7[%c38_117, %c0_118] {strides = array<i32: 2, 1>} : memref<360x4xf32, #tpu.memory_space<vmem>>, vector<144x4xf32>
    %c0_119 = arith.constant 0 : index
    %c32_120 = arith.constant 32 : index
    %142 = vector.load %arg10[%c0_119, %c32_120] : memref<288x36xf32, #tpu.memory_space<vmem>>, vector<144x4xf32>
    tpu.vector_store %arg10[%c0_119, %c32_120], %141 {strides = array<i32>} : memref<288x36xf32, #tpu.memory_space<vmem>>, vector<144x4xf32>,
    %c0_121 = arith.constant 0 : index
    %c0_122 = arith.constant 0 : index
    %143 = vector.load %arg10[%c0_121, %c0_122] : memref<288x36xf32, #tpu.memory_space<vmem>>, vector<144x36xf32>
    %144 = arith.truncf %143 : vector<144x36xf32> to vector<144x36xbf16>
    %c0_123 = arith.constant 0 : index
    %c0_124 = arith.constant 0 : index
    %145 = vector.load %arg3[%c0_123, %c0_124] : memref<36x8xbf16, #tpu.memory_space<vmem>>, vector<36x8xbf16>
    %cst_125 = arith.constant dense<0.000000e+00> : vector<144x8xf32>
    %146 = tpu.matmul %144, %145, %cst_125 {dimension_numbers = #tpu.dot_dimension_numbers<[1], [0], [0], [1], [0, 0, 1, 1], [], []>} : vector<144x36xbf16>, vector<36x8xbf16>, vector<144x8xf32> -> vector<144x8xf32>
    %cst_126 = arith.constant 0.000000e+00 : f32
    %147 = vector.broadcast %cst_126 : f32 to vector<144x8xf32>
    %148 = arith.cmpf oge, %146, %147 : vector<144x8xf32>
    %cst_127 = arith.constant 2.000000e-01 : f32
    %149 = vector.broadcast %cst_127 : f32 to vector<144x8xf32>
    %150 = arith.mulf %149, %146 : vector<144x8xf32>
    %151 = arith.select %148, %146, %150 : vector<144x8xi1>, vector<144x8xf32>
    %cst_128 = arith.constant 1.41421354 : f32
    %152 = vector.broadcast %cst_128 : f32 to vector<144x8xf32>
    %153 = arith.mulf %151, %152 : vector<144x8xf32>
    %c0_129 = arith.constant 0 : index
    %c0_130 = arith.constant 0 : index
    %c0_131 = arith.constant 0 : index
    %154 = vector.load %arg1[%c0_129, %c0_130, %c0_131] : memref<1x360x4xf32, #tpu.memory_space<vmem>>, vector<1x342x4xf32>
    %155 = vector.shape_cast %154 : vector<1x342x4xf32> to vector<342x4xf32>
    %cst_132 = arith.constant 1.250000e-01 : f32
    %156 = vector.broadcast %cst_132 : f32 to vector<342x4xf32>
    %157 = arith.mulf %156, %155 : vector<342x4xf32>
    %c0_133 = arith.constant 0 : index
    %c1_134 = arith.constant 1 : index
    %c0_135 = arith.constant 0 : index
    %158 = vector.load %arg1[%c0_133, %c1_134, %c0_135] : memref<1x360x4xf32, #tpu.memory_space<vmem>>, vector<1x342x4xf32>
    %159 = vector.shape_cast %158 : vector<1x342x4xf32> to vector<342x4xf32>
    %cst_136 = arith.constant 3.750000e-01 : f32
    %160 = vector.broadcast %cst_136 : f32 to vector<342x4xf32>
    %161 = arith.mulf %160, %159 : vector<342x4xf32>
    %162 = arith.addf %157, %161 : vector<342x4xf32>
    %c0_137 = arith.constant 0 : index
    %c2_138 = arith.constant 2 : index
    %c0_139 = arith.constant 0 : index
    %163 = vector.load %arg1[%c0_137, %c2_138, %c0_139] : memref<1x360x4xf32, #tpu.memory_space<vmem>>, vector<1x342x4xf32>
    %164 = vector.shape_cast %163 : vector<1x342x4xf32> to vector<342x4xf32>
    %cst_140 = arith.constant 3.750000e-01 : f32
    %165 = vector.broadcast %cst_140 : f32 to vector<342x4xf32>
    %166 = arith.mulf %165, %164 : vector<342x4xf32>
    %167 = arith.addf %162, %166 : vector<342x4xf32>
    %c0_141 = arith.constant 0 : index
    %c3_142 = arith.constant 3 : index
    %c0_143 = arith.constant 0 : index
    %168 = vector.load %arg1[%c0_141, %c3_142, %c0_143] : memref<1x360x4xf32, #tpu.memory_space<vmem>>, vector<1x342x4xf32>
    %169 = vector.shape_cast %168 : vector<1x342x4xf32> to vector<342x4xf32>
    %cst_144 = arith.constant 1.250000e-01 : f32
    %170 = vector.broadcast %cst_144 : f32 to vector<342x4xf32>
    %171 = arith.mulf %170, %169 : vector<342x4xf32>
    %172 = arith.addf %167, %171 : vector<342x4xf32>
    %c0_145 = arith.constant 0 : index
    %c0_146 = arith.constant 0 : index
    %173 = vector.load %arg8[%c0_145, %c0_146] : memref<342x4xf32, #tpu.memory_space<vmem>>, vector<342x4xf32>
    tpu.vector_store %arg8[%c0_145, %c0_146], %172 {strides = array<i32>} : memref<342x4xf32, #tpu.memory_space<vmem>>, vector<342x4xf32>,
    %c0_147 = arith.constant 0 : index
    %c0_148 = arith.constant 0 : index
    %174 = tpu.strided_load %arg8[%c0_147, %c0_148] {strides = array<i32: 2, 1>} : memref<342x4xf32, #tpu.memory_space<vmem>>, vector<144x4xf32>
    %cst_149 = arith.constant 1.250000e-01 : f32
    %175 = vector.broadcast %cst_149 : f32 to vector<144x4xf32>
    %176 = arith.mulf %175, %174 : vector<144x4xf32>
    %c18_150 = arith.constant 18 : index
    %c0_151 = arith.constant 0 : index
    %177 = tpu.strided_load %arg8[%c18_150, %c0_151] {strides = array<i32: 2, 1>} : memref<342x4xf32, #tpu.memory_space<vmem>>, vector<144x4xf32>
    %cst_152 = arith.constant 3.750000e-01 : f32
    %178 = vector.broadcast %cst_152 : f32 to vector<144x4xf32>
    %179 = arith.mulf %178, %177 : vector<144x4xf32>
    %180 = arith.addf %176, %179 : vector<144x4xf32>
    %c36_153 = arith.constant 36 : index
    %c0_154 = arith.constant 0 : index
    %181 = tpu.strided_load %arg8[%c36_153, %c0_154] {strides = array<i32: 2, 1>} : memref<342x4xf32, #tpu.memory_space<vmem>>, vector<144x4xf32>
    %cst_155 = arith.constant 3.750000e-01 : f32
    %182 = vector.broadcast %cst_155 : f32 to vector<144x4xf32>
    %183 = arith.mulf %182, %181 : vector<144x4xf32>
    %184 = arith.addf %180, %183 : vector<144x4xf32>
    %c54_156 = arith.constant 54 : index
    %c0_157 = arith.constant 0 : index
    %185 = tpu.strided_load %arg8[%c54_156, %c0_157] {strides = array<i32: 2, 1>} : memref<342x4xf32, #tpu.memory_space<vmem>>, vector<144x4xf32>
    %cst_158 = arith.constant 1.250000e-01 : f32
    %186 = vector.broadcast %cst_158 : f32 to vector<144x4xf32>
    %187 = arith.mulf %186, %185 : vector<144x4xf32>
    %188 = arith.addf %184, %187 : vector<144x4xf32>
    %189 = arith.truncf %188 : vector<144x4xf32> to vector<144x4xbf16>
    %c0_159 = arith.constant 0 : index
    %c0_160 = arith.constant 0 : index
    %190 = vector.load %arg4[%c0_159, %c0_160] : memref<4x8xbf16, #tpu.memory_space<vmem>>, vector<4x8xbf16>
    %cst_161 = arith.constant dense<0.000000e+00> : vector<144x8xf32>
    %191 = tpu.matmul %189, %190, %cst_161 {dimension_numbers = #tpu.dot_dimension_numbers<[1], [0], [0], [1], [0, 0, 1, 1], [], []>} : vector<144x4xbf16>, vector<4x8xbf16>, vector<144x8xf32> -> vector<144x8xf32>
    %192 = arith.addf %153, %191 : vector<144x8xf32>
    %cst_162 = arith.constant 0.707106769 : f32
    %193 = vector.broadcast %cst_162 : f32 to vector<144x8xf32>
    %194 = arith.mulf %192, %193 : vector<144x8xf32>
    %c0_163 = arith.constant 0 : index
    %c0_164 = arith.constant 0 : index
    %195 = vector.load %arg9[%c0_163, %c0_164] : memref<144x8xf32, #tpu.memory_space<vmem>>, vector<144x8xf32>
    tpu.vector_store %arg9[%c0_163, %c0_164], %194 {strides = array<i32>} : memref<144x8xf32, #tpu.memory_space<vmem>>, vector<144x8xf32>,
    %c0_165 = arith.constant 0 : index
    %c0_166 = arith.constant 0 : index
    %196 = tpu.strided_load %arg9[%c0_165, %c0_166] {strides = array<i32: 18, 1>} : memref<144x8xf32, #tpu.memory_space<vmem>>, vector<8x8xf32>
    %c0_167 = arith.constant 0 : index
    %c0_168 = arith.constant 0 : index
    %c0_169 = arith.constant 0 : index
    %197 = vector.load %arg5[%c0_167, %c0_168, %c0_169] : memref<1x8x64xf32, #tpu.memory_space<vmem>>, vector<1x8x8xf32>
    %198 = vector.shape_cast %197 : vector<1x8x8xf32> to vector<8x8xf32>
    %199 = vector.shape_cast %196 : vector<8x8xf32> to vector<1x8x8xf32>
    tpu.vector_store %arg5[%c0_167, %c0_168, %c0_169], %199 {strides = array<i32>} : memref<1x8x64xf32, #tpu.memory_space<vmem>>, vector<1x8x8xf32>,
    %c1_170 = arith.constant 1 : index
    %c0_171 = arith.constant 0 : index
    %200 = tpu.strided_load %arg9[%c1_170, %c0_171] {strides = array<i32: 18, 1>} : memref<144x8xf32, #tpu.memory_space<vmem>>, vector<8x8xf32>
    %c0_172 = arith.constant 0 : index
    %c0_173 = arith.constant 0 : index
    %c8_174 = arith.constant 8 : index
    %201 = vector.load %arg5[%c0_172, %c0_173, %c8_174] : memref<1x8x64xf32, #tpu.memory_space<vmem>>, vector<1x8x8xf32>
    %202 = vector.shape_cast %201 : vector<1x8x8xf32> to vector<8x8xf32>
    %203 = vector.shape_cast %200 : vector<8x8xf32> to vector<1x8x8xf32>
    tpu.vector_store %arg5[%c0_172, %c0_173, %c8_174], %203 {strides = array<i32>} : memref<1x8x64xf32, #tpu.memory_space<vmem>>, vector<1x8x8xf32>,
    %c2_175 = arith.constant 2 : index
    %c0_176 = arith.constant 0 : index
    %204 = tpu.strided_load %arg9[%c2_175, %c0_176] {strides = array<i32: 18, 1>} : memref<144x8xf32, #tpu.memory_space<vmem>>, vector<8x8xf32>
    %c0_177 = arith.constant 0 : index
    %c0_178 = arith.constant 0 : index
    %c16_179 = arith.constant 16 : index
    %205 = vector.load %arg5[%c0_177, %c0_178, %c16_179] : memref<1x8x64xf32, #tpu.memory_space<vmem>>, vector<1x8x8xf32>
    %206 = vector.shape_cast %205 : vector<1x8x8xf32> to vector<8x8xf32>
    %207 = vector.shape_cast %204 : vector<8x8xf32> to vector<1x8x8xf32>
    tpu.vector_store %arg5[%c0_177, %c0_178, %c16_179], %207 {strides = array<i32>} : memref<1x8x64xf32, #tpu.memory_space<vmem>>, vector<1x8x8xf32>,
    %c3_180 = arith.constant 3 : index
    %c0_181 = arith.constant 0 : index
    %208 = tpu.strided_load %arg9[%c3_180, %c0_181] {strides = array<i32: 18, 1>} : memref<144x8xf32, #tpu.memory_space<vmem>>, vector<8x8xf32>
    %c0_182 = arith.constant 0 : index
    %c0_183 = arith.constant 0 : index
    %c24_184 = arith.constant 24 : index
    %209 = vector.load %arg5[%c0_182, %c0_183, %c24_184] : memref<1x8x64xf32, #tpu.memory_space<vmem>>, vector<1x8x8xf32>
    %210 = vector.shape_cast %209 : vector<1x8x8xf32> to vector<8x8xf32>
    %211 = vector.shape_cast %208 : vector<8x8xf32> to vector<1x8x8xf32>
    tpu.vector_store %arg5[%c0_182, %c0_183, %c24_184], %211 {strides = array<i32>} : memref<1x8x64xf32, #tpu.memory_space<vmem>>, vector<1x8x8xf32>,
    %c4_185 = arith.constant 4 : index
    %c0_186 = arith.constant 0 : index
    %212 = tpu.strided_load %arg9[%c4_185, %c0_186] {strides = array<i32: 18, 1>} : memref<144x8xf32, #tpu.memory_space<vmem>>, vector<8x8xf32>
    %c0_187 = arith.constant 0 : index
    %c0_188 = arith.constant 0 : index
    %c32_189 = arith.constant 32 : index
    %213 = vector.load %arg5[%c0_187, %c0_188, %c32_189] : memref<1x8x64xf32, #tpu.memory_space<vmem>>, vector<1x8x8xf32>
    %214 = vector.shape_cast %213 : vector<1x8x8xf32> to vector<8x8xf32>
    %215 = vector.shape_cast %212 : vector<8x8xf32> to vector<1x8x8xf32>
    tpu.vector_store %arg5[%c0_187, %c0_188, %c32_189], %215 {strides = array<i32>} : memref<1x8x64xf32, #tpu.memory_space<vmem>>, vector<1x8x8xf32>,
    %c5 = arith.constant 5 : index
    %c0_190 = arith.constant 0 : index
    %216 = tpu.strided_load %arg9[%c5, %c0_190] {strides = array<i32: 18, 1>} : memref<144x8xf32, #tpu.memory_space<vmem>>, vector<8x8xf32>
    %c0_191 = arith.constant 0 : index
    %c0_192 = arith.constant 0 : index
    %c40 = arith.constant 40 : index
    %217 = vector.load %arg5[%c0_191, %c0_192, %c40] : memref<1x8x64xf32, #tpu.memory_space<vmem>>, vector<1x8x8xf32>
    %218 = vector.shape_cast %217 : vector<1x8x8xf32> to vector<8x8xf32>
    %219 = vector.shape_cast %216 : vector<8x8xf32> to vector<1x8x8xf32>
    tpu.vector_store %arg5[%c0_191, %c0_192, %c40], %219 {strides = array<i32>} : memref<1x8x64xf32, #tpu.memory_space<vmem>>, vector<1x8x8xf32>,
    %c6 = arith.constant 6 : index
    %c0_193 = arith.constant 0 : index
    %220 = tpu.strided_load %arg9[%c6, %c0_193] {strides = array<i32: 18, 1>} : memref<144x8xf32, #tpu.memory_space<vmem>>, vector<8x8xf32>
    %c0_194 = arith.constant 0 : index
    %c0_195 = arith.constant 0 : index
    %c48 = arith.constant 48 : index
    %221 = vector.load %arg5[%c0_194, %c0_195, %c48] : memref<1x8x64xf32, #tpu.memory_space<vmem>>, vector<1x8x8xf32>
    %222 = vector.shape_cast %221 : vector<1x8x8xf32> to vector<8x8xf32>
    %223 = vector.shape_cast %220 : vector<8x8xf32> to vector<1x8x8xf32>
    tpu.vector_store %arg5[%c0_194, %c0_195, %c48], %223 {strides = array<i32>} : memref<1x8x64xf32, #tpu.memory_space<vmem>>, vector<1x8x8xf32>,
    %c7 = arith.constant 7 : index
    %c0_196 = arith.constant 0 : index
    %224 = tpu.strided_load %arg9[%c7, %c0_196] {strides = array<i32: 18, 1>} : memref<144x8xf32, #tpu.memory_space<vmem>>, vector<8x8xf32>
    %c0_197 = arith.constant 0 : index
    %c0_198 = arith.constant 0 : index
    %c56 = arith.constant 56 : index
    %225 = vector.load %arg5[%c0_197, %c0_198, %c56] : memref<1x8x64xf32, #tpu.memory_space<vmem>>, vector<1x8x8xf32>
    %226 = vector.shape_cast %225 : vector<1x8x8xf32> to vector<8x8xf32>
    %227 = vector.shape_cast %224 : vector<8x8xf32> to vector<1x8x8xf32>
    tpu.vector_store %arg5[%c0_197, %c0_198, %c56], %227 {strides = array<i32>} : memref<1x8x64xf32, #tpu.memory_space<vmem>>, vector<1x8x8xf32>,
    return
  }
  func.func @transform_0(%arg0: i32) -> (i32, i32, i32) {
    %c0_i32 = arith.constant 0 : i32
    %c0_i32_0 = arith.constant 0 : i32
    %c0_i32_1 = arith.constant 0 : i32
    return %arg0, %c0_i32, %c0_i32_0 : i32, i32, i32
  }
  func.func @transform_1(%arg0: i32) -> (i32, i32) {
    %c0_i32 = arith.constant 0 : i32
    %c0_i32_0 = arith.constant 0 : i32
    %c0_i32_1 = arith.constant 0 : i32
    return %c0_i32, %c0_i32_0 : i32, i32
  }
  func.func @transform_2(%arg0: i32) -> (i32, i32) {
    %c0_i32 = arith.constant 0 : i32
    %c0_i32_0 = arith.constant 0 : i32
    %c0_i32_1 = arith.constant 0 : i32
    return %c0_i32, %c0_i32_0 : i32, i32
  }
  func.func @transform_3(%arg0: i32) -> (i32, i32) {
    %c0_i32 = arith.constant 0 : i32
    %c0_i32_0 = arith.constant 0 : i32
    %c0_i32_1 = arith.constant 0 : i32
    return %c0_i32, %c0_i32_0 : i32, i32
  }
  func.func @transform_4(%arg0: i32) -> (i32, i32, i32) {
    %c0_i32 = arith.constant 0 : i32
    %c0_i32_0 = arith.constant 0 : i32
    %c0_i32_1 = arith.constant 0 : i32
    return %arg0, %c0_i32, %c0_i32_0 : i32, i32, i32
  }
}

</mosaic_0001>

<llo_original>
// kernel: resblock_forward.1
$region0: #{resblock_forward.1}
  #allocation0 [shape = 'u32[]', space=smem, size = 0x4, offset = 0x4, fixed_abs, tag = 'smem constant byte address 0x4 - core index']
  #allocation1 [shape = 'u32[144,128]{1,0:T(1,128)}', space=vmem, size = 0x12000, scoped, tag = 'internal scratch']
  #allocation2 [shape = 'f32[360,4]{1,0:T(8,128)}', space=vmem, size = 0x2d000, scoped, tag = 'scratch operand']
  #allocation3 [shape = 'f32[360,4]{1,0:T(8,128)}', space=vmem, size = 0x2d000, scoped, tag = 'scratch operand']
  #allocation4 [shape = 'f32[342,4]{1,0:T(8,128)}', space=vmem, size = 0x2b000, scoped, tag = 'scratch operand']
  #allocation5 [shape = 'f32[144,8]{1,0:T(8,128)}', space=vmem, size = 0x12000, scoped, tag = 'scratch operand']
  #allocation6 [shape = 'f32[288,36]{1,0:T(8,128)}', space=vmem, size = 0x24000, scoped, tag = 'scratch operand']
  %s0 = inlined_call_operand.vmem [shape: f32[2,360,4], index: 0, kind: input, shape index: {}]
  %s1 = inlined_call_operand.vmem [shape: bf16[36,4], index: 1, kind: input, shape index: {}]
  %s2 = inlined_call_operand.vmem [shape: bf16[36,8], index: 2, kind: input, shape index: {}]
  %s3 = inlined_call_operand.vmem [shape: bf16[4,8], index: 3, kind: input, shape index: {}]
  %s4 = inlined_call_operand.vmem [shape: f32[2,8,64], index: 4, kind: output, shape index: {}]
  %s5 = sld [smem:[#allocation0]]
  $region49: #{resblock_forward.1} parent=0
    _
  %s7 = ssub.s32 1, %s5
  %s8 = scalar_select 0, %s7, %s5
  loop: start=0, step=1, limit=4
  $region2: #{resblock_forward.1} parent=0 // loop_pre_header
    _
  $region3: #{resblock_forward.1} parent=0 // loop_header
    %s10 = sphi 0, %s14
    %p11 = scmp.ge.s32.totalorder %s10, 4
    %s20 = sphi 0, %s22
    %s23 = sphi 0, %s20
    %s24 = sphi 0, %s23
    %s40 = sphi 0, %s24
    %s44 = sphi 0, %s44
    %s46 = sphi 0, %s44
    %s47 = sphi 0, %s46
    %s61 = sphi 0, %s47
    %s65 = sphi 0, %s65
    %s67 = sphi 0, %s65
    %s68 = sphi 0, %s67
    %s82 = sphi 0, %s68
    %s86 = sphi 0, %s86
    %s88 = sphi 0, %s86
    %s89 = sphi 0, %s88
    %s103 = sphi 0, %s89
    %s109 = sphi 0, %s111
    %s112 = sphi 0, %s109
    %s113 = sphi 0, %s112
    %s129 = sphi 0, %s113
  $region4: #{resblock_forward.1} parent=0 // loop_header_branch
    %13 = sbr.rel (%p11) target = $region8
  $region5: #{resblock_forward.1} parent=0 // loop_body
    %s15 = ssub.s32 %s10, 1
    %s16 = ssub.s32 %s10, 2
    %s17 = sadd.s32 %s10, 1
    %s18 = ssub.s32 %s10, %s17
    %p19 = scmp.eq.s32.totalorder %s18, 0
    %s21 = sadd.s32 %s20, 1
    %s22 = scalar_select %p19, %s20, %s21
    %p25 = pneg %p19
    %p26 = scmp.eq.s32.totalorder %s10, 1
    %p27 = por %p25, %p26
    %p28 = scmp.ne.s32.totalorder %s20, %s23
    %p29 = scmp.eq.s32.totalorder %s10, 0
    %p30 = por %p28, %p29
    %p31 = scmp.ne.s32.totalorder %s20, %s23
    %p32 = scmp.eq.s32.totalorder %s15, 1
    %p33 = por %p31, %p32
    %p34 = scmp.ne.s32.totalorder %s23, %s24
    %p35 = scmp.eq.s32.totalorder %s15, 0
    %p36 = por %p34, %p35
    %p37 = scmp.ne.s32.totalorder %s23, %s24
    %p38 = scmp.eq.s32.totalorder %s16, 1
    %p39 = por %p37, %p38
    %p41 = scmp.ne.s32.totalorder %s24, %s40
    %p42 = scmp.eq.s32.totalorder %s16, 0
    %p43 = por %p41, %p42
    %s45 = sadd.s32 %s44, 1
    %p48 = scmp.eq.s32.totalorder %s10, 1
    %p49 = scmp.ne.s32.totalorder %s44, %s46
    %p50 = scmp.eq.s32.totalorder %s10, 0
    %p51 = por %p49, %p50
    %p52 = scmp.ne.s32.totalorder %s44, %s46
    %p53 = scmp.eq.s32.totalorder %s15, 1
    %p54 = por %p52, %p53
    %p55 = scmp.ne.s32.totalorder %s46, %s47
    %p56 = scmp.eq.s32.totalorder %s15, 0
    %p57 = por %p55, %p56
    %p58 = scmp.ne.s32.totalorder %s46, %s47
    %p59 = scmp.eq.s32.totalorder %s16, 1
    %p60 = por %p58, %p59
    %p62 = scmp.ne.s32.totalorder %s47, %s61
    %p63 = scmp.eq.s32.totalorder %s16, 0
    %p64 = por %p62, %p63
    %s66 = sadd.s32 %s65, 1
    %p69 = scmp.eq.s32.totalorder %s10, 1
    %p70 = scmp.ne.s32.totalorder %s65, %s67
    %p71 = scmp.eq.s32.totalorder %s10, 0
    %p72 = por %p70, %p71
    %p73 = scmp.ne.s32.totalorder %s65, %s67
    %p74 = scmp.eq.s32.totalorder %s15, 1
    %p75 = por %p73, %p74
    %p76 = scmp.ne.s32.totalorder %s67, %s68
    %p77 = scmp.eq.s32.totalorder %s15, 0
    %p78 = por %p76, %p77
    %p79 = scmp.ne.s32.totalorder %s67, %s68
    %p80 = scmp.eq.s32.totalorder %s16, 1
    %p81 = por %p79, %p80
    %p83 = scmp.ne.s32.totalorder %s68, %s82
    %p84 = scmp.eq.s32.totalorder %s16, 0
    %p85 = por %p83, %p84
    %s87 = sadd.s32 %s86, 1
    %p90 = scmp.eq.s32.totalorder %s10, 1
    %p91 = scmp.ne.s32.totalorder %s86, %s88
    %p92 = scmp.eq.s32.totalorder %s10, 0
    %p93 = por %p91, %p92
    %p94 = scmp.ne.s32.totalorder %s86, %s88
    %p95 = scmp.eq.s32.totalorder %s15, 1
    %p96 = por %p94, %p95
    %p97 = scmp.ne.s32.totalorder %s88, %s89
    %p98 = scmp.eq.s32.totalorder %s15, 0
    %p99 = por %p97, %p98
    %p100 = scmp.ne.s32.totalorder %s88, %s89
    %p101 = scmp.eq.s32.totalorder %s16, 1
    %p102 = por %p100, %p101
    %p104 = scmp.ne.s32.totalorder %s89, %s103
    %p105 = scmp.eq.s32.totalorder %s16, 0
    %p106 = por %p104, %p105
    %s107 = ssub.s32 %s10, %s17
    %p108 = scmp.eq.s32.totalorder %s107, 0
    %s110 = sadd.s32 %s109, 1
    %s111 = scalar_select %p108, %s109, %s110
    %p114 = pneg %p108
    %p115 = scmp.eq.s32.totalorder %s10, 1
    %p116 = por %p114, %p115
    %p117 = scmp.ne.s32.totalorder %s109, %s112
    %p118 = scmp.eq.s32.totalorder %s10, 0
    %p119 = por %p117, %p118
    %p120 = scmp.ne.s32.totalorder %s109, %s112
    %p121 = scmp.eq.s32.totalorder %s15, 1
    %p122 = por %p120, %p121
    %p123 = scmp.ne.s32.totalorder %s112, %s113
    %p124 = scmp.eq.s32.totalorder %s15, 0
    %p125 = por %p123, %p124
    %p126 = scmp.ne.s32.totalorder %s112, %s113
    %p127 = scmp.eq.s32.totalorder %s16, 1
    %p128 = por %p126, %p127
    %p130 = scmp.ne.s32.totalorder %s113, %s129
    %p131 = scmp.eq.s32.totalorder %s16, 0
    %p132 = por %p130, %p131
    %p133 = scmp.le.s32.totalorder 1, %s10
    %p134 = scmp.lt.s32.totalorder %s10, 3
    %p135 = pnand %p133, %p134
    %p136 = pneg %p135
    // Predicated region
    $region9: #{resblock_forward.1} parent=5 // pred_check
      _
    $region10: #{resblock_forward.1} parent=5 // pred_check_branch
      %138 = sbr.rel (%p135) target = $region12
    $region11: #{resblock_forward.1} parent=5 // pred_region
      %s139 = ssub.s32 %s10, 1
      // Predicated region
      $region13: #{resblock_forward.1} parent=11 // pred_check
        %p140 = pneg %p57
      $region14: #{resblock_forward.1} parent=11 // pred_check_branch
        %142 = sbr.rel (%p140) target = $region16
      $region15: #{resblock_forward.1} parent=11 // pred_region
        _
      $region16: #{resblock_forward.1} parent=11 // pred_fallthru
        _
      // Predicated region
      $region17: #{resblock_forward.1} parent=11 // pred_check
        %p143 = pneg %p78
      $region18: #{resblock_forward.1} parent=11 // pred_check_branch
        %145 = sbr.rel (%p143) target = $region20
      $region19: #{resblock_forward.1} parent=11 // pred_region
        _
      $region20: #{resblock_forward.1} parent=11 // pred_fallthru
        _
      // Predicated region
      $region21: #{resblock_forward.1} parent=11 // pred_check
        %p146 = pneg %p99
      $region22: #{resblock_forward.1} parent=11 // pred_check_branch
        %148 = sbr.rel (%p146) target = $region24
      $region23: #{resblock_forward.1} parent=11 // pred_region
        _
      $region24: #{resblock_forward.1} parent=11 // pred_fallthru
        _
    $region12: #{resblock_forward.1} parent=5 // pred_fallthru
      _
    %p149 = scmp.lt.s32.totalorder %s10, 2
    // Predicated region
    $region25: #{resblock_forward.1} parent=5 // pred_check
      %p150 = pneg %p149
    $region26: #{resblock_forward.1} parent=5 // pred_check_branch
      %152 = sbr.rel (%p150) target = $region28
    $region27: #{resblock_forward.1} parent=5 // pred_region
      // Predicated region
      $region29: #{resblock_forward.1} parent=27 // pred_check
        %p153 = pneg %p30
      $region30: #{resblock_forward.1} parent=27 // pred_check_branch
        %155 = sbr.rel (%p153) target = $region32
      $region31: #{resblock_forward.1} parent=27 // pred_region
        %p156 = scmp.lt.s32.totalorder %s10, 1
        %s157 = scalar_select %p156, %s10, 1
        %s158 = smul.addr %s157, 45
        %s159 = smul.addr %s158, 8
        %s160 = scalar_lea.vmem %s0, %s159
      $region32: #{resblock_forward.1} parent=27 // pred_fallthru
        _
    $region28: #{resblock_forward.1} parent=5 // pred_fallthru
      _
    %p161 = scmp.le.s32.totalorder 1, %s10
    %p162 = scmp.lt.s32.totalorder %s10, 3
    %p163 = pnand %p161, %p162
    %p164 = pneg %p163
    // Predicated region
    $region33: #{resblock_forward.1} parent=5 // pred_check
      _
    $region34: #{resblock_forward.1} parent=5 // pred_check_branch
      %166 = sbr.rel (%p163) target = $region36
    $region35: #{resblock_forward.1} parent=5 // pred_region
      %s167 = ssub.s32 %s10, 1
      %p168 = scmp.lt.s32.totalorder %s15, 1
      %s169 = scalar_select %p168, %s15, 1
      %s170 = smul.addr %s169, 45
      %s171 = smul.addr %s170, 8
      %s172 = scalar_lea.vmem %s0, %s171
      %p173 = pneg %p36
      %p174 = pneg %p33
      %p175 = pneg %p57
      %p176 = pneg %p54
      %p177 = pneg %p78
      %p178 = pneg %p75
      %p179 = pneg %p99
      %p180 = pneg %p96
      %p181 = pneg %p125
      %p182 = pneg %p122
      %p183 = scmp.lt.s32.totalorder %s15, 1
      %s184 = scalar_select %p183, %s15, 1
      %s185 = smul.addr %s184, 8
      %s186 = scalar_lea.vmem %s4, %s185
      %p187 = scmp.lt.s32.totalorder %s15, 1
      %s188 = scalar_select %p187, %s15, 1
      %s189 = smul.addr %s188, 45
      %s190 = smul.addr %s189, 8
      %s191 = scalar_lea.vmem %s0, %s190
      %p192 = scmp.lt.s32.totalorder %s15, 1
      %s193 = scalar_select %p192, %s15, 1
      %s194 = smul.addr %s193, 8
      %s195 = scalar_lea.vmem %s4, %s194
      %vm197 = vcmask 31744
      %198 = vst.msk [vmem:[#allocation2] sm:$0xff] %vm197, 0.0
      %199 = vst.msk [vmem:[#allocation2 + $0x8] sm:$0xff] %vm197, 0.0
      %vm200 = vcmask 26624
      %201 = vst.msk [vmem:[#allocation2 + $0x10] sm:$0x7] %vm200, 0.0
      %202 = vst.msk [vmem:[#allocation2 + $0x133] sm:$0xff] %vm197, 0.0
      %203 = vst.msk [vmem:[#allocation2 + $0x13b] sm:$0xff] %vm197, 0.0
      %204 = vst.msk [vmem:[#allocation2 + $0x143] sm:$0xff] %vm197, 0.0
      %205 = vst.msk [vmem:[#allocation2 + $0x14b] sm:$0xff] %vm197, 0.0
      %206 = vst.msk [vmem:[#allocation2 + $0x153] sm:$0xff] %vm197, 0.0
      %207 = vst.msk [vmem:[#allocation2 + $0x15b] sm:$0xff] %vm197, 0.0
      %vm208 = vcmask 28672
      %209 = vst.msk [vmem:[#allocation2 + $0x163] sm:$0x1f] %vm208, 0.0
      %210 = vst.msk [vmem:[#allocation3] sm:$0xff] %vm197, 0.0
      %211 = vst.msk [vmem:[#allocation3 + $0x8] sm:$0xff] %vm197, 0.0
      %212 = vst.msk [vmem:[#allocation3 + $0x10] sm:$0x7] %vm200, 0.0
      %213 = vst.msk [vmem:[#allocation3 + $0x121] sm:$0xff] %vm197, 0.0
      %214 = vst.msk [vmem:[#allocation3 + $0x129] sm:$0xff] %vm197, 0.0
      %215 = vst.msk [vmem:[#allocation3 + $0x131] sm:$0xff] %vm197, 0.0
      %216 = vst.msk [vmem:[#allocation3 + $0x139] sm:$0xff] %vm197, 0.0
      %217 = vst.msk [vmem:[#allocation3 + $0x141] sm:$0xff] %vm197, 0.0
      %218 = vst.msk [vmem:[#allocation3 + $0x149] sm:$0xff] %vm197, 0.0
      %219 = vst.msk [vmem:[#allocation3 + $0x151] sm:$0xff] %vm197, 0.0
      %220 = vst.msk [vmem:[#allocation3 + $0x159] sm:$0xff] %vm197, 0.0
      %vm221 = vcmask 30720
      %222 = vst.msk [vmem:[#allocation3 + $0x161] sm:$0x7f] %vm221, 0.0
      %v223 = vld [vmem:[%s191] sm:$0xff]
      %v224 = vld [vmem:[%s191 + $0x8] sm:$0xff]
      %v225 = vld [vmem:[%s191 + $0x10] sm:$0xff]
      %v226 = vld [vmem:[%s191 + $0x18] sm:$0xff]
      %v227 = vld [vmem:[%s191 + $0x20] sm:$0xff]
      %v228 = vld [vmem:[%s191 + $0x28] sm:$0xff]
      %v229 = vld [vmem:[%s191 + $0x30] sm:$0xff]
      %v230 = vld [vmem:[%s191 + $0x38] sm:$0xff]
      %v231 = vld [vmem:[%s191 + $0x40] sm:$0xff]
      %v232 = vld [vmem:[%s191 + $0x48] sm:$0xff]
      %v233 = vld [vmem:[%s191 + $0x50] sm:$0xff]
      %v234 = vld [vmem:[%s191 + $0x58] sm:$0xff]
      %v235 = vld [vmem:[%s191 + $0x60] sm:$0xff]
      %v236 = vld [vmem:[%s191 + $0x68] sm:$0xff]
      %v237 = vld [vmem:[%s191 + $0x70] sm:$0xff]
      %v238 = vld [vmem:[%s191 + $0x78] sm:$0xff]
      %v239 = vld [vmem:[%s191 + $0x80] sm:$0xff]
      %v240 = vld [vmem:[%s191 + $0x88] sm:$0xff]
      %v241 = vld [vmem:[%s191 + $0x90] sm:$0xff]
      %v242 = vld [vmem:[%s191 + $0x98] sm:$0xff]
      %v243 = vld [vmem:[%s191 + $0xa0] sm:$0xff]
      %v244 = vld [vmem:[%s191 + $0xa8] sm:$0xff]
      %v245 = vld [vmem:[%s191 + $0xb0] sm:$0xff]
      %v246 = vld [vmem:[%s191 + $0xb8] sm:$0xff]
      %v247 = vld [vmem:[%s191 + $0xc0] sm:$0xff]
      %v248 = vld [vmem:[%s191 + $0xc8] sm:$0xff]
      %v249 = vld [vmem:[%s191 + $0xd0] sm:$0xff]
      %v250 = vld [vmem:[%s191 + $0xd8] sm:$0xff]
      %v251 = vld [vmem:[%s191 + $0xe0] sm:$0xff]
      %v252 = vld [vmem:[%s191 + $0xe8] sm:$0xff]
      %v253 = vld [vmem:[%s191 + $0xf0] sm:$0xff]
      %v254 = vld [vmem:[%s191 + $0xf8] sm:$0xff]
      %v255 = vld [vmem:[%s191 + $0x100] sm:$0xff]
      %v256 = vld [vmem:[%s191 + $0x108] sm:$0xff]
      %v257 = vld [vmem:[%s191 + $0x110] sm:$0xff]
      %v258 = vld [vmem:[%s191 + $0x118] sm:$0xff]
      %259 = vst.msk [vmem:[#allocation6] sm:$0xff] %vm197, %v223
      %260 = vst.msk [vmem:[#allocation6 + $0x8] sm:$0xff] %vm197, %v224
      %261 = vst.msk [vmem:[#allocation6 + $0x10] sm:$0xff] %vm197, %v225
      %262 = vst.msk [vmem:[#allocation6 + $0x18] sm:$0xff] %vm197, %v226
      %263 = vst.msk [vmem:[#allocation6 + $0x20] sm:$0xff] %vm197, %v227
      %264 = vst.msk [vmem:[#allocation6 + $0x28] sm:$0xff] %vm197, %v228
      %265 = vst.msk [vmem:[#allocation6 + $0x30] sm:$0xff] %vm197, %v229
      %266 = vst.msk [vmem:[#allocation6 + $0x38] sm:$0xff] %vm197, %v230
      %267 = vst.msk [vmem:[#allocation6 + $0x40] sm:$0xff] %vm197, %v231
      %268 = vst.msk [vmem:[#allocation6 + $0x48] sm:$0xff] %vm197, %v232
      %269 = vst.msk [vmem:[#allocation6 + $0x50] sm:$0xff] %vm197, %v233
      %270 = vst.msk [vmem:[#allocation6 + $0x58] sm:$0xff] %vm197, %v234
      %271 = vst.msk [vmem:[#allocation6 + $0x60] sm:$0xff] %vm197, %v235
      %272 = vst.msk [vmem:[#allocation6 + $0x68] sm:$0xff] %vm197, %v236
      %273 = vst.msk [vmem:[#allocation6 + $0x70] sm:$0xff] %vm197, %v237
      %274 = vst.msk [vmem:[#allocation6 + $0x78] sm:$0xff] %vm197, %v238
      %275 = vst.msk [vmem:[#allocation6 + $0x80] sm:$0xff] %vm197, %v239
      %276 = vst.msk [vmem:[#allocation6 + $0x88] sm:$0xff] %vm197, %v240
      %277 = vst.msk [vmem:[#allocation6 + $0x90] sm:$0xff] %vm197, %v241
      %278 = vst.msk [vmem:[#allocation6 + $0x98] sm:$0xff] %vm197, %v242
      %279 = vst.msk [vmem:[#allocation6 + $0xa0] sm:$0xff] %vm197, %v243
      %280 = vst.msk [vmem:[#allocation6 + $0xa8] sm:$0xff] %vm197, %v244
      %281 = vst.msk [vmem:[#allocation6 + $0xb0] sm:$0xff] %vm197, %v245
      %282 = vst.msk [vmem:[#allocation6 + $0xb8] sm:$0xff] %vm197, %v246
      %283 = vst.msk [vmem:[#allocation6 + $0xc0] sm:$0xff] %vm197, %v247
      %284 = vst.msk [vmem:[#allocation6 + $0xc8] sm:$0xff] %vm197, %v248
      %285 = vst.msk [vmem:[#allocation6 + $0xd0] sm:$0xff] %vm197, %v249
      %286 = vst.msk [vmem:[#allocation6 + $0xd8] sm:$0xff] %vm197, %v250
      %287 = vst.msk [vmem:[#allocation6 + $0xe0] sm:$0xff] %vm197, %v251
      %288 = vst.msk [vmem:[#allocation6 + $0xe8] sm:$0xff] %vm197, %v252
      %289 = vst.msk [vmem:[#allocation6 + $0xf0] sm:$0xff] %vm197, %v253
      %290 = vst.msk [vmem:[#allocation6 + $0xf8] sm:$0xff] %vm197, %v254
      %291 = vst.msk [vmem:[#allocation6 + $0x100] sm:$0xff] %vm197, %v255
      %292 = vst.msk [vmem:[#allocation6 + $0x108] sm:$0xff] %vm197, %v256
      %293 = vst.msk [vmem:[#allocation6 + $0x110] sm:$0xff] %vm197, %v257
      %294 = vst.msk [vmem:[#allocation6 + $0x118] sm:$0xff] %vm197, %v258
      %v295 = vld [vmem:[%s191 + $0x1] sm:$0xff]
      %v296 = vld [vmem:[%s191 + $0x9] sm:$0xff]
      %v297 = vld [vmem:[%s191 + $0x11] sm:$0xff]
      %v298 = vld [vmem:[%s191 + $0x19] sm:$0xff]
      %v299 = vld [vmem:[%s191 + $0x21] sm:$0xff]
      %v300 = vld [vmem:[%s191 + $0x29] sm:$0xff]
      %v301 = vld [vmem:[%s191 + $0x31] sm:$0xff]
      %v302 = vld [vmem:[%s191 + $0x39] sm:$0xff]
      %v303 = vld [vmem:[%s191 + $0x41] sm:$0xff]
      %v304 = vld [vmem:[%s191 + $0x49] sm:$0xff]
      %v305 = vld [vmem:[%s191 + $0x51] sm:$0xff]
      %v306 = vld [vmem:[%s191 + $0x59] sm:$0xff]
      %v307 = vld [vmem:[%s191 + $0x61] sm:$0xff]
      %v308 = vld [vmem:[%s191 + $0x69] sm:$0xff]
      %v309 = vld [vmem:[%s191 + $0x71] sm:$0xff]
      %v310 = vld [vmem:[%s191 + $0x79] sm:$0xff]
      %v311 = vld [vmem:[%s191 + $0x81] sm:$0xff]
      %v312 = vld [vmem:[%s191 + $0x89] sm:$0xff]
      %v313 = vld [vmem:[%s191 + $0x91] sm:$0xff]
      %v314 = vld [vmem:[%s191 + $0x99] sm:$0xff]
      %v315 = vld [vmem:[%s191 + $0xa1] sm:$0xff]
      %v316 = vld [vmem:[%s191 + $0xa9] sm:$0xff]
      %v317 = vld [vmem:[%s191 + $0xb1] sm:$0xff]
      %v318 = vld [vmem:[%s191 + $0xb9] sm:$0xff]
      %v319 = vld [vmem:[%s191 + $0xc1] sm:$0xff]
      %v320 = vld [vmem:[%s191 + $0xc9] sm:$0xff]
      %v321 = vld [vmem:[%s191 + $0xd1] sm:$0xff]
      %v322 = vld [vmem:[%s191 + $0xd9] sm:$0xff]
      %v323 = vld [vmem:[%s191 + $0xe1] sm:$0xff]
      %v324 = vld [vmem:[%s191 + $0xe9] sm:$0xff]
      %v325 = vld [vmem:[%s191 + $0xf1] sm:$0xff]
      %v326 = vld [vmem:[%s191 + $0xf9] sm:$0xff]
      %v327 = vld [vmem:[%s191 + $0x101] sm:$0xff]
      %v328 = vld [vmem:[%s191 + $0x109] sm:$0xff]
      %v329 = vld [vmem:[%s191 + $0x111] sm:$0xff]
      %v330 = vld [vmem:[%s191 + $0x119] sm:$0xff]
      %367 = vrot.lane.b32.xlu0 %v295, 4
      %v368 = vpop.permute.xlu0 %367
      %369 = vrot.lane.b32.xlu0 %v296, 4
      %v370 = vpop.permute.xlu0 %369
      %371 = vrot.lane.b32.xlu0 %v297, 4
      %v372 = vpop.permute.xlu0 %371
      %373 = vrot.lane.b32.xlu0 %v298, 4
      %v374 = vpop.permute.xlu0 %373
      %375 = vrot.lane.b32.xlu0 %v299, 4
      %v376 = vpop.permute.xlu0 %375
      %377 = vrot.lane.b32.xlu0 %v300, 4
      %v378 = vpop.permute.xlu0 %377
      %379 = vrot.lane.b32.xlu0 %v301, 4
      %v380 = vpop.permute.xlu0 %379
      %381 = vrot.lane.b32.xlu0 %v302, 4
      %v382 = vpop.permute.xlu0 %381
      %383 = vrot.lane.b32.xlu0 %v303, 4
      %v384 = vpop.permute.xlu0 %383
      %385 = vrot.lane.b32.xlu0 %v304, 4
      %v386 = vpop.permute.xlu0 %385
      %387 = vrot.lane.b32.xlu0 %v305, 4
      %v388 = vpop.permute.xlu0 %387
      %389 = vrot.lane.b32.xlu0 %v306, 4
      %v390 = vpop.permute.xlu0 %389
      %391 = vrot.lane.b32.xlu0 %v307, 4
      %v392 = vpop.permute.xlu0 %391
      %393 = vrot.lane.b32.xlu0 %v308, 4
      %v394 = vpop.permute.xlu0 %393
      %395 = vrot.lane.b32.xlu0 %v309, 4
      %v396 = vpop.permute.xlu0 %395
      %397 = vrot.lane.b32.xlu0 %v310, 4
      %v398 = vpop.permute.xlu0 %397
      %399 = vrot.lane.b32.xlu0 %v311, 4
      %v400 = vpop.permute.xlu0 %399
      %401 = vrot.lane.b32.xlu0 %v312, 4
      %v402 = vpop.permute.xlu0 %401
      %403 = vrot.lane.b32.xlu0 %v313, 4
      %v404 = vpop.permute.xlu0 %403
      %405 = vrot.lane.b32.xlu0 %v314, 4
      %v406 = vpop.permute.xlu0 %405
      %407 = vrot.lane.b32.xlu0 %v315, 4
      %v408 = vpop.permute.xlu0 %407
      %409 = vrot.lane.b32.xlu0 %v316, 4
      %v410 = vpop.permute.xlu0 %409
      %411 = vrot.lane.b32.xlu0 %v317, 4
      %v412 = vpop.permute.xlu0 %411
      %413 = vrot.lane.b32.xlu0 %v318, 4
      %v414 = vpop.permute.xlu0 %413
      %415 = vrot.lane.b32.xlu0 %v319, 4
      %v416 = vpop.permute.xlu0 %415
      %417 = vrot.lane.b32.xlu0 %v320, 4
      %v418 = vpop.permute.xlu0 %417
      %419 = vrot.lane.b32.xlu0 %v321, 4
      %v420 = vpop.permute.xlu0 %419
      %421 = vrot.lane.b32.xlu0 %v322, 4
      %v422 = vpop.permute.xlu0 %421
      %423 = vrot.lane.b32.xlu0 %v323, 4
      %v424 = vpop.permute.xlu0 %423
      %425 = vrot.lane.b32.xlu0 %v324, 4
      %v426 = vpop.permute.xlu0 %425
      %427 = vrot.lane.b32.xlu0 %v325, 4
      %v428 = vpop.permute.xlu0 %427
      %429 = vrot.lane.b32.xlu0 %v326, 4
      %v430 = vpop.permute.xlu0 %429
      %431 = vrot.lane.b32.xlu0 %v327, 4
      %v432 = vpop.permute.xlu0 %431
      %433 = vrot.lane.b32.xlu0 %v328, 4
      %v434 = vpop.permute.xlu0 %433
      %435 = vrot.lane.b32.xlu0 %v329, 4
      %v436 = vpop.permute.xlu0 %435
      %437 = vrot.lane.b32.xlu0 %v330, 4
      %v438 = vpop.permute.xlu0 %437
      %vm475 = vcmask 64544
      %476 = vst.msk [vmem:[#allocation6] sm:$0xff] %vm475, %v368
      %477 = vst.msk [vmem:[#allocation6 + $0x8] sm:$0xff] %vm475, %v370
      %478 = vst.msk [vmem:[#allocation6 + $0x10] sm:$0xff] %vm475, %v372
      %479 = vst.msk [vmem:[#allocation6 + $0x18] sm:$0xff] %vm475, %v374
      %480 = vst.msk [vmem:[#allocation6 + $0x20] sm:$0xff] %vm475, %v376
      %481 = vst.msk [vmem:[#allocation6 + $0x28] sm:$0xff] %vm475, %v378
      %482 = vst.msk [vmem:[#allocation6 + $0x30] sm:$0xff] %vm475, %v380
      %483 = vst.msk [vmem:[#allocation6 + $0x38] sm:$0xff] %vm475, %v382
      %484 = vst.msk [vmem:[#allocation6 + $0x40] sm:$0xff] %vm475, %v384
      %485 = vst.msk [vmem:[#allocation6 + $0x48] sm:$0xff] %vm475, %v386
      %486 = vst.msk [vmem:[#allocation6 + $0x50] sm:$0xff] %vm475, %v388
      %487 = vst.msk [vmem:[#allocation6 + $0x58] sm:$0xff] %vm475, %v390
      %488 = vst.msk [vmem:[#allocation6 + $0x60] sm:$0xff] %vm475, %v392
      %489 = vst.msk [vmem:[#allocation6 + $0x68] sm:$0xff] %vm475, %v394
      %490 = vst.msk [vmem:[#allocation6 + $0x70] sm:$0xff] %vm475, %v396
      %491 = vst.msk [vmem:[#allocation6 + $0x78] sm:$0xff] %vm475, %v398
      %492 = vst.msk [vmem:[#allocation6 + $0x80] sm:$0xff] %vm475, %v400
      %493 = vst.msk [vmem:[#allocation6 + $0x88] sm:$0xff] %vm475, %v402
      %494 = vst.msk [vmem:[#allocation6 + $0x90] sm:$0xff] %vm475, %v404
      %495 = vst.msk [vmem:[#allocation6 + $0x98] sm:$0xff] %vm475, %v406
      %496 = vst.msk [vmem:[#allocation6 + $0xa0] sm:$0xff] %vm475, %v408
      %497 = vst.msk [vmem:[#allocation6 + $0xa8] sm:$0xff] %vm475, %v410
      %498 = vst.msk [vmem:[#allocation6 + $0xb0] sm:$0xff] %vm475, %v412
      %499 = vst.msk [vmem:[#allocation6 + $0xb8] sm:$0xff] %vm475, %v414
      %500 = vst.msk [vmem:[#allocation6 + $0xc0] sm:$0xff] %vm475, %v416
      %501 = vst.msk [vmem:[#allocation6 + $0xc8] sm:$0xff] %vm475, %v418
      %502 = vst.msk [vmem:[#allocation6 + $0xd0] sm:$0xff] %vm475, %v420
      %503 = vst.msk [vmem:[#allocation6 + $0xd8] sm:$0xff] %vm475, %v422
      %504 = vst.msk [vmem:[#allocation6 + $0xe0] sm:$0xff] %vm475, %v424
      %505 = vst.msk [vmem:[#allocation6 + $0xe8] sm:$0xff] %vm475, %v426
      %506 = vst.msk [vmem:[#allocation6 + $0xf0] sm:$0xff] %vm475, %v428
      %507 = vst.msk [vmem:[#allocation6 + $0xf8] sm:$0xff] %vm475, %v430
      %508 = vst.msk [vmem:[#allocation6 + $0x100] sm:$0xff] %vm475, %v432
      %509 = vst.msk [vmem:[#allocation6 + $0x108] sm:$0xff] %vm475, %v434
      %510 = vst.msk [vmem:[#allocation6 + $0x110] sm:$0xff] %vm475, %v436
      %511 = vst.msk [vmem:[#allocation6 + $0x118] sm:$0xff] %vm475, %v438
      %v512 = vld [vmem:[%s191 + $0x2] sm:$0xff]
      %v513 = vld [vmem:[%s191 + $0xa] sm:$0xff]
      %v514 = vld [vmem:[%s191 + $0x12] sm:$0xff]
      %v515 = vld [vmem:[%s191 + $0x1a] sm:$0xff]
      %v516 = vld [vmem:[%s191 + $0x22] sm:$0xff]
      %v517 = vld [vmem:[%s191 + $0x2a] sm:$0xff]
      %v518 = vld [vmem:[%s191 + $0x32] sm:$0xff]
      %v519 = vld [vmem:[%s191 + $0x3a] sm:$0xff]
      %v520 = vld [vmem:[%s191 + $0x42] sm:$0xff]
      %v521 = vld [vmem:[%s191 + $0x4a] sm:$0xff]
      %v522 = vld [vmem:[%s191 + $0x52] sm:$0xff]
      %v523 = vld [vmem:[%s191 + $0x5a] sm:$0xff]
      %v524 = vld [vmem:[%s191 + $0x62] sm:$0xff]
      %v525 = vld [vmem:[%s191 + $0x6a] sm:$0xff]
      %v526 = vld [vmem:[%s191 + $0x72] sm:$0xff]
      %v527 = vld [vmem:[%s191 + $0x7a] sm:$0xff]
      %v528 = vld [vmem:[%s191 + $0x82] sm:$0xff]
      %v529 = vld [vmem:[%s191 + $0x8a] sm:$0xff]
      %v530 = vld [vmem:[%s191 + $0x92] sm:$0xff]
      %v531 = vld [vmem:[%s191 + $0x9a] sm:$0xff]
      %v532 = vld [vmem:[%s191 + $0xa2] sm:$0xff]
      %v533 = vld [vmem:[%s191 + $0xaa] sm:$0xff]
      %v534 = vld [vmem:[%s191 + $0xb2] sm:$0xff]
      %v535 = vld [vmem:[%s191 + $0xba] sm:$0xff]
      %v536 = vld [vmem:[%s191 + $0xc2] sm:$0xff]
      %v537 = vld [vmem:[%s191 + $0xca] sm:$0xff]
      %v538 = vld [vmem:[%s191 + $0xd2] sm:$0xff]
      %v539 = vld [vmem:[%s191 + $0xda] sm:$0xff]
      %v540 = vld [vmem:[%s191 + $0xe2] sm:$0xff]
      %v541 = vld [vmem:[%s191 + $0xea] sm:$0xff]
      %v542 = vld [vmem:[%s191 + $0xf2] sm:$0xff]
      %v543 = vld [vmem:[%s191 + $0xfa] sm:$0xff]
      %v544 = vld [vmem:[%s191 + $0x102] sm:$0xff]
      %v545 = vld [vmem:[%s191 + $0x10a] sm:$0xff]
      %v546 = vld [vmem:[%s191 + $0x112] sm:$0xff]
      %v547 = vld [vmem:[%s191 + $0x11a] sm:$0xff]
      %584 = vrot.lane.b32.xlu0 %v512, 8
      %v585 = vpop.permute.xlu0 %584
      %586 = vrot.lane.b32.xlu0 %v513, 8
      %v587 = vpop.permute.xlu0 %586
      %588 = vrot.lane.b32.xlu0 %v514, 8
      %v589 = vpop.permute.xlu0 %588
      %590 = vrot.lane.b32.xlu0 %v515, 8
      %v591 = vpop.permute.xlu0 %590
      %592 = vrot.lane.b32.xlu0 %v516, 8
      %v593 = vpop.permute.xlu0 %592
      %594 = vrot.lane.b32.xlu0 %v517, 8
      %v595 = vpop.permute.xlu0 %594
      %596 = vrot.lane.b32.xlu0 %v518, 8
      %v597 = vpop.permute.xlu0 %596
      %598 = vrot.lane.b32.xlu0 %v519, 8
      %v599 = vpop.permute.xlu0 %598
      %600 = vrot.lane.b32.xlu0 %v520, 8
      %v601 = vpop.permute.xlu0 %600
      %602 = vrot.lane.b32.xlu0 %v521, 8
      %v603 = vpop.permute.xlu0 %602
      %604 = vrot.lane.b32.xlu0 %v522, 8
      %v605 = vpop.permute.xlu0 %604
      %606 = vrot.lane.b32.xlu0 %v523, 8
      %v607 = vpop.permute.xlu0 %606
      %608 = vrot.lane.b32.xlu0 %v524, 8
      %v609 = vpop.permute.xlu0 %608
      %610 = vrot.lane.b32.xlu0 %v525, 8
      %v611 = vpop.permute.xlu0 %610
      %612 = vrot.lane.b32.xlu0 %v526, 8
      %v613 = vpop.permute.xlu0 %612
      %614 = vrot.lane.b32.xlu0 %v527, 8
      %v615 = vpop.permute.xlu0 %614
      %616 = vrot.lane.b32.xlu0 %v528, 8
      %v617 = vpop.permute.xlu0 %616
      %618 = vrot.lane.b32.xlu0 %v529, 8
      %v619 = vpop.permute.xlu0 %618
      %620 = vrot.lane.b32.xlu0 %v530, 8
      %v621 = vpop.permute.xlu0 %620
      %622 = vrot.lane.b32.xlu0 %v531, 8
      %v623 = vpop.permute.xlu0 %622
      %624 = vrot.lane.b32.xlu0 %v532, 8
      %v625 = vpop.permute.xlu0 %624
      %626 = vrot.lane.b32.xlu0 %v533, 8
      %v627 = vpop.permute.xlu0 %626
      %628 = vrot.lane.b32.xlu0 %v534, 8
      %v629 = vpop.permute.xlu0 %628
      %630 = vrot.lane.b32.xlu0 %v535, 8
      %v631 = vpop.permute.xlu0 %630
      %632 = vrot.lane.b32.xlu0 %v536, 8
      %v633 = vpop.permute.xlu0 %632
      %634 = vrot.lane.b32.xlu0 %v537, 8
      %v635 = vpop.permute.xlu0 %634
      %636 = vrot.lane.b32.xlu0 %v538, 8
      %v637 = vpop.permute.xlu0 %636
      %638 = vrot.lane.b32.xlu0 %v539, 8
      %v639 = vpop.permute.xlu0 %638
      %640 = vrot.lane.b32.xlu0 %v540, 8
      %v641 = vpop.permute.xlu0 %640
      %642 = vrot.lane.b32.xlu0 %v541, 8
      %v643 = vpop.permute.xlu0 %642
      %644 = vrot.lane.b32.xlu0 %v542, 8
      %v645 = vpop.permute.xlu0 %644
      %646 = vrot.lane.b32.xlu0 %v543, 8
      %v647 = vpop.permute.xlu0 %646
      %648 = vrot.lane.b32.xlu0 %v544, 8
      %v649 = vpop.permute.xlu0 %648
      %650 = vrot.lane.b32.xlu0 %v545, 8
      %v651 = vpop.permute.xlu0 %650
      %652 = vrot.lane.b32.xlu0 %v546, 8
      %v653 = vpop.permute.xlu0 %652
      %654 = vrot.lane.b32.xlu0 %v547, 8
      %v655 = vpop.permute.xlu0 %654
      %vm692 = vcmask 97344
      %693 = vst.msk [vmem:[#allocation6] sm:$0xff] %vm692, %v585
      %694 = vst.msk [vmem:[#allocation6 + $0x8] sm:$0xff] %vm692, %v587
      %695 = vst.msk [vmem:[#allocation6 + $0x10] sm:$0xff] %vm692, %v589
      %696 = vst.msk [vmem:[#allocation6 + $0x18] sm:$0xff] %vm692, %v591
      %697 = vst.msk [vmem:[#allocation6 + $0x20] sm:$0xff] %vm692, %v593
      %698 = vst.msk [vmem:[#allocation6 + $0x28] sm:$0xff] %vm692, %v595
      %699 = vst.msk [vmem:[#allocation6 + $0x30] sm:$0xff] %vm692, %v597
      %700 = vst.msk [vmem:[#allocation6 + $0x38] sm:$0xff] %vm692, %v599
      %701 = vst.msk [vmem:[#allocation6 + $0x40] sm:$0xff] %vm692, %v601
      %702 = vst.msk [vmem:[#allocation6 + $0x48] sm:$0xff] %vm692, %v603
      %703 = vst.msk [vmem:[#allocation6 + $0x50] sm:$0xff] %vm692, %v605
      %704 = vst.msk [vmem:[#allocation6 + $0x58] sm:$0xff] %vm692, %v607
      %705 = vst.msk [vmem:[#allocation6 + $0x60] sm:$0xff] %vm692, %v609
      %706 = vst.msk [vmem:[#allocation6 + $0x68] sm:$0xff] %vm692, %v611
      %707 = vst.msk [vmem:[#allocation6 + $0x70] sm:$0xff] %vm692, %v613
      %708 = vst.msk [vmem:[#allocation6 + $0x78] sm:$0xff] %vm692, %v615
      %709 = vst.msk [vmem:[#allocation6 + $0x80] sm:$0xff] %vm692, %v617
      %710 = vst.msk [vmem:[#allocation6 + $0x88] sm:$0xff] %vm692, %v619
      %711 = vst.msk [vmem:[#allocation6 + $0x90] sm:$0xff] %vm692, %v621
      %712 = vst.msk [vmem:[#allocation6 + $0x98] sm:$0xff] %vm692, %v623
      %713 = vst.msk [vmem:[#allocation6 + $0xa0] sm:$0xff] %vm692, %v625
      %714 = vst.msk [vmem:[#allocation6 + $0xa8] sm:$0xff] %vm692, %v627
      %715 = vst.msk [vmem:[#allocation6 + $0xb0] sm:$0xff] %vm692, %v629
      %716 = vst.msk [vmem:[#allocation6 + $0xb8] sm:$0xff] %vm692, %v631
      %717 = vst.msk [vmem:[#allocation6 + $0xc0] sm:$0xff] %vm692, %v633
      %718 = vst.msk [vmem:[#allocation6 + $0xc8] sm:$0xff] %vm692, %v635
      %719 = vst.msk [vmem:[#allocation6 + $0xd0] sm:$0xff] %vm692, %v637
      %720 = vst.msk [vmem:[#allocation6 + $0xd8] sm:$0xff] %vm692, %v639
      %721 = vst.msk [vmem:[#allocation6 + $0xe0] sm:$0xff] %vm692, %v641
      %722 = vst.msk [vmem:[#allocation6 + $0xe8] sm:$0xff] %vm692, %v643
      %723 = vst.msk [vmem:[#allocation6 + $0xf0] sm:$0xff] %vm692, %v645
      %724 = vst.msk [vmem:[#allocation6 + $0xf8] sm:$0xff] %vm692, %v647
      %725 = vst.msk [vmem:[#allocation6 + $0x100] sm:$0xff] %vm692, %v649
      %726 = vst.msk [vmem:[#allocation6 + $0x108] sm:$0xff] %vm692, %v651
      %727 = vst.msk [vmem:[#allocation6 + $0x110] sm:$0xff] %vm692, %v653
      %728 = vst.msk [vmem:[#allocation6 + $0x118] sm:$0xff] %vm692, %v655
      %v729 = vld [vmem:[%s191 + $0x12] sm:$0xff]
      %v730 = vld [vmem:[%s191 + $0x1a] sm:$0xff]
      %v731 = vld [vmem:[%s191 + $0x22] sm:$0xff]
      %v732 = vld [vmem:[%s191 + $0x2a] sm:$0xff]
      %v733 = vld [vmem:[%s191 + $0x32] sm:$0xff]
      %v734 = vld [vmem:[%s191 + $0x3a] sm:$0xff]
      %v735 = vld [vmem:[%s191 + $0x42] sm:$0xff]
      %v736 = vld [vmem:[%s191 + $0x4a] sm:$0xff]
      %v737 = vld [vmem:[%s191 + $0x52] sm:$0xff]
      %v738 = vld [vmem:[%s191 + $0x5a] sm:$0xff]
      %v739 = vld [vmem:[%s191 + $0x62] sm:$0xff]
      %v740 = vld [vmem:[%s191 + $0x6a] sm:$0xff]
      %v741 = vld [vmem:[%s191 + $0x72] sm:$0xff]
      %v742 = vld [vmem:[%s191 + $0x7a] sm:$0xff]
      %v743 = vld [vmem:[%s191 + $0x82] sm:$0xff]
      %v744 = vld [vmem:[%s191 + $0x8a] sm:$0xff]
      %v745 = vld [vmem:[%s191 + $0x92] sm:$0xff]
      %v746 = vld [vmem:[%s191 + $0x9a] sm:$0xff]
      %v747 = vld [vmem:[%s191 + $0xa2] sm:$0xff]
      %v748 = vld [vmem:[%s191 + $0xaa] sm:$0xff]
      %v749 = vld [vmem:[%s191 + $0xb2] sm:$0xff]
      %v750 = vld [vmem:[%s191 + $0xba] sm:$0xff]
      %v751 = vld [vmem:[%s191 + $0xc2] sm:$0xff]
      %v752 = vld [vmem:[%s191 + $0xca] sm:$0xff]
      %v753 = vld [vmem:[%s191 + $0xd2] sm:$0xff]
      %v754 = vld [vmem:[%s191 + $0xda] sm:$0xff]
      %v755 = vld [vmem:[%s191 + $0xe2] sm:$0xff]
      %v756 = vld [vmem:[%s191 + $0xea] sm:$0xff]
      %v757 = vld [vmem:[%s191 + $0xf2] sm:$0xff]
      %v758 = vld [vmem:[%s191 + $0xfa] sm:$0xff]
      %v759 = vld [vmem:[%s191 + $0x102] sm:$0xff]
      %v760 = vld [vmem:[%s191 + $0x10a] sm:$0xff]
      %v761 = vld [vmem:[%s191 + $0x112] sm:$0xff]
      %v762 = vld [vmem:[%s191 + $0x11a] sm:$0xff]
      %v763 = vld [vmem:[%s191 + $0x122] sm:$0xff]
      %v764 = vld [vmem:[%s191 + $0x12a] sm:$0xff]
      %801 = vrot.lane.b32.xlu0 %v729, 12
      %v802 = vpop.permute.xlu0 %801
      %803 = vrot.lane.b32.xlu0 %v730, 12
      %v804 = vpop.permute.xlu0 %803
      %805 = vrot.lane.b32.xlu0 %v731, 12
      %v806 = vpop.permute.xlu0 %805
      %807 = vrot.lane.b32.xlu0 %v732, 12
      %v808 = vpop.permute.xlu0 %807
      %809 = vrot.lane.b32.xlu0 %v733, 12
      %v810 = vpop.permute.xlu0 %809
      %811 = vrot.lane.b32.xlu0 %v734, 12
      %v812 = vpop.permute.xlu0 %811
      %813 = vrot.lane.b32.xlu0 %v735, 12
      %v814 = vpop.permute.xlu0 %813
      %815 = vrot.lane.b32.xlu0 %v736, 12
      %v816 = vpop.permute.xlu0 %815
      %817 = vrot.lane.b32.xlu0 %v737, 12
      %v818 = vpop.permute.xlu0 %817
      %819 = vrot.lane.b32.xlu0 %v738, 12
      %v820 = vpop.permute.xlu0 %819
      %821 = vrot.lane.b32.xlu0 %v739, 12
      %v822 = vpop.permute.xlu0 %821
      %823 = vrot.lane.b32.xlu0 %v740, 12
      %v824 = vpop.permute.xlu0 %823
      %825 = vrot.lane.b32.xlu0 %v741, 12
      %v826 = vpop.permute.xlu0 %825
      %827 = vrot.lane.b32.xlu0 %v742, 12
      %v828 = vpop.permute.xlu0 %827
      %829 = vrot.lane.b32.xlu0 %v743, 12
      %v830 = vpop.permute.xlu0 %829
      %831 = vrot.lane.b32.xlu0 %v744, 12
      %v832 = vpop.permute.xlu0 %831
      %833 = vrot.lane.b32.xlu0 %v745, 12
      %v834 = vpop.permute.xlu0 %833
      %835 = vrot.lane.b32.xlu0 %v746, 12
      %v836 = vpop.permute.xlu0 %835
      %837 = vrot.lane.b32.xlu0 %v747, 12
      %v838 = vpop.permute.xlu0 %837
      %839 = vrot.lane.b32.xlu0 %v748, 12
      %v840 = vpop.permute.xlu0 %839
      %841 = vrot.lane.b32.xlu0 %v749, 12
      %v842 = vpop.permute.xlu0 %841
      %843 = vrot.lane.b32.xlu0 %v750, 12
      %v844 = vpop.permute.xlu0 %843
      %845 = vrot.lane.b32.xlu0 %v751, 12
      %v846 = vpop.permute.xlu0 %845
      %847 = vrot.lane.b32.xlu0 %v752, 12
      %v848 = vpop.permute.xlu0 %847
      %849 = vrot.lane.b32.xlu0 %v753, 12
      %v850 = vpop.permute.xlu0 %849
      %851 = vrot.lane.b32.xlu0 %v754, 12
      %v852 = vpop.permute.xlu0 %851
      %853 = vrot.lane.b32.xlu0 %v755, 12
      %v854 = vpop.permute.xlu0 %853
      %855 = vrot.lane.b32.xlu0 %v756, 12
      %v856 = vpop.permute.xlu0 %855
      %857 = vrot.lane.b32.xlu0 %v757, 12
      %v858 = vpop.permute.xlu0 %857
      %859 = vrot.lane.b32.xlu0 %v758, 12
      %v860 = vpop.permute.xlu0 %859
      %861 = vrot.lane.b32.xlu0 %v759, 12
      %v862 = vpop.permute.xlu0 %861
      %863 = vrot.lane.b32.xlu0 %v760, 12
      %v864 = vpop.permute.xlu0 %863
      %865 = vrot.lane.b32.xlu0 %v761, 12
      %v866 = vpop.permute.xlu0 %865
      %867 = vrot.lane.b32.xlu0 %v762, 12
      %v868 = vpop.permute.xlu0 %867
      %869 = vrot.lane.b32.xlu0 %v763, 12
      %v870 = vpop.permute.xlu0 %869
      %871 = vrot.lane.b32.xlu0 %v764, 12
      %v872 = vpop.permute.xlu0 %871
      %vm909 = vcmask 130144
      %910 = vst.msk [vmem:[#allocation6] sm:$0xff] %vm909, %v802
      %911 = vst.msk [vmem:[#allocation6 + $0x8] sm:$0xff] %vm909, %v804
      %912 = vst.msk [vmem:[#allocation6 + $0x10] sm:$0xff] %vm909, %v806
      %913 = vst.msk [vmem:[#allocation6 + $0x18] sm:$0xff] %vm909, %v808
      %914 = vst.msk [vmem:[#allocation6 + $0x20] sm:$0xff] %vm909, %v810
      %915 = vst.msk [vmem:[#allocation6 + $0x28] sm:$0xff] %vm909, %v812
      %916 = vst.msk [vmem:[#allocation6 + $0x30] sm:$0xff] %vm909, %v814
      %917 = vst.msk [vmem:[#allocation6 + $0x38] sm:$0xff] %vm909, %v816
      %918 = vst.msk [vmem:[#allocation6 + $0x40] sm:$0xff] %vm909, %v818
      %919 = vst.msk [vmem:[#allocation6 + $0x48] sm:$0xff] %vm909, %v820
      %920 = vst.msk [vmem:[#allocation6 + $0x50] sm:$0xff] %vm909, %v822
      %921 = vst.msk [vmem:[#allocation6 + $0x58] sm:$0xff] %vm909, %v824
      %922 = vst.msk [vmem:[#allocation6 + $0x60] sm:$0xff] %vm909, %v826
      %923 = vst.msk [vmem:[#allocation6 + $0x68] sm:$0xff] %vm909, %v828
      %924 = vst.msk [vmem:[#allocation6 + $0x70] sm:$0xff] %vm909, %v830
      %925 = vst.msk [vmem:[#allocation6 + $0x78] sm:$0xff] %vm909, %v832
      %926 = vst.msk [vmem:[#allocation6 + $0x80] sm:$0xff] %vm909, %v834
      %927 = vst.msk [vmem:[#allocation6 + $0x88] sm:$0xff] %vm909, %v836
      %928 = vst.msk [vmem:[#allocation6 + $0x90] sm:$0xff] %vm909, %v838
      %929 = vst.msk [vmem:[#allocation6 + $0x98] sm:$0xff] %vm909, %v840
      %930 = vst.msk [vmem:[#allocation6 + $0xa0] sm:$0xff] %vm909, %v842
      %931 = vst.msk [vmem:[#allocation6 + $0xa8] sm:$0xff] %vm909, %v844
      %932 = vst.msk [vmem:[#allocation6 + $0xb0] sm:$0xff] %vm909, %v846
      %933 = vst.msk [vmem:[#allocation6 + $0xb8] sm:$0xff] %vm909, %v848
      %934 = vst.msk [vmem:[#allocation6 + $0xc0] sm:$0xff] %vm909, %v850
      %935 = vst.msk [vmem:[#allocation6 + $0xc8] sm:$0xff] %vm909, %v852
      %936 = vst.msk [vmem:[#allocation6 + $0xd0] sm:$0xff] %vm909, %v854
      %937 = vst.msk [vmem:[#allocation6 + $0xd8] sm:$0xff] %vm909, %v856
      %938 = vst.msk [vmem:[#allocation6 + $0xe0] sm:$0xff] %vm909, %v858
      %939 = vst.msk [vmem:[#allocation6 + $0xe8] sm:$0xff] %vm909, %v860
      %940 = vst.msk [vmem:[#allocation6 + $0xf0] sm:$0xff] %vm909, %v862
      %941 = vst.msk [vmem:[#allocation6 + $0xf8] sm:$0xff] %vm909, %v864
      %942 = vst.msk [vmem:[#allocation6 + $0x100] sm:$0xff] %vm909, %v866
      %943 = vst.msk [vmem:[#allocation6 + $0x108] sm:$0xff] %vm909, %v868
      %944 = vst.msk [vmem:[#allocation6 + $0x110] sm:$0xff] %vm909, %v870
      %945 = vst.msk [vmem:[#allocation6 + $0x118] sm:$0xff] %vm909, %v872
      %v946 = vld [vmem:[%s191 + $0x13] sm:$0xff]
      %v947 = vld [vmem:[%s191 + $0x1b] sm:$0xff]
      %v948 = vld [vmem:[%s191 + $0x23] sm:$0xff]
      %v949 = vld [vmem:[%s191 + $0x2b] sm:$0xff]
      %v950 = vld [vmem:[%s191 + $0x33] sm:$0xff]
      %v951 = vld [vmem:[%s191 + $0x3b] sm:$0xff]
      %v952 = vld [vmem:[%s191 + $0x43] sm:$0xff]
      %v953 = vld [vmem:[%s191 + $0x4b] sm:$0xff]
      %v954 = vld [vmem:[%s191 + $0x53] sm:$0xff]
      %v955 = vld [vmem:[%s191 + $0x5b] sm:$0xff]
      %v956 = vld [vmem:[%s191 + $0x63] sm:$0xff]
      %v957 = vld [vmem:[%s191 + $0x6b] sm:$0xff]
      %v958 = vld [vmem:[%s191 + $0x73] sm:$0xff]
      %v959 = vld [vmem:[%s191 + $0x7b] sm:$0xff]
      %v960 = vld [vmem:[%s191 + $0x83] sm:$0xff]
      %v961 = vld [vmem:[%s191 + $0x8b] sm:$0xff]
      %v962 = vld [vmem:[%s191 + $0x93] sm:$0xff]
      %v963 = vld [vmem:[%s191 + $0x9b] sm:$0xff]
      %v964 = vld [vmem:[%s191 + $0xa3] sm:$0xff]
      %v965 = vld [vmem:[%s191 + $0xab] sm:$0xff]
      %v966 = vld [vmem:[%s191 + $0xb3] sm:$0xff]
      %v967 = vld [vmem:[%s191 + $0xbb] sm:$0xff]
      %v968 = vld [vmem:[%s191 + $0xc3] sm:$0xff]
      %v969 = vld [vmem:[%s191 + $0xcb] sm:$0xff]
      %v970 = vld [vmem:[%s191 + $0xd3] sm:$0xff]
      %v971 = vld [vmem:[%s191 + $0xdb] sm:$0xff]
      %v972 = vld [vmem:[%s191 + $0xe3] sm:$0xff]
      %v973 = vld [vmem:[%s191 + $0xeb] sm:$0xff]
      %v974 = vld [vmem:[%s191 + $0xf3] sm:$0xff]
      %v975 = vld [vmem:[%s191 + $0xfb] sm:$0xff]
      %v976 = vld [vmem:[%s191 + $0x103] sm:$0xff]
      %v977 = vld [vmem:[%s191 + $0x10b] sm:$0xff]
      %v978 = vld [vmem:[%s191 + $0x113] sm:$0xff]
      %v979 = vld [vmem:[%s191 + $0x11b] sm:$0xff]
      %v980 = vld [vmem:[%s191 + $0x123] sm:$0xff]
      %v981 = vld [vmem:[%s191 + $0x12b] sm:$0xff]
      %1018 = vrot.lane.b32.xlu0 %v946, 16
      %v1019 = vpop.permute.xlu0 %1018
      %1020 = vrot.lane.b32.xlu0 %v947, 16
      %v1021 = vpop.permute.xlu0 %1020
      %1022 = vrot.lane.b32.xlu0 %v948, 16
      %v1023 = vpop.permute.xlu0 %1022
      %1024 = vrot.lane.b32.xlu0 %v949, 16
      %v1025 = vpop.permute.xlu0 %1024
      %1026 = vrot.lane.b32.xlu0 %v950, 16
      %v1027 = vpop.permute.xlu0 %1026
      %1028 = vrot.lane.b32.xlu0 %v951, 16
      %v1029 = vpop.permute.xlu0 %1028
      %1030 = vrot.lane.b32.xlu0 %v952, 16
      %v1031 = vpop.permute.xlu0 %1030
      %1032 = vrot.lane.b32.xlu0 %v953, 16
      %v1033 = vpop.permute.xlu0 %1032
      %1034 = vrot.lane.b32.xlu0 %v954, 16
      %v1035 = vpop.permute.xlu0 %1034
      %1036 = vrot.lane.b32.xlu0 %v955, 16
      %v1037 = vpop.permute.xlu0 %1036
      %1038 = vrot.lane.b32.xlu0 %v956, 16
      %v1039 = vpop.permute.xlu0 %1038
      %1040 = vrot.lane.b32.xlu0 %v957, 16
      %v1041 = vpop.permute.xlu0 %1040
      %1042 = vrot.lane.b32.xlu0 %v958, 16
      %v1043 = vpop.permute.xlu0 %1042
      %1044 = vrot.lane.b32.xlu0 %v959, 16
      %v1045 = vpop.permute.xlu0 %1044
      %1046 = vrot.lane.b32.xlu0 %v960, 16
      %v1047 = vpop.permute.xlu0 %1046
      %1048 = vrot.lane.b32.xlu0 %v961, 16
      %v1049 = vpop.permute.xlu0 %1048
      %1050 = vrot.lane.b32.xlu0 %v962, 16
      %v1051 = vpop.permute.xlu0 %1050
      %1052 = vrot.lane.b32.xlu0 %v963, 16
      %v1053 = vpop.permute.xlu0 %1052
      %1054 = vrot.lane.b32.xlu0 %v964, 16
      %v1055 = vpop.permute.xlu0 %1054
      %1056 = vrot.lane.b32.xlu0 %v965, 16
      %v1057 = vpop.permute.xlu0 %1056
      %1058 = vrot.lane.b32.xlu0 %v966, 16
      %v1059 = vpop.permute.xlu0 %1058
      %1060 = vrot.lane.b32.xlu0 %v967, 16
      %v1061 = vpop.permute.xlu0 %1060
      %1062 = vrot.lane.b32.xlu0 %v968, 16
      %v1063 = vpop.permute.xlu0 %1062
      %1064 = vrot.lane.b32.xlu0 %v969, 16
      %v1065 = vpop.permute.xlu0 %1064
      %1066 = vrot.lane.b32.xlu0 %v970, 16
      %v1067 = vpop.permute.xlu0 %1066
      %1068 = vrot.lane.b32.xlu0 %v971, 16
      %v1069 = vpop.permute.xlu0 %1068
      %1070 = vrot.lane.b32.xlu0 %v972, 16
      %v1071 = vpop.permute.xlu0 %1070
      %1072 = vrot.lane.b32.xlu0 %v973, 16
      %v1073 = vpop.permute.xlu0 %1072
      %1074 = vrot.lane.b32.xlu0 %v974, 16
      %v1075 = vpop.permute.xlu0 %1074
      %1076 = vrot.lane.b32.xlu0 %v975, 16
      %v1077 = vpop.permute.xlu0 %1076
      %1078 = vrot.lane.b32.xlu0 %v976, 16
      %v1079 = vpop.permute.xlu0 %1078
      %1080 = vrot.lane.b32.xlu0 %v977, 16
      %v1081 = vpop.permute.xlu0 %1080
      %1082 = vrot.lane.b32.xlu0 %v978, 16
      %v1083 = vpop.permute.xlu0 %1082
      %1084 = vrot.lane.b32.xlu0 %v979, 16
      %v1085 = vpop.permute.xlu0 %1084
      %1086 = vrot.lane.b32.xlu0 %v980, 16
      %v1087 = vpop.permute.xlu0 %1086
      %1088 = vrot.lane.b32.xlu0 %v981, 16
      %v1089 = vpop.permute.xlu0 %1088
      %vm1126 = vcmask 162944
      %1127 = vst.msk [vmem:[#allocation6] sm:$0xff] %vm1126, %v1019
      %1128 = vst.msk [vmem:[#allocation6 + $0x8] sm:$0xff] %vm1126, %v1021
      %1129 = vst.msk [vmem:[#allocation6 + $0x10] sm:$0xff] %vm1126, %v1023
      %1130 = vst.msk [vmem:[#allocation6 + $0x18] sm:$0xff] %vm1126, %v1025
      %1131 = vst.msk [vmem:[#allocation6 + $0x20] sm:$0xff] %vm1126, %v1027
      %1132 = vst.msk [vmem:[#allocation6 + $0x28] sm:$0xff] %vm1126, %v1029
      %1133 = vst.msk [vmem:[#allocation6 + $0x30] sm:$0xff] %vm1126, %v1031
      %1134 = vst.msk [vmem:[#allocation6 + $0x38] sm:$0xff] %vm1126, %v1033
      %1135 = vst.msk [vmem:[#allocation6 + $0x40] sm:$0xff] %vm1126, %v1035
      %1136 = vst.msk [vmem:[#allocation6 + $0x48] sm:$0xff] %vm1126, %v1037
      %1137 = vst.msk [vmem:[#allocation6 + $0x50] sm:$0xff] %vm1126, %v1039
      %1138 = vst.msk [vmem:[#allocation6 + $0x58] sm:$0xff] %vm1126, %v1041
      %1139 = vst.msk [vmem:[#allocation6 + $0x60] sm:$0xff] %vm1126, %v1043
      %1140 = vst.msk [vmem:[#allocation6 + $0x68] sm:$0xff] %vm1126, %v1045
      %1141 = vst.msk [vmem:[#allocation6 + $0x70] sm:$0xff] %vm1126, %v1047
      %1142 = vst.msk [vmem:[#allocation6 + $0x78] sm:$0xff] %vm1126, %v1049
      %1143 = vst.msk [vmem:[#allocation6 + $0x80] sm:$0xff] %vm1126, %v1051
      %1144 = vst.msk [vmem:[#allocation6 + $0x88] sm:$0xff] %vm1126, %v1053
      %1145 = vst.msk [vmem:[#allocation6 + $0x90] sm:$0xff] %vm1126, %v1055
      %1146 = vst.msk [vmem:[#allocation6 + $0x98] sm:$0xff] %vm1126, %v1057
      %1147 = vst.msk [vmem:[#allocation6 + $0xa0] sm:$0xff] %vm1126, %v1059
      %1148 = vst.msk [vmem:[#allocation6 + $0xa8] sm:$0xff] %vm1126, %v1061
      %1149 = vst.msk [vmem:[#allocation6 + $0xb0] sm:$0xff] %vm1126, %v1063
      %1150 = vst.msk [vmem:[#allocation6 + $0xb8] sm:$0xff] %vm1126, %v1065
      %1151 = vst.msk [vmem:[#allocation6 + $0xc0] sm:$0xff] %vm1126, %v1067
      %1152 = vst.msk [vmem:[#allocation6 + $0xc8] sm:$0xff] %vm1126, %v1069
      %1153 = vst.msk [vmem:[#allocation6 + $0xd0] sm:$0xff] %vm1126, %v1071
      %1154 = vst.msk [vmem:[#allocation6 + $0xd8] sm:$0xff] %vm1126, %v1073
      %1155 = vst.msk [vmem:[#allocation6 + $0xe0] sm:$0xff] %vm1126, %v1075
      %1156 = vst.msk [vmem:[#allocation6 + $0xe8] sm:$0xff] %vm1126, %v1077
      %1157 = vst.msk [vmem:[#allocation6 + $0xf0] sm:$0xff] %vm1126, %v1079
      %1158 = vst.msk [vmem:[#allocation6 + $0xf8] sm:$0xff] %vm1126, %v1081
      %1159 = vst.msk [vmem:[#allocation6 + $0x100] sm:$0xff] %vm1126, %v1083
      %1160 = vst.msk [vmem:[#allocation6 + $0x108] sm:$0xff] %vm1126, %v1085
      %1161 = vst.msk [vmem:[#allocation6 + $0x110] sm:$0xff] %vm1126, %v1087
      %1162 = vst.msk [vmem:[#allocation6 + $0x118] sm:$0xff] %vm1126, %v1089
      %v1163 = vld [vmem:[%s191 + $0x14] sm:$0xff]
      %v1164 = vld [vmem:[%s191 + $0x1c] sm:$0xff]
      %v1165 = vld [vmem:[%s191 + $0x24] sm:$0xff]
      %v1166 = vld [vmem:[%s191 + $0x2c] sm:$0xff]
      %v1167 = vld [vmem:[%s191 + $0x34] sm:$0xff]
      %v1168 = vld [vmem:[%s191 + $0x3c] sm:$0xff]
      %v1169 = vld [vmem:[%s191 + $0x44] sm:$0xff]
      %v1170 = vld [vmem:[%s191 + $0x4c] sm:$0xff]
      %v1171 = vld [vmem:[%s191 + $0x54] sm:$0xff]
      %v1172 = vld [vmem:[%s191 + $0x5c] sm:$0xff]
      %v1173 = vld [vmem:[%s191 + $0x64] sm:$0xff]
      %v1174 = vld [vmem:[%s191 + $0x6c] sm:$0xff]
      %v1175 = vld [vmem:[%s191 + $0x74] sm:$0xff]
      %v1176 = vld [vmem:[%s191 + $0x7c] sm:$0xff]
      %v1177 = vld [vmem:[%s191 + $0x84] sm:$0xff]
      %v1178 = vld [vmem:[%s191 + $0x8c] sm:$0xff]
      %v1179 = vld [vmem:[%s191 + $0x94] sm:$0xff]
      %v1180 = vld [vmem:[%s191 + $0x9c] sm:$0xff]
      %v1181 = vld [vmem:[%s191 + $0xa4] sm:$0xff]
      %v1182 = vld [vmem:[%s191 + $0xac] sm:$0xff]
      %v1183 = vld [vmem:[%s191 + $0xb4] sm:$0xff]
      %v1184 = vld [vmem:[%s191 + $0xbc] sm:$0xff]
      %v1185 = vld [vmem:[%s191 + $0xc4] sm:$0xff]
      %v1186 = vld [vmem:[%s191 + $0xcc] sm:$0xff]
      %v1187 = vld [vmem:[%s191 + $0xd4] sm:$0xff]
      %v1188 = vld [vmem:[%s191 + $0xdc] sm:$0xff]
      %v1189 = vld [vmem:[%s191 + $0xe4] sm:$0xff]
      %v1190 = vld [vmem:[%s191 + $0xec] sm:$0xff]
      %v1191 = vld [vmem:[%s191 + $0xf4] sm:$0xff]
      %v1192 = vld [vmem:[%s191 + $0xfc] sm:$0xff]
      %v1193 = vld [vmem:[%s191 + $0x104] sm:$0xff]
      %v1194 = vld [vmem:[%s191 + $0x10c] sm:$0xff]
      %v1195 = vld [vmem:[%s191 + $0x114] sm:$0xff]
      %v1196 = vld [vmem:[%s191 + $0x11c] sm:$0xff]
      %v1197 = vld [vmem:[%s191 + $0x124] sm:$0xff]
      %v1198 = vld [vmem:[%s191 + $0x12c] sm:$0xff]
      %1235 = vrot.lane.b32.xlu0 %v1163, 20
      %v1236 = vpop.permute.xlu0 %1235
      %1237 = vrot.lane.b32.xlu0 %v1164, 20
      %v1238 = vpop.permute.xlu0 %1237
      %1239 = vrot.lane.b32.xlu0 %v1165, 20
      %v1240 = vpop.permute.xlu0 %1239
      %1241 = vrot.lane.b32.xlu0 %v1166, 20
      %v1242 = vpop.permute.xlu0 %1241
      %1243 = vrot.lane.b32.xlu0 %v1167, 20
      %v1244 = vpop.permute.xlu0 %1243
      %1245 = vrot.lane.b32.xlu0 %v1168, 20
      %v1246 = vpop.permute.xlu0 %1245
      %1247 = vrot.lane.b32.xlu0 %v1169, 20
      %v1248 = vpop.permute.xlu0 %1247
      %1249 = vrot.lane.b32.xlu0 %v1170, 20
      %v1250 = vpop.permute.xlu0 %1249
      %1251 = vrot.lane.b32.xlu0 %v1171, 20
      %v1252 = vpop.permute.xlu0 %1251
      %1253 = vrot.lane.b32.xlu0 %v1172, 20
      %v1254 = vpop.permute.xlu0 %1253
      %1255 = vrot.lane.b32.xlu0 %v1173, 20
      %v1256 = vpop.permute.xlu0 %1255
      %1257 = vrot.lane.b32.xlu0 %v1174, 20
      %v1258 = vpop.permute.xlu0 %1257
      %1259 = vrot.lane.b32.xlu0 %v1175, 20
      %v1260 = vpop.permute.xlu0 %1259
      %1261 = vrot.lane.b32.xlu0 %v1176, 20
      %v1262 = vpop.permute.xlu0 %1261
      %1263 = vrot.lane.b32.xlu0 %v1177, 20
      %v1264 = vpop.permute.xlu0 %1263
      %1265 = vrot.lane.b32.xlu0 %v1178, 20
      %v1266 = vpop.permute.xlu0 %1265
      %1267 = vrot.lane.b32.xlu0 %v1179, 20
      %v1268 = vpop.permute.xlu0 %1267
      %1269 = vrot.lane.b32.xlu0 %v1180, 20
      %v1270 = vpop.permute.xlu0 %1269
      %1271 = vrot.lane.b32.xlu0 %v1181, 20
      %v1272 = vpop.permute.xlu0 %1271
      %1273 = vrot.lane.b32.xlu0 %v1182, 20
      %v1274 = vpop.permute.xlu0 %1273
      %1275 = vrot.lane.b32.xlu0 %v1183, 20
      %v1276 = vpop.permute.xlu0 %1275
      %1277 = vrot.lane.b32.xlu0 %v1184, 20
      %v1278 = vpop.permute.xlu0 %1277
      %1279 = vrot.lane.b32.xlu0 %v1185, 20
      %v1280 = vpop.permute.xlu0 %1279
      %1281 = vrot.lane.b32.xlu0 %v1186, 20
      %v1282 = vpop.permute.xlu0 %1281
      %1283 = vrot.lane.b32.xlu0 %v1187, 20
      %v1284 = vpop.permute.xlu0 %1283
      %1285 = vrot.lane.b32.xlu0 %v1188, 20
      %v1286 = vpop.permute.xlu0 %1285
      %1287 = vrot.lane.b32.xlu0 %v1189, 20
      %v1288 = vpop.permute.xlu0 %1287
      %1289 = vrot.lane.b32.xlu0 %v1190, 20
      %v1290 = vpop.permute.xlu0 %1289
      %1291 = vrot.lane.b32.xlu0 %v1191, 20
      %v1292 = vpop.permute.xlu0 %1291
      %1293 = vrot.lane.b32.xlu0 %v1192, 20
      %v1294 = vpop.permute.xlu0 %1293
      %1295 = vrot.lane.b32.xlu0 %v1193, 20
      %v1296 = vpop.permute.xlu0 %1295
      %1297 = vrot.lane.b32.xlu0 %v1194, 20
      %v1298 = vpop.permute.xlu0 %1297
      %1299 = vrot.lane.b32.xlu0 %v1195, 20
      %v1300 = vpop.permute.xlu0 %1299
      %1301 = vrot.lane.b32.xlu0 %v1196, 20
      %v1302 = vpop.permute.xlu0 %1301
      %1303 = vrot.lane.b32.xlu0 %v1197, 20
      %v1304 = vpop.permute.xlu0 %1303
      %1305 = vrot.lane.b32.xlu0 %v1198, 20
      %v1306 = vpop.permute.xlu0 %1305
      %vm1343 = vcmask 195744
      %1344 = vst.msk [vmem:[#allocation6] sm:$0xff] %vm1343, %v1236
      %1345 = vst.msk [vmem:[#allocation6 + $0x8] sm:$0xff] %vm1343, %v1238
      %1346 = vst.msk [vmem:[#allocation6 + $0x10] sm:$0xff] %vm1343, %v1240
      %1347 = vst.msk [vmem:[#allocation6 + $0x18] sm:$0xff] %vm1343, %v1242
      %1348 = vst.msk [vmem:[#allocation6 + $0x20] sm:$0xff] %vm1343, %v1244
      %1349 = vst.msk [vmem:[#allocation6 + $0x28] sm:$0xff] %vm1343, %v1246
      %1350 = vst.msk [vmem:[#allocation6 + $0x30] sm:$0xff] %vm1343, %v1248
      %1351 = vst.msk [vmem:[#allocation6 + $0x38] sm:$0xff] %vm1343, %v1250
      %1352 = vst.msk [vmem:[#allocation6 + $0x40] sm:$0xff] %vm1343, %v1252
      %1353 = vst.msk [vmem:[#allocation6 + $0x48] sm:$0xff] %vm1343, %v1254
      %1354 = vst.msk [vmem:[#allocation6 + $0x50] sm:$0xff] %vm1343, %v1256
      %1355 = vst.msk [vmem:[#allocation6 + $0x58] sm:$0xff] %vm1343, %v1258
      %1356 = vst.msk [vmem:[#allocation6 + $0x60] sm:$0xff] %vm1343, %v1260
      %1357 = vst.msk [vmem:[#allocation6 + $0x68] sm:$0xff] %vm1343, %v1262
      %1358 = vst.msk [vmem:[#allocation6 + $0x70] sm:$0xff] %vm1343, %v1264
      %1359 = vst.msk [vmem:[#allocation6 + $0x78] sm:$0xff] %vm1343, %v1266
      %1360 = vst.msk [vmem:[#allocation6 + $0x80] sm:$0xff] %vm1343, %v1268
      %1361 = vst.msk [vmem:[#allocation6 + $0x88] sm:$0xff] %vm1343, %v1270
      %1362 = vst.msk [vmem:[#allocation6 + $0x90] sm:$0xff] %vm1343, %v1272
      %1363 = vst.msk [vmem:[#allocation6 + $0x98] sm:$0xff] %vm1343, %v1274
      %1364 = vst.msk [vmem:[#allocation6 + $0xa0] sm:$0xff] %vm1343, %v1276
      %1365 = vst.msk [vmem:[#allocation6 + $0xa8] sm:$0xff] %vm1343, %v1278
      %1366 = vst.msk [vmem:[#allocation6 + $0xb0] sm:$0xff] %vm1343, %v1280
      %1367 = vst.msk [vmem:[#allocation6 + $0xb8] sm:$0xff] %vm1343, %v1282
      %1368 = vst.msk [vmem:[#allocation6 + $0xc0] sm:$0xff] %vm1343, %v1284
      %1369 = vst.msk [vmem:[#allocation6 + $0xc8] sm:$0xff] %vm1343, %v1286
      %1370 = vst.msk [vmem:[#allocation6 + $0xd0] sm:$0xff] %vm1343, %v1288
      %1371 = vst.msk [vmem:[#allocation6 + $0xd8] sm:$0xff] %vm1343, %v1290
      %1372 = vst.msk [vmem:[#allocation6 + $0xe0] sm:$0xff] %vm1343, %v1292
      %1373 = vst.msk [vmem:[#allocation6 + $0xe8] sm:$0xff] %vm1343, %v1294
      %1374 = vst.msk [vmem:[#allocation6 + $0xf0] sm:$0xff] %vm1343, %v1296
      %1375 = vst.msk [vmem:[#allocation6 + $0xf8] sm:$0xff] %vm1343, %v1298
      %1376 = vst.msk [vmem:[#allocation6 + $0x100] sm:$0xff] %vm1343, %v1300
      %1377 = vst.msk [vmem:[#allocation6 + $0x108] sm:$0xff] %vm1343, %v1302
      %1378 = vst.msk [vmem:[#allocation6 + $0x110] sm:$0xff] %vm1343, %v1304
      %1379 = vst.msk [vmem:[#allocation6 + $0x118] sm:$0xff] %vm1343, %v1306
      %v1380 = vld [vmem:[%s191 + $0x24] sm:$0xff]
      %v1381 = vld [vmem:[%s191 + $0x2c] sm:$0xff]
      %v1382 = vld [vmem:[%s191 + $0x34] sm:$0xff]
      %v1383 = vld [vmem:[%s191 + $0x3c] sm:$0xff]
      %v1384 = vld [vmem:[%s191 + $0x44] sm:$0xff]
      %v1385 = vld [vmem:[%s191 + $0x4c] sm:$0xff]
      %v1386 = vld [vmem:[%s191 + $0x54] sm:$0xff]
      %v1387 = vld [vmem:[%s191 + $0x5c] sm:$0xff]
      %v1388 = vld [vmem:[%s191 + $0x64] sm:$0xff]
      %v1389 = vld [vmem:[%s191 + $0x6c] sm:$0xff]
      %v1390 = vld [vmem:[%s191 + $0x74] sm:$0xff]
      %v1391 = vld [vmem:[%s191 + $0x7c] sm:$0xff]
      %v1392 = vld [vmem:[%s191 + $0x84] sm:$0xff]
      %v1393 = vld [vmem:[%s191 + $0x8c] sm:$0xff]
      %v1394 = vld [vmem:[%s191 + $0x94] sm:$0xff]
      %v1395 = vld [vmem:[%s191 + $0x9c] sm:$0xff]
      %v1396 = vld [vmem:[%s191 + $0xa4] sm:$0xff]
      %v1397 = vld [vmem:[%s191 + $0xac] sm:$0xff]
      %v1398 = vld [vmem:[%s191 + $0xb4] sm:$0xff]
      %v1399 = vld [vmem:[%s191 + $0xbc] sm:$0xff]
      %v1400 = vld [vmem:[%s191 + $0xc4] sm:$0xff]
      %v1401 = vld [vmem:[%s191 + $0xcc] sm:$0xff]
      %v1402 = vld [vmem:[%s191 + $0xd4] sm:$0xff]
      %v1403 = vld [vmem:[%s191 + $0xdc] sm:$0xff]
      %v1404 = vld [vmem:[%s191 + $0xe4] sm:$0xff]
      %v1405 = vld [vmem:[%s191 + $0xec] sm:$0xff]
      %v1406 = vld [vmem:[%s191 + $0xf4] sm:$0xff]
      %v1407 = vld [vmem:[%s191 + $0xfc] sm:$0xff]
      %v1408 = vld [vmem:[%s191 + $0x104] sm:$0xff]
      %v1409 = vld [vmem:[%s191 + $0x10c] sm:$0xff]
      %v1410 = vld [vmem:[%s191 + $0x114] sm:$0xff]
      %v1411 = vld [vmem:[%s191 + $0x11c] sm:$0xff]
      %v1412 = vld [vmem:[%s191 + $0x124] sm:$0xff]
      %v1413 = vld [vmem:[%s191 + $0x12c] sm:$0xff]
      %v1414 = vld [vmem:[%s191 + $0x134] sm:$0xff]
      %v1415 = vld [vmem:[%s191 + $0x13c] sm:$0xff]
      %1452 = vrot.lane.b32.xlu0 %v1380, 24
      %v1453 = vpop.permute.xlu0 %1452
      %1454 = vrot.lane.b32.xlu0 %v1381, 24
      %v1455 = vpop.permute.xlu0 %1454
      %1456 = vrot.lane.b32.xlu0 %v1382, 24
      %v1457 = vpop.permute.xlu0 %1456
      %1458 = vrot.lane.b32.xlu0 %v1383, 24
      %v1459 = vpop.permute.xlu0 %1458
      %1460 = vrot.lane.b32.xlu0 %v1384, 24
      %v1461 = vpop.permute.xlu0 %1460
      %1462 = vrot.lane.b32.xlu0 %v1385, 24
      %v1463 = vpop.permute.xlu0 %1462
      %1464 = vrot.lane.b32.xlu0 %v1386, 24
      %v1465 = vpop.permute.xlu0 %1464
      %1466 = vrot.lane.b32.xlu0 %v1387, 24
      %v1467 = vpop.permute.xlu0 %1466
      %1468 = vrot.lane.b32.xlu0 %v1388, 24
      %v1469 = vpop.permute.xlu0 %1468
      %1470 = vrot.lane.b32.xlu0 %v1389, 24
      %v1471 = vpop.permute.xlu0 %1470
      %1472 = vrot.lane.b32.xlu0 %v1390, 24
      %v1473 = vpop.permute.xlu0 %1472
      %1474 = vrot.lane.b32.xlu0 %v1391, 24
      %v1475 = vpop.permute.xlu0 %1474
      %1476 = vrot.lane.b32.xlu0 %v1392, 24
      %v1477 = vpop.permute.xlu0 %1476
      %1478 = vrot.lane.b32.xlu0 %v1393, 24
      %v1479 = vpop.permute.xlu0 %1478
      %1480 = vrot.lane.b32.xlu0 %v1394, 24
      %v1481 = vpop.permute.xlu0 %1480
      %1482 = vrot.lane.b32.xlu0 %v1395, 24
      %v1483 = vpop.permute.xlu0 %1482
      %1484 = vrot.lane.b32.xlu0 %v1396, 24
      %v1485 = vpop.permute.xlu0 %1484
      %1486 = vrot.lane.b32.xlu0 %v1397, 24
      %v1487 = vpop.permute.xlu0 %1486
      %1488 = vrot.lane.b32.xlu0 %v1398, 24
      %v1489 = vpop.permute.xlu0 %1488
      %1490 = vrot.lane.b32.xlu0 %v1399, 24
      %v1491 = vpop.permute.xlu0 %1490
      %1492 = vrot.lane.b32.xlu0 %v1400, 24
      %v1493 = vpop.permute.xlu0 %1492
      %1494 = vrot.lane.b32.xlu0 %v1401, 24
      %v1495 = vpop.permute.xlu0 %1494
      %1496 = vrot.lane.b32.xlu0 %v1402, 24
      %v1497 = vpop.permute.xlu0 %1496
      %1498 = vrot.lane.b32.xlu0 %v1403, 24
      %v1499 = vpop.permute.xlu0 %1498
      %1500 = vrot.lane.b32.xlu0 %v1404, 24
      %v1501 = vpop.permute.xlu0 %1500
      %1502 = vrot.lane.b32.xlu0 %v1405, 24
      %v1503 = vpop.permute.xlu0 %1502
      %1504 = vrot.lane.b32.xlu0 %v1406, 24
      %v1505 = vpop.permute.xlu0 %1504
      %1506 = vrot.lane.b32.xlu0 %v1407, 24
      %v1507 = vpop.permute.xlu0 %1506
      %1508 = vrot.lane.b32.xlu0 %v1408, 24
      %v1509 = vpop.permute.xlu0 %1508
      %1510 = vrot.lane.b32.xlu0 %v1409, 24
      %v1511 = vpop.permute.xlu0 %1510
      %1512 = vrot.lane.b32.xlu0 %v1410, 24
      %v1513 = vpop.permute.xlu0 %1512
      %1514 = vrot.lane.b32.xlu0 %v1411, 24
      %v1515 = vpop.permute.xlu0 %1514
      %1516 = vrot.lane.b32.xlu0 %v1412, 24
      %v1517 = vpop.permute.xlu0 %1516
      %1518 = vrot.lane.b32.xlu0 %v1413, 24
      %v1519 = vpop.permute.xlu0 %1518
      %1520 = vrot.lane.b32.xlu0 %v1414, 24
      %v1521 = vpop.permute.xlu0 %1520
      %1522 = vrot.lane.b32.xlu0 %v1415, 24
      %v1523 = vpop.permute.xlu0 %1522
      %vm1560 = vcmask 228544
      %1561 = vst.msk [vmem:[#allocation6] sm:$0xff] %vm1560, %v1453
      %1562 = vst.msk [vmem:[#allocation6 + $0x8] sm:$0xff] %vm1560, %v1455
      %1563 = vst.msk [vmem:[#allocation6 + $0x10] sm:$0xff] %vm1560, %v1457
      %1564 = vst.msk [vmem:[#allocation6 + $0x18] sm:$0xff] %vm1560, %v1459
      %1565 = vst.msk [vmem:[#allocation6 + $0x20] sm:$0xff] %vm1560, %v1461
      %1566 = vst.msk [vmem:[#allocation6 + $0x28] sm:$0xff] %vm1560, %v1463
      %1567 = vst.msk [vmem:[#allocation6 + $0x30] sm:$0xff] %vm1560, %v1465
      %1568 = vst.msk [vmem:[#allocation6 + $0x38] sm:$0xff] %vm1560, %v1467
      %1569 = vst.msk [vmem:[#allocation6 + $0x40] sm:$0xff] %vm1560, %v1469
      %1570 = vst.msk [vmem:[#allocation6 + $0x48] sm:$0xff] %vm1560, %v1471
      %1571 = vst.msk [vmem:[#allocation6 + $0x50] sm:$0xff] %vm1560, %v1473
      %1572 = vst.msk [vmem:[#allocation6 + $0x58] sm:$0xff] %vm1560, %v1475
      %1573 = vst.msk [vmem:[#allocation6 + $0x60] sm:$0xff] %vm1560, %v1477
      %1574 = vst.msk [vmem:[#allocation6 + $0x68] sm:$0xff] %vm1560, %v1479
      %1575 = vst.msk [vmem:[#allocation6 + $0x70] sm:$0xff] %vm1560, %v1481
      %1576 = vst.msk [vmem:[#allocation6 + $0x78] sm:$0xff] %vm1560, %v1483
      %1577 = vst.msk [vmem:[#allocation6 + $0x80] sm:$0xff] %vm1560, %v1485
      %1578 = vst.msk [vmem:[#allocation6 + $0x88] sm:$0xff] %vm1560, %v1487
      %1579 = vst.msk [vmem:[#allocation6 + $0x90] sm:$0xff] %vm1560, %v1489
      %1580 = vst.msk [vmem:[#allocation6 + $0x98] sm:$0xff] %vm1560, %v1491
      %1581 = vst.msk [vmem:[#allocation6 + $0xa0] sm:$0xff] %vm1560, %v1493
      %1582 = vst.msk [vmem:[#allocation6 + $0xa8] sm:$0xff] %vm1560, %v1495
      %1583 = vst.msk [vmem:[#allocation6 + $0xb0] sm:$0xff] %vm1560, %v1497
      %1584 = vst.msk [vmem:[#allocation6 + $0xb8] sm:$0xff] %vm1560, %v1499
      %1585 = vst.msk [vmem:[#allocation6 + $0xc0] sm:$0xff] %vm1560, %v1501
      %1586 = vst.msk [vmem:[#allocation6 + $0xc8] sm:$0xff] %vm1560, %v1503
      %1587 = vst.msk [vmem:[#allocation6 + $0xd0] sm:$0xff] %vm1560, %v1505
      %1588 = vst.msk [vmem:[#allocation6 + $0xd8] sm:$0xff] %vm1560, %v1507
      %1589 = vst.msk [vmem:[#allocation6 + $0xe0] sm:$0xff] %vm1560, %v1509
      %1590 = vst.msk [vmem:[#allocation6 + $0xe8] sm:$0xff] %vm1560, %v1511
      %1591 = vst.msk [vmem:[#allocation6 + $0xf0] sm:$0xff] %vm1560, %v1513
      %1592 = vst.msk [vmem:[#allocation6 + $0xf8] sm:$0xff] %vm1560, %v1515
      %1593 = vst.msk [vmem:[#allocation6 + $0x100] sm:$0xff] %vm1560, %v1517
      %1594 = vst.msk [vmem:[#allocation6 + $0x108] sm:$0xff] %vm1560, %v1519
      %1595 = vst.msk [vmem:[#allocation6 + $0x110] sm:$0xff] %vm1560, %v1521
      %1596 = vst.msk [vmem:[#allocation6 + $0x118] sm:$0xff] %vm1560, %v1523
      %v1597 = vld [vmem:[%s191 + $0x25] sm:$0xff]
      %v1598 = vld [vmem:[%s191 + $0x2d] sm:$0xff]
      %v1599 = vld [vmem:[%s191 + $0x35] sm:$0xff]
      %v1600 = vld [vmem:[%s191 + $0x3d] sm:$0xff]
      %v1601 = vld [vmem:[%s191 + $0x45] sm:$0xff]
      %v1602 = vld [vmem:[%s191 + $0x4d] sm:$0xff]
      %v1603 = vld [vmem:[%s191 + $0x55] sm:$0xff]
      %v1604 = vld [vmem:[%s191 + $0x5d] sm:$0xff]
      %v1605 = vld [vmem:[%s191 + $0x65] sm:$0xff]
      %v1606 = vld [vmem:[%s191 + $0x6d] sm:$0xff]
      %v1607 = vld [vmem:[%s191 + $0x75] sm:$0xff]
      %v1608 = vld [vmem:[%s191 + $0x7d] sm:$0xff]
      %v1609 = vld [vmem:[%s191 + $0x85] sm:$0xff]
      %v1610 = vld [vmem:[%s191 + $0x8d] sm:$0xff]
      %v1611 = vld [vmem:[%s191 + $0x95] sm:$0xff]
      %v1612 = vld [vmem:[%s191 + $0x9d] sm:$0xff]
      %v1613 = vld [vmem:[%s191 + $0xa5] sm:$0xff]
      %v1614 = vld [vmem:[%s191 + $0xad] sm:$0xff]
      %v1615 = vld [vmem:[%s191 + $0xb5] sm:$0xff]
      %v1616 = vld [vmem:[%s191 + $0xbd] sm:$0xff]
      %v1617 = vld [vmem:[%s191 + $0xc5] sm:$0xff]
      %v1618 = vld [vmem:[%s191 + $0xcd] sm:$0xff]
      %v1619 = vld [vmem:[%s191 + $0xd5] sm:$0xff]
      %v1620 = vld [vmem:[%s191 + $0xdd] sm:$0xff]
      %v1621 = vld [vmem:[%s191 + $0xe5] sm:$0xff]
      %v1622 = vld [vmem:[%s191 + $0xed] sm:$0xff]
      %v1623 = vld [vmem:[%s191 + $0xf5] sm:$0xff]
      %v1624 = vld [vmem:[%s191 + $0xfd] sm:$0xff]
      %v1625 = vld [vmem:[%s191 + $0x105] sm:$0xff]
      %v1626 = vld [vmem:[%s191 + $0x10d] sm:$0xff]
      %v1627 = vld [vmem:[%s191 + $0x115] sm:$0xff]
      %v1628 = vld [vmem:[%s191 + $0x11d] sm:$0xff]
      %v1629 = vld [vmem:[%s191 + $0x125] sm:$0xff]
      %v1630 = vld [vmem:[%s191 + $0x12d] sm:$0xff]
      %v1631 = vld [vmem:[%s191 + $0x135] sm:$0xff]
      %v1632 = vld [vmem:[%s191 + $0x13d] sm:$0xff]
      %1669 = vrot.lane.b32.xlu0 %v1597, 28
      %v1670 = vpop.permute.xlu0 %1669
      %1671 = vrot.lane.b32.xlu0 %v1598, 28
      %v1672 = vpop.permute.xlu0 %1671
      %1673 = vrot.lane.b32.xlu0 %v1599, 28
      %v1674 = vpop.permute.xlu0 %1673
      %1675 = vrot.lane.b32.xlu0 %v1600, 28
      %v1676 = vpop.permute.xlu0 %1675
      %1677 = vrot.lane.b32.xlu0 %v1601, 28
      %v1678 = vpop.permute.xlu0 %1677
      %1679 = vrot.lane.b32.xlu0 %v1602, 28
      %v1680 = vpop.permute.xlu0 %1679
      %1681 = vrot.lane.b32.xlu0 %v1603, 28
      %v1682 = vpop.permute.xlu0 %1681
      %1683 = vrot.lane.b32.xlu0 %v1604, 28
      %v1684 = vpop.permute.xlu0 %1683
      %1685 = vrot.lane.b32.xlu0 %v1605, 28
      %v1686 = vpop.permute.xlu0 %1685
      %1687 = vrot.lane.b32.xlu0 %v1606, 28
      %v1688 = vpop.permute.xlu0 %1687
      %1689 = vrot.lane.b32.xlu0 %v1607, 28
      %v1690 = vpop.permute.xlu0 %1689
      %1691 = vrot.lane.b32.xlu0 %v1608, 28
      %v1692 = vpop.permute.xlu0 %1691
      %1693 = vrot.lane.b32.xlu0 %v1609, 28
      %v1694 = vpop.permute.xlu0 %1693
      %1695 = vrot.lane.b32.xlu0 %v1610, 28
      %v1696 = vpop.permute.xlu0 %1695
      %1697 = vrot.lane.b32.xlu0 %v1611, 28
      %v1698 = vpop.permute.xlu0 %1697
      %1699 = vrot.lane.b32.xlu0 %v1612, 28
      %v1700 = vpop.permute.xlu0 %1699
      %1701 = vrot.lane.b32.xlu0 %v1613, 28
      %v1702 = vpop.permute.xlu0 %1701
      %1703 = vrot.lane.b32.xlu0 %v1614, 28
      %v1704 = vpop.permute.xlu0 %1703
      %1705 = vrot.lane.b32.xlu0 %v1615, 28
      %v1706 = vpop.permute.xlu0 %1705
      %1707 = vrot.lane.b32.xlu0 %v1616, 28
      %v1708 = vpop.permute.xlu0 %1707
      %1709 = vrot.lane.b32.xlu0 %v1617, 28
      %v1710 = vpop.permute.xlu0 %1709
      %1711 = vrot.lane.b32.xlu0 %v1618, 28
      %v1712 = vpop.permute.xlu0 %1711
      %1713 = vrot.lane.b32.xlu0 %v1619, 28
      %v1714 = vpop.permute.xlu0 %1713
      %1715 = vrot.lane.b32.xlu0 %v1620, 28
      %v1716 = vpop.permute.xlu0 %1715
      %1717 = vrot.lane.b32.xlu0 %v1621, 28
      %v1718 = vpop.permute.xlu0 %1717
      %1719 = vrot.lane.b32.xlu0 %v1622, 28
      %v1720 = vpop.permute.xlu0 %1719
      %1721 = vrot.lane.b32.xlu0 %v1623, 28
      %v1722 = vpop.permute.xlu0 %1721
      %1723 = vrot.lane.b32.xlu0 %v1624, 28
      %v1724 = vpop.permute.xlu0 %1723
      %1725 = vrot.lane.b32.xlu0 %v1625, 28
      %v1726 = vpop.permute.xlu0 %1725
      %1727 = vrot.lane.b32.xlu0 %v1626, 28
      %v1728 = vpop.permute.xlu0 %1727
      %1729 = vrot.lane.b32.xlu0 %v1627, 28
      %v1730 = vpop.permute.xlu0 %1729
      %1731 = vrot.lane.b32.xlu0 %v1628, 28
      %v1732 = vpop.permute.xlu0 %1731
      %1733 = vrot.lane.b32.xlu0 %v1629, 28
      %v1734 = vpop.permute.xlu0 %1733
      %1735 = vrot.lane.b32.xlu0 %v1630, 28
      %v1736 = vpop.permute.xlu0 %1735
      %1737 = vrot.lane.b32.xlu0 %v1631, 28
      %v1738 = vpop.permute.xlu0 %1737
      %1739 = vrot.lane.b32.xlu0 %v1632, 28
      %v1740 = vpop.permute.xlu0 %1739
      %vm1777 = vcmask 261344
      %1778 = vst.msk [vmem:[#allocation6] sm:$0xff] %vm1777, %v1670
      %1779 = vst.msk [vmem:[#allocation6 + $0x8] sm:$0xff] %vm1777, %v1672
      %1780 = vst.msk [vmem:[#allocation6 + $0x10] sm:$0xff] %vm1777, %v1674
      %1781 = vst.msk [vmem:[#allocation6 + $0x18] sm:$0xff] %vm1777, %v1676
      %1782 = vst.msk [vmem:[#allocation6 + $0x20] sm:$0xff] %vm1777, %v1678
      %1783 = vst.msk [vmem:[#allocation6 + $0x28] sm:$0xff] %vm1777, %v1680
      %1784 = vst.msk [vmem:[#allocation6 + $0x30] sm:$0xff] %vm1777, %v1682
      %1785 = vst.msk [vmem:[#allocation6 + $0x38] sm:$0xff] %vm1777, %v1684
      %1786 = vst.msk [vmem:[#allocation6 + $0x40] sm:$0xff] %vm1777, %v1686
      %1787 = vst.msk [vmem:[#allocation6 + $0x48] sm:$0xff] %vm1777, %v1688
      %1788 = vst.msk [vmem:[#allocation6 + $0x50] sm:$0xff] %vm1777, %v1690
      %1789 = vst.msk [vmem:[#allocation6 + $0x58] sm:$0xff] %vm1777, %v1692
      %1790 = vst.msk [vmem:[#allocation6 + $0x60] sm:$0xff] %vm1777, %v1694
      %1791 = vst.msk [vmem:[#allocation6 + $0x68] sm:$0xff] %vm1777, %v1696
      %1792 = vst.msk [vmem:[#allocation6 + $0x70] sm:$0xff] %vm1777, %v1698
      %1793 = vst.msk [vmem:[#allocation6 + $0x78] sm:$0xff] %vm1777, %v1700
      %1794 = vst.msk [vmem:[#allocation6 + $0x80] sm:$0xff] %vm1777, %v1702
      %1795 = vst.msk [vmem:[#allocation6 + $0x88] sm:$0xff] %vm1777, %v1704
      %1796 = vst.msk [vmem:[#allocation6 + $0x90] sm:$0xff] %vm1777, %v1706
      %1797 = vst.msk [vmem:[#allocation6 + $0x98] sm:$0xff] %vm1777, %v1708
      %1798 = vst.msk [vmem:[#allocation6 + $0xa0] sm:$0xff] %vm1777, %v1710
      %1799 = vst.msk [vmem:[#allocation6 + $0xa8] sm:$0xff] %vm1777, %v1712
      %1800 = vst.msk [vmem:[#allocation6 + $0xb0] sm:$0xff] %vm1777, %v1714
      %1801 = vst.msk [vmem:[#allocation6 + $0xb8] sm:$0xff] %vm1777, %v1716
      %1802 = vst.msk [vmem:[#allocation6 + $0xc0] sm:$0xff] %vm1777, %v1718
      %1803 = vst.msk [vmem:[#allocation6 + $0xc8] sm:$0xff] %vm1777, %v1720
      %1804 = vst.msk [vmem:[#allocation6 + $0xd0] sm:$0xff] %vm1777, %v1722
      %1805 = vst.msk [vmem:[#allocation6 + $0xd8] sm:$0xff] %vm1777, %v1724
      %1806 = vst.msk [vmem:[#allocation6 + $0xe0] sm:$0xff] %vm1777, %v1726
      %1807 = vst.msk [vmem:[#allocation6 + $0xe8] sm:$0xff] %vm1777, %v1728
      %1808 = vst.msk [vmem:[#allocation6 + $0xf0] sm:$0xff] %vm1777, %v1730
      %1809 = vst.msk [vmem:[#allocation6 + $0xf8] sm:$0xff] %vm1777, %v1732
      %1810 = vst.msk [vmem:[#allocation6 + $0x100] sm:$0xff] %vm1777, %v1734
      %1811 = vst.msk [vmem:[#allocation6 + $0x108] sm:$0xff] %vm1777, %v1736
      %1812 = vst.msk [vmem:[#allocation6 + $0x110] sm:$0xff] %vm1777, %v1738
      %1813 = vst.msk [vmem:[#allocation6 + $0x118] sm:$0xff] %vm1777, %v1740
      %v1814 = vld [vmem:[%s191 + $0x26] sm:$0xff]
      %v1815 = vld [vmem:[%s191 + $0x2e] sm:$0xff]
      %v1816 = vld [vmem:[%s191 + $0x36] sm:$0xff]
      %v1817 = vld [vmem:[%s191 + $0x3e] sm:$0xff]
      %v1818 = vld [vmem:[%s191 + $0x46] sm:$0xff]
      %v1819 = vld [vmem:[%s191 + $0x4e] sm:$0xff]
      %v1820 = vld [vmem:[%s191 + $0x56] sm:$0xff]
      %v1821 = vld [vmem:[%s191 + $0x5e] sm:$0xff]
      %v1822 = vld [vmem:[%s191 + $0x66] sm:$0xff]
      %v1823 = vld [vmem:[%s191 + $0x6e] sm:$0xff]
      %v1824 = vld [vmem:[%s191 + $0x76] sm:$0xff]
      %v1825 = vld [vmem:[%s191 + $0x7e] sm:$0xff]
      %v1826 = vld [vmem:[%s191 + $0x86] sm:$0xff]
      %v1827 = vld [vmem:[%s191 + $0x8e] sm:$0xff]
      %v1828 = vld [vmem:[%s191 + $0x96] sm:$0xff]
      %v1829 = vld [vmem:[%s191 + $0x9e] sm:$0xff]
      %v1830 = vld [vmem:[%s191 + $0xa6] sm:$0xff]
      %v1831 = vld [vmem:[%s191 + $0xae] sm:$0xff]
      %v1832 = vld [vmem:[%s191 + $0xb6] sm:$0xff]
      %v1833 = vld [vmem:[%s191 + $0xbe] sm:$0xff]
      %v1834 = vld [vmem:[%s191 + $0xc6] sm:$0xff]
      %v1835 = vld [vmem:[%s191 + $0xce] sm:$0xff]
      %v1836 = vld [vmem:[%s191 + $0xd6] sm:$0xff]
      %v1837 = vld [vmem:[%s191 + $0xde] sm:$0xff]
      %v1838 = vld [vmem:[%s191 + $0xe6] sm:$0xff]
      %v1839 = vld [vmem:[%s191 + $0xee] sm:$0xff]
      %v1840 = vld [vmem:[%s191 + $0xf6] sm:$0xff]
      %v1841 = vld [vmem:[%s191 + $0xfe] sm:$0xff]
      %v1842 = vld [vmem:[%s191 + $0x106] sm:$0xff]
      %v1843 = vld [vmem:[%s191 + $0x10e] sm:$0xff]
      %v1844 = vld [vmem:[%s191 + $0x116] sm:$0xff]
      %v1845 = vld [vmem:[%s191 + $0x11e] sm:$0xff]
      %v1846 = vld [vmem:[%s191 + $0x126] sm:$0xff]
      %v1847 = vld [vmem:[%s191 + $0x12e] sm:$0xff]
      %v1848 = vld [vmem:[%s191 + $0x136] sm:$0xff]
      %v1849 = vld [vmem:[%s191 + $0x13e] sm:$0xff]
      %1886 = vrot.lane.b32.xlu0 %v1814, 32
      %v1887 = vpop.permute.xlu0 %1886
      %1888 = vrot.lane.b32.xlu0 %v1815, 32
      %v1889 = vpop.permute.xlu0 %1888
      %1890 = vrot.lane.b32.xlu0 %v1816, 32
      %v1891 = vpop.permute.xlu0 %1890
      %1892 = vrot.lane.b32.xlu0 %v1817, 32
      %v1893 = vpop.permute.xlu0 %1892
      %1894 = vrot.lane.b32.xlu0 %v1818, 32
      %v1895 = vpop.permute.xlu0 %1894
      %1896 = vrot.lane.b32.xlu0 %v1819, 32
      %v1897 = vpop.permute.xlu0 %1896
      %1898 = vrot.lane.b32.xlu0 %v1820, 32
      %v1899 = vpop.permute.xlu0 %1898
      %1900 = vrot.lane.b32.xlu0 %v1821, 32
      %v1901 = vpop.permute.xlu0 %1900
      %1902 = vrot.lane.b32.xlu0 %v1822, 32
      %v1903 = vpop.permute.xlu0 %1902
      %1904 = vrot.lane.b32.xlu0 %v1823, 32
      %v1905 = vpop.permute.xlu0 %1904
      %1906 = vrot.lane.b32.xlu0 %v1824, 32
      %v1907 = vpop.permute.xlu0 %1906
      %1908 = vrot.lane.b32.xlu0 %v1825, 32
      %v1909 = vpop.permute.xlu0 %1908
      %1910 = vrot.lane.b32.xlu0 %v1826, 32
      %v1911 = vpop.permute.xlu0 %1910
      %1912 = vrot.lane.b32.xlu0 %v1827, 32
      %v1913 = vpop.permute.xlu0 %1912
      %1914 = vrot.lane.b32.xlu0 %v1828, 32
      %v1915 = vpop.permute.xlu0 %1914
      %1916 = vrot.lane.b32.xlu0 %v1829, 32
      %v1917 = vpop.permute.xlu0 %1916
      %1918 = vrot.lane.b32.xlu0 %v1830, 32
      %v1919 = vpop.permute.xlu0 %1918
      %1920 = vrot.lane.b32.xlu0 %v1831, 32
      %v1921 = vpop.permute.xlu0 %1920
      %1922 = vrot.lane.b32.xlu0 %v1832, 32
      %v1923 = vpop.permute.xlu0 %1922
      %1924 = vrot.lane.b32.xlu0 %v1833, 32
      %v1925 = vpop.permute.xlu0 %1924
      %1926 = vrot.lane.b32.xlu0 %v1834, 32
      %v1927 = vpop.permute.xlu0 %1926
      %1928 = vrot.lane.b32.xlu0 %v1835, 32
      %v1929 = vpop.permute.xlu0 %1928
      %1930 = vrot.lane.b32.xlu0 %v1836, 32
      %v1931 = vpop.permute.xlu0 %1930
      %1932 = vrot.lane.b32.xlu0 %v1837, 32
      %v1933 = vpop.permute.xlu0 %1932
      %1934 = vrot.lane.b32.xlu0 %v1838, 32
      %v1935 = vpop.permute.xlu0 %1934
      %1936 = vrot.lane.b32.xlu0 %v1839, 32
      %v1937 = vpop.permute.xlu0 %1936
      %1938 = vrot.lane.b32.xlu0 %v1840, 32
      %v1939 = vpop.permute.xlu0 %1938
      %1940 = vrot.lane.b32.xlu0 %v1841, 32
      %v1941 = vpop.permute.xlu0 %1940
      %1942 = vrot.lane.b32.xlu0 %v1842, 32
      %v1943 = vpop.permute.xlu0 %1942
      %1944 = vrot.lane.b32.xlu0 %v1843, 32
      %v1945 = vpop.permute.xlu0 %1944
      %1946 = vrot.lane.b32.xlu0 %v1844, 32
      %v1947 = vpop.permute.xlu0 %1946
      %1948 = vrot.lane.b32.xlu0 %v1845, 32
      %v1949 = vpop.permute.xlu0 %1948
      %1950 = vrot.lane.b32.xlu0 %v1846, 32
      %v1951 = vpop.permute.xlu0 %1950
      %1952 = vrot.lane.b32.xlu0 %v1847, 32
      %v1953 = vpop.permute.xlu0 %1952
      %1954 = vrot.lane.b32.xlu0 %v1848, 32
      %v1955 = vpop.permute.xlu0 %1954
      %1956 = vrot.lane.b32.xlu0 %v1849, 32
      %v1957 = vpop.permute.xlu0 %1956
      %vm1994 = vcmask 294144
      %1995 = vst.msk [vmem:[#allocation6] sm:$0xff] %vm1994, %v1887
      %1996 = vst.msk [vmem:[#allocation6 + $0x8] sm:$0xff] %vm1994, %v1889
      %1997 = vst.msk [vmem:[#allocation6 + $0x10] sm:$0xff] %vm1994, %v1891
      %1998 = vst.msk [vmem:[#allocation6 + $0x18] sm:$0xff] %vm1994, %v1893
      %1999 = vst.msk [vmem:[#allocation6 + $0x20] sm:$0xff] %vm1994, %v1895
      %2000 = vst.msk [vmem:[#allocation6 + $0x28] sm:$0xff] %vm1994, %v1897
      %2001 = vst.msk [vmem:[#allocation6 + $0x30] sm:$0xff] %vm1994, %v1899
      %2002 = vst.msk [vmem:[#allocation6 + $0x38] sm:$0xff] %vm1994, %v1901
      %2003 = vst.msk [vmem:[#allocation6 + $0x40] sm:$0xff] %vm1994, %v1903
      %2004 = vst.msk [vmem:[#allocation6 + $0x48] sm:$0xff] %vm1994, %v1905
      %2005 = vst.msk [vmem:[#allocation6 + $0x50] sm:$0xff] %vm1994, %v1907
      %2006 = vst.msk [vmem:[#allocation6 + $0x58] sm:$0xff] %vm1994, %v1909
      %2007 = vst.msk [vmem:[#allocation6 + $0x60] sm:$0xff] %vm1994, %v1911
      %2008 = vst.msk [vmem:[#allocation6 + $0x68] sm:$0xff] %vm1994, %v1913
      %2009 = vst.msk [vmem:[#allocation6 + $0x70] sm:$0xff] %vm1994, %v1915
      %2010 = vst.msk [vmem:[#allocation6 + $0x78] sm:$0xff] %vm1994, %v1917
      %2011 = vst.msk [vmem:[#allocation6 + $0x80] sm:$0xff] %vm1994, %v1919
      %2012 = vst.msk [vmem:[#allocation6 + $0x88] sm:$0xff] %vm1994, %v1921
      %2013 = vst.msk [vmem:[#allocation6 + $0x90] sm:$0xff] %vm1994, %v1923
      %2014 = vst.msk [vmem:[#allocation6 + $0x98] sm:$0xff] %vm1994, %v1925
      %2015 = vst.msk [vmem:[#allocation6 + $0xa0] sm:$0xff] %vm1994, %v1927
      %2016 = vst.msk [vmem:[#allocation6 + $0xa8] sm:$0xff] %vm1994, %v1929
      %2017 = vst.msk [vmem:[#allocation6 + $0xb0] sm:$0xff] %vm1994, %v1931
      %2018 = vst.msk [vmem:[#allocation6 + $0xb8] sm:$0xff] %vm1994, %v1933
      %2019 = vst.msk [vmem:[#allocation6 + $0xc0] sm:$0xff] %vm1994, %v1935
      %2020 = vst.msk [vmem:[#allocation6 + $0xc8] sm:$0xff] %vm1994, %v1937
      %2021 = vst.msk [vmem:[#allocation6 + $0xd0] sm:$0xff] %vm1994, %v1939
      %2022 = vst.msk [vmem:[#allocation6 + $0xd8] sm:$0xff] %vm1994, %v1941
      %2023 = vst.msk [vmem:[#allocation6 + $0xe0] sm:$0xff] %vm1994, %v1943
      %2024 = vst.msk [vmem:[#allocation6 + $0xe8] sm:$0xff] %vm1994, %v1945
      %2025 = vst.msk [vmem:[#allocation6 + $0xf0] sm:$0xff] %vm1994, %v1947
      %2026 = vst.msk [vmem:[#allocation6 + $0xf8] sm:$0xff] %vm1994, %v1949
      %2027 = vst.msk [vmem:[#allocation6 + $0x100] sm:$0xff] %vm1994, %v1951
      %2028 = vst.msk [vmem:[#allocation6 + $0x108] sm:$0xff] %vm1994, %v1953
      %2029 = vst.msk [vmem:[#allocation6 + $0x110] sm:$0xff] %vm1994, %v1955
      %2030 = vst.msk [vmem:[#allocation6 + $0x118] sm:$0xff] %vm1994, %v1957
      %v2031 = vld [vmem:[#allocation6] sm:$0xff]
      %v2032 = vld [vmem:[#allocation6 + $0x8] sm:$0xff]
      %v2033 = vld [vmem:[#allocation6 + $0x10] sm:$0xff]
      %v2034 = vld [vmem:[#allocation6 + $0x18] sm:$0xff]
      %v2035 = vld [vmem:[#allocation6 + $0x20] sm:$0xff]
      %v2036 = vld [vmem:[#allocation6 + $0x28] sm:$0xff]
      %v2037 = vld [vmem:[#allocation6 + $0x30] sm:$0xff]
      %v2038 = vld [vmem:[#allocation6 + $0x38] sm:$0xff]
      %v2039 = vld [vmem:[#allocation6 + $0x40] sm:$0xff]
      %v2040 = vld [vmem:[#allocation6 + $0x48] sm:$0xff]
      %v2041 = vld [vmem:[#allocation6 + $0x50] sm:$0xff]
      %v2042 = vld [vmem:[#allocation6 + $0x58] sm:$0xff]
      %v2043 = vld [vmem:[#allocation6 + $0x60] sm:$0xff]
      %v2044 = vld [vmem:[#allocation6 + $0x68] sm:$0xff]
      %v2045 = vld [vmem:[#allocation6 + $0x70] sm:$0xff]
      %v2046 = vld [vmem:[#allocation6 + $0x78] sm:$0xff]
      %v2047 = vld [vmem:[#allocation6 + $0x80] sm:$0xff]
      %v2048 = vld [vmem:[#allocation6 + $0x88] sm:$0xff]
      %v2049 = vld [vmem:[#allocation6 + $0x90] sm:$0xff]
      %v2050 = vld [vmem:[#allocation6 + $0x98] sm:$0xff]
      %v2051 = vld [vmem:[#allocation6 + $0xa0] sm:$0xff]
      %v2052 = vld [vmem:[#allocation6 + $0xa8] sm:$0xff]
      %v2053 = vld [vmem:[#allocation6 + $0xb0] sm:$0xff]
      %v2054 = vld [vmem:[#allocation6 + $0xb8] sm:$0xff]
      %v2055 = vld [vmem:[#allocation6 + $0xc0] sm:$0xff]
      %v2056 = vld [vmem:[#allocation6 + $0xc8] sm:$0xff]
      %v2057 = vld [vmem:[#allocation6 + $0xd0] sm:$0xff]
      %v2058 = vld [vmem:[#allocation6 + $0xd8] sm:$0xff]
      %v2059 = vld [vmem:[#allocation6 + $0xe0] sm:$0xff]
      %v2060 = vld [vmem:[#allocation6 + $0xe8] sm:$0xff]
      %v2061 = vld [vmem:[#allocation6 + $0xf0] sm:$0xff]
      %v2062 = vld [vmem:[#allocation6 + $0xf8] sm:$0xff]
      %v2063 = vld [vmem:[#allocation6 + $0x100] sm:$0xff]
      %v2064 = vld [vmem:[#allocation6 + $0x108] sm:$0xff]
      %v2065 = vld [vmem:[#allocation6 + $0x110] sm:$0xff]
      %v2066 = vld [vmem:[#allocation6 + $0x118] sm:$0xff]
      %v2067 = vpack.c.bf16 %v2032, %v2031
      %v2068 = vpack.c.bf16 %v2034, %v2033
      %v2069 = vpack.c.bf16 %v2036, %v2035
      %v2070 = vpack.c.bf16 %v2038, %v2037
      %v2071 = vpack.c.bf16 %v2040, %v2039
      %v2072 = vpack.c.bf16 %v2042, %v2041
      %v2073 = vpack.c.bf16 %v2044, %v2043
      %v2074 = vpack.c.bf16 %v2046, %v2045
      %v2075 = vpack.c.bf16 %v2048, %v2047
      %v2076 = vpack.c.bf16 %v2050, %v2049
      %v2077 = vpack.c.bf16 %v2052, %v2051
      %v2078 = vpack.c.bf16 %v2054, %v2053
      %v2079 = vpack.c.bf16 %v2056, %v2055
      %v2080 = vpack.c.bf16 %v2058, %v2057
      %v2081 = vpack.c.bf16 %v2060, %v2059
      %v2082 = vpack.c.bf16 %v2062, %v2061
      %v2083 = vpack.c.bf16 %v2064, %v2063
      %v2084 = vpack.c.bf16 %v2066, %v2065
      %v2085 = vld [vmem:[%s1] sm:$0xf]
      %v2086 = vld [vmem:[%s1 + $0x4] sm:$0xf]
      %v2087 = vld [vmem:[%s1 + $0x8] sm:$0xf]
      %v2088 = vld [vmem:[%s1 + $0xc] sm:$0xf]
      %v2089 = vld [vmem:[%s1 + $0x10] sm:$0x3]
      %v2095 = vunpack.c.l.b16 %v2085
      %v2096 = vunpack.c.l.b16 %v2086
      %v2097 = vunpack.c.l.b16 %v2087
      %v2098 = vunpack.c.l.b16 %v2088
      %v2099 = vunpack.c.l.b16 %v2089
      %v2100 = vpack.c.b16 %v2096, %v2095
      %v2101 = vpack.c.b16 %v2098, %v2097
      %v2102 = vpack.c.b16 %v2099, %v2099
      %vm2105 = vcmask 293888
      %v2107 = vsel %vm2105, %v2067, 0
      %v2110 = vsel %vm2105, %v2068, 0
      %v2113 = vsel %vm2105, %v2069, 0
      %v2116 = vsel %vm2105, %v2070, 0
      %v2119 = vsel %vm2105, %v2071, 0
      %v2122 = vsel %vm2105, %v2072, 0
      %v2125 = vsel %vm2105, %v2073, 0
      %v2128 = vsel %vm2105, %v2074, 0
      %v2131 = vsel %vm2105, %v2075, 0
      %v2134 = vsel %vm2105, %v2076, 0
      %v2137 = vsel %vm2105, %v2077, 0
      %v2140 = vsel %vm2105, %v2078, 0
      %v2143 = vsel %vm2105, %v2079, 0
      %v2146 = vsel %vm2105, %v2080, 0
      %v2149 = vsel %vm2105, %v2081, 0
      %v2152 = vsel %vm2105, %v2082, 0
      %v2155 = vsel %vm2105, %v2083, 0
      %v2158 = vsel %vm2105, %v2084, 0
      %vm2160 = vcmask 1041408
      %v2162 = vsel %vm2160, %v2102, 0
      %2164 = vmatprep.subr.bf16.mxu0 0
      %2165 = vmatpush1.bf16.msra.mxu0 %v2100
      %2166 = vmatprep.subr.bf16.mxu0 0
      %2167 = vmatpush1.bf16.msra.mxu0 %v2101
      %2168 = vmatprep.subr.bf16.mxu0 0
      %2169 = vmatpush1.bf16.msra.mxu0 %v2162
      %2170 = vmatprep.subr.bf16.mxu0 0
      %2171 = vmatpush1.bf16.msra.mxu0 0
      %2172 = vmatprep.subr.bf16.mxu0 0
      %2173 = vmatpush1.bf16.msra.mxu0 0
      %2174 = vmatprep.subr.bf16.mxu0 0
      %2175 = vmatpush1.bf16.msra.mxu0 0
      %2176 = vmatprep.subr.bf16.mxu0 0
      %2177 = vmatpush1.bf16.msra.mxu0 0
      %2178 = vmatprep.subr.bf16.mxu0 0
      %2179 = vmatpush1.bf16.msra.mxu0 0
      %2180 = vmatprep.subr.bf16.mxu0 0
      %2181 = vmatpush1.bf16.msra.mxu0 0
      %2182 = vmatprep.subr.bf16.mxu0 0
      %2183 = vmatpush1.bf16.msra.mxu0 0
      %2184 = vmatprep.subr.bf16.mxu0 0
      %2185 = vmatpush1.bf16.msra.mxu0 0
      %2186 = vmatprep.subr.bf16.mxu0 0
      %2187 = vmatpush1.bf16.msra.mxu0 0
      %2188 = vmatprep.subr.bf16.mxu0 0
      %2189 = vmatpush1.bf16.msra.mxu0 0
      %2190 = vmatprep.subr.bf16.mxu0 0
      %2191 = vmatpush1.bf16.msra.mxu0 0
      %2192 = vmatprep.subr.bf16.mxu0 0
      %2193 = vmatpush1.bf16.msra.mxu0 0
      %2194 = vmatprep.subr.bf16.mxu0 0
      %2195 = vmatpush1.bf16.msra.mxu0 0
      %2196 = vmatprep.mubr.bf16.mxu0 0
      %2197 = vmatmul.mubr.bf16.gmra.mrb[0].mxu0 %v2107
      %v2198 = vpop.f32.mrb[0].mxu0
      %v2199 = vadd.f32 0.0, %v2198
      %v2200 = vpop.f32.mrb[0].mxu0
      %v2201 = vpop.f32.mrb[0].mxu0
      %v2202 = vadd.f32 0.0, %v2201
      %v2203 = vpop.f32.mrb[0].mxu0
      %2204 = vmatprep.mubr.bf16.mxu0 0
      %2205 = vmatmul.mubr.bf16.gmra.mrb[0].mxu0 %v2110
      %v2206 = vpop.f32.mrb[0].mxu0
      %v2207 = vadd.f32 0.0, %v2206
      %v2208 = vpop.f32.mrb[0].mxu0
      %v2209 = vpop.f32.mrb[0].mxu0
      %v2210 = vadd.f32 0.0, %v2209
      %v2211 = vpop.f32.mrb[0].mxu0
      %2212 = vmatprep.mubr.bf16.mxu0 0
      %2213 = vmatmul.mubr.bf16.gmra.mrb[0].mxu0 %v2113
      %v2214 = vpop.f32.mrb[0].mxu0
      %v2215 = vadd.f32 0.0, %v2214
      %v2216 = vpop.f32.mrb[0].mxu0
      %v2217 = vpop.f32.mrb[0].mxu0
      %v2218 = vadd.f32 0.0, %v2217
      %v2219 = vpop.f32.mrb[0].mxu0
      %2220 = vmatprep.mubr.bf16.mxu0 0
      %2221 = vmatmul.mubr.bf16.gmra.mrb[0].mxu0 %v2116
      %v2222 = vpop.f32.mrb[0].mxu0
      %v2223 = vadd.f32 0.0, %v2222
      %v2224 = vpop.f32.mrb[0].mxu0
      %v2225 = vpop.f32.mrb[0].mxu0
      %v2226 = vadd.f32 0.0, %v2225
      %v2227 = vpop.f32.mrb[0].mxu0
      %2228 = vmatprep.mubr.bf16.mxu0 0
      %2229 = vmatmul.mubr.bf16.gmra.mrb[0].mxu0 %v2119
      %v2230 = vpop.f32.mrb[0].mxu0
      %v2231 = vadd.f32 0.0, %v2230
      %v2232 = vpop.f32.mrb[0].mxu0
      %v2233 = vpop.f32.mrb[0].mxu0
      %v2234 = vadd.f32 0.0, %v2233
      %v2235 = vpop.f32.mrb[0].mxu0
      %2236 = vmatprep.mubr.bf16.mxu0 0
      %2237 = vmatmul.mubr.bf16.gmra.mrb[0].mxu0 %v2122
      %v2238 = vpop.f32.mrb[0].mxu0
      %v2239 = vadd.f32 0.0, %v2238
      %v2240 = vpop.f32.mrb[0].mxu0
      %v2241 = vpop.f32.mrb[0].mxu0
      %v2242 = vadd.f32 0.0, %v2241
      %v2243 = vpop.f32.mrb[0].mxu0
      %2244 = vmatprep.mubr.bf16.mxu0 0
      %2245 = vmatmul.mubr.bf16.gmra.mrb[0].mxu0 %v2125
      %v2246 = vpop.f32.mrb[0].mxu0
      %v2247 = vadd.f32 0.0, %v2246
      %v2248 = vpop.f32.mrb[0].mxu0
      %v2249 = vpop.f32.mrb[0].mxu0
      %v2250 = vadd.f32 0.0, %v2249
      %v2251 = vpop.f32.mrb[0].mxu0
      %2252 = vmatprep.mubr.bf16.mxu0 0
      %2253 = vmatmul.mubr.bf16.gmra.mrb[0].mxu0 %v2128
      %v2254 = vpop.f32.mrb[0].mxu0
      %v2255 = vadd.f32 0.0, %v2254
      %v2256 = vpop.f32.mrb[0].mxu0
      %v2257 = vpop.f32.mrb[0].mxu0
      %v2258 = vadd.f32 0.0, %v2257
      %v2259 = vpop.f32.mrb[0].mxu0
      %2260 = vmatprep.mubr.bf16.mxu0 0
      %2261 = vmatmul.mubr.bf16.gmra.mrb[0].mxu0 %v2131
      %v2262 = vpop.f32.mrb[0].mxu0
      %v2263 = vadd.f32 0.0, %v2262
      %v2264 = vpop.f32.mrb[0].mxu0
      %v2265 = vpop.f32.mrb[0].mxu0
      %v2266 = vadd.f32 0.0, %v2265
      %v2267 = vpop.f32.mrb[0].mxu0
      %2268 = vmatprep.mubr.bf16.mxu0 0
      %2269 = vmatmul.mubr.bf16.gmra.mrb[0].mxu0 %v2134
      %v2270 = vpop.f32.mrb[0].mxu0
      %v2271 = vadd.f32 0.0, %v2270
      %v2272 = vpop.f32.mrb[0].mxu0
      %v2273 = vpop.f32.mrb[0].mxu0
      %v2274 = vadd.f32 0.0, %v2273
      %v2275 = vpop.f32.mrb[0].mxu0
      %2276 = vmatprep.mubr.bf16.mxu0 0
      %2277 = vmatmul.mubr.bf16.gmra.mrb[0].mxu0 %v2137
      %v2278 = vpop.f32.mrb[0].mxu0
      %v2279 = vadd.f32 0.0, %v2278
      %v2280 = vpop.f32.mrb[0].mxu0
      %v2281 = vpop.f32.mrb[0].mxu0
      %v2282 = vadd.f32 0.0, %v2281
      %v2283 = vpop.f32.mrb[0].mxu0
      %2284 = vmatprep.mubr.bf16.mxu0 0
      %2285 = vmatmul.mubr.bf16.gmra.mrb[0].mxu0 %v2140
      %v2286 = vpop.f32.mrb[0].mxu0
      %v2287 = vadd.f32 0.0, %v2286
      %v2288 = vpop.f32.mrb[0].mxu0
      %v2289 = vpop.f32.mrb[0].mxu0
      %v2290 = vadd.f32 0.0, %v2289
      %v2291 = vpop.f32.mrb[0].mxu0
      %2292 = vmatprep.mubr.bf16.mxu0 0
      %2293 = vmatmul.mubr.bf16.gmra.mrb[0].mxu0 %v2143
      %v2294 = vpop.f32.mrb[0].mxu0
      %v2295 = vadd.f32 0.0, %v2294
      %v2296 = vpop.f32.mrb[0].mxu0
      %v2297 = vpop.f32.mrb[0].mxu0
      %v2298 = vadd.f32 0.0, %v2297
      %v2299 = vpop.f32.mrb[0].mxu0
      %2300 = vmatprep.mubr.bf16.mxu0 0
      %2301 = vmatmul.mubr.bf16.gmra.mrb[0].mxu0 %v2146
      %v2302 = vpop.f32.mrb[0].mxu0
      %v2303 = vadd.f32 0.0, %v2302
      %v2304 = vpop.f32.mrb[0].mxu0
      %v2305 = vpop.f32.mrb[0].mxu0
      %v2306 = vadd.f32 0.0, %v2305
      %v2307 = vpop.f32.mrb[0].mxu0
      %2308 = vmatprep.mubr.bf16.mxu0 0
      %2309 = vmatmul.mubr.bf16.gmra.mrb[0].mxu0 %v2149
      %v2310 = vpop.f32.mrb[0].mxu0
      %v2311 = vadd.f32 0.0, %v2310
      %v2312 = vpop.f32.mrb[0].mxu0
      %v2313 = vpop.f32.mrb[0].mxu0
      %v2314 = vadd.f32 0.0, %v2313
      %v2315 = vpop.f32.mrb[0].mxu0
      %2316 = vmatprep.mubr.bf16.mxu0 0
      %2317 = vmatmul.mubr.bf16.gmra.mrb[0].mxu0 %v2152
      %v2318 = vpop.f32.mrb[0].mxu0
      %v2319 = vadd.f32 0.0, %v2318
      %v2320 = vpop.f32.mrb[0].mxu0
      %v2321 = vpop.f32.mrb[0].mxu0
      %v2322 = vadd.f32 0.0, %v2321
      %v2323 = vpop.f32.mrb[0].mxu0
      %2324 = vmatprep.mubr.bf16.mxu0 0
      %2325 = vmatmul.mubr.bf16.gmra.mrb[0].mxu0 %v2155
      %v2326 = vpop.f32.mrb[0].mxu0
      %v2327 = vadd.f32 0.0, %v2326
      %v2328 = vpop.f32.mrb[0].mxu0
      %v2329 = vpop.f32.mrb[0].mxu0
      %v2330 = vadd.f32 0.0, %v2329
      %v2331 = vpop.f32.mrb[0].mxu0
      %2332 = vmatprep.mubr.bf16.mxu0 0
      %2333 = vmatmul.mubr.bf16.gmra.mrb[0].mxu0 %v2158
      %v2334 = vpop.f32.mrb[0].mxu0
      %v2335 = vadd.f32 0.0, %v2334
      %v2336 = vpop.f32.mrb[0].mxu0
      %v2337 = vpop.f32.mrb[0].mxu0
      %v2338 = vadd.f32 0.0, %v2337
      %v2339 = vpop.f32.mrb[0].mxu0
      %2340 = vdwg.mxu0
      %vm2341 = vcmp.ge.f32.partialorder %v2199, 0.0
      %vm2342 = vcmp.ge.f32.partialorder %v2202, 0.0
      %vm2343 = vcmp.ge.f32.partialorder %v2207, 0.0
      %vm2344 = vcmp.ge.f32.partialorder %v2210, 0.0
      %vm2345 = vcmp.ge.f32.partialorder %v2215, 0.0
      %vm2346 = vcmp.ge.f32.partialorder %v2218, 0.0
      %vm2347 = vcmp.ge.f32.partialorder %v2223, 0.0
      %vm2348 = vcmp.ge.f32.partialorder %v2226, 0.0
      %vm2349 = vcmp.ge.f32.partialorder %v2231, 0.0
      %vm2350 = vcmp.ge.f32.partialorder %v2234, 0.0
      %vm2351 = vcmp.ge.f32.partialorder %v2239, 0.0
      %vm2352 = vcmp.ge.f32.partialorder %v2242, 0.0
      %vm2353 = vcmp.ge.f32.partialorder %v2247, 0.0
      %vm2354 = vcmp.ge.f32.partialorder %v2250, 0.0
      %vm2355 = vcmp.ge.f32.partialorder %v2255, 0.0
      %vm2356 = vcmp.ge.f32.partialorder %v2258, 0.0
      %vm2357 = vcmp.ge.f32.partialorder %v2263, 0.0
      %vm2358 = vcmp.ge.f32.partialorder %v2266, 0.0
      %vm2359 = vcmp.ge.f32.partialorder %v2271, 0.0
      %vm2360 = vcmp.ge.f32.partialorder %v2274, 0.0
      %vm2361 = vcmp.ge.f32.partialorder %v2279, 0.0
      %vm2362 = vcmp.ge.f32.partialorder %v2282, 0.0
      %vm2363 = vcmp.ge.f32.partialorder %v2287, 0.0
      %vm2364 = vcmp.ge.f32.partialorder %v2290, 0.0
      %vm2365 = vcmp.ge.f32.partialorder %v2295, 0.0
      %vm2366 = vcmp.ge.f32.partialorder %v2298, 0.0
      %vm2367 = vcmp.ge.f32.partialorder %v2303, 0.0
      %vm2368 = vcmp.ge.f32.partialorder %v2306, 0.0
      %vm2369 = vcmp.ge.f32.partialorder %v2311, 0.0
      %vm2370 = vcmp.ge.f32.partialorder %v2314, 0.0
      %vm2371 = vcmp.ge.f32.partialorder %v2319, 0.0
      %vm2372 = vcmp.ge.f32.partialorder %v2322, 0.0
      %vm2373 = vcmp.ge.f32.partialorder %v2327, 0.0
      %vm2374 = vcmp.ge.f32.partialorder %v2330, 0.0
      %vm2375 = vcmp.ge.f32.partialorder %v2335, 0.0
      %vm2376 = vcmp.ge.f32.partialorder %v2338, 0.0
      %v2377 = vmul.f32 %v2199, 0.2
      %v2378 = vmul.f32 %v2202, 0.2
      %v2379 = vmul.f32 %v2207, 0.2
      %v2380 = vmul.f32 %v2210, 0.2
      %v2381 = vmul.f32 %v2215, 0.2
      %v2382 = vmul.f32 %v2218, 0.2
      %v2383 = vmul.f32 %v2223, 0.2
      %v2384 = vmul.f32 %v2226, 0.2
      %v2385 = vmul.f32 %v2231, 0.2
      %v2386 = vmul.f32 %v2234, 0.2
      %v2387 = vmul.f32 %v2239, 0.2
      %v2388 = vmul.f32 %v2242, 0.2
      %v2389 = vmul.f32 %v2247, 0.2
      %v2390 = vmul.f32 %v2250, 0.2
      %v2391 = vmul.f32 %v2255, 0.2
      %v2392 = vmul.f32 %v2258, 0.2
      %v2393 = vmul.f32 %v2263, 0.2
      %v2394 = vmul.f32 %v2266, 0.2
      %v2395 = vmul.f32 %v2271, 0.2
      %v2396 = vmul.f32 %v2274, 0.2
      %v2397 = vmul.f32 %v2279, 0.2
      %v2398 = vmul.f32 %v2282, 0.2
      %v2399 = vmul.f32 %v2287, 0.2
      %v2400 = vmul.f32 %v2290, 0.2
      %v2401 = vmul.f32 %v2295, 0.2
      %v2402 = vmul.f32 %v2298, 0.2
      %v2403 = vmul.f32 %v2303, 0.2
      %v2404 = vmul.f32 %v2306, 0.2
      %v2405 = vmul.f32 %v2311, 0.2
      %v2406 = vmul.f32 %v2314, 0.2
      %v2407 = vmul.f32 %v2319, 0.2
      %v2408 = vmul.f32 %v2322, 0.2
      %v2409 = vmul.f32 %v2327, 0.2
      %v2410 = vmul.f32 %v2330, 0.2
      %v2411 = vmul.f32 %v2335, 0.2
      %v2412 = vmul.f32 %v2338, 0.2
      %v2413 = vsel %vm2341, %v2199, %v2377
      %v2414 = vsel %vm2342, %v2202, %v2378
      %v2415 = vsel %vm2343, %v2207, %v2379
      %v2416 = vsel %vm2344, %v2210, %v2380
      %v2417 = vsel %vm2345, %v2215, %v2381
      %v2418 = vsel %vm2346, %v2218, %v2382
      %v2419 = vsel %vm2347, %v2223, %v2383
      %v2420 = vsel %vm2348, %v2226, %v2384
      %v2421 = vsel %vm2349, %v2231, %v2385
      %v2422 = vsel %vm2350, %v2234, %v2386
      %v2423 = vsel %vm2351, %v2239, %v2387
      %v2424 = vsel %vm2352, %v2242, %v2388
      %v2425 = vsel %vm2353, %v2247, %v2389
      %v2426 = vsel %vm2354, %v2250, %v2390
      %v2427 = vsel %vm2355, %v2255, %v2391
      %v2428 = vsel %vm2356, %v2258, %v2392
      %v2429 = vsel %vm2357, %v2263, %v2393
      %v2430 = vsel %vm2358, %v2266, %v2394
      %v2431 = vsel %vm2359, %v2271, %v2395
      %v2432 = vsel %vm2360, %v2274, %v2396
      %v2433 = vsel %vm2361, %v2279, %v2397
      %v2434 = vsel %vm2362, %v2282, %v2398
      %v2435 = vsel %vm2363, %v2287, %v2399
      %v2436 = vsel %vm2364, %v2290, %v2400
      %v2437 = vsel %vm2365, %v2295, %v2401
      %v2438 = vsel %vm2366, %v2298, %v2402
      %v2439 = vsel %vm2367, %v2303, %v2403
      %v2440 = vsel %vm2368, %v2306, %v2404
      %v2441 = vsel %vm2369, %v2311, %v2405
      %v2442 = vsel %vm2370, %v2314, %v2406
      %v2443 = vsel %vm2371, %v2319, %v2407
      %v2444 = vsel %vm2372, %v2322, %v2408
      %v2445 = vsel %vm2373, %v2327, %v2409
      %v2446 = vsel %vm2374, %v2330, %v2410
      %v2447 = vsel %vm2375, %v2335, %v2411
      %v2448 = vsel %vm2376, %v2338, %v2412
      %v2449 = vmul.f32 %v2413, 1.4142135
      %v2450 = vmul.f32 %v2414, 1.4142135
      %v2451 = vmul.f32 %v2415, 1.4142135
      %v2452 = vmul.f32 %v2416, 1.4142135
      %v2453 = vmul.f32 %v2417, 1.4142135
      %v2454 = vmul.f32 %v2418, 1.4142135
      %v2455 = vmul.f32 %v2419, 1.4142135
      %v2456 = vmul.f32 %v2420, 1.4142135
      %v2457 = vmul.f32 %v2421, 1.4142135
      %v2458 = vmul.f32 %v2422, 1.4142135
      %v2459 = vmul.f32 %v2423, 1.4142135
      %v2460 = vmul.f32 %v2424, 1.4142135
      %v2461 = vmul.f32 %v2425, 1.4142135
      %v2462 = vmul.f32 %v2426, 1.4142135
      %v2463 = vmul.f32 %v2427, 1.4142135
      %v2464 = vmul.f32 %v2428, 1.4142135
      %v2465 = vmul.f32 %v2429, 1.4142135
      %v2466 = vmul.f32 %v2430, 1.4142135
      %v2467 = vmul.f32 %v2431, 1.4142135
      %v2468 = vmul.f32 %v2432, 1.4142135
      %v2469 = vmul.f32 %v2433, 1.4142135
      %v2470 = vmul.f32 %v2434, 1.4142135
      %v2471 = vmul.f32 %v2435, 1.4142135
      %v2472 = vmul.f32 %v2436, 1.4142135
      %v2473 = vmul.f32 %v2437, 1.4142135
      %v2474 = vmul.f32 %v2438, 1.4142135
      %v2475 = vmul.f32 %v2439, 1.4142135
      %v2476 = vmul.f32 %v2440, 1.4142135
      %v2477 = vmul.f32 %v2441, 1.4142135
      %v2478 = vmul.f32 %v2442, 1.4142135
      %v2479 = vmul.f32 %v2443, 1.4142135
      %v2480 = vmul.f32 %v2444, 1.4142135
      %v2481 = vmul.f32 %v2445, 1.4142135
      %v2482 = vmul.f32 %v2446, 1.4142135
      %v2483 = vmul.f32 %v2447, 1.4142135
      %v2484 = vmul.f32 %v2448, 1.4142135
      %v2485 = vlaneseq
      %v2486 = vshrl.u32 %v2485, 7
      %v2487 = vadd.s32 %v2486, 8
      %v2488 = vadd.s32 %v2486, 16
      %v2489 = vadd.s32 %v2486, 24
      %v2490 = vadd.s32 %v2486, 32
      %v2491 = vadd.s32 %v2486, 40
      %v2492 = vadd.s32 %v2486, 48
      %v2493 = vadd.s32 %v2486, 56
      %v2494 = vadd.s32 %v2486, 64
      %v2495 = vadd.s32 %v2486, 72
      %v2496 = vadd.s32 %v2486, 80
      %v2497 = vadd.s32 %v2486, 88
      %v2498 = vadd.s32 %v2486, 96
      %v2499 = vadd.s32 %v2486, 104
      %v2500 = vadd.s32 %v2486, 112
      %v2501 = vadd.s32 %v2486, 120
      %v2502 = vadd.s32 %v2486, 128
      %v2503 = vadd.s32 %v2486, 136
      %v2504 = vadd.s32 %v2486, 144
      %v2505 = vadd.s32 %v2486, 152
      %v2506 = vadd.s32 %v2486, 160
      %v2507 = vadd.s32 %v2486, 168
      %v2508 = vadd.s32 %v2486, 176
      %v2509 = vadd.s32 %v2486, 184
      %v2510 = vadd.s32 %v2486, 192
      %v2511 = vadd.s32 %v2486, 200
      %v2512 = vadd.s32 %v2486, 208
      %v2513 = vadd.s32 %v2486, 216
      %v2514 = vadd.s32 %v2486, 224
      %v2515 = vadd.s32 %v2486, 232
      %v2516 = vadd.s32 %v2486, 240
      %v2517 = vadd.s32 %v2486, 248
      %v2518 = vadd.s32 %v2486, 256
      %v2519 = vadd.s32 %v2486, 264
      %v2520 = vadd.s32 %v2486, 272
      %v2521 = vadd.s32 %v2486, 280
      %vm2522 = vcmp.lt.s32.totalorder %v2486, 0
      %v2523 = vsub.s32 0, %v2486
      %v2524 = vsel %vm2522, %v2523, %v2486
      %v2525 = vmul.u32.u64.compose %v2524, 3817748708
      %v2526 = vextract.low.u32 %v2525
      %v2527 = vextract.high.u32 %v2525
      %v2528 = vshrl.u32 %v2527, 4
      %v2529 = vmul.u32 %v2528, 18
      %v2530 = vsub.s32 %v2524, %v2529
      %v2531 = vsub.s32 0, %v2530
      %v2532 = vsel %vm2522, %v2531, %v2530
      %vm2533 = vcmp.lt.s32.totalorder %v2487, 0
      %v2534 = vsub.s32 0, %v2487
      %v2535 = vsel %vm2533, %v2534, %v2487
      %v2536 = vmul.u32.u64.compose %v2535, 3817748708
      %v2537 = vextract.low.u32 %v2536
      %v2538 = vextract.high.u32 %v2536
      %v2539 = vshrl.u32 %v2538, 4
      %v2540 = vmul.u32 %v2539, 18
      %v2541 = vsub.s32 %v2535, %v2540
      %v2542 = vsub.s32 0, %v2541
      %v2543 = vsel %vm2533, %v2542, %v2541
      %vm2544 = vcmp.lt.s32.totalorder %v2488, 0
      %v2545 = vsub.s32 0, %v2488
      %v2546 = vsel %vm2544, %v2545, %v2488
      %v2547 = vmul.u32.u64.compose %v2546, 3817748708
      %v2548 = vextract.low.u32 %v2547
      %v2549 = vextract.high.u32 %v2547
      %v2550 = vshrl.u32 %v2549, 4
      %v2551 = vmul.u32 %v2550, 18
      %v2552 = vsub.s32 %v2546, %v2551
      %v2553 = vsub.s32 0, %v2552
      %v2554 = vsel %vm2544, %v2553, %v2552
      %vm2555 = vcmp.lt.s32.totalorder %v2489, 0
      %v2556 = vsub.s32 0, %v2489
      %v2557 = vsel %vm2555, %v2556, %v2489
      %v2558 = vmul.u32.u64.compose %v2557, 3817748708
      %v2559 = vextract.low.u32 %v2558
      %v2560 = vextract.high.u32 %v2558
      %v2561 = vshrl.u32 %v2560, 4
      %v2562 = vmul.u32 %v2561, 18
      %v2563 = vsub.s32 %v2557, %v2562
      %v2564 = vsub.s32 0, %v2563
      %v2565 = vsel %vm2555, %v2564, %v2563
      %vm2566 = vcmp.lt.s32.totalorder %v2490, 0
      %v2567 = vsub.s32 0, %v2490
      %v2568 = vsel %vm2566, %v2567, %v2490
      %v2569 = vmul.u32.u64.compose %v2568, 3817748708
      %v2570 = vextract.low.u32 %v2569
      %v2571 = vextract.high.u32 %v2569
      %v2572 = vshrl.u32 %v2571, 4
      %v2573 = vmul.u32 %v2572, 18
      %v2574 = vsub.s32 %v2568, %v2573
      %v2575 = vsub.s32 0, %v2574
      %v2576 = vsel %vm2566, %v2575, %v2574
      %vm2577 = vcmp.lt.s32.totalorder %v2491, 0
      %v2578 = vsub.s32 0, %v2491
      %v2579 = vsel %vm2577, %v2578, %v2491
      %v2580 = vmul.u32.u64.compose %v2579, 3817748708
      %v2581 = vextract.low.u32 %v2580
      %v2582 = vextract.high.u32 %v2580
      %v2583 = vshrl.u32 %v2582, 4
      %v2584 = vmul.u32 %v2583, 18
      %v2585 = vsub.s32 %v2579, %v2584
      %v2586 = vsub.s32 0, %v2585
      %v2587 = vsel %vm2577, %v2586, %v2585
      %vm2588 = vcmp.lt.s32.totalorder %v2492, 0
      %v2589 = vsub.s32 0, %v2492
      %v2590 = vsel %vm2588, %v2589, %v2492
      %v2591 = vmul.u32.u64.compose %v2590, 3817748708
      %v2592 = vextract.low.u32 %v2591
      %v2593 = vextract.high.u32 %v2591
      %v2594 = vshrl.u32 %v2593, 4
      %v2595 = vmul.u32 %v2594, 18
      %v2596 = vsub.s32 %v2590, %v2595
      %v2597 = vsub.s32 0, %v2596
      %v2598 = vsel %vm2588, %v2597, %v2596
      %vm2599 = vcmp.lt.s32.totalorder %v2493, 0
      %v2600 = vsub.s32 0, %v2493
      %v2601 = vsel %vm2599, %v2600, %v2493
      %v2602 = vmul.u32.u64.compose %v2601, 3817748708
      %v2603 = vextract.low.u32 %v2602
      %v2604 = vextract.high.u32 %v2602
      %v2605 = vshrl.u32 %v2604, 4
      %v2606 = vmul.u32 %v2605, 18
      %v2607 = vsub.s32 %v2601, %v2606
      %v2608 = vsub.s32 0, %v2607
      %v2609 = vsel %vm2599, %v2608, %v2607
      %vm2610 = vcmp.lt.s32.totalorder %v2494, 0
      %v2611 = vsub.s32 0, %v2494
      %v2612 = vsel %vm2610, %v2611, %v2494
      %v2613 = vmul.u32.u64.compose %v2612, 3817748708
      %v2614 = vextract.low.u32 %v2613
      %v2615 = vextract.high.u32 %v2613
      %v2616 = vshrl.u32 %v2615, 4
      %v2617 = vmul.u32 %v2616, 18
      %v2618 = vsub.s32 %v2612, %v2617
      %v2619 = vsub.s32 0, %v2618
      %v2620 = vsel %vm2610, %v2619, %v2618
      %vm2621 = vcmp.lt.s32.totalorder %v2495, 0
      %v2622 = vsub.s32 0, %v2495
      %v2623 = vsel %vm2621, %v2622, %v2495
      %v2624 = vmul.u32.u64.compose %v2623, 3817748708
      %v2625 = vextract.low.u32 %v2624
      %v2626 = vextract.high.u32 %v2624
      %v2627 = vshrl.u32 %v2626, 4
      %v2628 = vmul.u32 %v2627, 18
      %v2629 = vsub.s32 %v2623, %v2628
      %v2630 = vsub.s32 0, %v2629
      %v2631 = vsel %vm2621, %v2630, %v2629
      %vm2632 = vcmp.lt.s32.totalorder %v2496, 0
      %v2633 = vsub.s32 0, %v2496
      %v2634 = vsel %vm2632, %v2633, %v2496
      %v2635 = vmul.u32.u64.compose %v2634, 3817748708
      %v2636 = vextract.low.u32 %v2635
      %v2637 = vextract.high.u32 %v2635
      %v2638 = vshrl.u32 %v2637, 4
      %v2639 = vmul.u32 %v2638, 18
      %v2640 = vsub.s32 %v2634, %v2639
      %v2641 = vsub.s32 0, %v2640
      %v2642 = vsel %vm2632, %v2641, %v2640
      %vm2643 = vcmp.lt.s32.totalorder %v2497, 0
      %v2644 = vsub.s32 0, %v2497
      %v2645 = vsel %vm2643, %v2644, %v2497
      %v2646 = vmul.u32.u64.compose %v2645, 3817748708
      %v2647 = vextract.low.u32 %v2646
      %v2648 = vextract.high.u32 %v2646
      %v2649 = vshrl.u32 %v2648, 4
      %v2650 = vmul.u32 %v2649, 18
      %v2651 = vsub.s32 %v2645, %v2650
      %v2652 = vsub.s32 0, %v2651
      %v2653 = vsel %vm2643, %v2652, %v2651
      %vm2654 = vcmp.lt.s32.totalorder %v2498, 0
      %v2655 = vsub.s32 0, %v2498
      %v2656 = vsel %vm2654, %v2655, %v2498
      %v2657 = vmul.u32.u64.compose %v2656, 3817748708
      %v2658 = vextract.low.u32 %v2657
      %v2659 = vextract.high.u32 %v2657
      %v2660 = vshrl.u32 %v2659, 4
      %v2661 = vmul.u32 %v2660, 18
      %v2662 = vsub.s32 %v2656, %v2661
      %v2663 = vsub.s32 0, %v2662
      %v2664 = vsel %vm2654, %v2663, %v2662
      %vm2665 = vcmp.lt.s32.totalorder %v2499, 0
      %v2666 = vsub.s32 0, %v2499
      %v2667 = vsel %vm2665, %v2666, %v2499
      %v2668 = vmul.u32.u64.compose %v2667, 3817748708
      %v2669 = vextract.low.u32 %v2668
      %v2670 = vextract.high.u32 %v2668
      %v2671 = vshrl.u32 %v2670, 4
      %v2672 = vmul.u32 %v2671, 18
      %v2673 = vsub.s32 %v2667, %v2672
      %v2674 = vsub.s32 0, %v2673
      %v2675 = vsel %vm2665, %v2674, %v2673
      %vm2676 = vcmp.lt.s32.totalorder %v2500, 0
      %v2677 = vsub.s32 0, %v2500
      %v2678 = vsel %vm2676, %v2677, %v2500
      %v2679 = vmul.u32.u64.compose %v2678, 3817748708
      %v2680 = vextract.low.u32 %v2679
      %v2681 = vextract.high.u32 %v2679
      %v2682 = vshrl.u32 %v2681, 4
      %v2683 = vmul.u32 %v2682, 18
      %v2684 = vsub.s32 %v2678, %v2683
      %v2685 = vsub.s32 0, %v2684
      %v2686 = vsel %vm2676, %v2685, %v2684
      %vm2687 = vcmp.lt.s32.totalorder %v2501, 0
      %v2688 = vsub.s32 0, %v2501
      %v2689 = vsel %vm2687, %v2688, %v2501
      %v2690 = vmul.u32.u64.compose %v2689, 3817748708
      %v2691 = vextract.low.u32 %v2690
      %v2692 = vextract.high.u32 %v2690
      %v2693 = vshrl.u32 %v2692, 4
      %v2694 = vmul.u32 %v2693, 18
      %v2695 = vsub.s32 %v2689, %v2694
      %v2696 = vsub.s32 0, %v2695
      %v2697 = vsel %vm2687, %v2696, %v2695
      %vm2698 = vcmp.lt.s32.totalorder %v2502, 0
      %v2699 = vsub.s32 0, %v2502
      %v2700 = vsel %vm2698, %v2699, %v2502
      %v2701 = vmul.u32.u64.compose %v2700, 3817748708
      %v2702 = vextract.low.u32 %v2701
      %v2703 = vextract.high.u32 %v2701
      %v2704 = vshrl.u32 %v2703, 4
      %v2705 = vmul.u32 %v2704, 18
      %v2706 = vsub.s32 %v2700, %v2705
      %v2707 = vsub.s32 0, %v2706
      %v2708 = vsel %vm2698, %v2707, %v2706
      %vm2709 = vcmp.lt.s32.totalorder %v2503, 0
      %v2710 = vsub.s32 0, %v2503
      %v2711 = vsel %vm2709, %v2710, %v2503
      %v2712 = vmul.u32.u64.compose %v2711, 3817748708
      %v2713 = vextract.low.u32 %v2712
      %v2714 = vextract.high.u32 %v2712
      %v2715 = vshrl.u32 %v2714, 4
      %v2716 = vmul.u32 %v2715, 18
      %v2717 = vsub.s32 %v2711, %v2716
      %v2718 = vsub.s32 0, %v2717
      %v2719 = vsel %vm2709, %v2718, %v2717
      %vm2720 = vcmp.lt.s32.totalorder %v2504, 0
      %v2721 = vsub.s32 0, %v2504
      %v2722 = vsel %vm2720, %v2721, %v2504
      %v2723 = vmul.u32.u64.compose %v2722, 3817748708
      %v2724 = vextract.low.u32 %v2723
      %v2725 = vextract.high.u32 %v2723
      %v2726 = vshrl.u32 %v2725, 4
      %v2727 = vmul.u32 %v2726, 18
      %v2728 = vsub.s32 %v2722, %v2727
      %v2729 = vsub.s32 0, %v2728
      %v2730 = vsel %vm2720, %v2729, %v2728
      %vm2731 = vcmp.lt.s32.totalorder %v2505, 0
      %v2732 = vsub.s32 0, %v2505
      %v2733 = vsel %vm2731, %v2732, %v2505
      %v2734 = vmul.u32.u64.compose %v2733, 3817748708
      %v2735 = vextract.low.u32 %v2734
      %v2736 = vextract.high.u32 %v2734
      %v2737 = vshrl.u32 %v2736, 4
      %v2738 = vmul.u32 %v2737, 18
      %v2739 = vsub.s32 %v2733, %v2738
      %v2740 = vsub.s32 0, %v2739
      %v2741 = vsel %vm2731, %v2740, %v2739
      %vm2742 = vcmp.lt.s32.totalorder %v2506, 0
      %v2743 = vsub.s32 0, %v2506
      %v2744 = vsel %vm2742, %v2743, %v2506
      %v2745 = vmul.u32.u64.compose %v2744, 3817748708
      %v2746 = vextract.low.u32 %v2745
      %v2747 = vextract.high.u32 %v2745
      %v2748 = vshrl.u32 %v2747, 4
      %v2749 = vmul.u32 %v2748, 18
      %v2750 = vsub.s32 %v2744, %v2749
      %v2751 = vsub.s32 0, %v2750
      %v2752 = vsel %vm2742, %v2751, %v2750
      %vm2753 = vcmp.lt.s32.totalorder %v2507, 0
      %v2754 = vsub.s32 0, %v2507
      %v2755 = vsel %vm2753, %v2754, %v2507
      %v2756 = vmul.u32.u64.compose %v2755, 3817748708
      %v2757 = vextract.low.u32 %v2756
      %v2758 = vextract.high.u32 %v2756
      %v2759 = vshrl.u32 %v2758, 4
      %v2760 = vmul.u32 %v2759, 18
      %v2761 = vsub.s32 %v2755, %v2760
      %v2762 = vsub.s32 0, %v2761
      %v2763 = vsel %vm2753, %v2762, %v2761
      %vm2764 = vcmp.lt.s32.totalorder %v2508, 0
      %v2765 = vsub.s32 0, %v2508
      %v2766 = vsel %vm2764, %v2765, %v2508
      %v2767 = vmul.u32.u64.compose %v2766, 3817748708
      %v2768 = vextract.low.u32 %v2767
      %v2769 = vextract.high.u32 %v2767
      %v2770 = vshrl.u32 %v2769, 4
      %v2771 = vmul.u32 %v2770, 18
      %v2772 = vsub.s32 %v2766, %v2771
      %v2773 = vsub.s32 0, %v2772
      %v2774 = vsel %vm2764, %v2773, %v2772
      %vm2775 = vcmp.lt.s32.totalorder %v2509, 0
      %v2776 = vsub.s32 0, %v2509
      %v2777 = vsel %vm2775, %v2776, %v2509
      %v2778 = vmul.u32.u64.compose %v2777, 3817748708
      %v2779 = vextract.low.u32 %v2778
      %v2780 = vextract.high.u32 %v2778
      %v2781 = vshrl.u32 %v2780, 4
      %v2782 = vmul.u32 %v2781, 18
      %v2783 = vsub.s32 %v2777, %v2782
      %v2784 = vsub.s32 0, %v2783
      %v2785 = vsel %vm2775, %v2784, %v2783
      %vm2786 = vcmp.lt.s32.totalorder %v2510, 0
      %v2787 = vsub.s32 0, %v2510
      %v2788 = vsel %vm2786, %v2787, %v2510
      %v2789 = vmul.u32.u64.compose %v2788, 3817748708
      %v2790 = vextract.low.u32 %v2789
      %v2791 = vextract.high.u32 %v2789
      %v2792 = vshrl.u32 %v2791, 4
      %v2793 = vmul.u32 %v2792, 18
      %v2794 = vsub.s32 %v2788, %v2793
      %v2795 = vsub.s32 0, %v2794
      %v2796 = vsel %vm2786, %v2795, %v2794
      %vm2797 = vcmp.lt.s32.totalorder %v2511, 0
      %v2798 = vsub.s32 0, %v2511
      %v2799 = vsel %vm2797, %v2798, %v2511
      %v2800 = vmul.u32.u64.compose %v2799, 3817748708
      %v2801 = vextract.low.u32 %v2800
      %v2802 = vextract.high.u32 %v2800
      %v2803 = vshrl.u32 %v2802, 4
      %v2804 = vmul.u32 %v2803, 18
      %v2805 = vsub.s32 %v2799, %v2804
      %v2806 = vsub.s32 0, %v2805
      %v2807 = vsel %vm2797, %v2806, %v2805
      %vm2808 = vcmp.lt.s32.totalorder %v2512, 0
      %v2809 = vsub.s32 0, %v2512
      %v2810 = vsel %vm2808, %v2809, %v2512
      %v2811 = vmul.u32.u64.compose %v2810, 3817748708
      %v2812 = vextract.low.u32 %v2811
      %v2813 = vextract.high.u32 %v2811
      %v2814 = vshrl.u32 %v2813, 4
      %v2815 = vmul.u32 %v2814, 18
      %v2816 = vsub.s32 %v2810, %v2815
      %v2817 = vsub.s32 0, %v2816
      %v2818 = vsel %vm2808, %v2817, %v2816
      %vm2819 = vcmp.lt.s32.totalorder %v2513, 0
      %v2820 = vsub.s32 0, %v2513
      %v2821 = vsel %vm2819, %v2820, %v2513
      %v2822 = vmul.u32.u64.compose %v2821, 3817748708
      %v2823 = vextract.low.u32 %v2822
      %v2824 = vextract.high.u32 %v2822
      %v2825 = vshrl.u32 %v2824, 4
      %v2826 = vmul.u32 %v2825, 18
      %v2827 = vsub.s32 %v2821, %v2826
      %v2828 = vsub.s32 0, %v2827
      %v2829 = vsel %vm2819, %v2828, %v2827
      %vm2830 = vcmp.lt.s32.totalorder %v2514, 0
      %v2831 = vsub.s32 0, %v2514
      %v2832 = vsel %vm2830, %v2831, %v2514
      %v2833 = vmul.u32.u64.compose %v2832, 3817748708
      %v2834 = vextract.low.u32 %v2833
      %v2835 = vextract.high.u32 %v2833
      %v2836 = vshrl.u32 %v2835, 4
      %v2837 = vmul.u32 %v2836, 18
      %v2838 = vsub.s32 %v2832, %v2837
      %v2839 = vsub.s32 0, %v2838
      %v2840 = vsel %vm2830, %v2839, %v2838
      %vm2841 = vcmp.lt.s32.totalorder %v2515, 0
      %v2842 = vsub.s32 0, %v2515
      %v2843 = vsel %vm2841, %v2842, %v2515
      %v2844 = vmul.u32.u64.compose %v2843, 3817748708
      %v2845 = vextract.low.u32 %v2844
      %v2846 = vextract.high.u32 %v2844
      %v2847 = vshrl.u32 %v2846, 4
      %v2848 = vmul.u32 %v2847, 18
      %v2849 = vsub.s32 %v2843, %v2848
      %v2850 = vsub.s32 0, %v2849
      %v2851 = vsel %vm2841, %v2850, %v2849
      %vm2852 = vcmp.lt.s32.totalorder %v2516, 0
      %v2853 = vsub.s32 0, %v2516
      %v2854 = vsel %vm2852, %v2853, %v2516
      %v2855 = vmul.u32.u64.compose %v2854, 3817748708
      %v2856 = vextract.low.u32 %v2855
      %v2857 = vextract.high.u32 %v2855
      %v2858 = vshrl.u32 %v2857, 4
      %v2859 = vmul.u32 %v2858, 18
      %v2860 = vsub.s32 %v2854, %v2859
      %v2861 = vsub.s32 0, %v2860
      %v2862 = vsel %vm2852, %v2861, %v2860
      %vm2863 = vcmp.lt.s32.totalorder %v2517, 0
      %v2864 = vsub.s32 0, %v2517
      %v2865 = vsel %vm2863, %v2864, %v2517
      %v2866 = vmul.u32.u64.compose %v2865, 3817748708
      %v2867 = vextract.low.u32 %v2866
      %v2868 = vextract.high.u32 %v2866
      %v2869 = vshrl.u32 %v2868, 4
      %v2870 = vmul.u32 %v2869, 18
      %v2871 = vsub.s32 %v2865, %v2870
      %v2872 = vsub.s32 0, %v2871
      %v2873 = vsel %vm2863, %v2872, %v2871
      %vm2874 = vcmp.lt.s32.totalorder %v2518, 0
      %v2875 = vsub.s32 0, %v2518
      %v2876 = vsel %vm2874, %v2875, %v2518
      %v2877 = vmul.u32.u64.compose %v2876, 3817748708
      %v2878 = vextract.low.u32 %v2877
      %v2879 = vextract.high.u32 %v2877
      %v2880 = vshrl.u32 %v2879, 4
      %v2881 = vmul.u32 %v2880, 18
      %v2882 = vsub.s32 %v2876, %v2881
      %v2883 = vsub.s32 0, %v2882
      %v2884 = vsel %vm2874, %v2883, %v2882
      %vm2885 = vcmp.lt.s32.totalorder %v2519, 0
      %v2886 = vsub.s32 0, %v2519
      %v2887 = vsel %vm2885, %v2886, %v2519
      %v2888 = vmul.u32.u64.compose %v2887, 3817748708
      %v2889 = vextract.low.u32 %v2888
      %v2890 = vextract.high.u32 %v2888
      %v2891 = vshrl.u32 %v2890, 4
      %v2892 = vmul.u32 %v2891, 18
      %v2893 = vsub.s32 %v2887, %v2892
      %v2894 = vsub.s32 0, %v2893
      %v2895 = vsel %vm2885, %v2894, %v2893
      %vm2896 = vcmp.lt.s32.totalorder %v2520, 0
      %v2897 = vsub.s32 0, %v2520
      %v2898 = vsel %vm2896, %v2897, %v2520
      %v2899 = vmul.u32.u64.compose %v2898, 3817748708
      %v2900 = vextract.low.u32 %v2899
      %v2901 = vextract.high.u32 %v2899
      %v2902 = vshrl.u32 %v2901, 4
      %v2903 = vmul.u32 %v2902, 18
      %v2904 = vsub.s32 %v2898, %v2903
      %v2905 = vsub.s32 0, %v2904
      %v2906 = vsel %vm2896, %v2905, %v2904
      %vm2907 = vcmp.lt.s32.totalorder %v2521, 0
      %v2908 = vsub.s32 0, %v2521
      %v2909 = vsel %vm2907, %v2908, %v2521
      %v2910 = vmul.u32.u64.compose %v2909, 3817748708
      %v2911 = vextract.low.u32 %v2910
      %v2912 = vextract.high.u32 %v2910
      %v2913 = vshrl.u32 %v2912, 4
      %v2914 = vmul.u32 %v2913, 18
      %v2915 = vsub.s32 %v2909, %v2914
      %v2916 = vsub.s32 0, %v2915
      %v2917 = vsel %vm2907, %v2916, %v2915
      %vm2918 = vcmp.ne.s32.totalorder %v2532, 0
      %vm2919 = vcmp.ne.s32.totalorder %v2543, 0
      %vm2920 = vcmp.ne.s32.totalorder %v2554, 0
      %vm2921 = vcmp.ne.s32.totalorder %v2565, 0
      %vm2922 = vcmp.ne.s32.totalorder %v2576, 0
      %vm2923 = vcmp.ne.s32.totalorder %v2587, 0
      %vm2924 = vcmp.ne.s32.totalorder %v2598, 0
      %vm2925 = vcmp.ne.s32.totalorder %v2609, 0
      %vm2926 = vcmp.ne.s32.totalorder %v2620, 0
      %vm2927 = vcmp.ne.s32.totalorder %v2631, 0
      %vm2928 = vcmp.ne.s32.totalorder %v2642, 0
      %vm2929 = vcmp.ne.s32.totalorder %v2653, 0
      %vm2930 = vcmp.ne.s32.totalorder %v2664, 0
      %vm2931 = vcmp.ne.s32.totalorder %v2675, 0
      %vm2932 = vcmp.ne.s32.totalorder %v2686, 0
      %vm2933 = vcmp.ne.s32.totalorder %v2697, 0
      %vm2934 = vcmp.ne.s32.totalorder %v2708, 0
      %vm2935 = vcmp.ne.s32.totalorder %v2719, 0
      %vm2936 = vcmp.ne.s32.totalorder %v2730, 0
      %vm2937 = vcmp.ne.s32.totalorder %v2741, 0
      %vm2938 = vcmp.ne.s32.totalorder %v2752, 0
      %vm2939 = vcmp.ne.s32.totalorder %v2763, 0
      %vm2940 = vcmp.ne.s32.totalorder %v2774, 0
      %vm2941 = vcmp.ne.s32.totalorder %v2785, 0
      %vm2942 = vcmp.ne.s32.totalorder %v2796, 0
      %vm2943 = vcmp.ne.s32.totalorder %v2807, 0
      %vm2944 = vcmp.ne.s32.totalorder %v2818, 0
      %vm2945 = vcmp.ne.s32.totalorder %v2829, 0
      %vm2946 = vcmp.ne.s32.totalorder %v2840, 0
      %vm2947 = vcmp.ne.s32.totalorder %v2851, 0
      %vm2948 = vcmp.ne.s32.totalorder %v2862, 0
      %vm2949 = vcmp.ne.s32.totalorder %v2873, 0
      %vm2950 = vcmp.ne.s32.totalorder %v2884, 0
      %vm2951 = vcmp.ne.s32.totalorder %v2895, 0
      %vm2952 = vcmp.ne.s32.totalorder %v2906, 0
      %vm2953 = vcmp.ne.s32.totalorder %v2917, 0
      %vm2954 = vcmp.lt.s32.totalorder %v2532, 0
      %vm2955 = vcmp.lt.s32.totalorder %v2543, 0
      %vm2956 = vcmp.lt.s32.totalorder %v2554, 0
      %vm2957 = vcmp.lt.s32.totalorder %v2565, 0
      %vm2958 = vcmp.lt.s32.totalorder %v2576, 0
      %vm2959 = vcmp.lt.s32.totalorder %v2587, 0
      %vm2960 = vcmp.lt.s32.totalorder %v2598, 0
      %vm2961 = vcmp.lt.s32.totalorder %v2609, 0
      %vm2962 = vcmp.lt.s32.totalorder %v2620, 0
      %vm2963 = vcmp.lt.s32.totalorder %v2631, 0
      %vm2964 = vcmp.lt.s32.totalorder %v2642, 0
      %vm2965 = vcmp.lt.s32.totalorder %v2653, 0
      %vm2966 = vcmp.lt.s32.totalorder %v2664, 0
      %vm2967 = vcmp.lt.s32.totalorder %v2675, 0
      %vm2968 = vcmp.lt.s32.totalorder %v2686, 0
      %vm2969 = vcmp.lt.s32.totalorder %v2697, 0
      %vm2970 = vcmp.lt.s32.totalorder %v2708, 0
      %vm2971 = vcmp.lt.s32.totalorder %v2719, 0
      %vm2972 = vcmp.lt.s32.totalorder %v2730, 0
      %vm2973 = vcmp.lt.s32.totalorder %v2741, 0
      %vm2974 = vcmp.lt.s32.totalorder %v2752, 0
      %vm2975 = vcmp.lt.s32.totalorder %v2763, 0
      %vm2976 = vcmp.lt.s32.totalorder %v2774, 0
      %vm2977 = vcmp.lt.s32.totalorder %v2785, 0
      %vm2978 = vcmp.lt.s32.totalorder %v2796, 0
      %vm2979 = vcmp.lt.s32.totalorder %v2807, 0
      %vm2980 = vcmp.lt.s32.totalorder %v2818, 0
      %vm2981 = vcmp.lt.s32.totalorder %v2829, 0
      %vm2982 = vcmp.lt.s32.totalorder %v2840, 0
      %vm2983 = vcmp.lt.s32.totalorder %v2851, 0
      %vm2984 = vcmp.lt.s32.totalorder %v2862, 0
      %vm2985 = vcmp.lt.s32.totalorder %v2873, 0
      %vm2986 = vcmp.lt.s32.totalorder %v2884, 0
      %vm2987 = vcmp.lt.s32.totalorder %v2895, 0
      %vm2988 = vcmp.lt.s32.totalorder %v2906, 0
      %vm2989 = vcmp.lt.s32.totalorder %v2917, 0
      %vm2990 = vmand %vm2954, %vm2918
      %vm2991 = vmand %vm2955, %vm2919
      %vm2992 = vmand %vm2956, %vm2920
      %vm2993 = vmand %vm2957, %vm2921
      %vm2994 = vmand %vm2958, %vm2922
      %vm2995 = vmand %vm2959, %vm2923
      %vm2996 = vmand %vm2960, %vm2924
      %vm2997 = vmand %vm2961, %vm2925
      %vm2998 = vmand %vm2962, %vm2926
      %vm2999 = vmand %vm2963, %vm2927
      %vm3000 = vmand %vm2964, %vm2928
      %vm3001 = vmand %vm2965, %vm2929
      %vm3002 = vmand %vm2966, %vm2930
      %vm3003 = vmand %vm2967, %vm2931
      %vm3004 = vmand %vm2968, %vm2932
      %vm3005 = vmand %vm2969, %vm2933
      %vm3006 = vmand %vm2970, %vm2934
      %vm3007 = vmand %vm2971, %vm2935
      %vm3008 = vmand %vm2972, %vm2936
      %vm3009 = vmand %vm2973, %vm2937
      %vm3010 = vmand %vm2974, %vm2938
      %vm3011 = vmand %vm2975, %vm2939
      %vm3012 = vmand %vm2976, %vm2940
      %vm3013 = vmand %vm2977, %vm2941
      %vm3014 = vmand %vm2978, %vm2942
      %vm3015 = vmand %vm2979, %vm2943
      %vm3016 = vmand %vm2980, %vm2944
      %vm3017 = vmand %vm2981, %vm2945
      %vm3018 = vmand %vm2982, %vm2946
      %vm3019 = vmand %vm2983, %vm2947
      %vm3020 = vmand %vm2984, %vm2948
      %vm3021 = vmand %vm2985, %vm2949
      %vm3022 = vmand %vm2986, %vm2950
      %vm3023 = vmand %vm2987, %vm2951
      %vm3024 = vmand %vm2988, %vm2952
      %vm3025 = vmand %vm2989, %vm2953
      %v3026 = vadd.s32 %v2532, 18
      %v3027 = vadd.s32 %v2543, 18
      %v3028 = vadd.s32 %v2554, 18
      %v3029 = vadd.s32 %v2565, 18
      %v3030 = vadd.s32 %v2576, 18
      %v3031 = vadd.s32 %v2587, 18
      %v3032 = vadd.s32 %v2598, 18
      %v3033 = vadd.s32 %v2609, 18
      %v3034 = vadd.s32 %v2620, 18
      %v3035 = vadd.s32 %v2631, 18
      %v3036 = vadd.s32 %v2642, 18
      %v3037 = vadd.s32 %v2653, 18
      %v3038 = vadd.s32 %v2664, 18
      %v3039 = vadd.s32 %v2675, 18
      %v3040 = vadd.s32 %v2686, 18
      %v3041 = vadd.s32 %v2697, 18
      %v3042 = vadd.s32 %v2708, 18
      %v3043 = vadd.s32 %v2719, 18
      %v3044 = vadd.s32 %v2730, 18
      %v3045 = vadd.s32 %v2741, 18
      %v3046 = vadd.s32 %v2752, 18
      %v3047 = vadd.s32 %v2763, 18
      %v3048 = vadd.s32 %v2774, 18
      %v3049 = vadd.s32 %v2785, 18
      %v3050 = vadd.s32 %v2796, 18
      %v3051 = vadd.s32 %v2807, 18
      %v3052 = vadd.s32 %v2818, 18
      %v3053 = vadd.s32 %v2829, 18
      %v3054 = vadd.s32 %v2840, 18
      %v3055 = vadd.s32 %v2851, 18
      %v3056 = vadd.s32 %v2862, 18
      %v3057 = vadd.s32 %v2873, 18
      %v3058 = vadd.s32 %v2884, 18
      %v3059 = vadd.s32 %v2895, 18
      %v3060 = vadd.s32 %v2906, 18
      %v3061 = vadd.s32 %v2917, 18
      %v3062 = vsel %vm2990, %v3026, %v2532
      %v3063 = vsel %vm2991, %v3027, %v2543
      %v3064 = vsel %vm2992, %v3028, %v2554
      %v3065 = vsel %vm2993, %v3029, %v2565
      %v3066 = vsel %vm2994, %v3030, %v2576
      %v3067 = vsel %vm2995, %v3031, %v2587
      %v3068 = vsel %vm2996, %v3032, %v2598
      %v3069 = vsel %vm2997, %v3033, %v2609
      %v3070 = vsel %vm2998, %v3034, %v2620
      %v3071 = vsel %vm2999, %v3035, %v2631
      %v3072 = vsel %vm3000, %v3036, %v2642
      %v3073 = vsel %vm3001, %v3037, %v2653
      %v3074 = vsel %vm3002, %v3038, %v2664
      %v3075 = vsel %vm3003, %v3039, %v2675
      %v3076 = vsel %vm3004, %v3040, %v2686
      %v3077 = vsel %vm3005, %v3041, %v2697
      %v3078 = vsel %vm3006, %v3042, %v2708
      %v3079 = vsel %vm3007, %v3043, %v2719
      %v3080 = vsel %vm3008, %v3044, %v2730
      %v3081 = vsel %vm3009, %v3045, %v2741
      %v3082 = vsel %vm3010, %v3046, %v2752
      %v3083 = vsel %vm3011, %v3047, %v2763
      %v3084 = vsel %vm3012, %v3048, %v2774
      %v3085 = vsel %vm3013, %v3049, %v2785
      %v3086 = vsel %vm3014, %v3050, %v2796
      %v3087 = vsel %vm3015, %v3051, %v2807
      %v3088 = vsel %vm3016, %v3052, %v2818
      %v3089 = vsel %vm3017, %v3053, %v2829
      %v3090 = vsel %vm3018, %v3054, %v2840
      %v3091 = vsel %vm3019, %v3055, %v2851
      %v3092 = vsel %vm3020, %v3056, %v2862
      %v3093 = vsel %vm3021, %v3057, %v2873
      %v3094 = vsel %vm3022, %v3058, %v2884
      %v3095 = vsel %vm3023, %v3059, %v2895
      %v3096 = vsel %vm3024, %v3060, %v2906
      %v3097 = vsel %vm3025, %v3061, %v2917
      %vm3098 = vcmp.lt.s32.totalorder %v3062, 16
      %vm3099 = vcmp.lt.s32.totalorder %v3063, 16
      %vm3100 = vcmp.lt.s32.totalorder %v3064, 16
      %vm3101 = vcmp.lt.s32.totalorder %v3065, 16
      %vm3102 = vcmp.lt.s32.totalorder %v3066, 16
      %vm3103 = vcmp.lt.s32.totalorder %v3067, 16
      %vm3104 = vcmp.lt.s32.totalorder %v3068, 16
      %vm3105 = vcmp.lt.s32.totalorder %v3069, 16
      %vm3106 = vcmp.lt.s32.totalorder %v3070, 16
      %vm3107 = vcmp.lt.s32.totalorder %v3071, 16
      %vm3108 = vcmp.lt.s32.totalorder %v3072, 16
      %vm3109 = vcmp.lt.s32.totalorder %v3073, 16
      %vm3110 = vcmp.lt.s32.totalorder %v3074, 16
      %vm3111 = vcmp.lt.s32.totalorder %v3075, 16
      %vm3112 = vcmp.lt.s32.totalorder %v3076, 16
      %vm3113 = vcmp.lt.s32.totalorder %v3077, 16
      %vm3114 = vcmp.lt.s32.totalorder %v3078, 16
      %vm3115 = vcmp.lt.s32.totalorder %v3079, 16
      %vm3116 = vcmp.lt.s32.totalorder %v3080, 16
      %vm3117 = vcmp.lt.s32.totalorder %v3081, 16
      %vm3118 = vcmp.lt.s32.totalorder %v3082, 16
      %vm3119 = vcmp.lt.s32.totalorder %v3083, 16
      %vm3120 = vcmp.lt.s32.totalorder %v3084, 16
      %vm3121 = vcmp.lt.s32.totalorder %v3085, 16
      %vm3122 = vcmp.lt.s32.totalorder %v3086, 16
      %vm3123 = vcmp.lt.s32.totalorder %v3087, 16
      %vm3124 = vcmp.lt.s32.totalorder %v3088, 16
      %vm3125 = vcmp.lt.s32.totalorder %v3089, 16
      %vm3126 = vcmp.lt.s32.totalorder %v3090, 16
      %vm3127 = vcmp.lt.s32.totalorder %v3091, 16
      %vm3128 = vcmp.lt.s32.totalorder %v3092, 16
      %vm3129 = vcmp.lt.s32.totalorder %v3093, 16
      %vm3130 = vcmp.lt.s32.totalorder %v3094, 16
      %vm3131 = vcmp.lt.s32.totalorder %v3095, 16
      %vm3132 = vcmp.lt.s32.totalorder %v3096, 16
      %vm3133 = vcmp.lt.s32.totalorder %v3097, 16
      %v3134 = vsel %vm3098, 1, 0
      %v3135 = vsel %vm3099, 1, 0
      %v3136 = vsel %vm3100, 1, 0
      %v3137 = vsel %vm3101, 1, 0
      %v3138 = vsel %vm3102, 1, 0
      %v3139 = vsel %vm3103, 1, 0
      %v3140 = vsel %vm3104, 1, 0
      %v3141 = vsel %vm3105, 1, 0
      %v3142 = vsel %vm3106, 1, 0
      %v3143 = vsel %vm3107, 1, 0
      %v3144 = vsel %vm3108, 1, 0
      %v3145 = vsel %vm3109, 1, 0
      %v3146 = vsel %vm3110, 1, 0
      %v3147 = vsel %vm3111, 1, 0
      %v3148 = vsel %vm3112, 1, 0
      %v3149 = vsel %vm3113, 1, 0
      %v3150 = vsel %vm3114, 1, 0
      %v3151 = vsel %vm3115, 1, 0
      %v3152 = vsel %vm3116, 1, 0
      %v3153 = vsel %vm3117, 1, 0
      %v3154 = vsel %vm3118, 1, 0
      %v3155 = vsel %vm3119, 1, 0
      %v3156 = vsel %vm3120, 1, 0
      %v3157 = vsel %vm3121, 1, 0
      %v3158 = vsel %vm3122, 1, 0
      %v3159 = vsel %vm3123, 1, 0
      %v3160 = vsel %vm3124, 1, 0
      %v3161 = vsel %vm3125, 1, 0
      %v3162 = vsel %vm3126, 1, 0
      %v3163 = vsel %vm3127, 1, 0
      %v3164 = vsel %vm3128, 1, 0
      %v3165 = vsel %vm3129, 1, 0
      %v3166 = vsel %vm3130, 1, 0
      %v3167 = vsel %vm3131, 1, 0
      %v3168 = vsel %vm3132, 1, 0
      %v3169 = vsel %vm3133, 1, 0
      %vm3170 = vcmp.eq.s32.totalorder %v3134, 1
      %vm3171 = vcmp.eq.s32.totalorder %v3135, 1
      %vm3172 = vcmp.eq.s32.totalorder %v3136, 1
      %vm3173 = vcmp.eq.s32.totalorder %v3137, 1
      %vm3174 = vcmp.eq.s32.totalorder %v3138, 1
      %vm3175 = vcmp.eq.s32.totalorder %v3139, 1
      %vm3176 = vcmp.eq.s32.totalorder %v3140, 1
      %vm3177 = vcmp.eq.s32.totalorder %v3141, 1
      %vm3178 = vcmp.eq.s32.totalorder %v3142, 1
      %vm3179 = vcmp.eq.s32.totalorder %v3143, 1
      %vm3180 = vcmp.eq.s32.totalorder %v3144, 1
      %vm3181 = vcmp.eq.s32.totalorder %v3145, 1
      %vm3182 = vcmp.eq.s32.totalorder %v3146, 1
      %vm3183 = vcmp.eq.s32.totalorder %v3147, 1
      %vm3184 = vcmp.eq.s32.totalorder %v3148, 1
      %vm3185 = vcmp.eq.s32.totalorder %v3149, 1
      %vm3186 = vcmp.eq.s32.totalorder %v3150, 1
      %vm3187 = vcmp.eq.s32.totalorder %v3151, 1
      %vm3188 = vcmp.eq.s32.totalorder %v3152, 1
      %vm3189 = vcmp.eq.s32.totalorder %v3153, 1
      %vm3190 = vcmp.eq.s32.totalorder %v3154, 1
      %vm3191 = vcmp.eq.s32.totalorder %v3155, 1
      %vm3192 = vcmp.eq.s32.totalorder %v3156, 1
      %vm3193 = vcmp.eq.s32.totalorder %v3157, 1
      %vm3194 = vcmp.eq.s32.totalorder %v3158, 1
      %vm3195 = vcmp.eq.s32.totalorder %v3159, 1
      %vm3196 = vcmp.eq.s32.totalorder %v3160, 1
      %vm3197 = vcmp.eq.s32.totalorder %v3161, 1
      %vm3198 = vcmp.eq.s32.totalorder %v3162, 1
      %vm3199 = vcmp.eq.s32.totalorder %v3163, 1
      %vm3200 = vcmp.eq.s32.totalorder %v3164, 1
      %vm3201 = vcmp.eq.s32.totalorder %v3165, 1
      %vm3202 = vcmp.eq.s32.totalorder %v3166, 1
      %vm3203 = vcmp.eq.s32.totalorder %v3167, 1
      %vm3204 = vcmp.eq.s32.totalorder %v3168, 1
      %vm3205 = vcmp.eq.s32.totalorder %v3169, 1
      %v3206 = vsel %vm3170, %v2449, 0.0
      %v3207 = vsel %vm3171, %v2450, 0.0
      %v3208 = vsel %vm3172, %v2451, 0.0
      %v3209 = vsel %vm3173, %v2452, 0.0
      %v3210 = vsel %vm3174, %v2453, 0.0
      %v3211 = vsel %vm3175, %v2454, 0.0
      %v3212 = vsel %vm3176, %v2455, 0.0
      %v3213 = vsel %vm3177, %v2456, 0.0
      %v3214 = vsel %vm3178, %v2457, 0.0
      %v3215 = vsel %vm3179, %v2458, 0.0
      %v3216 = vsel %vm3180, %v2459, 0.0
      %v3217 = vsel %vm3181, %v2460, 0.0
      %v3218 = vsel %vm3182, %v2461, 0.0
      %v3219 = vsel %vm3183, %v2462, 0.0
      %v3220 = vsel %vm3184, %v2463, 0.0
      %v3221 = vsel %vm3185, %v2464, 0.0
      %v3222 = vsel %vm3186, %v2465, 0.0
      %v3223 = vsel %vm3187, %v2466, 0.0
      %v3224 = vsel %vm3188, %v2467, 0.0
      %v3225 = vsel %vm3189, %v2468, 0.0
      %v3226 = vsel %vm3190, %v2469, 0.0
      %v3227 = vsel %vm3191, %v2470, 0.0
      %v3228 = vsel %vm3192, %v2471, 0.0
      %v3229 = vsel %vm3193, %v2472, 0.0
      %v3230 = vsel %vm3194, %v2473, 0.0
      %v3231 = vsel %vm3195, %v2474, 0.0
      %v3232 = vsel %vm3196, %v2475, 0.0
      %v3233 = vsel %vm3197, %v2476, 0.0
      %v3234 = vsel %vm3198, %v2477, 0.0
      %v3235 = vsel %vm3199, %v2478, 0.0
      %v3236 = vsel %vm3200, %v2479, 0.0
      %v3237 = vsel %vm3201, %v2480, 0.0
      %v3238 = vsel %vm3202, %v2481, 0.0
      %v3239 = vsel %vm3203, %v2482, 0.0
      %v3240 = vsel %vm3204, %v2483, 0.0
      %v3241 = vsel %vm3205, %v2484, 0.0
      %3242 = vst.msk [vmem:[#allocation2 + $0x13] sm:$0xff] %vm197, %v3206
      %3243 = vst.msk [vmem:[#allocation2 + $0x1b] sm:$0xff] %vm197, %v3207
      %3244 = vst.msk [vmem:[#allocation2 + $0x23] sm:$0xff] %vm197, %v3208
      %3245 = vst.msk [vmem:[#allocation2 + $0x2b] sm:$0xff] %vm197, %v3209
      %3246 = vst.msk [vmem:[#allocation2 + $0x33] sm:$0xff] %vm197, %v3210
      %3247 = vst.msk [vmem:[#allocation2 + $0x3b] sm:$0xff] %vm197, %v3211
      %3248 = vst.msk [vmem:[#allocation2 + $0x43] sm:$0xff] %vm197, %v3212
      %3249 = vst.msk [vmem:[#allocation2 + $0x4b] sm:$0xff] %vm197, %v3213
      %3250 = vst.msk [vmem:[#allocation2 + $0x53] sm:$0xff] %vm197, %v3214
      %3251 = vst.msk [vmem:[#allocation2 + $0x5b] sm:$0xff] %vm197, %v3215
      %3252 = vst.msk [vmem:[#allocation2 + $0x63] sm:$0xff] %vm197, %v3216
      %3253 = vst.msk [vmem:[#allocation2 + $0x6b] sm:$0xff] %vm197, %v3217
      %3254 = vst.msk [vmem:[#allocation2 + $0x73] sm:$0xff] %vm197, %v3218
      %3255 = vst.msk [vmem:[#allocation2 + $0x7b] sm:$0xff] %vm197, %v3219
      %3256 = vst.msk [vmem:[#allocation2 + $0x83] sm:$0xff] %vm197, %v3220
      %3257 = vst.msk [vmem:[#allocation2 + $0x8b] sm:$0xff] %vm197, %v3221
      %3258 = vst.msk [vmem:[#allocation2 + $0x93] sm:$0xff] %vm197, %v3222
      %3259 = vst.msk [vmem:[#allocation2 + $0x9b] sm:$0xff] %vm197, %v3223
      %3260 = vst.msk [vmem:[#allocation2 + $0xa3] sm:$0xff] %vm197, %v3224
      %3261 = vst.msk [vmem:[#allocation2 + $0xab] sm:$0xff] %vm197, %v3225
      %3262 = vst.msk [vmem:[#allocation2 + $0xb3] sm:$0xff] %vm197, %v3226
      %3263 = vst.msk [vmem:[#allocation2 + $0xbb] sm:$0xff] %vm197, %v3227
      %3264 = vst.msk [vmem:[#allocation2 + $0xc3] sm:$0xff] %vm197, %v3228
      %3265 = vst.msk [vmem:[#allocation2 + $0xcb] sm:$0xff] %vm197, %v3229
      %3266 = vst.msk [vmem:[#allocation2 + $0xd3] sm:$0xff] %vm197, %v3230
      %3267 = vst.msk [vmem:[#allocation2 + $0xdb] sm:$0xff] %vm197, %v3231
      %3268 = vst.msk [vmem:[#allocation2 + $0xe3] sm:$0xff] %vm197, %v3232
      %3269 = vst.msk [vmem:[#allocation2 + $0xeb] sm:$0xff] %vm197, %v3233
      %3270 = vst.msk [vmem:[#allocation2 + $0xf3] sm:$0xff] %vm197, %v3234
      %3271 = vst.msk [vmem:[#allocation2 + $0xfb] sm:$0xff] %vm197, %v3235
      %3272 = vst.msk [vmem:[#allocation2 + $0x103] sm:$0xff] %vm197, %v3236
      %3273 = vst.msk [vmem:[#allocation2 + $0x10b] sm:$0xff] %vm197, %v3237
      %3274 = vst.msk [vmem:[#allocation2 + $0x113] sm:$0xff] %vm197, %v3238
      %3275 = vst.msk [vmem:[#allocation2 + $0x11b] sm:$0xff] %vm197, %v3239
      %3276 = vst.msk [vmem:[#allocation2 + $0x123] sm:$0xff] %vm197, %v3240
      %3277 = vst.msk [vmem:[#allocation2 + $0x12b] sm:$0xff] %vm197, %v3241
      %v3278 = vld [vmem:[#allocation2] sm:$0xff]
      %v3279 = vld [vmem:[#allocation2 + $0x8] sm:$0xff]
      %v3280 = vld [vmem:[#allocation2 + $0x10] sm:$0xff]
      %v3281 = vld [vmem:[#allocation2 + $0x18] sm:$0xff]
      %v3282 = vld [vmem:[#allocation2 + $0x20] sm:$0xff]
      %v3283 = vld [vmem:[#allocation2 + $0x28] sm:$0xff]
      %v3284 = vld [vmem:[#allocation2 + $0x30] sm:$0xff]
      %v3285 = vld [vmem:[#allocation2 + $0x38] sm:$0xff]
      %v3286 = vld [vmem:[#allocation2 + $0x40] sm:$0xff]
      %v3287 = vld [vmem:[#allocation2 + $0x48] sm:$0xff]
      %v3288 = vld [vmem:[#allocation2 + $0x50] sm:$0xff]
      %v3289 = vld [vmem:[#allocation2 + $0x58] sm:$0xff]
      %v3290 = vld [vmem:[#allocation2 + $0x60] sm:$0xff]
      %v3291 = vld [vmem:[#allocation2 + $0x68] sm:$0xff]
      %v3292 = vld [vmem:[#allocation2 + $0x70] sm:$0xff]
      %v3293 = vld [vmem:[#allocation2 + $0x78] sm:$0xff]
      %v3294 = vld [vmem:[#allocation2 + $0x80] sm:$0xff]
      %v3295 = vld [vmem:[#allocation2 + $0x88] sm:$0xff]
      %v3296 = vld [vmem:[#allocation2 + $0x90] sm:$0xff]
      %v3297 = vld [vmem:[#allocation2 + $0x98] sm:$0xff]
      %v3298 = vld [vmem:[#allocation2 + $0xa0] sm:$0xff]
      %v3299 = vld [vmem:[#allocation2 + $0xa8] sm:$0xff]
      %v3300 = vld [vmem:[#allocation2 + $0xb0] sm:$0xff]
      %v3301 = vld [vmem:[#allocation2 + $0xb8] sm:$0xff]
      %v3302 = vld [vmem:[#allocation2 + $0xc0] sm:$0xff]
      %v3303 = vld [vmem:[#allocation2 + $0xc8] sm:$0xff]
      %v3304 = vld [vmem:[#allocation2 + $0xd0] sm:$0xff]
      %v3305 = vld [vmem:[#allocation2 + $0xd8] sm:$0xff]
      %v3306 = vld [vmem:[#allocation2 + $0xe0] sm:$0xff]
      %v3307 = vld [vmem:[#allocation2 + $0xe8] sm:$0xff]
      %v3308 = vld [vmem:[#allocation2 + $0xf0] sm:$0xff]
      %v3309 = vld [vmem:[#allocation2 + $0xf8] sm:$0xff]
      %v3310 = vld [vmem:[#allocation2 + $0x100] sm:$0xff]
      %v3311 = vld [vmem:[#allocation2 + $0x108] sm:$0xff]
      %v3312 = vld [vmem:[#allocation2 + $0x110] sm:$0xff]
      %v3313 = vld [vmem:[#allocation2 + $0x118] sm:$0xff]
      %v3314 = vld [vmem:[#allocation2 + $0x120] sm:$0xff]
      %v3315 = vld [vmem:[#allocation2 + $0x128] sm:$0xff]
      %v3316 = vld [vmem:[#allocation2 + $0x130] sm:$0xff]
      %v3317 = vld [vmem:[#allocation2 + $0x138] sm:$0xff]
      %v3318 = vld [vmem:[#allocation2 + $0x140] sm:$0xf]
      %v3319 = vmul.f32 %v3278, 0.125
      %v3320 = vmul.f32 %v3279, 0.125
      %v3321 = vmul.f32 %v3280, 0.125
      %v3322 = vmul.f32 %v3281, 0.125
      %v3323 = vmul.f32 %v3282, 0.125
      %v3324 = vmul.f32 %v3283, 0.125
      %v3325 = vmul.f32 %v3284, 0.125
      %v3326 = vmul.f32 %v3285, 0.125
      %v3327 = vmul.f32 %v3286, 0.125
      %v3328 = vmul.f32 %v3287, 0.125
      %v3329 = vmul.f32 %v3288, 0.125
      %v3330 = vmul.f32 %v3289, 0.125
      %v3331 = vmul.f32 %v3290, 0.125
      %v3332 = vmul.f32 %v3291, 0.125
      %v3333 = vmul.f32 %v3292, 0.125
      %v3334 = vmul.f32 %v3293, 0.125
      %v3335 = vmul.f32 %v3294, 0.125
      %v3336 = vmul.f32 %v3295, 0.125
      %v3337 = vmul.f32 %v3296, 0.125
      %v3338 = vmul.f32 %v3297, 0.125
      %v3339 = vmul.f32 %v3298, 0.125
      %v3340 = vmul.f32 %v3299, 0.125
      %v3341 = vmul.f32 %v3300, 0.125
      %v3342 = vmul.f32 %v3301, 0.125
      %v3343 = vmul.f32 %v3302, 0.125
      %v3344 = vmul.f32 %v3303, 0.125
      %v3345 = vmul.f32 %v3304, 0.125
      %v3346 = vmul.f32 %v3305, 0.125
      %v3347 = vmul.f32 %v3306, 0.125
      %v3348 = vmul.f32 %v3307, 0.125
      %v3349 = vmul.f32 %v3308, 0.125
      %v3350 = vmul.f32 %v3309, 0.125
      %v3351 = vmul.f32 %v3310, 0.125
      %v3352 = vmul.f32 %v3311, 0.125
      %v3353 = vmul.f32 %v3312, 0.125
      %v3354 = vmul.f32 %v3313, 0.125
      %v3355 = vmul.f32 %v3314, 0.125
      %v3356 = vmul.f32 %v3315, 0.125
      %v3357 = vmul.f32 %v3316, 0.125
      %v3358 = vmul.f32 %v3317, 0.125
      %v3359 = vmul.f32 %v3318, 0.125
      %v3360 = vld [vmem:[#allocation2 + $0x1] sm:$0xff]
      %v3361 = vld [vmem:[#allocation2 + $0x9] sm:$0xff]
      %v3362 = vld [vmem:[#allocation2 + $0x11] sm:$0xff]
      %v3363 = vld [vmem:[#allocation2 + $0x19] sm:$0xff]
      %v3364 = vld [vmem:[#allocation2 + $0x21] sm:$0xff]
      %v3365 = vld [vmem:[#allocation2 + $0x29] sm:$0xff]
      %v3366 = vld [vmem:[#allocation2 + $0x31] sm:$0xff]
      %v3367 = vld [vmem:[#allocation2 + $0x39] sm:$0xff]
      %v3368 = vld [vmem:[#allocation2 + $0x41] sm:$0xff]
      %v3369 = vld [vmem:[#allocation2 + $0x49] sm:$0xff]
      %v3370 = vld [vmem:[#allocation2 + $0x51] sm:$0xff]
      %v3371 = vld [vmem:[#allocation2 + $0x59] sm:$0xff]
      %v3372 = vld [vmem:[#allocation2 + $0x61] sm:$0xff]
      %v3373 = vld [vmem:[#allocation2 + $0x69] sm:$0xff]
      %v3374 = vld [vmem:[#allocation2 + $0x71] sm:$0xff]
      %v3375 = vld [vmem:[#allocation2 + $0x79] sm:$0xff]
      %v3376 = vld [vmem:[#allocation2 + $0x81] sm:$0xff]
      %v3377 = vld [vmem:[#allocation2 + $0x89] sm:$0xff]
      %v3378 = vld [vmem:[#allocation2 + $0x91] sm:$0xff]
      %v3379 = vld [vmem:[#allocation2 + $0x99] sm:$0xff]
      %v3380 = vld [vmem:[#allocation2 + $0xa1] sm:$0xff]
      %v3381 = vld [vmem:[#allocation2 + $0xa9] sm:$0xff]
      %v3382 = vld [vmem:[#allocation2 + $0xb1] sm:$0xff]
      %v3383 = vld [vmem:[#allocation2 + $0xb9] sm:$0xff]
      %v3384 = vld [vmem:[#allocation2 + $0xc1] sm:$0xff]
      %v3385 = vld [vmem:[#allocation2 + $0xc9] sm:$0xff]
      %v3386 = vld [vmem:[#allocation2 + $0xd1] sm:$0xff]
      %v3387 = vld [vmem:[#allocation2 + $0xd9] sm:$0xff]
      %v3388 = vld [vmem:[#allocation2 + $0xe1] sm:$0xff]
      %v3389 = vld [vmem:[#allocation2 + $0xe9] sm:$0xff]
      %v3390 = vld [vmem:[#allocation2 + $0xf1] sm:$0xff]
      %v3391 = vld [vmem:[#allocation2 + $0xf9] sm:$0xff]
      %v3392 = vld [vmem:[#allocation2 + $0x101] sm:$0xff]
      %v3393 = vld [vmem:[#allocation2 + $0x109] sm:$0xff]
      %v3394 = vld [vmem:[#allocation2 + $0x111] sm:$0xff]
      %v3395 = vld [vmem:[#allocation2 + $0x119] sm:$0xff]
      %v3396 = vld [vmem:[#allocation2 + $0x121] sm:$0xff]
      %v3397 = vld [vmem:[#allocation2 + $0x129] sm:$0xff]
      %v3398 = vld [vmem:[#allocation2 + $0x131] sm:$0xff]
      %v3399 = vld [vmem:[#allocation2 + $0x139] sm:$0xff]
      %v3400 = vld [vmem:[#allocation2 + $0x141] sm:$0xf]
      %v3401 = vmul.f32 %v3360, 0.375
      %v3402 = vmul.f32 %v3361, 0.375
      %v3403 = vmul.f32 %v3362, 0.375
      %v3404 = vmul.f32 %v3363, 0.375
      %v3405 = vmul.f32 %v3364, 0.375
      %v3406 = vmul.f32 %v3365, 0.375
      %v3407 = vmul.f32 %v3366, 0.375
      %v3408 = vmul.f32 %v3367, 0.375
      %v3409 = vmul.f32 %v3368, 0.375
      %v3410 = vmul.f32 %v3369, 0.375
      %v3411 = vmul.f32 %v3370, 0.375
      %v3412 = vmul.f32 %v3371, 0.375
      %v3413 = vmul.f32 %v3372, 0.375
      %v3414 = vmul.f32 %v3373, 0.375
      %v3415 = vmul.f32 %v3374, 0.375
      %v3416 = vmul.f32 %v3375, 0.375
      %v3417 = vmul.f32 %v3376, 0.375
      %v3418 = vmul.f32 %v3377, 0.375
      %v3419 = vmul.f32 %v3378, 0.375
      %v3420 = vmul.f32 %v3379, 0.375
      %v3421 = vmul.f32 %v3380, 0.375
      %v3422 = vmul.f32 %v3381, 0.375
      %v3423 = vmul.f32 %v3382, 0.375
      %v3424 = vmul.f32 %v3383, 0.375
      %v3425 = vmul.f32 %v3384, 0.375
      %v3426 = vmul.f32 %v3385, 0.375
      %v3427 = vmul.f32 %v3386, 0.375
      %v3428 = vmul.f32 %v3387, 0.375
      %v3429 = vmul.f32 %v3388, 0.375
      %v3430 = vmul.f32 %v3389, 0.375
      %v3431 = vmul.f32 %v3390, 0.375
      %v3432 = vmul.f32 %v3391, 0.375
      %v3433 = vmul.f32 %v3392, 0.375
      %v3434 = vmul.f32 %v3393, 0.375
      %v3435 = vmul.f32 %v3394, 0.375
      %v3436 = vmul.f32 %v3395, 0.375
      %v3437 = vmul.f32 %v3396, 0.375
      %v3438 = vmul.f32 %v3397, 0.375
      %v3439 = vmul.f32 %v3398, 0.375
      %v3440 = vmul.f32 %v3399, 0.375
      %v3441 = vmul.f32 %v3400, 0.375
      %v3442 = vadd.f32 %v3319, %v3401
      %v3443 = vadd.f32 %v3320, %v3402
      %v3444 = vadd.f32 %v3321, %v3403
      %v3445 = vadd.f32 %v3322, %v3404
      %v3446 = vadd.f32 %v3323, %v3405
      %v3447 = vadd.f32 %v3324, %v3406
      %v3448 = vadd.f32 %v3325, %v3407
      %v3449 = vadd.f32 %v3326, %v3408
      %v3450 = vadd.f32 %v3327, %v3409
      %v3451 = vadd.f32 %v3328, %v3410
      %v3452 = vadd.f32 %v3329, %v3411
      %v3453 = vadd.f32 %v3330, %v3412
      %v3454 = vadd.f32 %v3331, %v3413
      %v3455 = vadd.f32 %v3332, %v3414
      %v3456 = vadd.f32 %v3333, %v3415
      %v3457 = vadd.f32 %v3334, %v3416
      %v3458 = vadd.f32 %v3335, %v3417
      %v3459 = vadd.f32 %v3336, %v3418
      %v3460 = vadd.f32 %v3337, %v3419
      %v3461 = vadd.f32 %v3338, %v3420
      %v3462 = vadd.f32 %v3339, %v3421
      %v3463 = vadd.f32 %v3340, %v3422
      %v3464 = vadd.f32 %v3341, %v3423
      %v3465 = vadd.f32 %v3342, %v3424
      %v3466 = vadd.f32 %v3343, %v3425
      %v3467 = vadd.f32 %v3344, %v3426
      %v3468 = vadd.f32 %v3345, %v3427
      %v3469 = vadd.f32 %v3346, %v3428
      %v3470 = vadd.f32 %v3347, %v3429
      %v3471 = vadd.f32 %v3348, %v3430
      %v3472 = vadd.f32 %v3349, %v3431
      %v3473 = vadd.f32 %v3350, %v3432
      %v3474 = vadd.f32 %v3351, %v3433
      %v3475 = vadd.f32 %v3352, %v3434
      %v3476 = vadd.f32 %v3353, %v3435
      %v3477 = vadd.f32 %v3354, %v3436
      %v3478 = vadd.f32 %v3355, %v3437
      %v3479 = vadd.f32 %v3356, %v3438
      %v3480 = vadd.f32 %v3357, %v3439
      %v3481 = vadd.f32 %v3358, %v3440
      %v3482 = vadd.f32 %v3359, %v3441
      %v3483 = vld [vmem:[#allocation2 + $0x2] sm:$0xff]
      %v3484 = vld [vmem:[#allocation2 + $0xa] sm:$0xff]
      %v3485 = vld [vmem:[#allocation2 + $0x12] sm:$0xff]
      %v3486 = vld [vmem:[#allocation2 + $0x1a] sm:$0xff]
      %v3487 = vld [vmem:[#allocation2 + $0x22] sm:$0xff]
      %v3488 = vld [vmem:[#allocation2 + $0x2a] sm:$0xff]
      %v3489 = vld [vmem:[#allocation2 + $0x32] sm:$0xff]
      %v3490 = vld [vmem:[#allocation2 + $0x3a] sm:$0xff]
      %v3491 = vld [vmem:[#allocation2 + $0x42] sm:$0xff]
      %v3492 = vld [vmem:[#allocation2 + $0x4a] sm:$0xff]
      %v3493 = vld [vmem:[#allocation2 + $0x52] sm:$0xff]
      %v3494 = vld [vmem:[#allocation2 + $0x5a] sm:$0xff]
      %v3495 = vld [vmem:[#allocation2 + $0x62] sm:$0xff]
      %v3496 = vld [vmem:[#allocation2 + $0x6a] sm:$0xff]
      %v3497 = vld [vmem:[#allocation2 + $0x72] sm:$0xff]
      %v3498 = vld [vmem:[#allocation2 + $0x7a] sm:$0xff]
      %v3499 = vld [vmem:[#allocation2 + $0x82] sm:$0xff]
      %v3500 = vld [vmem:[#allocation2 + $0x8a] sm:$0xff]
      %v3501 = vld [vmem:[#allocation2 + $0x92] sm:$0xff]
      %v3502 = vld [vmem:[#allocation2 + $0x9a] sm:$0xff]
      %v3503 = vld [vmem:[#allocation2 + $0xa2] sm:$0xff]
      %v3504 = vld [vmem:[#allocation2 + $0xaa] sm:$0xff]
      %v3505 = vld [vmem:[#allocation2 + $0xb2] sm:$0xff]
      %v3506 = vld [vmem:[#allocation2 + $0xba] sm:$0xff]
      %v3507 = vld [vmem:[#allocation2 + $0xc2] sm:$0xff]
      %v3508 = vld [vmem:[#allocation2 + $0xca] sm:$0xff]
      %v3509 = vld [vmem:[#allocation2 + $0xd2] sm:$0xff]
      %v3510 = vld [vmem:[#allocation2 + $0xda] sm:$0xff]
      %v3511 = vld [vmem:[#allocation2 + $0xe2] sm:$0xff]
      %v3512 = vld [vmem:[#allocation2 + $0xea] sm:$0xff]
      %v3513 = vld [vmem:[#allocation2 + $0xf2] sm:$0xff]
      %v3514 = vld [vmem:[#allocation2 + $0xfa] sm:$0xff]
      %v3515 = vld [vmem:[#allocation2 + $0x102] sm:$0xff]
      %v3516 = vld [vmem:[#allocation2 + $0x10a] sm:$0xff]
      %v3517 = vld [vmem:[#allocation2 + $0x112] sm:$0xff]
      %v3518 = vld [vmem:[#allocation2 + $0x11a] sm:$0xff]
      %v3519 = vld [vmem:[#allocation2 + $0x122] sm:$0xff]
      %v3520 = vld [vmem:[#allocation2 + $0x12a] sm:$0xff]
      %v3521 = vld [vmem:[#allocation2 + $0x132] sm:$0xff]
      %v3522 = vld [vmem:[#allocation2 + $0x13a] sm:$0xff]
      %v3523 = vld [vmem:[#allocation2 + $0x142] sm:$0xf]
      %v3524 = vmul.f32 %v3483, 0.375
      %v3525 = vmul.f32 %v3484, 0.375
      %v3526 = vmul.f32 %v3485, 0.375
      %v3527 = vmul.f32 %v3486, 0.375
      %v3528 = vmul.f32 %v3487, 0.375
      %v3529 = vmul.f32 %v3488, 0.375
      %v3530 = vmul.f32 %v3489, 0.375
      %v3531 = vmul.f32 %v3490, 0.375
      %v3532 = vmul.f32 %v3491, 0.375
      %v3533 = vmul.f32 %v3492, 0.375
      %v3534 = vmul.f32 %v3493, 0.375
      %v3535 = vmul.f32 %v3494, 0.375
      %v3536 = vmul.f32 %v3495, 0.375
      %v3537 = vmul.f32 %v3496, 0.375
      %v3538 = vmul.f32 %v3497, 0.375
      %v3539 = vmul.f32 %v3498, 0.375
      %v3540 = vmul.f32 %v3499, 0.375
      %v3541 = vmul.f32 %v3500, 0.375
      %v3542 = vmul.f32 %v3501, 0.375
      %v3543 = vmul.f32 %v3502, 0.375
      %v3544 = vmul.f32 %v3503, 0.375
      %v3545 = vmul.f32 %v3504, 0.375
      %v3546 = vmul.f32 %v3505, 0.375
      %v3547 = vmul.f32 %v3506, 0.375
      %v3548 = vmul.f32 %v3507, 0.375
      %v3549 = vmul.f32 %v3508, 0.375
      %v3550 = vmul.f32 %v3509, 0.375
      %v3551 = vmul.f32 %v3510, 0.375
      %v3552 = vmul.f32 %v3511, 0.375
      %v3553 = vmul.f32 %v3512, 0.375
      %v3554 = vmul.f32 %v3513, 0.375
      %v3555 = vmul.f32 %v3514, 0.375
      %v3556 = vmul.f32 %v3515, 0.375
      %v3557 = vmul.f32 %v3516, 0.375
      %v3558 = vmul.f32 %v3517, 0.375
      %v3559 = vmul.f32 %v3518, 0.375
      %v3560 = vmul.f32 %v3519, 0.375
      %v3561 = vmul.f32 %v3520, 0.375
      %v3562 = vmul.f32 %v3521, 0.375
      %v3563 = vmul.f32 %v3522, 0.375
      %v3564 = vmul.f32 %v3523, 0.375
      %v3565 = vadd.f32 %v3442, %v3524
      %v3566 = vadd.f32 %v3443, %v3525
      %v3567 = vadd.f32 %v3444, %v3526
      %v3568 = vadd.f32 %v3445, %v3527
      %v3569 = vadd.f32 %v3446, %v3528
      %v3570 = vadd.f32 %v3447, %v3529
      %v3571 = vadd.f32 %v3448, %v3530
      %v3572 = vadd.f32 %v3449, %v3531
      %v3573 = vadd.f32 %v3450, %v3532
      %v3574 = vadd.f32 %v3451, %v3533
      %v3575 = vadd.f32 %v3452, %v3534
      %v3576 = vadd.f32 %v3453, %v3535
      %v3577 = vadd.f32 %v3454, %v3536
      %v3578 = vadd.f32 %v3455, %v3537
      %v3579 = vadd.f32 %v3456, %v3538
      %v3580 = vadd.f32 %v3457, %v3539
      %v3581 = vadd.f32 %v3458, %v3540
      %v3582 = vadd.f32 %v3459, %v3541
      %v3583 = vadd.f32 %v3460, %v3542
      %v3584 = vadd.f32 %v3461, %v3543
      %v3585 = vadd.f32 %v3462, %v3544
      %v3586 = vadd.f32 %v3463, %v3545
      %v3587 = vadd.f32 %v3464, %v3546
      %v3588 = vadd.f32 %v3465, %v3547
      %v3589 = vadd.f32 %v3466, %v3548
      %v3590 = vadd.f32 %v3467, %v3549
      %v3591 = vadd.f32 %v3468, %v3550
      %v3592 = vadd.f32 %v3469, %v3551
      %v3593 = vadd.f32 %v3470, %v3552
      %v3594 = vadd.f32 %v3471, %v3553
      %v3595 = vadd.f32 %v3472, %v3554
      %v3596 = vadd.f32 %v3473, %v3555
      %v3597 = vadd.f32 %v3474, %v3556
      %v3598 = vadd.f32 %v3475, %v3557
      %v3599 = vadd.f32 %v3476, %v3558
      %v3600 = vadd.f32 %v3477, %v3559
      %v3601 = vadd.f32 %v3478, %v3560
      %v3602 = vadd.f32 %v3479, %v3561
      %v3603 = vadd.f32 %v3480, %v3562
      %v3604 = vadd.f32 %v3481, %v3563
      %v3605 = vadd.f32 %v3482, %v3564
      %v3606 = vld [vmem:[#allocation2 + $0x3] sm:$0xff]
      %v3607 = vld [vmem:[#allocation2 + $0xb] sm:$0xff]
      %v3608 = vld [vmem:[#allocation2 + $0x13] sm:$0xff]
      %v3609 = vld [vmem:[#allocation2 + $0x1b] sm:$0xff]
      %v3610 = vld [vmem:[#allocation2 + $0x23] sm:$0xff]
      %v3611 = vld [vmem:[#allocation2 + $0x2b] sm:$0xff]
      %v3612 = vld [vmem:[#allocation2 + $0x33] sm:$0xff]
      %v3613 = vld [vmem:[#allocation2 + $0x3b] sm:$0xff]
      %v3614 = vld [vmem:[#allocation2 + $0x43] sm:$0xff]
      %v3615 = vld [vmem:[#allocation2 + $0x4b] sm:$0xff]
      %v3616 = vld [vmem:[#allocation2 + $0x53] sm:$0xff]
      %v3617 = vld [vmem:[#allocation2 + $0x5b] sm:$0xff]
      %v3618 = vld [vmem:[#allocation2 + $0x63] sm:$0xff]
      %v3619 = vld [vmem:[#allocation2 + $0x6b] sm:$0xff]
      %v3620 = vld [vmem:[#allocation2 + $0x73] sm:$0xff]
      %v3621 = vld [vmem:[#allocation2 + $0x7b] sm:$0xff]
      %v3622 = vld [vmem:[#allocation2 + $0x83] sm:$0xff]
      %v3623 = vld [vmem:[#allocation2 + $0x8b] sm:$0xff]
      %v3624 = vld [vmem:[#allocation2 + $0x93] sm:$0xff]
      %v3625 = vld [vmem:[#allocation2 + $0x9b] sm:$0xff]
      %v3626 = vld [vmem:[#allocation2 + $0xa3] sm:$0xff]
      %v3627 = vld [vmem:[#allocation2 + $0xab] sm:$0xff]
      %v3628 = vld [vmem:[#allocation2 + $0xb3] sm:$0xff]
      %v3629 = vld [vmem:[#allocation2 + $0xbb] sm:$0xff]
      %v3630 = vld [vmem:[#allocation2 + $0xc3] sm:$0xff]
      %v3631 = vld [vmem:[#allocation2 + $0xcb] sm:$0xff]
      %v3632 = vld [vmem:[#allocation2 + $0xd3] sm:$0xff]
      %v3633 = vld [vmem:[#allocation2 + $0xdb] sm:$0xff]
      %v3634 = vld [vmem:[#allocation2 + $0xe3] sm:$0xff]
      %v3635 = vld [vmem:[#allocation2 + $0xeb] sm:$0xff]
      %v3636 = vld [vmem:[#allocation2 + $0xf3] sm:$0xff]
      %v3637 = vld [vmem:[#allocation2 + $0xfb] sm:$0xff]
      %v3638 = vld [vmem:[#allocation2 + $0x103] sm:$0xff]
      %v3639 = vld [vmem:[#allocation2 + $0x10b] sm:$0xff]
      %v3640 = vld [vmem:[#allocation2 + $0x113] sm:$0xff]
      %v3641 = vld [vmem:[#allocation2 + $0x11b] sm:$0xff]
      %v3642 = vld [vmem:[#allocation2 + $0x123] sm:$0xff]
      %v3643 = vld [vmem:[#allocation2 + $0x12b] sm:$0xff]
      %v3644 = vld [vmem:[#allocation2 + $0x133] sm:$0xff]
      %v3645 = vld [vmem:[#allocation2 + $0x13b] sm:$0xff]
      %v3646 = vld [vmem:[#allocation2 + $0x143] sm:$0xf]
      %v3647 = vmul.f32 %v3606, 0.125
      %v3648 = vmul.f32 %v3607, 0.125
      %v3649 = vmul.f32 %v3608, 0.125
      %v3650 = vmul.f32 %v3609, 0.125
      %v3651 = vmul.f32 %v3610, 0.125
      %v3652 = vmul.f32 %v3611, 0.125
      %v3653 = vmul.f32 %v3612, 0.125
      %v3654 = vmul.f32 %v3613, 0.125
      %v3655 = vmul.f32 %v3614, 0.125
      %v3656 = vmul.f32 %v3615, 0.125
      %v3657 = vmul.f32 %v3616, 0.125
      %v3658 = vmul.f32 %v3617, 0.125
      %v3659 = vmul.f32 %v3618, 0.125
      %v3660 = vmul.f32 %v3619, 0.125
      %v3661 = vmul.f32 %v3620, 0.125
      %v3662 = vmul.f32 %v3621, 0.125
      %v3663 = vmul.f32 %v3622, 0.125
      %v3664 = vmul.f32 %v3623, 0.125
      %v3665 = vmul.f32 %v3624, 0.125
      %v3666 = vmul.f32 %v3625, 0.125
      %v3667 = vmul.f32 %v3626, 0.125
      %v3668 = vmul.f32 %v3627, 0.125
      %v3669 = vmul.f32 %v3628, 0.125
      %v3670 = vmul.f32 %v3629, 0.125
      %v3671 = vmul.f32 %v3630, 0.125
      %v3672 = vmul.f32 %v3631, 0.125
      %v3673 = vmul.f32 %v3632, 0.125
      %v3674 = vmul.f32 %v3633, 0.125
      %v3675 = vmul.f32 %v3634, 0.125
      %v3676 = vmul.f32 %v3635, 0.125
      %v3677 = vmul.f32 %v3636, 0.125
      %v3678 = vmul.f32 %v3637, 0.125
      %v3679 = vmul.f32 %v3638, 0.125
      %v3680 = vmul.f32 %v3639, 0.125
      %v3681 = vmul.f32 %v3640, 0.125
      %v3682 = vmul.f32 %v3641, 0.125
      %v3683 = vmul.f32 %v3642, 0.125
      %v3684 = vmul.f32 %v3643, 0.125
      %v3685 = vmul.f32 %v3644, 0.125
      %v3686 = vmul.f32 %v3645, 0.125
      %v3687 = vmul.f32 %v3646, 0.125
      %v3688 = vadd.f32 %v3565, %v3647
      %v3689 = vadd.f32 %v3566, %v3648
      %v3690 = vadd.f32 %v3567, %v3649
      %v3691 = vadd.f32 %v3568, %v3650
      %v3692 = vadd.f32 %v3569, %v3651
      %v3693 = vadd.f32 %v3570, %v3652
      %v3694 = vadd.f32 %v3571, %v3653
      %v3695 = vadd.f32 %v3572, %v3654
      %v3696 = vadd.f32 %v3573, %v3655
      %v3697 = vadd.f32 %v3574, %v3656
      %v3698 = vadd.f32 %v3575, %v3657
      %v3699 = vadd.f32 %v3576, %v3658
      %v3700 = vadd.f32 %v3577, %v3659
      %v3701 = vadd.f32 %v3578, %v3660
      %v3702 = vadd.f32 %v3579, %v3661
      %v3703 = vadd.f32 %v3580, %v3662
      %v3704 = vadd.f32 %v3581, %v3663
      %v3705 = vadd.f32 %v3582, %v3664
      %v3706 = vadd.f32 %v3583, %v3665
      %v3707 = vadd.f32 %v3584, %v3666
      %v3708 = vadd.f32 %v3585, %v3667
      %v3709 = vadd.f32 %v3586, %v3668
      %v3710 = vadd.f32 %v3587, %v3669
      %v3711 = vadd.f32 %v3588, %v3670
      %v3712 = vadd.f32 %v3589, %v3671
      %v3713 = vadd.f32 %v3590, %v3672
      %v3714 = vadd.f32 %v3591, %v3673
      %v3715 = vadd.f32 %v3592, %v3674
      %v3716 = vadd.f32 %v3593, %v3675
      %v3717 = vadd.f32 %v3594, %v3676
      %v3718 = vadd.f32 %v3595, %v3677
      %v3719 = vadd.f32 %v3596, %v3678
      %v3720 = vadd.f32 %v3597, %v3679
      %v3721 = vadd.f32 %v3598, %v3680
      %v3722 = vadd.f32 %v3599, %v3681
      %v3723 = vadd.f32 %v3600, %v3682
      %v3724 = vadd.f32 %v3601, %v3683
      %v3725 = vadd.f32 %v3602, %v3684
      %v3726 = vadd.f32 %v3603, %v3685
      %v3727 = vadd.f32 %v3604, %v3686
      %v3728 = vadd.f32 %v3605, %v3687
      %3729 = vst.msk [vmem:[#allocation4] sm:$0xff] %vm197, %v3688
      %3730 = vst.msk [vmem:[#allocation4 + $0x8] sm:$0xff] %vm197, %v3689
      %3731 = vst.msk [vmem:[#allocation4 + $0x10] sm:$0xff] %vm197, %v3690
      %3732 = vst.msk [vmem:[#allocation4 + $0x18] sm:$0xff] %vm197, %v3691
      %3733 = vst.msk [vmem:[#allocation4 + $0x20] sm:$0xff] %vm197, %v3692
      %3734 = vst.msk [vmem:[#allocation4 + $0x28] sm:$0xff] %vm197, %v3693
      %3735 = vst.msk [vmem:[#allocation4 + $0x30] sm:$0xff] %vm197, %v3694
      %3736 = vst.msk [vmem:[#allocation4 + $0x38] sm:$0xff] %vm197, %v3695
      %3737 = vst.msk [vmem:[#allocation4 + $0x40] sm:$0xff] %vm197, %v3696
      %3738 = vst.msk [vmem:[#allocation4 + $0x48] sm:$0xff] %vm197, %v3697
      %3739 = vst.msk [vmem:[#allocation4 + $0x50] sm:$0xff] %vm197, %v3698
      %3740 = vst.msk [vmem:[#allocation4 + $0x58] sm:$0xff] %vm197, %v3699
      %3741 = vst.msk [vmem:[#allocation4 + $0x60] sm:$0xff] %vm197, %v3700
      %3742 = vst.msk [vmem:[#allocation4 + $0x68] sm:$0xff] %vm197, %v3701
      %3743 = vst.msk [vmem:[#allocation4 + $0x70] sm:$0xff] %vm197, %v3702
      %3744 = vst.msk [vmem:[#allocation4 + $0x78] sm:$0xff] %vm197, %v3703
      %3745 = vst.msk [vmem:[#allocation4 + $0x80] sm:$0xff] %vm197, %v3704
      %3746 = vst.msk [vmem:[#allocation4 + $0x88] sm:$0xff] %vm197, %v3705
      %3747 = vst.msk [vmem:[#allocation4 + $0x90] sm:$0xff] %vm197, %v3706
      %3748 = vst.msk [vmem:[#allocation4 + $0x98] sm:$0xff] %vm197, %v3707
      %3749 = vst.msk [vmem:[#allocation4 + $0xa0] sm:$0xff] %vm197, %v3708
      %3750 = vst.msk [vmem:[#allocation4 + $0xa8] sm:$0xff] %vm197, %v3709
      %3751 = vst.msk [vmem:[#allocation4 + $0xb0] sm:$0xff] %vm197, %v3710
      %3752 = vst.msk [vmem:[#allocation4 + $0xb8] sm:$0xff] %vm197, %v3711
      %3753 = vst.msk [vmem:[#allocation4 + $0xc0] sm:$0xff] %vm197, %v3712
      %3754 = vst.msk [vmem:[#allocation4 + $0xc8] sm:$0xff] %vm197, %v3713
      %3755 = vst.msk [vmem:[#allocation4 + $0xd0] sm:$0xff] %vm197, %v3714
      %3756 = vst.msk [vmem:[#allocation4 + $0xd8] sm:$0xff] %vm197, %v3715
      %3757 = vst.msk [vmem:[#allocation4 + $0xe0] sm:$0xff] %vm197, %v3716
      %3758 = vst.msk [vmem:[#allocation4 + $0xe8] sm:$0xff] %vm197, %v3717
      %3759 = vst.msk [vmem:[#allocation4 + $0xf0] sm:$0xff] %vm197, %v3718
      %3760 = vst.msk [vmem:[#allocation4 + $0xf8] sm:$0xff] %vm197, %v3719
      %3761 = vst.msk [vmem:[#allocation4 + $0x100] sm:$0xff] %vm197, %v3720
      %3762 = vst.msk [vmem:[#allocation4 + $0x108] sm:$0xff] %vm197, %v3721
      %3763 = vst.msk [vmem:[#allocation4 + $0x110] sm:$0xff] %vm197, %v3722
      %3764 = vst.msk [vmem:[#allocation4 + $0x118] sm:$0xff] %vm197, %v3723
      %3765 = vst.msk [vmem:[#allocation4 + $0x120] sm:$0xff] %vm197, %v3724
      %3766 = vst.msk [vmem:[#allocation4 + $0x128] sm:$0xff] %vm197, %v3725
      %3767 = vst.msk [vmem:[#allocation4 + $0x130] sm:$0xff] %vm197, %v3726
      %3768 = vst.msk [vmem:[#allocation4 + $0x138] sm:$0xff] %vm197, %v3727
      %vm3769 = vcmask 27648
      %3770 = vst.msk [vmem:[#allocation4 + $0x140] sm:$0xf] %vm3769, %v3728
      %v3771 = vld [vmem:[#allocation4] sm:$0xff]
      %v3772 = vld [vmem:[#allocation4 + $0x8] sm:$0xff]
      %v3773 = vld [vmem:[#allocation4 + $0x10] sm:$0xff]
      %v3774 = vld [vmem:[#allocation4 + $0x18] sm:$0xff]
      %v3775 = vld [vmem:[#allocation4 + $0x20] sm:$0xff]
      %v3776 = vld [vmem:[#allocation4 + $0x28] sm:$0xff]
      %v3777 = vld [vmem:[#allocation4 + $0x30] sm:$0xff]
      %v3778 = vld [vmem:[#allocation4 + $0x38] sm:$0xff]
      %v3779 = vld [vmem:[#allocation4 + $0x40] sm:$0xff]
      %v3780 = vld [vmem:[#allocation4 + $0x48] sm:$0xff]
      %v3781 = vld [vmem:[#allocation4 + $0x50] sm:$0xff]
      %v3782 = vld [vmem:[#allocation4 + $0x58] sm:$0xff]
      %v3783 = vld [vmem:[#allocation4 + $0x60] sm:$0xff]
      %v3784 = vld [vmem:[#allocation4 + $0x68] sm:$0xff]
      %v3785 = vld [vmem:[#allocation4 + $0x70] sm:$0xff]
      %v3786 = vld [vmem:[#allocation4 + $0x78] sm:$0xff]
      %v3787 = vld [vmem:[#allocation4 + $0x80] sm:$0xff]
      %v3788 = vld [vmem:[#allocation4 + $0x88] sm:$0xff]
      %v3789 = vld [vmem:[#allocation4 + $0x90] sm:$0xff]
      %v3790 = vld [vmem:[#allocation4 + $0x98] sm:$0xff]
      %v3791 = vld [vmem:[#allocation4 + $0xa0] sm:$0xff]
      %v3792 = vld [vmem:[#allocation4 + $0xa8] sm:$0xff]
      %v3793 = vld [vmem:[#allocation4 + $0xb0] sm:$0xff]
      %v3794 = vld [vmem:[#allocation4 + $0xb8] sm:$0xff]
      %v3795 = vld [vmem:[#allocation4 + $0xc0] sm:$0xff]
      %v3796 = vld [vmem:[#allocation4 + $0xc8] sm:$0xff]
      %v3797 = vld [vmem:[#allocation4 + $0xd0] sm:$0xff]
      %v3798 = vld [vmem:[#allocation4 + $0xd8] sm:$0xff]
      %v3799 = vld [vmem:[#allocation4 + $0xe0] sm:$0xff]
      %v3800 = vld [vmem:[#allocation4 + $0xe8] sm:$0xff]
      %v3801 = vld [vmem:[#allocation4 + $0xf0] sm:$0xff]
      %v3802 = vld [vmem:[#allocation4 + $0xf8] sm:$0xff]
      %v3803 = vld [vmem:[#allocation4 + $0x100] sm:$0xff]
      %v3804 = vld [vmem:[#allocation4 + $0x108] sm:$0x3f]
      %v3805 = vmul.f32 %v3771, 0.125
      %v3806 = vmul.f32 %v3772, 0.125
      %v3807 = vmul.f32 %v3773, 0.125
      %v3808 = vmul.f32 %v3774, 0.125
      %v3809 = vmul.f32 %v3775, 0.125
      %v3810 = vmul.f32 %v3776, 0.125
      %v3811 = vmul.f32 %v3777, 0.125
      %v3812 = vmul.f32 %v3778, 0.125
      %v3813 = vmul.f32 %v3779, 0.125
      %v3814 = vmul.f32 %v3780, 0.125
      %v3815 = vmul.f32 %v3781, 0.125
      %v3816 = vmul.f32 %v3782, 0.125
      %v3817 = vmul.f32 %v3783, 0.125
      %v3818 = vmul.f32 %v3784, 0.125
      %v3819 = vmul.f32 %v3785, 0.125
      %v3820 = vmul.f32 %v3786, 0.125
      %v3821 = vmul.f32 %v3787, 0.125
      %v3822 = vmul.f32 %v3788, 0.125
      %v3823 = vmul.f32 %v3789, 0.125
      %v3824 = vmul.f32 %v3790, 0.125
      %v3825 = vmul.f32 %v3791, 0.125
      %v3826 = vmul.f32 %v3792, 0.125
      %v3827 = vmul.f32 %v3793, 0.125
      %v3828 = vmul.f32 %v3794, 0.125
      %v3829 = vmul.f32 %v3795, 0.125
      %v3830 = vmul.f32 %v3796, 0.125
      %v3831 = vmul.f32 %v3797, 0.125
      %v3832 = vmul.f32 %v3798, 0.125
      %v3833 = vmul.f32 %v3799, 0.125
      %v3834 = vmul.f32 %v3800, 0.125
      %v3835 = vmul.f32 %v3801, 0.125
      %v3836 = vmul.f32 %v3802, 0.125
      %v3837 = vmul.f32 %v3803, 0.125
      %v3838 = vmul.f32 %v3804, 0.125
      %v3839 = vld [vmem:[#allocation4 + $0x12] sm:$0xff]
      %v3840 = vld [vmem:[#allocation4 + $0x1a] sm:$0xff]
      %v3841 = vld [vmem:[#allocation4 + $0x22] sm:$0xff]
      %v3842 = vld [vmem:[#allocation4 + $0x2a] sm:$0xff]
      %v3843 = vld [vmem:[#allocation4 + $0x32] sm:$0xff]
      %v3844 = vld [vmem:[#allocation4 + $0x3a] sm:$0xff]
      %v3845 = vld [vmem:[#allocation4 + $0x42] sm:$0xff]
      %v3846 = vld [vmem:[#allocation4 + $0x4a] sm:$0xff]
      %v3847 = vld [vmem:[#allocation4 + $0x52] sm:$0xff]
      %v3848 = vld [vmem:[#allocation4 + $0x5a] sm:$0xff]
      %v3849 = vld [vmem:[#allocation4 + $0x62] sm:$0xff]
      %v3850 = vld [vmem:[#allocation4 + $0x6a] sm:$0xff]
      %v3851 = vld [vmem:[#allocation4 + $0x72] sm:$0xff]
      %v3852 = vld [vmem:[#allocation4 + $0x7a] sm:$0xff]
      %v3853 = vld [vmem:[#allocation4 + $0x82] sm:$0xff]
      %v3854 = vld [vmem:[#allocation4 + $0x8a] sm:$0xff]
      %v3855 = vld [vmem:[#allocation4 + $0x92] sm:$0xff]
      %v3856 = vld [vmem:[#allocation4 + $0x9a] sm:$0xff]
      %v3857 = vld [vmem:[#allocation4 + $0xa2] sm:$0xff]
      %v3858 = vld [vmem:[#allocation4 + $0xaa] sm:$0xff]
      %v3859 = vld [vmem:[#allocation4 + $0xb2] sm:$0xff]
      %v3860 = vld [vmem:[#allocation4 + $0xba] sm:$0xff]
      %v3861 = vld [vmem:[#allocation4 + $0xc2] sm:$0xff]
      %v3862 = vld [vmem:[#allocation4 + $0xca] sm:$0xff]
      %v3863 = vld [vmem:[#allocation4 + $0xd2] sm:$0xff]
      %v3864 = vld [vmem:[#allocation4 + $0xda] sm:$0xff]
      %v3865 = vld [vmem:[#allocation4 + $0xe2] sm:$0xff]
      %v3866 = vld [vmem:[#allocation4 + $0xea] sm:$0xff]
      %v3867 = vld [vmem:[#allocation4 + $0xf2] sm:$0xff]
      %v3868 = vld [vmem:[#allocation4 + $0xfa] sm:$0xff]
      %v3869 = vld [vmem:[#allocation4 + $0x102] sm:$0xff]
      %v3870 = vld [vmem:[#allocation4 + $0x10a] sm:$0xff]
      %v3871 = vld [vmem:[#allocation4 + $0x112] sm:$0xff]
      %v3872 = vld [vmem:[#allocation4 + $0x11a] sm:$0x3f]
      %v3873 = vmul.f32 %v3839, 0.375
      %v3874 = vmul.f32 %v3840, 0.375
      %v3875 = vmul.f32 %v3841, 0.375
      %v3876 = vmul.f32 %v3842, 0.375
      %v3877 = vmul.f32 %v3843, 0.375
      %v3878 = vmul.f32 %v3844, 0.375
      %v3879 = vmul.f32 %v3845, 0.375
      %v3880 = vmul.f32 %v3846, 0.375
      %v3881 = vmul.f32 %v3847, 0.375
      %v3882 = vmul.f32 %v3848, 0.375
      %v3883 = vmul.f32 %v3849, 0.375
      %v3884 = vmul.f32 %v3850, 0.375
      %v3885 = vmul.f32 %v3851, 0.375
      %v3886 = vmul.f32 %v3852, 0.375
      %v3887 = vmul.f32 %v3853, 0.375
      %v3888 = vmul.f32 %v3854, 0.375
      %v3889 = vmul.f32 %v3855, 0.375
      %v3890 = vmul.f32 %v3856, 0.375
      %v3891 = vmul.f32 %v3857, 0.375
      %v3892 = vmul.f32 %v3858, 0.375
      %v3893 = vmul.f32 %v3859, 0.375
      %v3894 = vmul.f32 %v3860, 0.375
      %v3895 = vmul.f32 %v3861, 0.375
      %v3896 = vmul.f32 %v3862, 0.375
      %v3897 = vmul.f32 %v3863, 0.375
      %v3898 = vmul.f32 %v3864, 0.375
      %v3899 = vmul.f32 %v3865, 0.375
      %v3900 = vmul.f32 %v3866, 0.375
      %v3901 = vmul.f32 %v3867, 0.375
      %v3902 = vmul.f32 %v3868, 0.375
      %v3903 = vmul.f32 %v3869, 0.375
      %v3904 = vmul.f32 %v3870, 0.375
      %v3905 = vmul.f32 %v3871, 0.375
      %v3906 = vmul.f32 %v3872, 0.375
      %v3907 = vadd.f32 %v3805, %v3873
      %v3908 = vadd.f32 %v3806, %v3874
      %v3909 = vadd.f32 %v3807, %v3875
      %v3910 = vadd.f32 %v3808, %v3876
      %v3911 = vadd.f32 %v3809, %v3877
      %v3912 = vadd.f32 %v3810, %v3878
      %v3913 = vadd.f32 %v3811, %v3879
      %v3914 = vadd.f32 %v3812, %v3880
      %v3915 = vadd.f32 %v3813, %v3881
      %v3916 = vadd.f32 %v3814, %v3882
      %v3917 = vadd.f32 %v3815, %v3883
      %v3918 = vadd.f32 %v3816, %v3884
      %v3919 = vadd.f32 %v3817, %v3885
      %v3920 = vadd.f32 %v3818, %v3886
      %v3921 = vadd.f32 %v3819, %v3887
      %v3922 = vadd.f32 %v3820, %v3888
      %v3923 = vadd.f32 %v3821, %v3889
      %v3924 = vadd.f32 %v3822, %v3890
      %v3925 = vadd.f32 %v3823, %v3891
      %v3926 = vadd.f32 %v3824, %v3892
      %v3927 = vadd.f32 %v3825, %v3893
      %v3928 = vadd.f32 %v3826, %v3894
      %v3929 = vadd.f32 %v3827, %v3895
      %v3930 = vadd.f32 %v3828, %v3896
      %v3931 = vadd.f32 %v3829, %v3897
      %v3932 = vadd.f32 %v3830, %v3898
      %v3933 = vadd.f32 %v3831, %v3899
      %v3934 = vadd.f32 %v3832, %v3900
      %v3935 = vadd.f32 %v3833, %v3901
      %v3936 = vadd.f32 %v3834, %v3902
      %v3937 = vadd.f32 %v3835, %v3903
      %v3938 = vadd.f32 %v3836, %v3904
      %v3939 = vadd.f32 %v3837, %v3905
      %v3940 = vadd.f32 %v3838, %v3906
      %v3941 = vld [vmem:[#allocation4 + $0x24] sm:$0xff]
      %v3942 = vld [vmem:[#allocation4 + $0x2c] sm:$0xff]
      %v3943 = vld [vmem:[#allocation4 + $0x34] sm:$0xff]
      %v3944 = vld [vmem:[#allocation4 + $0x3c] sm:$0xff]
      %v3945 = vld [vmem:[#allocation4 + $0x44] sm:$0xff]
      %v3946 = vld [vmem:[#allocation4 + $0x4c] sm:$0xff]
      %v3947 = vld [vmem:[#allocation4 + $0x54] sm:$0xff]
      %v3948 = vld [vmem:[#allocation4 + $0x5c] sm:$0xff]
      %v3949 = vld [vmem:[#allocation4 + $0x64] sm:$0xff]
      %v3950 = vld [vmem:[#allocation4 + $0x6c] sm:$0xff]
      %v3951 = vld [vmem:[#allocation4 + $0x74] sm:$0xff]
      %v3952 = vld [vmem:[#allocation4 + $0x7c] sm:$0xff]
      %v3953 = vld [vmem:[#allocation4 + $0x84] sm:$0xff]
      %v3954 = vld [vmem:[#allocation4 + $0x8c] sm:$0xff]
      %v3955 = vld [vmem:[#allocation4 + $0x94] sm:$0xff]
      %v3956 = vld [vmem:[#allocation4 + $0x9c] sm:$0xff]
      %v3957 = vld [vmem:[#allocation4 + $0xa4] sm:$0xff]
      %v3958 = vld [vmem:[#allocation4 + $0xac] sm:$0xff]
      %v3959 = vld [vmem:[#allocation4 + $0xb4] sm:$0xff]
      %v3960 = vld [vmem:[#allocation4 + $0xbc] sm:$0xff]
      %v3961 = vld [vmem:[#allocation4 + $0xc4] sm:$0xff]
      %v3962 = vld [vmem:[#allocation4 + $0xcc] sm:$0xff]
      %v3963 = vld [vmem:[#allocation4 + $0xd4] sm:$0xff]
      %v3964 = vld [vmem:[#allocation4 + $0xdc] sm:$0xff]
      %v3965 = vld [vmem:[#allocation4 + $0xe4] sm:$0xff]
      %v3966 = vld [vmem:[#allocation4 + $0xec] sm:$0xff]
      %v3967 = vld [vmem:[#allocation4 + $0xf4] sm:$0xff]
      %v3968 = vld [vmem:[#allocation4 + $0xfc] sm:$0xff]
      %v3969 = vld [vmem:[#allocation4 + $0x104] sm:$0xff]
      %v3970 = vld [vmem:[#allocation4 + $0x10c] sm:$0xff]
      %v3971 = vld [vmem:[#allocation4 + $0x114] sm:$0xff]
      %v3972 = vld [vmem:[#allocation4 + $0x11c] sm:$0xff]
      %v3973 = vld [vmem:[#allocation4 + $0x124] sm:$0xff]
      %v3974 = vld [vmem:[#allocation4 + $0x12c] sm:$0x3f]
      %v3975 = vmul.f32 %v3941, 0.375
      %v3976 = vmul.f32 %v3942, 0.375
      %v3977 = vmul.f32 %v3943, 0.375
      %v3978 = vmul.f32 %v3944, 0.375
      %v3979 = vmul.f32 %v3945, 0.375
      %v3980 = vmul.f32 %v3946, 0.375
      %v3981 = vmul.f32 %v3947, 0.375
      %v3982 = vmul.f32 %v3948, 0.375
      %v3983 = vmul.f32 %v3949, 0.375
      %v3984 = vmul.f32 %v3950, 0.375
      %v3985 = vmul.f32 %v3951, 0.375
      %v3986 = vmul.f32 %v3952, 0.375
      %v3987 = vmul.f32 %v3953, 0.375
      %v3988 = vmul.f32 %v3954, 0.375
      %v3989 = vmul.f32 %v3955, 0.375
      %v3990 = vmul.f32 %v3956, 0.375
      %v3991 = vmul.f32 %v3957, 0.375
      %v3992 = vmul.f32 %v3958, 0.375
      %v3993 = vmul.f32 %v3959, 0.375
      %v3994 = vmul.f32 %v3960, 0.375
      %v3995 = vmul.f32 %v3961, 0.375
      %v3996 = vmul.f32 %v3962, 0.375
      %v3997 = vmul.f32 %v3963, 0.375
      %v3998 = vmul.f32 %v3964, 0.375
      %v3999 = vmul.f32 %v3965, 0.375
      %v4000 = vmul.f32 %v3966, 0.375
      %v4001 = vmul.f32 %v3967, 0.375
      %v4002 = vmul.f32 %v3968, 0.375
      %v4003 = vmul.f32 %v3969, 0.375
      %v4004 = vmul.f32 %v3970, 0.375
      %v4005 = vmul.f32 %v3971, 0.375
      %v4006 = vmul.f32 %v3972, 0.375
      %v4007 = vmul.f32 %v3973, 0.375
      %v4008 = vmul.f32 %v3974, 0.375
      %v4009 = vadd.f32 %v3907, %v3975
      %v4010 = vadd.f32 %v3908, %v3976
      %v4011 = vadd.f32 %v3909, %v3977
      %v4012 = vadd.f32 %v3910, %v3978
      %v4013 = vadd.f32 %v3911, %v3979
      %v4014 = vadd.f32 %v3912, %v3980
      %v4015 = vadd.f32 %v3913, %v3981
      %v4016 = vadd.f32 %v3914, %v3982
      %v4017 = vadd.f32 %v3915, %v3983
      %v4018 = vadd.f32 %v3916, %v3984
      %v4019 = vadd.f32 %v3917, %v3985
      %v4020 = vadd.f32 %v3918, %v3986
      %v4021 = vadd.f32 %v3919, %v3987
      %v4022 = vadd.f32 %v3920, %v3988
      %v4023 = vadd.f32 %v3921, %v3989
      %v4024 = vadd.f32 %v3922, %v3990
      %v4025 = vadd.f32 %v3923, %v3991
      %v4026 = vadd.f32 %v3924, %v3992
      %v4027 = vadd.f32 %v3925, %v3993
      %v4028 = vadd.f32 %v3926, %v3994
      %v4029 = vadd.f32 %v3927, %v3995
      %v4030 = vadd.f32 %v3928, %v3996
      %v4031 = vadd.f32 %v3929, %v3997
      %v4032 = vadd.f32 %v3930, %v3998
      %v4033 = vadd.f32 %v3931, %v3999
      %v4034 = vadd.f32 %v3932, %v4000
      %v4035 = vadd.f32 %v3933, %v4001
      %v4036 = vadd.f32 %v3934, %v4002
      %v4037 = vadd.f32 %v3935, %v4003
      %v4038 = vadd.f32 %v3936, %v4004
      %v4039 = vadd.f32 %v3937, %v4005
      %v4040 = vadd.f32 %v3938, %v4006
      %v4041 = vadd.f32 %v3939, %v4007
      %v4042 = vadd.f32 %v3940, %v4008
      %v4043 = vld [vmem:[#allocation4 + $0x36] sm:$0xff]
      %v4044 = vld [vmem:[#allocation4 + $0x3e] sm:$0xff]
      %v4045 = vld [vmem:[#allocation4 + $0x46] sm:$0xff]
      %v4046 = vld [vmem:[#allocation4 + $0x4e] sm:$0xff]
      %v4047 = vld [vmem:[#allocation4 + $0x56] sm:$0xff]
      %v4048 = vld [vmem:[#allocation4 + $0x5e] sm:$0xff]
      %v4049 = vld [vmem:[#allocation4 + $0x66] sm:$0xff]
      %v4050 = vld [vmem:[#allocation4 + $0x6e] sm:$0xff]
      %v4051 = vld [vmem:[#allocation4 + $0x76] sm:$0xff]
      %v4052 = vld [vmem:[#allocation4 + $0x7e] sm:$0xff]
      %v4053 = vld [vmem:[#allocation4 + $0x86] sm:$0xff]
      %v4054 = vld [vmem:[#allocation4 + $0x8e] sm:$0xff]
      %v4055 = vld [vmem:[#allocation4 + $0x96] sm:$0xff]
      %v4056 = vld [vmem:[#allocation4 + $0x9e] sm:$0xff]
      %v4057 = vld [vmem:[#allocation4 + $0xa6] sm:$0xff]
      %v4058 = vld [vmem:[#allocation4 + $0xae] sm:$0xff]
      %v4059 = vld [vmem:[#allocation4 + $0xb6] sm:$0xff]
      %v4060 = vld [vmem:[#allocation4 + $0xbe] sm:$0xff]
      %v4061 = vld [vmem:[#allocation4 + $0xc6] sm:$0xff]
      %v4062 = vld [vmem:[#allocation4 + $0xce] sm:$0xff]
      %v4063 = vld [vmem:[#allocation4 + $0xd6] sm:$0xff]
      %v4064 = vld [vmem:[#allocation4 + $0xde] sm:$0xff]
      %v4065 = vld [vmem:[#allocation4 + $0xe6] sm:$0xff]
      %v4066 = vld [vmem:[#allocation4 + $0xee] sm:$0xff]
      %v4067 = vld [vmem:[#allocation4 + $0xf6] sm:$0xff]
      %v4068 = vld [vmem:[#allocation4 + $0xfe] sm:$0xff]
      %v4069 = vld [vmem:[#allocation4 + $0x106] sm:$0xff]
      %v4070 = vld [vmem:[#allocation4 + $0x10e] sm:$0xff]
      %v4071 = vld [vmem:[#allocation4 + $0x116] sm:$0xff]
      %v4072 = vld [vmem:[#allocation4 + $0x11e] sm:$0xff]
      %v4073 = vld [vmem:[#allocation4 + $0x126] sm:$0xff]
      %v4074 = vld [vmem:[#allocation4 + $0x12e] sm:$0xff]
      %v4075 = vld [vmem:[#allocation4 + $0x136] sm:$0xff]
      %v4076 = vld [vmem:[#allocation4 + $0x13e] sm:$0x3f]
      %v4077 = vmul.f32 %v4043, 0.125
      %v4078 = vmul.f32 %v4044, 0.125
      %v4079 = vmul.f32 %v4045, 0.125
      %v4080 = vmul.f32 %v4046, 0.125
      %v4081 = vmul.f32 %v4047, 0.125
      %v4082 = vmul.f32 %v4048, 0.125
      %v4083 = vmul.f32 %v4049, 0.125
      %v4084 = vmul.f32 %v4050, 0.125
      %v4085 = vmul.f32 %v4051, 0.125
      %v4086 = vmul.f32 %v4052, 0.125
      %v4087 = vmul.f32 %v4053, 0.125
      %v4088 = vmul.f32 %v4054, 0.125
      %v4089 = vmul.f32 %v4055, 0.125
      %v4090 = vmul.f32 %v4056, 0.125
      %v4091 = vmul.f32 %v4057, 0.125
      %v4092 = vmul.f32 %v4058, 0.125
      %v4093 = vmul.f32 %v4059, 0.125
      %v4094 = vmul.f32 %v4060, 0.125
      %v4095 = vmul.f32 %v4061, 0.125
      %v4096 = vmul.f32 %v4062, 0.125
      %v4097 = vmul.f32 %v4063, 0.125
      %v4098 = vmul.f32 %v4064, 0.125
      %v4099 = vmul.f32 %v4065, 0.125
      %v4100 = vmul.f32 %v4066, 0.125
      %v4101 = vmul.f32 %v4067, 0.125
      %v4102 = vmul.f32 %v4068, 0.125
      %v4103 = vmul.f32 %v4069, 0.125
      %v4104 = vmul.f32 %v4070, 0.125
      %v4105 = vmul.f32 %v4071, 0.125
      %v4106 = vmul.f32 %v4072, 0.125
      %v4107 = vmul.f32 %v4073, 0.125
      %v4108 = vmul.f32 %v4074, 0.125
      %v4109 = vmul.f32 %v4075, 0.125
      %v4110 = vmul.f32 %v4076, 0.125
      %v4111 = vadd.f32 %v4009, %v4077
      %v4112 = vadd.f32 %v4010, %v4078
      %v4113 = vadd.f32 %v4011, %v4079
      %v4114 = vadd.f32 %v4012, %v4080
      %v4115 = vadd.f32 %v4013, %v4081
      %v4116 = vadd.f32 %v4014, %v4082
      %v4117 = vadd.f32 %v4015, %v4083
      %v4118 = vadd.f32 %v4016, %v4084
      %v4119 = vadd.f32 %v4017, %v4085
      %v4120 = vadd.f32 %v4018, %v4086
      %v4121 = vadd.f32 %v4019, %v4087
      %v4122 = vadd.f32 %v4020, %v4088
      %v4123 = vadd.f32 %v4021, %v4089
      %v4124 = vadd.f32 %v4022, %v4090
      %v4125 = vadd.f32 %v4023, %v4091
      %v4126 = vadd.f32 %v4024, %v4092
      %v4127 = vadd.f32 %v4025, %v4093
      %v4128 = vadd.f32 %v4026, %v4094
      %v4129 = vadd.f32 %v4027, %v4095
      %v4130 = vadd.f32 %v4028, %v4096
      %v4131 = vadd.f32 %v4029, %v4097
      %v4132 = vadd.f32 %v4030, %v4098
      %v4133 = vadd.f32 %v4031, %v4099
      %v4134 = vadd.f32 %v4032, %v4100
      %v4135 = vadd.f32 %v4033, %v4101
      %v4136 = vadd.f32 %v4034, %v4102
      %v4137 = vadd.f32 %v4035, %v4103
      %v4138 = vadd.f32 %v4036, %v4104
      %v4139 = vadd.f32 %v4037, %v4105
      %v4140 = vadd.f32 %v4038, %v4106
      %v4141 = vadd.f32 %v4039, %v4107
      %v4142 = vadd.f32 %v4040, %v4108
      %v4143 = vadd.f32 %v4041, %v4109
      %v4144 = vadd.f32 %v4042, %v4110
      %vm4145 = vcmp.lt.s32.totalorder %v3062, 15
      %vm4146 = vcmp.lt.s32.totalorder %v3063, 15
      %vm4147 = vcmp.lt.s32.totalorder %v3064, 15
      %vm4148 = vcmp.lt.s32.totalorder %v3065, 15
      %vm4149 = vcmp.lt.s32.totalorder %v3066, 15
      %vm4150 = vcmp.lt.s32.totalorder %v3067, 15
      %vm4151 = vcmp.lt.s32.totalorder %v3068, 15
      %vm4152 = vcmp.lt.s32.totalorder %v3069, 15
      %vm4153 = vcmp.lt.s32.totalorder %v3070, 15
      %vm4154 = vcmp.lt.s32.totalorder %v3071, 15
      %vm4155 = vcmp.lt.s32.totalorder %v3072, 15
      %vm4156 = vcmp.lt.s32.totalorder %v3073, 15
      %vm4157 = vcmp.lt.s32.totalorder %v3074, 15
      %vm4158 = vcmp.lt.s32.totalorder %v3075, 15
      %vm4159 = vcmp.lt.s32.totalorder %v3076, 15
      %vm4160 = vcmp.lt.s32.totalorder %v3077, 15
      %vm4161 = vcmp.lt.s32.totalorder %v3078, 15
      %vm4162 = vcmp.lt.s32.totalorder %v3079, 15
      %vm4163 = vcmp.lt.s32.totalorder %v3080, 15
      %vm4164 = vcmp.lt.s32.totalorder %v3081, 15
      %vm4165 = vcmp.lt.s32.totalorder %v3082, 15
      %vm4166 = vcmp.lt.s32.totalorder %v3083, 15
      %vm4167 = vcmp.lt.s32.totalorder %v3084, 15
      %vm4168 = vcmp.lt.s32.totalorder %v3085, 15
      %vm4169 = vcmp.lt.s32.totalorder %v3086, 15
      %vm4170 = vcmp.lt.s32.totalorder %v3087, 15
      %vm4171 = vcmp.lt.s32.totalorder %v3088, 15
      %vm4172 = vcmp.lt.s32.totalorder %v3089, 15
      %vm4173 = vcmp.lt.s32.totalorder %v3090, 15
      %vm4174 = vcmp.lt.s32.totalorder %v3091, 15
      %vm4175 = vcmp.lt.s32.totalorder %v3092, 15
      %vm4176 = vcmp.lt.s32.totalorder %v3093, 15
      %vm4177 = vcmp.lt.s32.totalorder %v3094, 15
      %vm4178 = vcmp.lt.s32.totalorder %v3095, 15
      %v4179 = vsel %vm4145, 1, 0
      %v4180 = vsel %vm4146, 1, 0
      %v4181 = vsel %vm4147, 1, 0
      %v4182 = vsel %vm4148, 1, 0
      %v4183 = vsel %vm4149, 1, 0
      %v4184 = vsel %vm4150, 1, 0
      %v4185 = vsel %vm4151, 1, 0
      %v4186 = vsel %vm4152, 1, 0
      %v4187 = vsel %vm4153, 1, 0
      %v4188 = vsel %vm4154, 1, 0
      %v4189 = vsel %vm4155, 1, 0
      %v4190 = vsel %vm4156, 1, 0
      %v4191 = vsel %vm4157, 1, 0
      %v4192 = vsel %vm4158, 1, 0
      %v4193 = vsel %vm4159, 1, 0
      %v4194 = vsel %vm4160, 1, 0
      %v4195 = vsel %vm4161, 1, 0
      %v4196 = vsel %vm4162, 1, 0
      %v4197 = vsel %vm4163, 1, 0
      %v4198 = vsel %vm4164, 1, 0
      %v4199 = vsel %vm4165, 1, 0
      %v4200 = vsel %vm4166, 1, 0
      %v4201 = vsel %vm4167, 1, 0
      %v4202 = vsel %vm4168, 1, 0
      %v4203 = vsel %vm4169, 1, 0
      %v4204 = vsel %vm4170, 1, 0
      %v4205 = vsel %vm4171, 1, 0
      %v4206 = vsel %vm4172, 1, 0
      %v4207 = vsel %vm4173, 1, 0
      %v4208 = vsel %vm4174, 1, 0
      %v4209 = vsel %vm4175, 1, 0
      %v4210 = vsel %vm4176, 1, 0
      %v4211 = vsel %vm4177, 1, 0
      %v4212 = vsel %vm4178, 1, 0
      %vm4213 = vcmp.eq.s32.totalorder %v4179, 1
      %vm4214 = vcmp.eq.s32.totalorder %v4180, 1
      %vm4215 = vcmp.eq.s32.totalorder %v4181, 1
      %vm4216 = vcmp.eq.s32.totalorder %v4182, 1
      %vm4217 = vcmp.eq.s32.totalorder %v4183, 1
      %vm4218 = vcmp.eq.s32.totalorder %v4184, 1
      %vm4219 = vcmp.eq.s32.totalorder %v4185, 1
      %vm4220 = vcmp.eq.s32.totalorder %v4186, 1
      %vm4221 = vcmp.eq.s32.totalorder %v4187, 1
      %vm4222 = vcmp.eq.s32.totalorder %v4188, 1
      %vm4223 = vcmp.eq.s32.totalorder %v4189, 1
      %vm4224 = vcmp.eq.s32.totalorder %v4190, 1
      %vm4225 = vcmp.eq.s32.totalorder %v4191, 1
      %vm4226 = vcmp.eq.s32.totalorder %v4192, 1
      %vm4227 = vcmp.eq.s32.totalorder %v4193, 1
      %vm4228 = vcmp.eq.s32.totalorder %v4194, 1
      %vm4229 = vcmp.eq.s32.totalorder %v4195, 1
      %vm4230 = vcmp.eq.s32.totalorder %v4196, 1
      %vm4231 = vcmp.eq.s32.totalorder %v4197, 1
      %vm4232 = vcmp.eq.s32.totalorder %v4198, 1
      %vm4233 = vcmp.eq.s32.totalorder %v4199, 1
      %vm4234 = vcmp.eq.s32.totalorder %v4200, 1
      %vm4235 = vcmp.eq.s32.totalorder %v4201, 1
      %vm4236 = vcmp.eq.s32.totalorder %v4202, 1
      %vm4237 = vcmp.eq.s32.totalorder %v4203, 1
      %vm4238 = vcmp.eq.s32.totalorder %v4204, 1
      %vm4239 = vcmp.eq.s32.totalorder %v4205, 1
      %vm4240 = vcmp.eq.s32.totalorder %v4206, 1
      %vm4241 = vcmp.eq.s32.totalorder %v4207, 1
      %vm4242 = vcmp.eq.s32.totalorder %v4208, 1
      %vm4243 = vcmp.eq.s32.totalorder %v4209, 1
      %vm4244 = vcmp.eq.s32.totalorder %v4210, 1
      %vm4245 = vcmp.eq.s32.totalorder %v4211, 1
      %vm4246 = vcmp.eq.s32.totalorder %v4212, 1
      %v4247 = vsel %vm4213, %v4111, 0.0
      %v4248 = vsel %vm4214, %v4112, 0.0
      %v4249 = vsel %vm4215, %v4113, 0.0
      %v4250 = vsel %vm4216, %v4114, 0.0
      %v4251 = vsel %vm4217, %v4115, 0.0
      %v4252 = vsel %vm4218, %v4116, 0.0
      %v4253 = vsel %vm4219, %v4117, 0.0
      %v4254 = vsel %vm4220, %v4118, 0.0
      %v4255 = vsel %vm4221, %v4119, 0.0
      %v4256 = vsel %vm4222, %v4120, 0.0
      %v4257 = vsel %vm4223, %v4121, 0.0
      %v4258 = vsel %vm4224, %v4122, 0.0
      %v4259 = vsel %vm4225, %v4123, 0.0
      %v4260 = vsel %vm4226, %v4124, 0.0
      %v4261 = vsel %vm4227, %v4125, 0.0
      %v4262 = vsel %vm4228, %v4126, 0.0
      %v4263 = vsel %vm4229, %v4127, 0.0
      %v4264 = vsel %vm4230, %v4128, 0.0
      %v4265 = vsel %vm4231, %v4129, 0.0
      %v4266 = vsel %vm4232, %v4130, 0.0
      %v4267 = vsel %vm4233, %v4131, 0.0
      %v4268 = vsel %vm4234, %v4132, 0.0
      %v4269 = vsel %vm4235, %v4133, 0.0
      %v4270 = vsel %vm4236, %v4134, 0.0
      %v4271 = vsel %vm4237, %v4135, 0.0
      %v4272 = vsel %vm4238, %v4136, 0.0
      %v4273 = vsel %vm4239, %v4137, 0.0
      %v4274 = vsel %vm4240, %v4138, 0.0
      %v4275 = vsel %vm4241, %v4139, 0.0
      %v4276 = vsel %vm4242, %v4140, 0.0
      %v4277 = vsel %vm4243, %v4141, 0.0
      %v4278 = vsel %vm4244, %v4142, 0.0
      %v4279 = vsel %vm4245, %v4143, 0.0
      %v4280 = vsel %vm4246, %v4144, 0.0
      %4281 = vst.msk [vmem:[#allocation3 + $0x13] sm:$0xff] %vm197, %v4247
      %4282 = vst.msk [vmem:[#allocation3 + $0x1b] sm:$0xff] %vm197, %v4248
      %4283 = vst.msk [vmem:[#allocation3 + $0x23] sm:$0xff] %vm197, %v4249
      %4284 = vst.msk [vmem:[#allocation3 + $0x2b] sm:$0xff] %vm197, %v4250
      %4285 = vst.msk [vmem:[#allocation3 + $0x33] sm:$0xff] %vm197, %v4251
      %4286 = vst.msk [vmem:[#allocation3 + $0x3b] sm:$0xff] %vm197, %v4252
      %4287 = vst.msk [vmem:[#allocation3 + $0x43] sm:$0xff] %vm197, %v4253
      %4288 = vst.msk [vmem:[#allocation3 + $0x4b] sm:$0xff] %vm197, %v4254
      %4289 = vst.msk [vmem:[#allocation3 + $0x53] sm:$0xff] %vm197, %v4255
      %4290 = vst.msk [vmem:[#allocation3 + $0x5b] sm:$0xff] %vm197, %v4256
      %4291 = vst.msk [vmem:[#allocation3 + $0x63] sm:$0xff] %vm197, %v4257
      %4292 = vst.msk [vmem:[#allocation3 + $0x6b] sm:$0xff] %vm197, %v4258
      %4293 = vst.msk [vmem:[#allocation3 + $0x73] sm:$0xff] %vm197, %v4259
      %4294 = vst.msk [vmem:[#allocation3 + $0x7b] sm:$0xff] %vm197, %v4260
      %4295 = vst.msk [vmem:[#allocation3 + $0x83] sm:$0xff] %vm197, %v4261
      %4296 = vst.msk [vmem:[#allocation3 + $0x8b] sm:$0xff] %vm197, %v4262
      %4297 = vst.msk [vmem:[#allocation3 + $0x93] sm:$0xff] %vm197, %v4263
      %4298 = vst.msk [vmem:[#allocation3 + $0x9b] sm:$0xff] %vm197, %v4264
      %4299 = vst.msk [vmem:[#allocation3 + $0xa3] sm:$0xff] %vm197, %v4265
      %4300 = vst.msk [vmem:[#allocation3 + $0xab] sm:$0xff] %vm197, %v4266
      %4301 = vst.msk [vmem:[#allocation3 + $0xb3] sm:$0xff] %vm197, %v4267
      %4302 = vst.msk [vmem:[#allocation3 + $0xbb] sm:$0xff] %vm197, %v4268
      %4303 = vst.msk [vmem:[#allocation3 + $0xc3] sm:$0xff] %vm197, %v4269
      %4304 = vst.msk [vmem:[#allocation3 + $0xcb] sm:$0xff] %vm197, %v4270
      %4305 = vst.msk [vmem:[#allocation3 + $0xd3] sm:$0xff] %vm197, %v4271
      %4306 = vst.msk [vmem:[#allocation3 + $0xdb] sm:$0xff] %vm197, %v4272
      %4307 = vst.msk [vmem:[#allocation3 + $0xe3] sm:$0xff] %vm197, %v4273
      %4308 = vst.msk [vmem:[#allocation3 + $0xeb] sm:$0xff] %vm197, %v4274
      %4309 = vst.msk [vmem:[#allocation3 + $0xf3] sm:$0xff] %vm197, %v4275
      %4310 = vst.msk [vmem:[#allocation3 + $0xfb] sm:$0xff] %vm197, %v4276
      %4311 = vst.msk [vmem:[#allocation3 + $0x103] sm:$0xff] %vm197, %v4277
      %4312 = vst.msk [vmem:[#allocation3 + $0x10b] sm:$0xff] %vm197, %v4278
      %4313 = vst.msk [vmem:[#allocation3 + $0x113] sm:$0xff] %vm197, %v4279
      %vm4314 = vcmask 29696
      %4315 = vst.msk [vmem:[#allocation3 + $0x11b] sm:$0x3f] %vm4314, %v4280
      %v4316 = vld [vmem:[#allocation3] ss:$2 sm:$0xff]
      %s4317 = scalar_lea.vmem [#allocation3], 16
      %v4318 = vld [vmem:[%s4317] ss:$2 sm:$0xff]
      %s4319 = scalar_lea.vmem [#allocation3], 32
      %v4320 = vld [vmem:[%s4319] ss:$2 sm:$0xff]
      %s4321 = scalar_lea.vmem [#allocation3], 48
      %v4322 = vld [vmem:[%s4321] ss:$2 sm:$0xff]
      %s4323 = scalar_lea.vmem [#allocation3], 64
      %v4324 = vld [vmem:[%s4323] ss:$2 sm:$0xff]
      %s4325 = scalar_lea.vmem [#allocation3], 80
      %v4326 = vld [vmem:[%s4325] ss:$2 sm:$0xff]
      %s4327 = scalar_lea.vmem [#allocation3], 96
      %v4328 = vld [vmem:[%s4327] ss:$2 sm:$0xff]
      %s4329 = scalar_lea.vmem [#allocation3], 112
      %v4330 = vld [vmem:[%s4329] ss:$2 sm:$0xff]
      %s4331 = scalar_lea.vmem [#allocation3], 128
      %v4332 = vld [vmem:[%s4331] ss:$2 sm:$0xff]
      %s4333 = scalar_lea.vmem [#allocation3], 144
      %v4334 = vld [vmem:[%s4333] ss:$2 sm:$0xff]
      %s4335 = scalar_lea.vmem [#allocation3], 160
      %v4336 = vld [vmem:[%s4335] ss:$2 sm:$0xff]
      %s4337 = scalar_lea.vmem [#allocation3], 176
      %v4338 = vld [vmem:[%s4337] ss:$2 sm:$0xff]
      %s4339 = scalar_lea.vmem [#allocation3], 192
      %v4340 = vld [vmem:[%s4339] ss:$2 sm:$0xff]
      %s4341 = scalar_lea.vmem [#allocation3], 208
      %v4342 = vld [vmem:[%s4341] ss:$2 sm:$0xff]
      %s4343 = scalar_lea.vmem [#allocation3], 224
      %v4344 = vld [vmem:[%s4343] ss:$2 sm:$0xff]
      %s4345 = scalar_lea.vmem [#allocation3], 240
      %v4346 = vld [vmem:[%s4345] ss:$2 sm:$0xff]
      %s4347 = scalar_lea.vmem [#allocation3], 256
      %v4348 = vld [vmem:[%s4347] ss:$2 sm:$0xff]
      %s4349 = scalar_lea.vmem [#allocation3], 272
      %v4350 = vld [vmem:[%s4349] ss:$2 sm:$0xff]
      %4351 = vst.msk [vmem:[#allocation6] sm:$0xff] %vm197, %v4316
      %4352 = vst.msk [vmem:[#allocation6 + $0x8] sm:$0xff] %vm197, %v4318
      %4353 = vst.msk [vmem:[#allocation6 + $0x10] sm:$0xff] %vm197, %v4320
      %4354 = vst.msk [vmem:[#allocation6 + $0x18] sm:$0xff] %vm197, %v4322
      %4355 = vst.msk [vmem:[#allocation6 + $0x20] sm:$0xff] %vm197, %v4324
      %4356 = vst.msk [vmem:[#allocation6 + $0x28] sm:$0xff] %vm197, %v4326
      %4357 = vst.msk [vmem:[#allocation6 + $0x30] sm:$0xff] %vm197, %v4328
      %4358 = vst.msk [vmem:[#allocation6 + $0x38] sm:$0xff] %vm197, %v4330
      %4359 = vst.msk [vmem:[#allocation6 + $0x40] sm:$0xff] %vm197, %v4332
      %4360 = vst.msk [vmem:[#allocation6 + $0x48] sm:$0xff] %vm197, %v4334
      %4361 = vst.msk [vmem:[#allocation6 + $0x50] sm:$0xff] %vm197, %v4336
      %4362 = vst.msk [vmem:[#allocation6 + $0x58] sm:$0xff] %vm197, %v4338
      %4363 = vst.msk [vmem:[#allocation6 + $0x60] sm:$0xff] %vm197, %v4340
      %4364 = vst.msk [vmem:[#allocation6 + $0x68] sm:$0xff] %vm197, %v4342
      %4365 = vst.msk [vmem:[#allocation6 + $0x70] sm:$0xff] %vm197, %v4344
      %4366 = vst.msk [vmem:[#allocation6 + $0x78] sm:$0xff] %vm197, %v4346
      %4367 = vst.msk [vmem:[#allocation6 + $0x80] sm:$0xff] %vm197, %v4348
      %4368 = vst.msk [vmem:[#allocation6 + $0x88] sm:$0xff] %vm197, %v4350
      %s4369 = scalar_lea.vmem [#allocation3], 1
      %v4370 = vld [vmem:[%s4369] ss:$2 sm:$0xff]
      %s4371 = scalar_lea.vmem [#allocation3], 17
      %v4372 = vld [vmem:[%s4371] ss:$2 sm:$0xff]
      %s4373 = scalar_lea.vmem [#allocation3], 33
      %v4374 = vld [vmem:[%s4373] ss:$2 sm:$0xff]
      %s4375 = scalar_lea.vmem [#allocation3], 49
      %v4376 = vld [vmem:[%s4375] ss:$2 sm:$0xff]
      %s4377 = scalar_lea.vmem [#allocation3], 65
      %v4378 = vld [vmem:[%s4377] ss:$2 sm:$0xff]
      %s4379 = scalar_lea.vmem [#allocation3], 81
      %v4380 = vld [vmem:[%s4379] ss:$2 sm:$0xff]
      %s4381 = scalar_lea.vmem [#allocation3], 97
      %v4382 = vld [vmem:[%s4381] ss:$2 sm:$0xff]
      %s4383 = scalar_lea.vmem [#allocation3], 113
      %v4384 = vld [vmem:[%s4383] ss:$2 sm:$0xff]
      %s4385 = scalar_lea.vmem [#allocation3], 129
      %v4386 = vld [vmem:[%s4385] ss:$2 sm:$0xff]
      %s4387 = scalar_lea.vmem [#allocation3], 145
      %v4388 = vld [vmem:[%s4387] ss:$2 sm:$0xff]
      %s4389 = scalar_lea.vmem [#allocation3], 161
      %v4390 = vld [vmem:[%s4389] ss:$2 sm:$0xff]
      %s4391 = scalar_lea.vmem [#allocation3], 177
      %v4392 = vld [vmem:[%s4391] ss:$2 sm:$0xff]
      %s4393 = scalar_lea.vmem [#allocation3], 193
      %v4394 = vld [vmem:[%s4393] ss:$2 sm:$0xff]
      %s4395 = scalar_lea.vmem [#allocation3], 209
      %v4396 = vld [vmem:[%s4395] ss:$2 sm:$0xff]
      %s4397 = scalar_lea.vmem [#allocation3], 225
      %v4398 = vld [vmem:[%s4397] ss:$2 sm:$0xff]
      %s4399 = scalar_lea.vmem [#allocation3], 241
      %v4400 = vld [vmem:[%s4399] ss:$2 sm:$0xff]
      %s4401 = scalar_lea.vmem [#allocation3], 257
      %v4402 = vld [vmem:[%s4401] ss:$2 sm:$0xff]
      %s4403 = scalar_lea.vmem [#allocation3], 273
      %v4404 = vld [vmem:[%s4403] ss:$2 sm:$0xff]
      %4423 = vrot.lane.b32.xlu0 %v4370, 4
      %v4424 = vpop.permute.xlu0 %4423
      %4425 = vrot.lane.b32.xlu0 %v4372, 4
      %v4426 = vpop.permute.xlu0 %4425
      %4427 = vrot.lane.b32.xlu0 %v4374, 4
      %v4428 = vpop.permute.xlu0 %4427
      %4429 = vrot.lane.b32.xlu0 %v4376, 4
      %v4430 = vpop.permute.xlu0 %4429
      %4431 = vrot.lane.b32.xlu0 %v4378, 4
      %v4432 = vpop.permute.xlu0 %4431
      %4433 = vrot.lane.b32.xlu0 %v4380, 4
      %v4434 = vpop.permute.xlu0 %4433
      %4435 = vrot.lane.b32.xlu0 %v4382, 4
      %v4436 = vpop.permute.xlu0 %4435
      %4437 = vrot.lane.b32.xlu0 %v4384, 4
      %v4438 = vpop.permute.xlu0 %4437
      %4439 = vrot.lane.b32.xlu0 %v4386, 4
      %v4440 = vpop.permute.xlu0 %4439
      %4441 = vrot.lane.b32.xlu0 %v4388, 4
      %v4442 = vpop.permute.xlu0 %4441
      %4443 = vrot.lane.b32.xlu0 %v4390, 4
      %v4444 = vpop.permute.xlu0 %4443
      %4445 = vrot.lane.b32.xlu0 %v4392, 4
      %v4446 = vpop.permute.xlu0 %4445
      %4447 = vrot.lane.b32.xlu0 %v4394, 4
      %v4448 = vpop.permute.xlu0 %4447
      %4449 = vrot.lane.b32.xlu0 %v4396, 4
      %v4450 = vpop.permute.xlu0 %4449
      %4451 = vrot.lane.b32.xlu0 %v4398, 4
      %v4452 = vpop.permute.xlu0 %4451
      %4453 = vrot.lane.b32.xlu0 %v4400, 4
      %v4454 = vpop.permute.xlu0 %4453
      %4455 = vrot.lane.b32.xlu0 %v4402, 4
      %v4456 = vpop.permute.xlu0 %4455
      %4457 = vrot.lane.b32.xlu0 %v4404, 4
      %v4458 = vpop.permute.xlu0 %4457
      %4477 = vst.msk [vmem:[#allocation6] sm:$0xff] %vm475, %v4424
      %4478 = vst.msk [vmem:[#allocation6 + $0x8] sm:$0xff] %vm475, %v4426
      %4479 = vst.msk [vmem:[#allocation6 + $0x10] sm:$0xff] %vm475, %v4428
      %4480 = vst.msk [vmem:[#allocation6 + $0x18] sm:$0xff] %vm475, %v4430
      %4481 = vst.msk [vmem:[#allocation6 + $0x20] sm:$0xff] %vm475, %v4432
      %4482 = vst.msk [vmem:[#allocation6 + $0x28] sm:$0xff] %vm475, %v4434
      %4483 = vst.msk [vmem:[#allocation6 + $0x30] sm:$0xff] %vm475, %v4436
      %4484 = vst.msk [vmem:[#allocation6 + $0x38] sm:$0xff] %vm475, %v4438
      %4485 = vst.msk [vmem:[#allocation6 + $0x40] sm:$0xff] %vm475, %v4440
      %4486 = vst.msk [vmem:[#allocation6 + $0x48] sm:$0xff] %vm475, %v4442
      %4487 = vst.msk [vmem:[#allocation6 + $0x50] sm:$0xff] %vm475, %v4444
      %4488 = vst.msk [vmem:[#allocation6 + $0x58] sm:$0xff] %vm475, %v4446
      %4489 = vst.msk [vmem:[#allocation6 + $0x60] sm:$0xff] %vm475, %v4448
      %4490 = vst.msk [vmem:[#allocation6 + $0x68] sm:$0xff] %vm475, %v4450
      %4491 = vst.msk [vmem:[#allocation6 + $0x70] sm:$0xff] %vm475, %v4452
      %4492 = vst.msk [vmem:[#allocation6 + $0x78] sm:$0xff] %vm475, %v4454
      %4493 = vst.msk [vmem:[#allocation6 + $0x80] sm:$0xff] %vm475, %v4456
      %4494 = vst.msk [vmem:[#allocation6 + $0x88] sm:$0xff] %vm475, %v4458
      %s4495 = scalar_lea.vmem [#allocation3], 2
      %v4496 = vld [vmem:[%s4495] ss:$2 sm:$0xff]
      %s4497 = scalar_lea.vmem [#allocation3], 18
      %v4498 = vld [vmem:[%s4497] ss:$2 sm:$0xff]
      %s4499 = scalar_lea.vmem [#allocation3], 34
      %v4500 = vld [vmem:[%s4499] ss:$2 sm:$0xff]
      %s4501 = scalar_lea.vmem [#allocation3], 50
      %v4502 = vld [vmem:[%s4501] ss:$2 sm:$0xff]
      %s4503 = scalar_lea.vmem [#allocation3], 66
      %v4504 = vld [vmem:[%s4503] ss:$2 sm:$0xff]
      %s4505 = scalar_lea.vmem [#allocation3], 82
      %v4506 = vld [vmem:[%s4505] ss:$2 sm:$0xff]
      %s4507 = scalar_lea.vmem [#allocation3], 98
      %v4508 = vld [vmem:[%s4507] ss:$2 sm:$0xff]
      %s4509 = scalar_lea.vmem [#allocation3], 114
      %v4510 = vld [vmem:[%s4509] ss:$2 sm:$0xff]
      %s4511 = scalar_lea.vmem [#allocation3], 130
      %v4512 = vld [vmem:[%s4511] ss:$2 sm:$0xff]
      %s4513 = scalar_lea.vmem [#allocation3], 146
      %v4514 = vld [vmem:[%s4513] ss:$2 sm:$0xff]
      %s4515 = scalar_lea.vmem [#allocation3], 162
      %v4516 = vld [vmem:[%s4515] ss:$2 sm:$0xff]
      %s4517 = scalar_lea.vmem [#allocation3], 178
      %v4518 = vld [vmem:[%s4517] ss:$2 sm:$0xff]
      %s4519 = scalar_lea.vmem [#allocation3], 194
      %v4520 = vld [vmem:[%s4519] ss:$2 sm:$0xff]
      %s4521 = scalar_lea.vmem [#allocation3], 210
      %v4522 = vld [vmem:[%s4521] ss:$2 sm:$0xff]
      %s4523 = scalar_lea.vmem [#allocation3], 226
      %v4524 = vld [vmem:[%s4523] ss:$2 sm:$0xff]
      %s4525 = scalar_lea.vmem [#allocation3], 242
      %v4526 = vld [vmem:[%s4525] ss:$2 sm:$0xff]
      %s4527 = scalar_lea.vmem [#allocation3], 258
      %v4528 = vld [vmem:[%s4527] ss:$2 sm:$0xff]
      %s4529 = scalar_lea.vmem [#allocation3], 274
      %v4530 = vld [vmem:[%s4529] ss:$2 sm:$0xff]
      %4549 = vrot.lane.b32.xlu0 %v4496, 8
      %v4550 = vpop.permute.xlu0 %4549
      %4551 = vrot.lane.b32.xlu0 %v4498, 8
      %v4552 = vpop.permute.xlu0 %4551
      %4553 = vrot.lane.b32.xlu0 %v4500, 8
      %v4554 = vpop.permute.xlu0 %4553
      %4555 = vrot.lane.b32.xlu0 %v4502, 8
      %v4556 = vpop.permute.xlu0 %4555
      %4557 = vrot.lane.b32.xlu0 %v4504, 8
      %v4558 = vpop.permute.xlu0 %4557
      %4559 = vrot.lane.b32.xlu0 %v4506, 8
      %v4560 = vpop.permute.xlu0 %4559
      %4561 = vrot.lane.b32.xlu0 %v4508, 8
      %v4562 = vpop.permute.xlu0 %4561
      %4563 = vrot.lane.b32.xlu0 %v4510, 8
      %v4564 = vpop.permute.xlu0 %4563
      %4565 = vrot.lane.b32.xlu0 %v4512, 8
      %v4566 = vpop.permute.xlu0 %4565
      %4567 = vrot.lane.b32.xlu0 %v4514, 8
      %v4568 = vpop.permute.xlu0 %4567
      %4569 = vrot.lane.b32.xlu0 %v4516, 8
      %v4570 = vpop.permute.xlu0 %4569
      %4571 = vrot.lane.b32.xlu0 %v4518, 8
      %v4572 = vpop.permute.xlu0 %4571
      %4573 = vrot.lane.b32.xlu0 %v4520, 8
      %v4574 = vpop.permute.xlu0 %4573
      %4575 = vrot.lane.b32.xlu0 %v4522, 8
      %v4576 = vpop.permute.xlu0 %4575
      %4577 = vrot.lane.b32.xlu0 %v4524, 8
      %v4578 = vpop.permute.xlu0 %4577
      %4579 = vrot.lane.b32.xlu0 %v4526, 8
      %v4580 = vpop.permute.xlu0 %4579
      %4581 = vrot.lane.b32.xlu0 %v4528, 8
      %v4582 = vpop.permute.xlu0 %4581
      %4583 = vrot.lane.b32.xlu0 %v4530, 8
      %v4584 = vpop.permute.xlu0 %4583
      %4603 = vst.msk [vmem:[#allocation6] sm:$0xff] %vm692, %v4550
      %4604 = vst.msk [vmem:[#allocation6 + $0x8] sm:$0xff] %vm692, %v4552
      %4605 = vst.msk [vmem:[#allocation6 + $0x10] sm:$0xff] %vm692, %v4554
      %4606 = vst.msk [vmem:[#allocation6 + $0x18] sm:$0xff] %vm692, %v4556
      %4607 = vst.msk [vmem:[#allocation6 + $0x20] sm:$0xff] %vm692, %v4558
      %4608 = vst.msk [vmem:[#allocation6 + $0x28] sm:$0xff] %vm692, %v4560
      %4609 = vst.msk [vmem:[#allocation6 + $0x30] sm:$0xff] %vm692, %v4562
      %4610 = vst.msk [vmem:[#allocation6 + $0x38] sm:$0xff] %vm692, %v4564
      %4611 = vst.msk [vmem:[#allocation6 + $0x40] sm:$0xff] %vm692, %v4566
      %4612 = vst.msk [vmem:[#allocation6 + $0x48] sm:$0xff] %vm692, %v4568
      %4613 = vst.msk [vmem:[#allocation6 + $0x50] sm:$0xff] %vm692, %v4570
      %4614 = vst.msk [vmem:[#allocation6 + $0x58] sm:$0xff] %vm692, %v4572
      %4615 = vst.msk [vmem:[#allocation6 + $0x60] sm:$0xff] %vm692, %v4574
      %4616 = vst.msk [vmem:[#allocation6 + $0x68] sm:$0xff] %vm692, %v4576
      %4617 = vst.msk [vmem:[#allocation6 + $0x70] sm:$0xff] %vm692, %v4578
      %4618 = vst.msk [vmem:[#allocation6 + $0x78] sm:$0xff] %vm692, %v4580
      %4619 = vst.msk [vmem:[#allocation6 + $0x80] sm:$0xff] %vm692, %v4582
      %4620 = vst.msk [vmem:[#allocation6 + $0x88] sm:$0xff] %vm692, %v4584
      %v4621 = vld [vmem:[%s4497] ss:$2 sm:$0xff]
      %v4622 = vld [vmem:[%s4499] ss:$2 sm:$0xff]
      %v4623 = vld [vmem:[%s4501] ss:$2 sm:$0xff]
      %v4624 = vld [vmem:[%s4503] ss:$2 sm:$0xff]
      %v4625 = vld [vmem:[%s4505] ss:$2 sm:$0xff]
      %v4626 = vld [vmem:[%s4507] ss:$2 sm:$0xff]
      %v4627 = vld [vmem:[%s4509] ss:$2 sm:$0xff]
      %v4628 = vld [vmem:[%s4511] ss:$2 sm:$0xff]
      %v4629 = vld [vmem:[%s4513] ss:$2 sm:$0xff]
      %v4630 = vld [vmem:[%s4515] ss:$2 sm:$0xff]
      %v4631 = vld [vmem:[%s4517] ss:$2 sm:$0xff]
      %v4632 = vld [vmem:[%s4519] ss:$2 sm:$0xff]
      %v4633 = vld [vmem:[%s4521] ss:$2 sm:$0xff]
      %v4634 = vld [vmem:[%s4523] ss:$2 sm:$0xff]
      %v4635 = vld [vmem:[%s4525] ss:$2 sm:$0xff]
      %v4636 = vld [vmem:[%s4527] ss:$2 sm:$0xff]
      %v4637 = vld [vmem:[%s4529] ss:$2 sm:$0xff]
      %s4638 = scalar_lea.vmem [#allocation3], 290
      %v4639 = vld [vmem:[%s4638] ss:$2 sm:$0xff]
      %4658 = vrot.lane.b32.xlu0 %v4621, 12
      %v4659 = vpop.permute.xlu0 %4658
      %4660 = vrot.lane.b32.xlu0 %v4622, 12
      %v4661 = vpop.permute.xlu0 %4660
      %4662 = vrot.lane.b32.xlu0 %v4623, 12
      %v4663 = vpop.permute.xlu0 %4662
      %4664 = vrot.lane.b32.xlu0 %v4624, 12
      %v4665 = vpop.permute.xlu0 %4664
      %4666 = vrot.lane.b32.xlu0 %v4625, 12
      %v4667 = vpop.permute.xlu0 %4666
      %4668 = vrot.lane.b32.xlu0 %v4626, 12
      %v4669 = vpop.permute.xlu0 %4668
      %4670 = vrot.lane.b32.xlu0 %v4627, 12
      %v4671 = vpop.permute.xlu0 %4670
      %4672 = vrot.lane.b32.xlu0 %v4628, 12
      %v4673 = vpop.permute.xlu0 %4672
      %4674 = vrot.lane.b32.xlu0 %v4629, 12
      %v4675 = vpop.permute.xlu0 %4674
      %4676 = vrot.lane.b32.xlu0 %v4630, 12
      %v4677 = vpop.permute.xlu0 %4676
      %4678 = vrot.lane.b32.xlu0 %v4631, 12
      %v4679 = vpop.permute.xlu0 %4678
      %4680 = vrot.lane.b32.xlu0 %v4632, 12
      %v4681 = vpop.permute.xlu0 %4680
      %4682 = vrot.lane.b32.xlu0 %v4633, 12
      %v4683 = vpop.permute.xlu0 %4682
      %4684 = vrot.lane.b32.xlu0 %v4634, 12
      %v4685 = vpop.permute.xlu0 %4684
      %4686 = vrot.lane.b32.xlu0 %v4635, 12
      %v4687 = vpop.permute.xlu0 %4686
      %4688 = vrot.lane.b32.xlu0 %v4636, 12
      %v4689 = vpop.permute.xlu0 %4688
      %4690 = vrot.lane.b32.xlu0 %v4637, 12
      %v4691 = vpop.permute.xlu0 %4690
      %4692 = vrot.lane.b32.xlu0 %v4639, 12
      %v4693 = vpop.permute.xlu0 %4692
      %4712 = vst.msk [vmem:[#allocation6] sm:$0xff] %vm909, %v4659
      %4713 = vst.msk [vmem:[#allocation6 + $0x8] sm:$0xff] %vm909, %v4661
      %4714 = vst.msk [vmem:[#allocation6 + $0x10] sm:$0xff] %vm909, %v4663
      %4715 = vst.msk [vmem:[#allocation6 + $0x18] sm:$0xff] %vm909, %v4665
      %4716 = vst.msk [vmem:[#allocation6 + $0x20] sm:$0xff] %vm909, %v4667
      %4717 = vst.msk [vmem:[#allocation6 + $0x28] sm:$0xff] %vm909, %v4669
      %4718 = vst.msk [vmem:[#allocation6 + $0x30] sm:$0xff] %vm909, %v4671
      %4719 = vst.msk [vmem:[#allocation6 + $0x38] sm:$0xff] %vm909, %v4673
      %4720 = vst.msk [vmem:[#allocation6 + $0x40] sm:$0xff] %vm909, %v4675
      %4721 = vst.msk [vmem:[#allocation6 + $0x48] sm:$0xff] %vm909, %v4677
      %4722 = vst.msk [vmem:[#allocation6 + $0x50] sm:$0xff] %vm909, %v4679
      %4723 = vst.msk [vmem:[#allocation6 + $0x58] sm:$0xff] %vm909, %v4681
      %4724 = vst.msk [vmem:[#allocation6 + $0x60] sm:$0xff] %vm909, %v4683
      %4725 = vst.msk [vmem:[#allocation6 + $0x68] sm:$0xff] %vm909, %v4685
      %4726 = vst.msk [vmem:[#allocation6 + $0x70] sm:$0xff] %vm909, %v4687
      %4727 = vst.msk [vmem:[#allocation6 + $0x78] sm:$0xff] %vm909, %v4689
      %4728 = vst.msk [vmem:[#allocation6 + $0x80] sm:$0xff] %vm909, %v4691
      %4729 = vst.msk [vmem:[#allocation6 + $0x88] sm:$0xff] %vm909, %v4693
      %s4730 = scalar_lea.vmem [#allocation3], 19
      %v4731 = vld [vmem:[%s4730] ss:$2 sm:$0xff]
      %s4732 = scalar_lea.vmem [#allocation3], 35
      %v4733 = vld [vmem:[%s4732] ss:$2 sm:$0xff]
      %s4734 = scalar_lea.vmem [#allocation3], 51
      %v4735 = vld [vmem:[%s4734] ss:$2 sm:$0xff]
      %s4736 = scalar_lea.vmem [#allocation3], 67
      %v4737 = vld [vmem:[%s4736] ss:$2 sm:$0xff]
      %s4738 = scalar_lea.vmem [#allocation3], 83
      %v4739 = vld [vmem:[%s4738] ss:$2 sm:$0xff]
      %s4740 = scalar_lea.vmem [#allocation3], 99
      %v4741 = vld [vmem:[%s4740] ss:$2 sm:$0xff]
      %s4742 = scalar_lea.vmem [#allocation3], 115
      %v4743 = vld [vmem:[%s4742] ss:$2 sm:$0xff]
      %s4744 = scalar_lea.vmem [#allocation3], 131
      %v4745 = vld [vmem:[%s4744] ss:$2 sm:$0xff]
      %s4746 = scalar_lea.vmem [#allocation3], 147
      %v4747 = vld [vmem:[%s4746] ss:$2 sm:$0xff]
      %s4748 = scalar_lea.vmem [#allocation3], 163
      %v4749 = vld [vmem:[%s4748] ss:$2 sm:$0xff]
      %s4750 = scalar_lea.vmem [#allocation3], 179
      %v4751 = vld [vmem:[%s4750] ss:$2 sm:$0xff]
      %s4752 = scalar_lea.vmem [#allocation3], 195
      %v4753 = vld [vmem:[%s4752] ss:$2 sm:$0xff]
      %s4754 = scalar_lea.vmem [#allocation3], 211
      %v4755 = vld [vmem:[%s4754] ss:$2 sm:$0xff]
      %s4756 = scalar_lea.vmem [#allocation3], 227
      %v4757 = vld [vmem:[%s4756] ss:$2 sm:$0xff]
      %s4758 = scalar_lea.vmem [#allocation3], 243
      %v4759 = vld [vmem:[%s4758] ss:$2 sm:$0xff]
      %s4760 = scalar_lea.vmem [#allocation3], 259
      %v4761 = vld [vmem:[%s4760] ss:$2 sm:$0xff]
      %s4762 = scalar_lea.vmem [#allocation3], 275
      %v4763 = vld [vmem:[%s4762] ss:$2 sm:$0xff]
      %s4764 = scalar_lea.vmem [#allocation3], 291
      %v4765 = vld [vmem:[%s4764] ss:$2 sm:$0xff]
      %4784 = vrot.lane.b32.xlu0 %v4731, 16
      %v4785 = vpop.permute.xlu0 %4784
      %4786 = vrot.lane.b32.xlu0 %v4733, 16
      %v4787 = vpop.permute.xlu0 %4786
      %4788 = vrot.lane.b32.xlu0 %v4735, 16
      %v4789 = vpop.permute.xlu0 %4788
      %4790 = vrot.lane.b32.xlu0 %v4737, 16
      %v4791 = vpop.permute.xlu0 %4790
      %4792 = vrot.lane.b32.xlu0 %v4739, 16
      %v4793 = vpop.permute.xlu0 %4792
      %4794 = vrot.lane.b32.xlu0 %v4741, 16
      %v4795 = vpop.permute.xlu0 %4794
      %4796 = vrot.lane.b32.xlu0 %v4743, 16
      %v4797 = vpop.permute.xlu0 %4796
      %4798 = vrot.lane.b32.xlu0 %v4745, 16
      %v4799 = vpop.permute.xlu0 %4798
      %4800 = vrot.lane.b32.xlu0 %v4747, 16
      %v4801 = vpop.permute.xlu0 %4800
      %4802 = vrot.lane.b32.xlu0 %v4749, 16
      %v4803 = vpop.permute.xlu0 %4802
      %4804 = vrot.lane.b32.xlu0 %v4751, 16
      %v4805 = vpop.permute.xlu0 %4804
      %4806 = vrot.lane.b32.xlu0 %v4753, 16
      %v4807 = vpop.permute.xlu0 %4806
      %4808 = vrot.lane.b32.xlu0 %v4755, 16
      %v4809 = vpop.permute.xlu0 %4808
      %4810 = vrot.lane.b32.xlu0 %v4757, 16
      %v4811 = vpop.permute.xlu0 %4810
      %4812 = vrot.lane.b32.xlu0 %v4759, 16
      %v4813 = vpop.permute.xlu0 %4812
      %4814 = vrot.lane.b32.xlu0 %v4761, 16
      %v4815 = vpop.permute.xlu0 %4814
      %4816 = vrot.lane.b32.xlu0 %v4763, 16
      %v4817 = vpop.permute.xlu0 %4816
      %4818 = vrot.lane.b32.xlu0 %v4765, 16
      %v4819 = vpop.permute.xlu0 %4818
      %4838 = vst.msk [vmem:[#allocation6] sm:$0xff] %vm1126, %v4785
      %4839 = vst.msk [vmem:[#allocation6 + $0x8] sm:$0xff] %vm1126, %v4787
      %4840 = vst.msk [vmem:[#allocation6 + $0x10] sm:$0xff] %vm1126, %v4789
      %4841 = vst.msk [vmem:[#allocation6 + $0x18] sm:$0xff] %vm1126, %v4791
      %4842 = vst.msk [vmem:[#allocation6 + $0x20] sm:$0xff] %vm1126, %v4793
      %4843 = vst.msk [vmem:[#allocation6 + $0x28] sm:$0xff] %vm1126, %v4795
      %4844 = vst.msk [vmem:[#allocation6 + $0x30] sm:$0xff] %vm1126, %v4797
      %4845 = vst.msk [vmem:[#allocation6 + $0x38] sm:$0xff] %vm1126, %v4799
      %4846 = vst.msk [vmem:[#allocation6 + $0x40] sm:$0xff] %vm1126, %v4801
      %4847 = vst.msk [vmem:[#allocation6 + $0x48] sm:$0xff] %vm1126, %v4803
      %4848 = vst.msk [vmem:[#allocation6 + $0x50] sm:$0xff] %vm1126, %v4805
      %4849 = vst.msk [vmem:[#allocation6 + $0x58] sm:$0xff] %vm1126, %v4807
      %4850 = vst.msk [vmem:[#allocation6 + $0x60] sm:$0xff] %vm1126, %v4809
      %4851 = vst.msk [vmem:[#allocation6 + $0x68] sm:$0xff] %vm1126, %v4811
      %4852 = vst.msk [vmem:[#allocation6 + $0x70] sm:$0xff] %vm1126, %v4813
      %4853 = vst.msk [vmem:[#allocation6 + $0x78] sm:$0xff] %vm1126, %v4815
      %4854 = vst.msk [vmem:[#allocation6 + $0x80] sm:$0xff] %vm1126, %v4817
      %4855 = vst.msk [vmem:[#allocation6 + $0x88] sm:$0xff] %vm1126, %v4819
      %s4856 = scalar_lea.vmem [#allocation3], 20
      %v4857 = vld [vmem:[%s4856] ss:$2 sm:$0xff]
      %s4858 = scalar_lea.vmem [#allocation3], 36
      %v4859 = vld [vmem:[%s4858] ss:$2 sm:$0xff]
      %s4860 = scalar_lea.vmem [#allocation3], 52
      %v4861 = vld [vmem:[%s4860] ss:$2 sm:$0xff]
      %s4862 = scalar_lea.vmem [#allocation3], 68
      %v4863 = vld [vmem:[%s4862] ss:$2 sm:$0xff]
      %s4864 = scalar_lea.vmem [#allocation3], 84
      %v4865 = vld [vmem:[%s4864] ss:$2 sm:$0xff]
      %s4866 = scalar_lea.vmem [#allocation3], 100
      %v4867 = vld [vmem:[%s4866] ss:$2 sm:$0xff]
      %s4868 = scalar_lea.vmem [#allocation3], 116
      %v4869 = vld [vmem:[%s4868] ss:$2 sm:$0xff]
      %s4870 = scalar_lea.vmem [#allocation3], 132
      %v4871 = vld [vmem:[%s4870] ss:$2 sm:$0xff]
      %s4872 = scalar_lea.vmem [#allocation3], 148
      %v4873 = vld [vmem:[%s4872] ss:$2 sm:$0xff]
      %s4874 = scalar_lea.vmem [#allocation3], 164
      %v4875 = vld [vmem:[%s4874] ss:$2 sm:$0xff]
      %s4876 = scalar_lea.vmem [#allocation3], 180
      %v4877 = vld [vmem:[%s4876] ss:$2 sm:$0xff]
      %s4878 = scalar_lea.vmem [#allocation3], 196
      %v4879 = vld [vmem:[%s4878] ss:$2 sm:$0xff]
      %s4880 = scalar_lea.vmem [#allocation3], 212
      %v4881 = vld [vmem:[%s4880] ss:$2 sm:$0xff]
      %s4882 = scalar_lea.vmem [#allocation3], 228
      %v4883 = vld [vmem:[%s4882] ss:$2 sm:$0xff]
      %s4884 = scalar_lea.vmem [#allocation3], 244
      %v4885 = vld [vmem:[%s4884] ss:$2 sm:$0xff]
      %s4886 = scalar_lea.vmem [#allocation3], 260
      %v4887 = vld [vmem:[%s4886] ss:$2 sm:$0xff]
      %s4888 = scalar_lea.vmem [#allocation3], 276
      %v4889 = vld [vmem:[%s4888] ss:$2 sm:$0xff]
      %s4890 = scalar_lea.vmem [#allocation3], 292
      %v4891 = vld [vmem:[%s4890] ss:$2 sm:$0xff]
      %4910 = vrot.lane.b32.xlu0 %v4857, 20
      %v4911 = vpop.permute.xlu0 %4910
      %4912 = vrot.lane.b32.xlu0 %v4859, 20
      %v4913 = vpop.permute.xlu0 %4912
      %4914 = vrot.lane.b32.xlu0 %v4861, 20
      %v4915 = vpop.permute.xlu0 %4914
      %4916 = vrot.lane.b32.xlu0 %v4863, 20
      %v4917 = vpop.permute.xlu0 %4916
      %4918 = vrot.lane.b32.xlu0 %v4865, 20
      %v4919 = vpop.permute.xlu0 %4918
      %4920 = vrot.lane.b32.xlu0 %v4867, 20
      %v4921 = vpop.permute.xlu0 %4920
      %4922 = vrot.lane.b32.xlu0 %v4869, 20
      %v4923 = vpop.permute.xlu0 %4922
      %4924 = vrot.lane.b32.xlu0 %v4871, 20
      %v4925 = vpop.permute.xlu0 %4924
      %4926 = vrot.lane.b32.xlu0 %v4873, 20
      %v4927 = vpop.permute.xlu0 %4926
      %4928 = vrot.lane.b32.xlu0 %v4875, 20
      %v4929 = vpop.permute.xlu0 %4928
      %4930 = vrot.lane.b32.xlu0 %v4877, 20
      %v4931 = vpop.permute.xlu0 %4930
      %4932 = vrot.lane.b32.xlu0 %v4879, 20
      %v4933 = vpop.permute.xlu0 %4932
      %4934 = vrot.lane.b32.xlu0 %v4881, 20
      %v4935 = vpop.permute.xlu0 %4934
      %4936 = vrot.lane.b32.xlu0 %v4883, 20
      %v4937 = vpop.permute.xlu0 %4936
      %4938 = vrot.lane.b32.xlu0 %v4885, 20
      %v4939 = vpop.permute.xlu0 %4938
      %4940 = vrot.lane.b32.xlu0 %v4887, 20
      %v4941 = vpop.permute.xlu0 %4940
      %4942 = vrot.lane.b32.xlu0 %v4889, 20
      %v4943 = vpop.permute.xlu0 %4942
      %4944 = vrot.lane.b32.xlu0 %v4891, 20
      %v4945 = vpop.permute.xlu0 %4944
      %4964 = vst.msk [vmem:[#allocation6] sm:$0xff] %vm1343, %v4911
      %4965 = vst.msk [vmem:[#allocation6 + $0x8] sm:$0xff] %vm1343, %v4913
      %4966 = vst.msk [vmem:[#allocation6 + $0x10] sm:$0xff] %vm1343, %v4915
      %4967 = vst.msk [vmem:[#allocation6 + $0x18] sm:$0xff] %vm1343, %v4917
      %4968 = vst.msk [vmem:[#allocation6 + $0x20] sm:$0xff] %vm1343, %v4919
      %4969 = vst.msk [vmem:[#allocation6 + $0x28] sm:$0xff] %vm1343, %v4921
      %4970 = vst.msk [vmem:[#allocation6 + $0x30] sm:$0xff] %vm1343, %v4923
      %4971 = vst.msk [vmem:[#allocation6 + $0x38] sm:$0xff] %vm1343, %v4925
      %4972 = vst.msk [vmem:[#allocation6 + $0x40] sm:$0xff] %vm1343, %v4927
      %4973 = vst.msk [vmem:[#allocation6 + $0x48] sm:$0xff] %vm1343, %v4929
      %4974 = vst.msk [vmem:[#allocation6 + $0x50] sm:$0xff] %vm1343, %v4931
      %4975 = vst.msk [vmem:[#allocation6 + $0x58] sm:$0xff] %vm1343, %v4933
      %4976 = vst.msk [vmem:[#allocation6 + $0x60] sm:$0xff] %vm1343, %v4935
      %4977 = vst.msk [vmem:[#allocation6 + $0x68] sm:$0xff] %vm1343, %v4937
      %4978 = vst.msk [vmem:[#allocation6 + $0x70] sm:$0xff] %vm1343, %v4939
      %4979 = vst.msk [vmem:[#allocation6 + $0x78] sm:$0xff] %vm1343, %v4941
      %4980 = vst.msk [vmem:[#allocation6 + $0x80] sm:$0xff] %vm1343, %v4943
      %4981 = vst.msk [vmem:[#allocation6 + $0x88] sm:$0xff] %vm1343, %v4945
      %v4982 = vld [vmem:[%s4858] ss:$2 sm:$0xff]
      %v4983 = vld [vmem:[%s4860] ss:$2 sm:$0xff]
      %v4984 = vld [vmem:[%s4862] ss:$2 sm:$0xff]
      %v4985 = vld [vmem:[%s4864] ss:$2 sm:$0xff]
      %v4986 = vld [vmem:[%s4866] ss:$2 sm:$0xff]
      %v4987 = vld [vmem:[%s4868] ss:$2 sm:$0xff]
      %v4988 = vld [vmem:[%s4870] ss:$2 sm:$0xff]
      %v4989 = vld [vmem:[%s4872] ss:$2 sm:$0xff]
      %v4990 = vld [vmem:[%s4874] ss:$2 sm:$0xff]
      %v4991 = vld [vmem:[%s4876] ss:$2 sm:$0xff]
      %v4992 = vld [vmem:[%s4878] ss:$2 sm:$0xff]
      %v4993 = vld [vmem:[%s4880] ss:$2 sm:$0xff]
      %v4994 = vld [vmem:[%s4882] ss:$2 sm:$0xff]
      %v4995 = vld [vmem:[%s4884] ss:$2 sm:$0xff]
      %v4996 = vld [vmem:[%s4886] ss:$2 sm:$0xff]
      %v4997 = vld [vmem:[%s4888] ss:$2 sm:$0xff]
      %v4998 = vld [vmem:[%s4890] ss:$2 sm:$0xff]
      %s4999 = scalar_lea.vmem [#allocation3], 308
      %v5000 = vld [vmem:[%s4999] ss:$2 sm:$0xff]
      %5019 = vrot.lane.b32.xlu0 %v4982, 24
      %v5020 = vpop.permute.xlu0 %5019
      %5021 = vrot.lane.b32.xlu0 %v4983, 24
      %v5022 = vpop.permute.xlu0 %5021
      %5023 = vrot.lane.b32.xlu0 %v4984, 24
      %v5024 = vpop.permute.xlu0 %5023
      %5025 = vrot.lane.b32.xlu0 %v4985, 24
      %v5026 = vpop.permute.xlu0 %5025
      %5027 = vrot.lane.b32.xlu0 %v4986, 24
      %v5028 = vpop.permute.xlu0 %5027
      %5029 = vrot.lane.b32.xlu0 %v4987, 24
      %v5030 = vpop.permute.xlu0 %5029
      %5031 = vrot.lane.b32.xlu0 %v4988, 24
      %v5032 = vpop.permute.xlu0 %5031
      %5033 = vrot.lane.b32.xlu0 %v4989, 24
      %v5034 = vpop.permute.xlu0 %5033
      %5035 = vrot.lane.b32.xlu0 %v4990, 24
      %v5036 = vpop.permute.xlu0 %5035
      %5037 = vrot.lane.b32.xlu0 %v4991, 24
      %v5038 = vpop.permute.xlu0 %5037
      %5039 = vrot.lane.b32.xlu0 %v4992, 24
      %v5040 = vpop.permute.xlu0 %5039
      %5041 = vrot.lane.b32.xlu0 %v4993, 24
      %v5042 = vpop.permute.xlu0 %5041
      %5043 = vrot.lane.b32.xlu0 %v4994, 24
      %v5044 = vpop.permute.xlu0 %5043
      %5045 = vrot.lane.b32.xlu0 %v4995, 24
      %v5046 = vpop.permute.xlu0 %5045
      %5047 = vrot.lane.b32.xlu0 %v4996, 24
      %v5048 = vpop.permute.xlu0 %5047
      %5049 = vrot.lane.b32.xlu0 %v4997, 24
      %v5050 = vpop.permute.xlu0 %5049
      %5051 = vrot.lane.b32.xlu0 %v4998, 24
      %v5052 = vpop.permute.xlu0 %5051
      %5053 = vrot.lane.b32.xlu0 %v5000, 24
      %v5054 = vpop.permute.xlu0 %5053
      %5073 = vst.msk [vmem:[#allocation6] sm:$0xff] %vm1560, %v5020
      %5074 = vst.msk [vmem:[#allocation6 + $0x8] sm:$0xff] %vm1560, %v5022
      %5075 = vst.msk [vmem:[#allocation6 + $0x10] sm:$0xff] %vm1560, %v5024
      %5076 = vst.msk [vmem:[#allocation6 + $0x18] sm:$0xff] %vm1560, %v5026
      %5077 = vst.msk [vmem:[#allocation6 + $0x20] sm:$0xff] %vm1560, %v5028
      %5078 = vst.msk [vmem:[#allocation6 + $0x28] sm:$0xff] %vm1560, %v5030
      %5079 = vst.msk [vmem:[#allocation6 + $0x30] sm:$0xff] %vm1560, %v5032
      %5080 = vst.msk [vmem:[#allocation6 + $0x38] sm:$0xff] %vm1560, %v5034
      %5081 = vst.msk [vmem:[#allocation6 + $0x40] sm:$0xff] %vm1560, %v5036
      %5082 = vst.msk [vmem:[#allocation6 + $0x48] sm:$0xff] %vm1560, %v5038
      %5083 = vst.msk [vmem:[#allocation6 + $0x50] sm:$0xff] %vm1560, %v5040
      %5084 = vst.msk [vmem:[#allocation6 + $0x58] sm:$0xff] %vm1560, %v5042
      %5085 = vst.msk [vmem:[#allocation6 + $0x60] sm:$0xff] %vm1560, %v5044
      %5086 = vst.msk [vmem:[#allocation6 + $0x68] sm:$0xff] %vm1560, %v5046
      %5087 = vst.msk [vmem:[#allocation6 + $0x70] sm:$0xff] %vm1560, %v5048
      %5088 = vst.msk [vmem:[#allocation6 + $0x78] sm:$0xff] %vm1560, %v5050
      %5089 = vst.msk [vmem:[#allocation6 + $0x80] sm:$0xff] %vm1560, %v5052
      %5090 = vst.msk [vmem:[#allocation6 + $0x88] sm:$0xff] %vm1560, %v5054
      %s5091 = scalar_lea.vmem [#allocation3], 37
      %v5092 = vld [vmem:[%s5091] ss:$2 sm:$0xff]
      %s5093 = scalar_lea.vmem [#allocation3], 53
      %v5094 = vld [vmem:[%s5093] ss:$2 sm:$0xff]
      %s5095 = scalar_lea.vmem [#allocation3], 69
      %v5096 = vld [vmem:[%s5095] ss:$2 sm:$0xff]
      %s5097 = scalar_lea.vmem [#allocation3], 85
      %v5098 = vld [vmem:[%s5097] ss:$2 sm:$0xff]
      %s5099 = scalar_lea.vmem [#allocation3], 101
      %v5100 = vld [vmem:[%s5099] ss:$2 sm:$0xff]
      %s5101 = scalar_lea.vmem [#allocation3], 117
      %v5102 = vld [vmem:[%s5101] ss:$2 sm:$0xff]
      %s5103 = scalar_lea.vmem [#allocation3], 133
      %v5104 = vld [vmem:[%s5103] ss:$2 sm:$0xff]
      %s5105 = scalar_lea.vmem [#allocation3], 149
      %v5106 = vld [vmem:[%s5105] ss:$2 sm:$0xff]
      %s5107 = scalar_lea.vmem [#allocation3], 165
      %v5108 = vld [vmem:[%s5107] ss:$2 sm:$0xff]
      %s5109 = scalar_lea.vmem [#allocation3], 181
      %v5110 = vld [vmem:[%s5109] ss:$2 sm:$0xff]
      %s5111 = scalar_lea.vmem [#allocation3], 197
      %v5112 = vld [vmem:[%s5111] ss:$2 sm:$0xff]
      %s5113 = scalar_lea.vmem [#allocation3], 213
      %v5114 = vld [vmem:[%s5113] ss:$2 sm:$0xff]
      %s5115 = scalar_lea.vmem [#allocation3], 229
      %v5116 = vld [vmem:[%s5115] ss:$2 sm:$0xff]
      %s5117 = scalar_lea.vmem [#allocation3], 245
      %v5118 = vld [vmem:[%s5117] ss:$2 sm:$0xff]
      %s5119 = scalar_lea.vmem [#allocation3], 261
      %v5120 = vld [vmem:[%s5119] ss:$2 sm:$0xff]
      %s5121 = scalar_lea.vmem [#allocation3], 277
      %v5122 = vld [vmem:[%s5121] ss:$2 sm:$0xff]
      %s5123 = scalar_lea.vmem [#allocation3], 293
      %v5124 = vld [vmem:[%s5123] ss:$2 sm:$0xff]
      %s5125 = scalar_lea.vmem [#allocation3], 309
      %v5126 = vld [vmem:[%s5125] ss:$2 sm:$0xff]
      %5145 = vrot.lane.b32.xlu0 %v5092, 28
      %v5146 = vpop.permute.xlu0 %5145
      %5147 = vrot.lane.b32.xlu0 %v5094, 28
      %v5148 = vpop.permute.xlu0 %5147
      %5149 = vrot.lane.b32.xlu0 %v5096, 28
      %v5150 = vpop.permute.xlu0 %5149
      %5151 = vrot.lane.b32.xlu0 %v5098, 28
      %v5152 = vpop.permute.xlu0 %5151
      %5153 = vrot.lane.b32.xlu0 %v5100, 28
      %v5154 = vpop.permute.xlu0 %5153
      %5155 = vrot.lane.b32.xlu0 %v5102, 28
      %v5156 = vpop.permute.xlu0 %5155
      %5157 = vrot.lane.b32.xlu0 %v5104, 28
      %v5158 = vpop.permute.xlu0 %5157
      %5159 = vrot.lane.b32.xlu0 %v5106, 28
      %v5160 = vpop.permute.xlu0 %5159
      %5161 = vrot.lane.b32.xlu0 %v5108, 28
      %v5162 = vpop.permute.xlu0 %5161
      %5163 = vrot.lane.b32.xlu0 %v5110, 28
      %v5164 = vpop.permute.xlu0 %5163
      %5165 = vrot.lane.b32.xlu0 %v5112, 28
      %v5166 = vpop.permute.xlu0 %5165
      %5167 = vrot.lane.b32.xlu0 %v5114, 28
      %v5168 = vpop.permute.xlu0 %5167
      %5169 = vrot.lane.b32.xlu0 %v5116, 28
      %v5170 = vpop.permute.xlu0 %5169
      %5171 = vrot.lane.b32.xlu0 %v5118, 28
      %v5172 = vpop.permute.xlu0 %5171
      %5173 = vrot.lane.b32.xlu0 %v5120, 28
      %v5174 = vpop.permute.xlu0 %5173
      %5175 = vrot.lane.b32.xlu0 %v5122, 28
      %v5176 = vpop.permute.xlu0 %5175
      %5177 = vrot.lane.b32.xlu0 %v5124, 28
      %v5178 = vpop.permute.xlu0 %5177
      %5179 = vrot.lane.b32.xlu0 %v5126, 28
      %v5180 = vpop.permute.xlu0 %5179
      %5199 = vst.msk [vmem:[#allocation6] sm:$0xff] %vm1777, %v5146
      %5200 = vst.msk [vmem:[#allocation6 + $0x8] sm:$0xff] %vm1777, %v5148
      %5201 = vst.msk [vmem:[#allocation6 + $0x10] sm:$0xff] %vm1777, %v5150
      %5202 = vst.msk [vmem:[#allocation6 + $0x18] sm:$0xff] %vm1777, %v5152
      %5203 = vst.msk [vmem:[#allocation6 + $0x20] sm:$0xff] %vm1777, %v5154
      %5204 = vst.msk [vmem:[#allocation6 + $0x28] sm:$0xff] %vm1777, %v5156
      %5205 = vst.msk [vmem:[#allocation6 + $0x30] sm:$0xff] %vm1777, %v5158
      %5206 = vst.msk [vmem:[#allocation6 + $0x38] sm:$0xff] %vm1777, %v5160
      %5207 = vst.msk [vmem:[#allocation6 + $0x40] sm:$0xff] %vm1777, %v5162
      %5208 = vst.msk [vmem:[#allocation6 + $0x48] sm:$0xff] %vm1777, %v5164
      %5209 = vst.msk [vmem:[#allocation6 + $0x50] sm:$0xff] %vm1777, %v5166
      %5210 = vst.msk [vmem:[#allocation6 + $0x58] sm:$0xff] %vm1777, %v5168
      %5211 = vst.msk [vmem:[#allocation6 + $0x60] sm:$0xff] %vm1777, %v5170
      %5212 = vst.msk [vmem:[#allocation6 + $0x68] sm:$0xff] %vm1777, %v5172
      %5213 = vst.msk [vmem:[#allocation6 + $0x70] sm:$0xff] %vm1777, %v5174
      %5214 = vst.msk [vmem:[#allocation6 + $0x78] sm:$0xff] %vm1777, %v5176
      %5215 = vst.msk [vmem:[#allocation6 + $0x80] sm:$0xff] %vm1777, %v5178
      %5216 = vst.msk [vmem:[#allocation6 + $0x88] sm:$0xff] %vm1777, %v5180
      %s5217 = scalar_lea.vmem [#allocation3], 38
      %v5218 = vld [vmem:[%s5217] ss:$2 sm:$0xff]
      %s5219 = scalar_lea.vmem [#allocation3], 54
      %v5220 = vld [vmem:[%s5219] ss:$2 sm:$0xff]
      %s5221 = scalar_lea.vmem [#allocation3], 70
      %v5222 = vld [vmem:[%s5221] ss:$2 sm:$0xff]
      %s5223 = scalar_lea.vmem [#allocation3], 86
      %v5224 = vld [vmem:[%s5223] ss:$2 sm:$0xff]
      %s5225 = scalar_lea.vmem [#allocation3], 102
      %v5226 = vld [vmem:[%s5225] ss:$2 sm:$0xff]
      %s5227 = scalar_lea.vmem [#allocation3], 118
      %v5228 = vld [vmem:[%s5227] ss:$2 sm:$0xff]
      %s5229 = scalar_lea.vmem [#allocation3], 134
      %v5230 = vld [vmem:[%s5229] ss:$2 sm:$0xff]
      %s5231 = scalar_lea.vmem [#allocation3], 150
      %v5232 = vld [vmem:[%s5231] ss:$2 sm:$0xff]
      %s5233 = scalar_lea.vmem [#allocation3], 166
      %v5234 = vld [vmem:[%s5233] ss:$2 sm:$0xff]
      %s5235 = scalar_lea.vmem [#allocation3], 182
      %v5236 = vld [vmem:[%s5235] ss:$2 sm:$0xff]
      %s5237 = scalar_lea.vmem [#allocation3], 198
      %v5238 = vld [vmem:[%s5237] ss:$2 sm:$0xff]
      %s5239 = scalar_lea.vmem [#allocation3], 214
      %v5240 = vld [vmem:[%s5239] ss:$2 sm:$0xff]
      %s5241 = scalar_lea.vmem [#allocation3], 230
      %v5242 = vld [vmem:[%s5241] ss:$2 sm:$0xff]
      %s5243 = scalar_lea.vmem [#allocation3], 246
      %v5244 = vld [vmem:[%s5243] ss:$2 sm:$0xff]
      %s5245 = scalar_lea.vmem [#allocation3], 262
      %v5246 = vld [vmem:[%s5245] ss:$2 sm:$0xff]
      %s5247 = scalar_lea.vmem [#allocation3], 278
      %v5248 = vld [vmem:[%s5247] ss:$2 sm:$0xff]
      %s5249 = scalar_lea.vmem [#allocation3], 294
      %v5250 = vld [vmem:[%s5249] ss:$2 sm:$0xff]
      %s5251 = scalar_lea.vmem [#allocation3], 310
      %v5252 = vld [vmem:[%s5251] ss:$2 sm:$0xff]
      %5271 = vrot.lane.b32.xlu0 %v5218, 32
      %v5272 = vpop.permute.xlu0 %5271
      %5273 = vrot.lane.b32.xlu0 %v5220, 32
      %v5274 = vpop.permute.xlu0 %5273
      %5275 = vrot.lane.b32.xlu0 %v5222, 32
      %v5276 = vpop.permute.xlu0 %5275
      %5277 = vrot.lane.b32.xlu0 %v5224, 32
      %v5278 = vpop.permute.xlu0 %5277
      %5279 = vrot.lane.b32.xlu0 %v5226, 32
      %v5280 = vpop.permute.xlu0 %5279
      %5281 = vrot.lane.b32.xlu0 %v5228, 32
      %v5282 = vpop.permute.xlu0 %5281
      %5283 = vrot.lane.b32.xlu0 %v5230, 32
      %v5284 = vpop.permute.xlu0 %5283
      %5285 = vrot.lane.b32.xlu0 %v5232, 32
      %v5286 = vpop.permute.xlu0 %5285
      %5287 = vrot.lane.b32.xlu0 %v5234, 32
      %v5288 = vpop.permute.xlu0 %5287
      %5289 = vrot.lane.b32.xlu0 %v5236, 32
      %v5290 = vpop.permute.xlu0 %5289
      %5291 = vrot.lane.b32.xlu0 %v5238, 32
      %v5292 = vpop.permute.xlu0 %5291
      %5293 = vrot.lane.b32.xlu0 %v5240, 32
      %v5294 = vpop.permute.xlu0 %5293
      %5295 = vrot.lane.b32.xlu0 %v5242, 32
      %v5296 = vpop.permute.xlu0 %5295
      %5297 = vrot.lane.b32.xlu0 %v5244, 32
      %v5298 = vpop.permute.xlu0 %5297
      %5299 = vrot.lane.b32.xlu0 %v5246, 32
      %v5300 = vpop.permute.xlu0 %5299
      %5301 = vrot.lane.b32.xlu0 %v5248, 32
      %v5302 = vpop.permute.xlu0 %5301
      %5303 = vrot.lane.b32.xlu0 %v5250, 32
      %v5304 = vpop.permute.xlu0 %5303
      %5305 = vrot.lane.b32.xlu0 %v5252, 32
      %v5306 = vpop.permute.xlu0 %5305
      %5325 = vst.msk [vmem:[#allocation6] sm:$0xff] %vm1994, %v5272
      %5326 = vst.msk [vmem:[#allocation6 + $0x8] sm:$0xff] %vm1994, %v5274
      %5327 = vst.msk [vmem:[#allocation6 + $0x10] sm:$0xff] %vm1994, %v5276
      %5328 = vst.msk [vmem:[#allocation6 + $0x18] sm:$0xff] %vm1994, %v5278
      %5329 = vst.msk [vmem:[#allocation6 + $0x20] sm:$0xff] %vm1994, %v5280
      %5330 = vst.msk [vmem:[#allocation6 + $0x28] sm:$0xff] %vm1994, %v5282
      %5331 = vst.msk [vmem:[#allocation6 + $0x30] sm:$0xff] %vm1994, %v5284
      %5332 = vst.msk [vmem:[#allocation6 + $0x38] sm:$0xff] %vm1994, %v5286
      %5333 = vst.msk [vmem:[#allocation6 + $0x40] sm:$0xff] %vm1994, %v5288
      %5334 = vst.msk [vmem:[#allocation6 + $0x48] sm:$0xff] %vm1994, %v5290
      %5335 = vst.msk [vmem:[#allocation6 + $0x50] sm:$0xff] %vm1994, %v5292
      %5336 = vst.msk [vmem:[#allocation6 + $0x58] sm:$0xff] %vm1994, %v5294
      %5337 = vst.msk [vmem:[#allocation6 + $0x60] sm:$0xff] %vm1994, %v5296
      %5338 = vst.msk [vmem:[#allocation6 + $0x68] sm:$0xff] %vm1994, %v5298
      %5339 = vst.msk [vmem:[#allocation6 + $0x70] sm:$0xff] %vm1994, %v5300
      %5340 = vst.msk [vmem:[#allocation6 + $0x78] sm:$0xff] %vm1994, %v5302
      %5341 = vst.msk [vmem:[#allocation6 + $0x80] sm:$0xff] %vm1994, %v5304
      %5342 = vst.msk [vmem:[#allocation6 + $0x88] sm:$0xff] %vm1994, %v5306
      %v5343 = vld [vmem:[#allocation6] sm:$0xff]
      %v5344 = vld [vmem:[#allocation6 + $0x8] sm:$0xff]
      %v5345 = vld [vmem:[#allocation6 + $0x10] sm:$0xff]
      %v5346 = vld [vmem:[#allocation6 + $0x18] sm:$0xff]
      %v5347 = vld [vmem:[#allocation6 + $0x20] sm:$0xff]
      %v5348 = vld [vmem:[#allocation6 + $0x28] sm:$0xff]
      %v5349 = vld [vmem:[#allocation6 + $0x30] sm:$0xff]
      %v5350 = vld [vmem:[#allocation6 + $0x38] sm:$0xff]
      %v5351 = vld [vmem:[#allocation6 + $0x40] sm:$0xff]
      %v5352 = vld [vmem:[#allocation6 + $0x48] sm:$0xff]
      %v5353 = vld [vmem:[#allocation6 + $0x50] sm:$0xff]
      %v5354 = vld [vmem:[#allocation6 + $0x58] sm:$0xff]
      %v5355 = vld [vmem:[#allocation6 + $0x60] sm:$0xff]
      %v5356 = vld [vmem:[#allocation6 + $0x68] sm:$0xff]
      %v5357 = vld [vmem:[#allocation6 + $0x70] sm:$0xff]
      %v5358 = vld [vmem:[#allocation6 + $0x78] sm:$0xff]
      %v5359 = vld [vmem:[#allocation6 + $0x80] sm:$0xff]
      %v5360 = vld [vmem:[#allocation6 + $0x88] sm:$0xff]
      %v5361 = vpack.c.bf16 %v5344, %v5343
      %v5362 = vpack.c.bf16 %v5346, %v5345
      %v5363 = vpack.c.bf16 %v5348, %v5347
      %v5364 = vpack.c.bf16 %v5350, %v5349
      %v5365 = vpack.c.bf16 %v5352, %v5351
      %v5366 = vpack.c.bf16 %v5354, %v5353
      %v5367 = vpack.c.bf16 %v5356, %v5355
      %v5368 = vpack.c.bf16 %v5358, %v5357
      %v5369 = vpack.c.bf16 %v5360, %v5359
      %v5370 = vld [vmem:[%s2] sm:$0xf]
      %v5371 = vld [vmem:[%s2 + $0x4] sm:$0xf]
      %v5372 = vld [vmem:[%s2 + $0x8] sm:$0xf]
      %v5373 = vld [vmem:[%s2 + $0xc] sm:$0xf]
      %v5374 = vld [vmem:[%s2 + $0x10] sm:$0x3]
      %v5380 = vunpack.c.l.b16 %v5370
      %v5381 = vunpack.c.l.b16 %v5371
      %v5382 = vunpack.c.l.b16 %v5372
      %v5383 = vunpack.c.l.b16 %v5373
      %v5384 = vunpack.c.l.b16 %v5374
      %v5385 = vpack.c.b16 %v5381, %v5380
      %v5386 = vpack.c.b16 %v5383, %v5382
      %v5387 = vpack.c.b16 %v5384, %v5384
      %v5391 = vsel %vm2105, %v5361, 0
      %v5394 = vsel %vm2105, %v5362, 0
      %v5397 = vsel %vm2105, %v5363, 0
      %v5400 = vsel %vm2105, %v5364, 0
      %v5403 = vsel %vm2105, %v5365, 0
      %v5406 = vsel %vm2105, %v5366, 0
      %v5409 = vsel %vm2105, %v5367, 0
      %v5412 = vsel %vm2105, %v5368, 0
      %v5415 = vsel %vm2105, %v5369, 0
      %v5418 = vsel %vm2160, %v5387, 0
      %5420 = vmatprep.subr.bf16.mxu0 0
      %5421 = vmatpush1.bf16.msra.mxu0 %v5385
      %5422 = vmatprep.subr.bf16.mxu0 0
      %5423 = vmatpush1.bf16.msra.mxu0 %v5386
      %5424 = vmatprep.subr.bf16.mxu0 0
      %5425 = vmatpush1.bf16.msra.mxu0 %v5418
      %5426 = vmatprep.subr.bf16.mxu0 0
      %5427 = vmatpush1.bf16.msra.mxu0 0
      %5428 = vmatprep.subr.bf16.mxu0 0
      %5429 = vmatpush1.bf16.msra.mxu0 0
      %5430 = vmatprep.subr.bf16.mxu0 0
      %5431 = vmatpush1.bf16.msra.mxu0 0
      %5432 = vmatprep.subr.bf16.mxu0 0
      %5433 = vmatpush1.bf16.msra.mxu0 0
      %5434 = vmatprep.subr.bf16.mxu0 0
      %5435 = vmatpush1.bf16.msra.mxu0 0
      %5436 = vmatprep.subr.bf16.mxu0 0
      %5437 = vmatpush1.bf16.msra.mxu0 0
      %5438 = vmatprep.subr.bf16.mxu0 0
      %5439 = vmatpush1.bf16.msra.mxu0 0
      %5440 = vmatprep.subr.bf16.mxu0 0
      %5441 = vmatpush1.bf16.msra.mxu0 0
      %5442 = vmatprep.subr.bf16.mxu0 0
      %5443 = vmatpush1.bf16.msra.mxu0 0
      %5444 = vmatprep.subr.bf16.mxu0 0
      %5445 = vmatpush1.bf16.msra.mxu0 0
      %5446 = vmatprep.subr.bf16.mxu0 0
      %5447 = vmatpush1.bf16.msra.mxu0 0
      %5448 = vmatprep.subr.bf16.mxu0 0
      %5449 = vmatpush1.bf16.msra.mxu0 0
      %5450 = vmatprep.subr.bf16.mxu0 0
      %5451 = vmatpush1.bf16.msra.mxu0 0
      %5452 = vmatprep.mubr.bf16.mxu0 0
      %5453 = vmatmul.mubr.bf16.gmra.mrb[0].mxu0 %v5391
      %v5454 = vpop.f32.mrb[0].mxu0
      %v5455 = vadd.f32 0.0, %v5454
      %v5456 = vpop.f32.mrb[0].mxu0
      %v5457 = vpop.f32.mrb[0].mxu0
      %v5458 = vadd.f32 0.0, %v5457
      %v5459 = vpop.f32.mrb[0].mxu0
      %5460 = vmatprep.mubr.bf16.mxu0 0
      %5461 = vmatmul.mubr.bf16.gmra.mrb[0].mxu0 %v5394
      %v5462 = vpop.f32.mrb[0].mxu0
      %v5463 = vadd.f32 0.0, %v5462
      %v5464 = vpop.f32.mrb[0].mxu0
      %v5465 = vpop.f32.mrb[0].mxu0
      %v5466 = vadd.f32 0.0, %v5465
      %v5467 = vpop.f32.mrb[0].mxu0
      %5468 = vmatprep.mubr.bf16.mxu0 0
      %5469 = vmatmul.mubr.bf16.gmra.mrb[0].mxu0 %v5397
      %v5470 = vpop.f32.mrb[0].mxu0
      %v5471 = vadd.f32 0.0, %v5470
      %v5472 = vpop.f32.mrb[0].mxu0
      %v5473 = vpop.f32.mrb[0].mxu0
      %v5474 = vadd.f32 0.0, %v5473
      %v5475 = vpop.f32.mrb[0].mxu0
      %5476 = vmatprep.mubr.bf16.mxu0 0
      %5477 = vmatmul.mubr.bf16.gmra.mrb[0].mxu0 %v5400
      %v5478 = vpop.f32.mrb[0].mxu0
      %v5479 = vadd.f32 0.0, %v5478
      %v5480 = vpop.f32.mrb[0].mxu0
      %v5481 = vpop.f32.mrb[0].mxu0
      %v5482 = vadd.f32 0.0, %v5481
      %v5483 = vpop.f32.mrb[0].mxu0
      %5484 = vmatprep.mubr.bf16.mxu0 0
      %5485 = vmatmul.mubr.bf16.gmra.mrb[0].mxu0 %v5403
      %v5486 = vpop.f32.mrb[0].mxu0
      %v5487 = vadd.f32 0.0, %v5486
      %v5488 = vpop.f32.mrb[0].mxu0
      %v5489 = vpop.f32.mrb[0].mxu0
      %v5490 = vadd.f32 0.0, %v5489
      %v5491 = vpop.f32.mrb[0].mxu0
      %5492 = vmatprep.mubr.bf16.mxu0 0
      %5493 = vmatmul.mubr.bf16.gmra.mrb[0].mxu0 %v5406
      %v5494 = vpop.f32.mrb[0].mxu0
      %v5495 = vadd.f32 0.0, %v5494
      %v5496 = vpop.f32.mrb[0].mxu0
      %v5497 = vpop.f32.mrb[0].mxu0
      %v5498 = vadd.f32 0.0, %v5497
      %v5499 = vpop.f32.mrb[0].mxu0
      %5500 = vmatprep.mubr.bf16.mxu0 0
      %5501 = vmatmul.mubr.bf16.gmra.mrb[0].mxu0 %v5409
      %v5502 = vpop.f32.mrb[0].mxu0
      %v5503 = vadd.f32 0.0, %v5502
      %v5504 = vpop.f32.mrb[0].mxu0
      %v5505 = vpop.f32.mrb[0].mxu0
      %v5506 = vadd.f32 0.0, %v5505
      %v5507 = vpop.f32.mrb[0].mxu0
      %5508 = vmatprep.mubr.bf16.mxu0 0
      %5509 = vmatmul.mubr.bf16.gmra.mrb[0].mxu0 %v5412
      %v5510 = vpop.f32.mrb[0].mxu0
      %v5511 = vadd.f32 0.0, %v5510
      %v5512 = vpop.f32.mrb[0].mxu0
      %v5513 = vpop.f32.mrb[0].mxu0
      %v5514 = vadd.f32 0.0, %v5513
      %v5515 = vpop.f32.mrb[0].mxu0
      %5516 = vmatprep.mubr.bf16.mxu0 0
      %5517 = vmatmul.mubr.bf16.gmra.mrb[0].mxu0 %v5415
      %v5518 = vpop.f32.mrb[0].mxu0
      %v5519 = vadd.f32 0.0, %v5518
      %v5520 = vpop.f32.mrb[0].mxu0
      %v5521 = vpop.f32.mrb[0].mxu0
      %v5522 = vadd.f32 0.0, %v5521
      %v5523 = vpop.f32.mrb[0].mxu0
      %5524 = vdwg.mxu0
      %vm5525 = vcmp.ge.f32.partialorder %v5455, 0.0
      %vm5526 = vcmp.ge.f32.partialorder %v5458, 0.0
      %vm5527 = vcmp.ge.f32.partialorder %v5463, 0.0
      %vm5528 = vcmp.ge.f32.partialorder %v5466, 0.0
      %vm5529 = vcmp.ge.f32.partialorder %v5471, 0.0
      %vm5530 = vcmp.ge.f32.partialorder %v5474, 0.0
      %vm5531 = vcmp.ge.f32.partialorder %v5479, 0.0
      %vm5532 = vcmp.ge.f32.partialorder %v5482, 0.0
      %vm5533 = vcmp.ge.f32.partialorder %v5487, 0.0
      %vm5534 = vcmp.ge.f32.partialorder %v5490, 0.0
      %vm5535 = vcmp.ge.f32.partialorder %v5495, 0.0
      %vm5536 = vcmp.ge.f32.partialorder %v5498, 0.0
      %vm5537 = vcmp.ge.f32.partialorder %v5503, 0.0
      %vm5538 = vcmp.ge.f32.partialorder %v5506, 0.0
      %vm5539 = vcmp.ge.f32.partialorder %v5511, 0.0
      %vm5540 = vcmp.ge.f32.partialorder %v5514, 0.0
      %vm5541 = vcmp.ge.f32.partialorder %v5519, 0.0
      %vm5542 = vcmp.ge.f32.partialorder %v5522, 0.0
      %v5543 = vmul.f32 %v5455, 0.2
      %v5544 = vmul.f32 %v5458, 0.2
      %v5545 = vmul.f32 %v5463, 0.2
      %v5546 = vmul.f32 %v5466, 0.2
      %v5547 = vmul.f32 %v5471, 0.2
      %v5548 = vmul.f32 %v5474, 0.2
      %v5549 = vmul.f32 %v5479, 0.2
      %v5550 = vmul.f32 %v5482, 0.2
      %v5551 = vmul.f32 %v5487, 0.2
      %v5552 = vmul.f32 %v5490, 0.2
      %v5553 = vmul.f32 %v5495, 0.2
      %v5554 = vmul.f32 %v5498, 0.2
      %v5555 = vmul.f32 %v5503, 0.2
      %v5556 = vmul.f32 %v5506, 0.2
      %v5557 = vmul.f32 %v5511, 0.2
      %v5558 = vmul.f32 %v5514, 0.2
      %v5559 = vmul.f32 %v5519, 0.2
      %v5560 = vmul.f32 %v5522, 0.2
      %v5561 = vsel %vm5525, %v5455, %v5543
      %v5562 = vsel %vm5526, %v5458, %v5544
      %v5563 = vsel %vm5527, %v5463, %v5545
      %v5564 = vsel %vm5528, %v5466, %v5546
      %v5565 = vsel %vm5529, %v5471, %v5547
      %v5566 = vsel %vm5530, %v5474, %v5548
      %v5567 = vsel %vm5531, %v5479, %v5549
      %v5568 = vsel %vm5532, %v5482, %v5550
      %v5569 = vsel %vm5533, %v5487, %v5551
      %v5570 = vsel %vm5534, %v5490, %v5552
      %v5571 = vsel %vm5535, %v5495, %v5553
      %v5572 = vsel %vm5536, %v5498, %v5554
      %v5573 = vsel %vm5537, %v5503, %v5555
      %v5574 = vsel %vm5538, %v5506, %v5556
      %v5575 = vsel %vm5539, %v5511, %v5557
      %v5576 = vsel %vm5540, %v5514, %v5558
      %v5577 = vsel %vm5541, %v5519, %v5559
      %v5578 = vsel %vm5542, %v5522, %v5560
      %v5579 = vmul.f32 %v5561, 1.4142135
      %v5580 = vmul.f32 %v5562, 1.4142135
      %v5581 = vmul.f32 %v5563, 1.4142135
      %v5582 = vmul.f32 %v5564, 1.4142135
      %v5583 = vmul.f32 %v5565, 1.4142135
      %v5584 = vmul.f32 %v5566, 1.4142135
      %v5585 = vmul.f32 %v5567, 1.4142135
      %v5586 = vmul.f32 %v5568, 1.4142135
      %v5587 = vmul.f32 %v5569, 1.4142135
      %v5588 = vmul.f32 %v5570, 1.4142135
      %v5589 = vmul.f32 %v5571, 1.4142135
      %v5590 = vmul.f32 %v5572, 1.4142135
      %v5591 = vmul.f32 %v5573, 1.4142135
      %v5592 = vmul.f32 %v5574, 1.4142135
      %v5593 = vmul.f32 %v5575, 1.4142135
      %v5594 = vmul.f32 %v5576, 1.4142135
      %v5595 = vmul.f32 %v5577, 1.4142135
      %v5596 = vmul.f32 %v5578, 1.4142135
      %v5597 = vld [vmem:[%s191] sm:$0xff]
      %v5598 = vld [vmem:[%s191 + $0x8] sm:$0xff]
      %v5599 = vld [vmem:[%s191 + $0x10] sm:$0xff]
      %v5600 = vld [vmem:[%s191 + $0x18] sm:$0xff]
      %v5601 = vld [vmem:[%s191 + $0x20] sm:$0xff]
      %v5602 = vld [vmem:[%s191 + $0x28] sm:$0xff]
      %v5603 = vld [vmem:[%s191 + $0x30] sm:$0xff]
      %v5604 = vld [vmem:[%s191 + $0x38] sm:$0xff]
      %v5605 = vld [vmem:[%s191 + $0x40] sm:$0xff]
      %v5606 = vld [vmem:[%s191 + $0x48] sm:$0xff]
      %v5607 = vld [vmem:[%s191 + $0x50] sm:$0xff]
      %v5608 = vld [vmem:[%s191 + $0x58] sm:$0xff]
      %v5609 = vld [vmem:[%s191 + $0x60] sm:$0xff]
      %v5610 = vld [vmem:[%s191 + $0x68] sm:$0xff]
      %v5611 = vld [vmem:[%s191 + $0x70] sm:$0xff]
      %v5612 = vld [vmem:[%s191 + $0x78] sm:$0xff]
      %v5613 = vld [vmem:[%s191 + $0x80] sm:$0xff]
      %v5614 = vld [vmem:[%s191 + $0x88] sm:$0xff]
      %v5615 = vld [vmem:[%s191 + $0x90] sm:$0xff]
      %v5616 = vld [vmem:[%s191 + $0x98] sm:$0xff]
      %v5617 = vld [vmem:[%s191 + $0xa0] sm:$0xff]
      %v5618 = vld [vmem:[%s191 + $0xa8] sm:$0xff]
      %v5619 = vld [vmem:[%s191 + $0xb0] sm:$0xff]
      %v5620 = vld [vmem:[%s191 + $0xb8] sm:$0xff]
      %v5621 = vld [vmem:[%s191 + $0xc0] sm:$0xff]
      %v5622 = vld [vmem:[%s191 + $0xc8] sm:$0xff]
      %v5623 = vld [vmem:[%s191 + $0xd0] sm:$0xff]
      %v5624 = vld [vmem:[%s191 + $0xd8] sm:$0xff]
      %v5625 = vld [vmem:[%s191 + $0xe0] sm:$0xff]
      %v5626 = vld [vmem:[%s191 + $0xe8] sm:$0xff]
      %v5627 = vld [vmem:[%s191 + $0xf0] sm:$0xff]
      %v5628 = vld [vmem:[%s191 + $0xf8] sm:$0xff]
      %v5629 = vld [vmem:[%s191 + $0x100] sm:$0xff]
      %v5630 = vld [vmem:[%s191 + $0x108] sm:$0xff]
      %v5631 = vld [vmem:[%s191 + $0x110] sm:$0xff]
      %v5632 = vld [vmem:[%s191 + $0x118] sm:$0xff]
      %v5633 = vld [vmem:[%s191 + $0x120] sm:$0xff]
      %v5634 = vld [vmem:[%s191 + $0x128] sm:$0xff]
      %v5635 = vld [vmem:[%s191 + $0x130] sm:$0xff]
      %v5636 = vld [vmem:[%s191 + $0x138] sm:$0xff]
      %v5637 = vld [vmem:[%s191 + $0x140] sm:$0xff]
      %v5638 = vld [vmem:[%s191 + $0x148] sm:$0xff]
      %v5639 = vld [vmem:[%s191 + $0x150] sm:$0x3f]
      %v5640 = vmul.f32 %v5597, 0.125
      %v5641 = vmul.f32 %v5598, 0.125
      %v5642 = vmul.f32 %v5599, 0.125
      %v5643 = vmul.f32 %v5600, 0.125
      %v5644 = vmul.f32 %v5601, 0.125
      %v5645 = vmul.f32 %v5602, 0.125
      %v5646 = vmul.f32 %v5603, 0.125
      %v5647 = vmul.f32 %v5604, 0.125
      %v5648 = vmul.f32 %v5605, 0.125
      %v5649 = vmul.f32 %v5606, 0.125
      %v5650 = vmul.f32 %v5607, 0.125
      %v5651 = vmul.f32 %v5608, 0.125
      %v5652 = vmul.f32 %v5609, 0.125
      %v5653 = vmul.f32 %v5610, 0.125
      %v5654 = vmul.f32 %v5611, 0.125
      %v5655 = vmul.f32 %v5612, 0.125
      %v5656 = vmul.f32 %v5613, 0.125
      %v5657 = vmul.f32 %v5614, 0.125
      %v5658 = vmul.f32 %v5615, 0.125
      %v5659 = vmul.f32 %v5616, 0.125
      %v5660 = vmul.f32 %v5617, 0.125
      %v5661 = vmul.f32 %v5618, 0.125
      %v5662 = vmul.f32 %v5619, 0.125
      %v5663 = vmul.f32 %v5620, 0.125
      %v5664 = vmul.f32 %v5621, 0.125
      %v5665 = vmul.f32 %v5622, 0.125
      %v5666 = vmul.f32 %v5623, 0.125
      %v5667 = vmul.f32 %v5624, 0.125
      %v5668 = vmul.f32 %v5625, 0.125
      %v5669 = vmul.f32 %v5626, 0.125
      %v5670 = vmul.f32 %v5627, 0.125
      %v5671 = vmul.f32 %v5628, 0.125
      %v5672 = vmul.f32 %v5629, 0.125
      %v5673 = vmul.f32 %v5630, 0.125
      %v5674 = vmul.f32 %v5631, 0.125
      %v5675 = vmul.f32 %v5632, 0.125
      %v5676 = vmul.f32 %v5633, 0.125
      %v5677 = vmul.f32 %v5634, 0.125
      %v5678 = vmul.f32 %v5635, 0.125
      %v5679 = vmul.f32 %v5636, 0.125
      %v5680 = vmul.f32 %v5637, 0.125
      %v5681 = vmul.f32 %v5638, 0.125
      %v5682 = vmul.f32 %v5639, 0.125
      %v5683 = vld [vmem:[%s191 + $0x1] sm:$0xff]
      %v5684 = vld [vmem:[%s191 + $0x9] sm:$0xff]
      %v5685 = vld [vmem:[%s191 + $0x11] sm:$0xff]
      %v5686 = vld [vmem:[%s191 + $0x19] sm:$0xff]
      %v5687 = vld [vmem:[%s191 + $0x21] sm:$0xff]
      %v5688 = vld [vmem:[%s191 + $0x29] sm:$0xff]
      %v5689 = vld [vmem:[%s191 + $0x31] sm:$0xff]
      %v5690 = vld [vmem:[%s191 + $0x39] sm:$0xff]
      %v5691 = vld [vmem:[%s191 + $0x41] sm:$0xff]
      %v5692 = vld [vmem:[%s191 + $0x49] sm:$0xff]
      %v5693 = vld [vmem:[%s191 + $0x51] sm:$0xff]
      %v5694 = vld [vmem:[%s191 + $0x59] sm:$0xff]
      %v5695 = vld [vmem:[%s191 + $0x61] sm:$0xff]
      %v5696 = vld [vmem:[%s191 + $0x69] sm:$0xff]
      %v5697 = vld [vmem:[%s191 + $0x71] sm:$0xff]
      %v5698 = vld [vmem:[%s191 + $0x79] sm:$0xff]
      %v5699 = vld [vmem:[%s191 + $0x81] sm:$0xff]
      %v5700 = vld [vmem:[%s191 + $0x89] sm:$0xff]
      %v5701 = vld [vmem:[%s191 + $0x91] sm:$0xff]
      %v5702 = vld [vmem:[%s191 + $0x99] sm:$0xff]
      %v5703 = vld [vmem:[%s191 + $0xa1] sm:$0xff]
      %v5704 = vld [vmem:[%s191 + $0xa9] sm:$0xff]
      %v5705 = vld [vmem:[%s191 + $0xb1] sm:$0xff]
      %v5706 = vld [vmem:[%s191 + $0xb9] sm:$0xff]
      %v5707 = vld [vmem:[%s191 + $0xc1] sm:$0xff]
      %v5708 = vld [vmem:[%s191 + $0xc9] sm:$0xff]
      %v5709 = vld [vmem:[%s191 + $0xd1] sm:$0xff]
      %v5710 = vld [vmem:[%s191 + $0xd9] sm:$0xff]
      %v5711 = vld [vmem:[%s191 + $0xe1] sm:$0xff]
      %v5712 = vld [vmem:[%s191 + $0xe9] sm:$0xff]
      %v5713 = vld [vmem:[%s191 + $0xf1] sm:$0xff]
      %v5714 = vld [vmem:[%s191 + $0xf9] sm:$0xff]
      %v5715 = vld [vmem:[%s191 + $0x101] sm:$0xff]
      %v5716 = vld [vmem:[%s191 + $0x109] sm:$0xff]
      %v5717 = vld [vmem:[%s191 + $0x111] sm:$0xff]
      %v5718 = vld [vmem:[%s191 + $0x119] sm:$0xff]
      %v5719 = vld [vmem:[%s191 + $0x121] sm:$0xff]
      %v5720 = vld [vmem:[%s191 + $0x129] sm:$0xff]
      %v5721 = vld [vmem:[%s191 + $0x131] sm:$0xff]
      %v5722 = vld [vmem:[%s191 + $0x139] sm:$0xff]
      %v5723 = vld [vmem:[%s191 + $0x141] sm:$0xff]
      %v5724 = vld [vmem:[%s191 + $0x149] sm:$0xff]
      %v5725 = vld [vmem:[%s191 + $0x151] sm:$0x3f]
      %v5726 = vmul.f32 %v5683, 0.375
      %v5727 = vmul.f32 %v5684, 0.375
      %v5728 = vmul.f32 %v5685, 0.375
      %v5729 = vmul.f32 %v5686, 0.375
      %v5730 = vmul.f32 %v5687, 0.375
      %v5731 = vmul.f32 %v5688, 0.375
      %v5732 = vmul.f32 %v5689, 0.375
      %v5733 = vmul.f32 %v5690, 0.375
      %v5734 = vmul.f32 %v5691, 0.375
      %v5735 = vmul.f32 %v5692, 0.375
      %v5736 = vmul.f32 %v5693, 0.375
      %v5737 = vmul.f32 %v5694, 0.375
      %v5738 = vmul.f32 %v5695, 0.375
      %v5739 = vmul.f32 %v5696, 0.375
      %v5740 = vmul.f32 %v5697, 0.375
      %v5741 = vmul.f32 %v5698, 0.375
      %v5742 = vmul.f32 %v5699, 0.375
      %v5743 = vmul.f32 %v5700, 0.375
      %v5744 = vmul.f32 %v5701, 0.375
      %v5745 = vmul.f32 %v5702, 0.375
      %v5746 = vmul.f32 %v5703, 0.375
      %v5747 = vmul.f32 %v5704, 0.375
      %v5748 = vmul.f32 %v5705, 0.375
      %v5749 = vmul.f32 %v5706, 0.375
      %v5750 = vmul.f32 %v5707, 0.375
      %v5751 = vmul.f32 %v5708, 0.375
      %v5752 = vmul.f32 %v5709, 0.375
      %v5753 = vmul.f32 %v5710, 0.375
      %v5754 = vmul.f32 %v5711, 0.375
      %v5755 = vmul.f32 %v5712, 0.375
      %v5756 = vmul.f32 %v5713, 0.375
      %v5757 = vmul.f32 %v5714, 0.375
      %v5758 = vmul.f32 %v5715, 0.375
      %v5759 = vmul.f32 %v5716, 0.375
      %v5760 = vmul.f32 %v5717, 0.375
      %v5761 = vmul.f32 %v5718, 0.375
      %v5762 = vmul.f32 %v5719, 0.375
      %v5763 = vmul.f32 %v5720, 0.375
      %v5764 = vmul.f32 %v5721, 0.375
      %v5765 = vmul.f32 %v5722, 0.375
      %v5766 = vmul.f32 %v5723, 0.375
      %v5767 = vmul.f32 %v5724, 0.375
      %v5768 = vmul.f32 %v5725, 0.375
      %v5769 = vadd.f32 %v5640, %v5726
      %v5770 = vadd.f32 %v5641, %v5727
      %v5771 = vadd.f32 %v5642, %v5728
      %v5772 = vadd.f32 %v5643, %v5729
      %v5773 = vadd.f32 %v5644, %v5730
      %v5774 = vadd.f32 %v5645, %v5731
      %v5775 = vadd.f32 %v5646, %v5732
      %v5776 = vadd.f32 %v5647, %v5733
      %v5777 = vadd.f32 %v5648, %v5734
      %v5778 = vadd.f32 %v5649, %v5735
      %v5779 = vadd.f32 %v5650, %v5736
      %v5780 = vadd.f32 %v5651, %v5737
      %v5781 = vadd.f32 %v5652, %v5738
      %v5782 = vadd.f32 %v5653, %v5739
      %v5783 = vadd.f32 %v5654, %v5740
      %v5784 = vadd.f32 %v5655, %v5741
      %v5785 = vadd.f32 %v5656, %v5742
      %v5786 = vadd.f32 %v5657, %v5743
      %v5787 = vadd.f32 %v5658, %v5744
      %v5788 = vadd.f32 %v5659, %v5745
      %v5789 = vadd.f32 %v5660, %v5746
      %v5790 = vadd.f32 %v5661, %v5747
      %v5791 = vadd.f32 %v5662, %v5748
      %v5792 = vadd.f32 %v5663, %v5749
      %v5793 = vadd.f32 %v5664, %v5750
      %v5794 = vadd.f32 %v5665, %v5751
      %v5795 = vadd.f32 %v5666, %v5752
      %v5796 = vadd.f32 %v5667, %v5753
      %v5797 = vadd.f32 %v5668, %v5754
      %v5798 = vadd.f32 %v5669, %v5755
      %v5799 = vadd.f32 %v5670, %v5756
      %v5800 = vadd.f32 %v5671, %v5757
      %v5801 = vadd.f32 %v5672, %v5758
      %v5802 = vadd.f32 %v5673, %v5759
      %v5803 = vadd.f32 %v5674, %v5760
      %v5804 = vadd.f32 %v5675, %v5761
      %v5805 = vadd.f32 %v5676, %v5762
      %v5806 = vadd.f32 %v5677, %v5763
      %v5807 = vadd.f32 %v5678, %v5764
      %v5808 = vadd.f32 %v5679, %v5765
      %v5809 = vadd.f32 %v5680, %v5766
      %v5810 = vadd.f32 %v5681, %v5767
      %v5811 = vadd.f32 %v5682, %v5768
      %v5812 = vld [vmem:[%s191 + $0x2] sm:$0xff]
      %v5813 = vld [vmem:[%s191 + $0xa] sm:$0xff]
      %v5814 = vld [vmem:[%s191 + $0x12] sm:$0xff]
      %v5815 = vld [vmem:[%s191 + $0x1a] sm:$0xff]
      %v5816 = vld [vmem:[%s191 + $0x22] sm:$0xff]
      %v5817 = vld [vmem:[%s191 + $0x2a] sm:$0xff]
      %v5818 = vld [vmem:[%s191 + $0x32] sm:$0xff]
      %v5819 = vld [vmem:[%s191 + $0x3a] sm:$0xff]
      %v5820 = vld [vmem:[%s191 + $0x42] sm:$0xff]
      %v5821 = vld [vmem:[%s191 + $0x4a] sm:$0xff]
      %v5822 = vld [vmem:[%s191 + $0x52] sm:$0xff]
      %v5823 = vld [vmem:[%s191 + $0x5a] sm:$0xff]
      %v5824 = vld [vmem:[%s191 + $0x62] sm:$0xff]
      %v5825 = vld [vmem:[%s191 + $0x6a] sm:$0xff]
      %v5826 = vld [vmem:[%s191 + $0x72] sm:$0xff]
      %v5827 = vld [vmem:[%s191 + $0x7a] sm:$0xff]
      %v5828 = vld [vmem:[%s191 + $0x82] sm:$0xff]
      %v5829 = vld [vmem:[%s191 + $0x8a] sm:$0xff]
      %v5830 = vld [vmem:[%s191 + $0x92] sm:$0xff]
      %v5831 = vld [vmem:[%s191 + $0x9a] sm:$0xff]
      %v5832 = vld [vmem:[%s191 + $0xa2] sm:$0xff]
      %v5833 = vld [vmem:[%s191 + $0xaa] sm:$0xff]
      %v5834 = vld [vmem:[%s191 + $0xb2] sm:$0xff]
      %v5835 = vld [vmem:[%s191 + $0xba] sm:$0xff]
      %v5836 = vld [vmem:[%s191 + $0xc2] sm:$0xff]
      %v5837 = vld [vmem:[%s191 + $0xca] sm:$0xff]
      %v5838 = vld [vmem:[%s191 + $0xd2] sm:$0xff]
      %v5839 = vld [vmem:[%s191 + $0xda] sm:$0xff]
      %v5840 = vld [vmem:[%s191 + $0xe2] sm:$0xff]
      %v5841 = vld [vmem:[%s191 + $0xea] sm:$0xff]
      %v5842 = vld [vmem:[%s191 + $0xf2] sm:$0xff]
      %v5843 = vld [vmem:[%s191 + $0xfa] sm:$0xff]
      %v5844 = vld [vmem:[%s191 + $0x102] sm:$0xff]
      %v5845 = vld [vmem:[%s191 + $0x10a] sm:$0xff]
      %v5846 = vld [vmem:[%s191 + $0x112] sm:$0xff]
      %v5847 = vld [vmem:[%s191 + $0x11a] sm:$0xff]
      %v5848 = vld [vmem:[%s191 + $0x122] sm:$0xff]
      %v5849 = vld [vmem:[%s191 + $0x12a] sm:$0xff]
      %v5850 = vld [vmem:[%s191 + $0x132] sm:$0xff]
      %v5851 = vld [vmem:[%s191 + $0x13a] sm:$0xff]
      %v5852 = vld [vmem:[%s191 + $0x142] sm:$0xff]
      %v5853 = vld [vmem:[%s191 + $0x14a] sm:$0xff]
      %v5854 = vld [vmem:[%s191 + $0x152] sm:$0x3f]
      %v5855 = vmul.f32 %v5812, 0.375
      %v5856 = vmul.f32 %v5813, 0.375
      %v5857 = vmul.f32 %v5814, 0.375
      %v5858 = vmul.f32 %v5815, 0.375
      %v5859 = vmul.f32 %v5816, 0.375
      %v5860 = vmul.f32 %v5817, 0.375
      %v5861 = vmul.f32 %v5818, 0.375
      %v5862 = vmul.f32 %v5819, 0.375
      %v5863 = vmul.f32 %v5820, 0.375
      %v5864 = vmul.f32 %v5821, 0.375
      %v5865 = vmul.f32 %v5822, 0.375
      %v5866 = vmul.f32 %v5823, 0.375
      %v5867 = vmul.f32 %v5824, 0.375
      %v5868 = vmul.f32 %v5825, 0.375
      %v5869 = vmul.f32 %v5826, 0.375
      %v5870 = vmul.f32 %v5827, 0.375
      %v5871 = vmul.f32 %v5828, 0.375
      %v5872 = vmul.f32 %v5829, 0.375
      %v5873 = vmul.f32 %v5830, 0.375
      %v5874 = vmul.f32 %v5831, 0.375
      %v5875 = vmul.f32 %v5832, 0.375
      %v5876 = vmul.f32 %v5833, 0.375
      %v5877 = vmul.f32 %v5834, 0.375
      %v5878 = vmul.f32 %v5835, 0.375
      %v5879 = vmul.f32 %v5836, 0.375
      %v5880 = vmul.f32 %v5837, 0.375
      %v5881 = vmul.f32 %v5838, 0.375
      %v5882 = vmul.f32 %v5839, 0.375
      %v5883 = vmul.f32 %v5840, 0.375
      %v5884 = vmul.f32 %v5841, 0.375
      %v5885 = vmul.f32 %v5842, 0.375
      %v5886 = vmul.f32 %v5843, 0.375
      %v5887 = vmul.f32 %v5844, 0.375
      %v5888 = vmul.f32 %v5845, 0.375
      %v5889 = vmul.f32 %v5846, 0.375
      %v5890 = vmul.f32 %v5847, 0.375
      %v5891 = vmul.f32 %v5848, 0.375
      %v5892 = vmul.f32 %v5849, 0.375
      %v5893 = vmul.f32 %v5850, 0.375
      %v5894 = vmul.f32 %v5851, 0.375
      %v5895 = vmul.f32 %v5852, 0.375
      %v5896 = vmul.f32 %v5853, 0.375
      %v5897 = vmul.f32 %v5854, 0.375
      %v5898 = vadd.f32 %v5769, %v5855
      %v5899 = vadd.f32 %v5770, %v5856
      %v5900 = vadd.f32 %v5771, %v5857
      %v5901 = vadd.f32 %v5772, %v5858
      %v5902 = vadd.f32 %v5773, %v5859
      %v5903 = vadd.f32 %v5774, %v5860
      %v5904 = vadd.f32 %v5775, %v5861
      %v5905 = vadd.f32 %v5776, %v5862
      %v5906 = vadd.f32 %v5777, %v5863
      %v5907 = vadd.f32 %v5778, %v5864
      %v5908 = vadd.f32 %v5779, %v5865
      %v5909 = vadd.f32 %v5780, %v5866
      %v5910 = vadd.f32 %v5781, %v5867
      %v5911 = vadd.f32 %v5782, %v5868
      %v5912 = vadd.f32 %v5783, %v5869
      %v5913 = vadd.f32 %v5784, %v5870
      %v5914 = vadd.f32 %v5785, %v5871
      %v5915 = vadd.f32 %v5786, %v5872
      %v5916 = vadd.f32 %v5787, %v5873
      %v5917 = vadd.f32 %v5788, %v5874
      %v5918 = vadd.f32 %v5789, %v5875
      %v5919 = vadd.f32 %v5790, %v5876
      %v5920 = vadd.f32 %v5791, %v5877
      %v5921 = vadd.f32 %v5792, %v5878
      %v5922 = vadd.f32 %v5793, %v5879
      %v5923 = vadd.f32 %v5794, %v5880
      %v5924 = vadd.f32 %v5795, %v5881
      %v5925 = vadd.f32 %v5796, %v5882
      %v5926 = vadd.f32 %v5797, %v5883
      %v5927 = vadd.f32 %v5798, %v5884
      %v5928 = vadd.f32 %v5799, %v5885
      %v5929 = vadd.f32 %v5800, %v5886
      %v5930 = vadd.f32 %v5801, %v5887
      %v5931 = vadd.f32 %v5802, %v5888
      %v5932 = vadd.f32 %v5803, %v5889
      %v5933 = vadd.f32 %v5804, %v5890
      %v5934 = vadd.f32 %v5805, %v5891
      %v5935 = vadd.f32 %v5806, %v5892
      %v5936 = vadd.f32 %v5807, %v5893
      %v5937 = vadd.f32 %v5808, %v5894
      %v5938 = vadd.f32 %v5809, %v5895
      %v5939 = vadd.f32 %v5810, %v5896
      %v5940 = vadd.f32 %v5811, %v5897
      %v5941 = vld [vmem:[%s191 + $0x3] sm:$0xff]
      %v5942 = vld [vmem:[%s191 + $0xb] sm:$0xff]
      %v5943 = vld [vmem:[%s191 + $0x13] sm:$0xff]
      %v5944 = vld [vmem:[%s191 + $0x1b] sm:$0xff]
      %v5945 = vld [vmem:[%s191 + $0x23] sm:$0xff]
      %v5946 = vld [vmem:[%s191 + $0x2b] sm:$0xff]
      %v5947 = vld [vmem:[%s191 + $0x33] sm:$0xff]
      %v5948 = vld [vmem:[%s191 + $0x3b] sm:$0xff]
      %v5949 = vld [vmem:[%s191 + $0x43] sm:$0xff]
      %v5950 = vld [vmem:[%s191 + $0x4b] sm:$0xff]
      %v5951 = vld [vmem:[%s191 + $0x53] sm:$0xff]
      %v5952 = vld [vmem:[%s191 + $0x5b] sm:$0xff]
      %v5953 = vld [vmem:[%s191 + $0x63] sm:$0xff]
      %v5954 = vld [vmem:[%s191 + $0x6b] sm:$0xff]
      %v5955 = vld [vmem:[%s191 + $0x73] sm:$0xff]
      %v5956 = vld [vmem:[%s191 + $0x7b] sm:$0xff]
      %v5957 = vld [vmem:[%s191 + $0x83] sm:$0xff]
      %v5958 = vld [vmem:[%s191 + $0x8b] sm:$0xff]
      %v5959 = vld [vmem:[%s191 + $0x93] sm:$0xff]
      %v5960 = vld [vmem:[%s191 + $0x9b] sm:$0xff]
      %v5961 = vld [vmem:[%s191 + $0xa3] sm:$0xff]
      %v5962 = vld [vmem:[%s191 + $0xab] sm:$0xff]
      %v5963 = vld [vmem:[%s191 + $0xb3] sm:$0xff]
      %v5964 = vld [vmem:[%s191 + $0xbb] sm:$0xff]
      %v5965 = vld [vmem:[%s191 + $0xc3] sm:$0xff]
      %v5966 = vld [vmem:[%s191 + $0xcb] sm:$0xff]
      %v5967 = vld [vmem:[%s191 + $0xd3] sm:$0xff]
      %v5968 = vld [vmem:[%s191 + $0xdb] sm:$0xff]
      %v5969 = vld [vmem:[%s191 + $0xe3] sm:$0xff]
      %v5970 = vld [vmem:[%s191 + $0xeb] sm:$0xff]
      %v5971 = vld [vmem:[%s191 + $0xf3] sm:$0xff]
      %v5972 = vld [vmem:[%s191 + $0xfb] sm:$0xff]
      %v5973 = vld [vmem:[%s191 + $0x103] sm:$0xff]
      %v5974 = vld [vmem:[%s191 + $0x10b] sm:$0xff]
      %v5975 = vld [vmem:[%s191 + $0x113] sm:$0xff]
      %v5976 = vld [vmem:[%s191 + $0x11b] sm:$0xff]
      %v5977 = vld [vmem:[%s191 + $0x123] sm:$0xff]
      %v5978 = vld [vmem:[%s191 + $0x12b] sm:$0xff]
      %v5979 = vld [vmem:[%s191 + $0x133] sm:$0xff]
      %v5980 = vld [vmem:[%s191 + $0x13b] sm:$0xff]
      %v5981 = vld [vmem:[%s191 + $0x143] sm:$0xff]
      %v5982 = vld [vmem:[%s191 + $0x14b] sm:$0xff]
      %v5983 = vld [vmem:[%s191 + $0x153] sm:$0x3f]
      %v5984 = vmul.f32 %v5941, 0.125
      %v5985 = vmul.f32 %v5942, 0.125
      %v5986 = vmul.f32 %v5943, 0.125
      %v5987 = vmul.f32 %v5944, 0.125
      %v5988 = vmul.f32 %v5945, 0.125
      %v5989 = vmul.f32 %v5946, 0.125
      %v5990 = vmul.f32 %v5947, 0.125
      %v5991 = vmul.f32 %v5948, 0.125
      %v5992 = vmul.f32 %v5949, 0.125
      %v5993 = vmul.f32 %v5950, 0.125
      %v5994 = vmul.f32 %v5951, 0.125
      %v5995 = vmul.f32 %v5952, 0.125
      %v5996 = vmul.f32 %v5953, 0.125
      %v5997 = vmul.f32 %v5954, 0.125
      %v5998 = vmul.f32 %v5955, 0.125
      %v5999 = vmul.f32 %v5956, 0.125
      %v6000 = vmul.f32 %v5957, 0.125
      %v6001 = vmul.f32 %v5958, 0.125
      %v6002 = vmul.f32 %v5959, 0.125
      %v6003 = vmul.f32 %v5960, 0.125
      %v6004 = vmul.f32 %v5961, 0.125
      %v6005 = vmul.f32 %v5962, 0.125
      %v6006 = vmul.f32 %v5963, 0.125
      %v6007 = vmul.f32 %v5964, 0.125
      %v6008 = vmul.f32 %v5965, 0.125
      %v6009 = vmul.f32 %v5966, 0.125
      %v6010 = vmul.f32 %v5967, 0.125
      %v6011 = vmul.f32 %v5968, 0.125
      %v6012 = vmul.f32 %v5969, 0.125
      %v6013 = vmul.f32 %v5970, 0.125
      %v6014 = vmul.f32 %v5971, 0.125
      %v6015 = vmul.f32 %v5972, 0.125
      %v6016 = vmul.f32 %v5973, 0.125
      %v6017 = vmul.f32 %v5974, 0.125
      %v6018 = vmul.f32 %v5975, 0.125
      %v6019 = vmul.f32 %v5976, 0.125
      %v6020 = vmul.f32 %v5977, 0.125
      %v6021 = vmul.f32 %v5978, 0.125
      %v6022 = vmul.f32 %v5979, 0.125
      %v6023 = vmul.f32 %v5980, 0.125
      %v6024 = vmul.f32 %v5981, 0.125
      %v6025 = vmul.f32 %v5982, 0.125
      %v6026 = vmul.f32 %v5983, 0.125
      %v6027 = vadd.f32 %v5898, %v5984
      %v6028 = vadd.f32 %v5899, %v5985
      %v6029 = vadd.f32 %v5900, %v5986
      %v6030 = vadd.f32 %v5901, %v5987
      %v6031 = vadd.f32 %v5902, %v5988
      %v6032 = vadd.f32 %v5903, %v5989
      %v6033 = vadd.f32 %v5904, %v5990
      %v6034 = vadd.f32 %v5905, %v5991
      %v6035 = vadd.f32 %v5906, %v5992
      %v6036 = vadd.f32 %v5907, %v5993
      %v6037 = vadd.f32 %v5908, %v5994
      %v6038 = vadd.f32 %v5909, %v5995
      %v6039 = vadd.f32 %v5910, %v5996
      %v6040 = vadd.f32 %v5911, %v5997
      %v6041 = vadd.f32 %v5912, %v5998
      %v6042 = vadd.f32 %v5913, %v5999
      %v6043 = vadd.f32 %v5914, %v6000
      %v6044 = vadd.f32 %v5915, %v6001
      %v6045 = vadd.f32 %v5916, %v6002
      %v6046 = vadd.f32 %v5917, %v6003
      %v6047 = vadd.f32 %v5918, %v6004
      %v6048 = vadd.f32 %v5919, %v6005
      %v6049 = vadd.f32 %v5920, %v6006
      %v6050 = vadd.f32 %v5921, %v6007
      %v6051 = vadd.f32 %v5922, %v6008
      %v6052 = vadd.f32 %v5923, %v6009
      %v6053 = vadd.f32 %v5924, %v6010
      %v6054 = vadd.f32 %v5925, %v6011
      %v6055 = vadd.f32 %v5926, %v6012
      %v6056 = vadd.f32 %v5927, %v6013
      %v6057 = vadd.f32 %v5928, %v6014
      %v6058 = vadd.f32 %v5929, %v6015
      %v6059 = vadd.f32 %v5930, %v6016
      %v6060 = vadd.f32 %v5931, %v6017
      %v6061 = vadd.f32 %v5932, %v6018
      %v6062 = vadd.f32 %v5933, %v6019
      %v6063 = vadd.f32 %v5934, %v6020
      %v6064 = vadd.f32 %v5935, %v6021
      %v6065 = vadd.f32 %v5936, %v6022
      %v6066 = vadd.f32 %v5937, %v6023
      %v6067 = vadd.f32 %v5938, %v6024
      %v6068 = vadd.f32 %v5939, %v6025
      %v6069 = vadd.f32 %v5940, %v6026
      %6070 = vst.msk [vmem:[#allocation4] sm:$0xff] %vm197, %v6027
      %6071 = vst.msk [vmem:[#allocation4 + $0x8] sm:$0xff] %vm197, %v6028
      %6072 = vst.msk [vmem:[#allocation4 + $0x10] sm:$0xff] %vm197, %v6029
      %6073 = vst.msk [vmem:[#allocation4 + $0x18] sm:$0xff] %vm197, %v6030
      %6074 = vst.msk [vmem:[#allocation4 + $0x20] sm:$0xff] %vm197, %v6031
      %6075 = vst.msk [vmem:[#allocation4 + $0x28] sm:$0xff] %vm197, %v6032
      %6076 = vst.msk [vmem:[#allocation4 + $0x30] sm:$0xff] %vm197, %v6033
      %6077 = vst.msk [vmem:[#allocation4 + $0x38] sm:$0xff] %vm197, %v6034
      %6078 = vst.msk [vmem:[#allocation4 + $0x40] sm:$0xff] %vm197, %v6035
      %6079 = vst.msk [vmem:[#allocation4 + $0x48] sm:$0xff] %vm197, %v6036
      %6080 = vst.msk [vmem:[#allocation4 + $0x50] sm:$0xff] %vm197, %v6037
      %6081 = vst.msk [vmem:[#allocation4 + $0x58] sm:$0xff] %vm197, %v6038
      %6082 = vst.msk [vmem:[#allocation4 + $0x60] sm:$0xff] %vm197, %v6039
      %6083 = vst.msk [vmem:[#allocation4 + $0x68] sm:$0xff] %vm197, %v6040
      %6084 = vst.msk [vmem:[#allocation4 + $0x70] sm:$0xff] %vm197, %v6041
      %6085 = vst.msk [vmem:[#allocation4 + $0x78] sm:$0xff] %vm197, %v6042
      %6086 = vst.msk [vmem:[#allocation4 + $0x80] sm:$0xff] %vm197, %v6043
      %6087 = vst.msk [vmem:[#allocation4 + $0x88] sm:$0xff] %vm197, %v6044
      %6088 = vst.msk [vmem:[#allocation4 + $0x90] sm:$0xff] %vm197, %v6045
      %6089 = vst.msk [vmem:[#allocation4 + $0x98] sm:$0xff] %vm197, %v6046
      %6090 = vst.msk [vmem:[#allocation4 + $0xa0] sm:$0xff] %vm197, %v6047
      %6091 = vst.msk [vmem:[#allocation4 + $0xa8] sm:$0xff] %vm197, %v6048
      %6092 = vst.msk [vmem:[#allocation4 + $0xb0] sm:$0xff] %vm197, %v6049
      %6093 = vst.msk [vmem:[#allocation4 + $0xb8] sm:$0xff] %vm197, %v6050
      %6094 = vst.msk [vmem:[#allocation4 + $0xc0] sm:$0xff] %vm197, %v6051
      %6095 = vst.msk [vmem:[#allocation4 + $0xc8] sm:$0xff] %vm197, %v6052
      %6096 = vst.msk [vmem:[#allocation4 + $0xd0] sm:$0xff] %vm197, %v6053
      %6097 = vst.msk [vmem:[#allocation4 + $0xd8] sm:$0xff] %vm197, %v6054
      %6098 = vst.msk [vmem:[#allocation4 + $0xe0] sm:$0xff] %vm197, %v6055
      %6099 = vst.msk [vmem:[#allocation4 + $0xe8] sm:$0xff] %vm197, %v6056
      %6100 = vst.msk [vmem:[#allocation4 + $0xf0] sm:$0xff] %vm197, %v6057
      %6101 = vst.msk [vmem:[#allocation4 + $0xf8] sm:$0xff] %vm197, %v6058
      %6102 = vst.msk [vmem:[#allocation4 + $0x100] sm:$0xff] %vm197, %v6059
      %6103 = vst.msk [vmem:[#allocation4 + $0x108] sm:$0xff] %vm197, %v6060
      %6104 = vst.msk [vmem:[#allocation4 + $0x110] sm:$0xff] %vm197, %v6061
      %6105 = vst.msk [vmem:[#allocation4 + $0x118] sm:$0xff] %vm197, %v6062
      %6106 = vst.msk [vmem:[#allocation4 + $0x120] sm:$0xff] %vm197, %v6063
      %6107 = vst.msk [vmem:[#allocation4 + $0x128] sm:$0xff] %vm197, %v6064
      %6108 = vst.msk [vmem:[#allocation4 + $0x130] sm:$0xff] %vm197, %v6065
      %6109 = vst.msk [vmem:[#allocation4 + $0x138] sm:$0xff] %vm197, %v6066
      %6110 = vst.msk [vmem:[#allocation4 + $0x140] sm:$0xff] %vm197, %v6067
      %6111 = vst.msk [vmem:[#allocation4 + $0x148] sm:$0xff] %vm197, %v6068
      %6112 = vst.msk [vmem:[#allocation4 + $0x150] sm:$0x3f] %vm4314, %v6069
      %v6113 = vld [vmem:[#allocation4] ss:$2 sm:$0xff]
      %s6114 = scalar_lea.vmem [#allocation4], 16
      %v6115 = vld [vmem:[%s6114] ss:$2 sm:$0xff]
      %s6116 = scalar_lea.vmem [#allocation4], 32
      %v6117 = vld [vmem:[%s6116] ss:$2 sm:$0xff]
      %s6118 = scalar_lea.vmem [#allocation4], 48
      %v6119 = vld [vmem:[%s6118] ss:$2 sm:$0xff]
      %s6120 = scalar_lea.vmem [#allocation4], 64
      %v6121 = vld [vmem:[%s6120] ss:$2 sm:$0xff]
      %s6122 = scalar_lea.vmem [#allocation4], 80
      %v6123 = vld [vmem:[%s6122] ss:$2 sm:$0xff]
      %s6124 = scalar_lea.vmem [#allocation4], 96
      %v6125 = vld [vmem:[%s6124] ss:$2 sm:$0xff]
      %s6126 = scalar_lea.vmem [#allocation4], 112
      %v6127 = vld [vmem:[%s6126] ss:$2 sm:$0xff]
      %s6128 = scalar_lea.vmem [#allocation4], 128
      %v6129 = vld [vmem:[%s6128] ss:$2 sm:$0xff]
      %s6130 = scalar_lea.vmem [#allocation4], 144
      %v6131 = vld [vmem:[%s6130] ss:$2 sm:$0xff]
      %s6132 = scalar_lea.vmem [#allocation4], 160
      %v6133 = vld [vmem:[%s6132] ss:$2 sm:$0xff]
      %s6134 = scalar_lea.vmem [#allocation4], 176
      %v6135 = vld [vmem:[%s6134] ss:$2 sm:$0xff]
      %s6136 = scalar_lea.vmem [#allocation4], 192
      %v6137 = vld [vmem:[%s6136] ss:$2 sm:$0xff]
      %s6138 = scalar_lea.vmem [#allocation4], 208
      %v6139 = vld [vmem:[%s6138] ss:$2 sm:$0xff]
      %s6140 = scalar_lea.vmem [#allocation4], 224
      %v6141 = vld [vmem:[%s6140] ss:$2 sm:$0xff]
      %s6142 = scalar_lea.vmem [#allocation4], 240
      %v6143 = vld [vmem:[%s6142] ss:$2 sm:$0xff]
      %s6144 = scalar_lea.vmem [#allocation4], 256
      %v6145 = vld [vmem:[%s6144] ss:$2 sm:$0xff]
      %s6146 = scalar_lea.vmem [#allocation4], 272
      %v6147 = vld [vmem:[%s6146] ss:$2 sm:$0xff]
      %v6148 = vmul.f32 %v6113, 0.125
      %v6149 = vmul.f32 %v6115, 0.125
      %v6150 = vmul.f32 %v6117, 0.125
      %v6151 = vmul.f32 %v6119, 0.125
      %v6152 = vmul.f32 %v6121, 0.125
      %v6153 = vmul.f32 %v6123, 0.125
      %v6154 = vmul.f32 %v6125, 0.125
      %v6155 = vmul.f32 %v6127, 0.125
      %v6156 = vmul.f32 %v6129, 0.125
      %v6157 = vmul.f32 %v6131, 0.125
      %v6158 = vmul.f32 %v6133, 0.125
      %v6159 = vmul.f32 %v6135, 0.125
      %v6160 = vmul.f32 %v6137, 0.125
      %v6161 = vmul.f32 %v6139, 0.125
      %v6162 = vmul.f32 %v6141, 0.125
      %v6163 = vmul.f32 %v6143, 0.125
      %v6164 = vmul.f32 %v6145, 0.125
      %v6165 = vmul.f32 %v6147, 0.125
      %s6166 = scalar_lea.vmem [#allocation4], 18
      %v6167 = vld [vmem:[%s6166] ss:$2 sm:$0xff]
      %s6168 = scalar_lea.vmem [#allocation4], 34
      %v6169 = vld [vmem:[%s6168] ss:$2 sm:$0xff]
      %s6170 = scalar_lea.vmem [#allocation4], 50
      %v6171 = vld [vmem:[%s6170] ss:$2 sm:$0xff]
      %s6172 = scalar_lea.vmem [#allocation4], 66
      %v6173 = vld [vmem:[%s6172] ss:$2 sm:$0xff]
      %s6174 = scalar_lea.vmem [#allocation4], 82
      %v6175 = vld [vmem:[%s6174] ss:$2 sm:$0xff]
      %s6176 = scalar_lea.vmem [#allocation4], 98
      %v6177 = vld [vmem:[%s6176] ss:$2 sm:$0xff]
      %s6178 = scalar_lea.vmem [#allocation4], 114
      %v6179 = vld [vmem:[%s6178] ss:$2 sm:$0xff]
      %s6180 = scalar_lea.vmem [#allocation4], 130
      %v6181 = vld [vmem:[%s6180] ss:$2 sm:$0xff]
      %s6182 = scalar_lea.vmem [#allocation4], 146
      %v6183 = vld [vmem:[%s6182] ss:$2 sm:$0xff]
      %s6184 = scalar_lea.vmem [#allocation4], 162
      %v6185 = vld [vmem:[%s6184] ss:$2 sm:$0xff]
      %s6186 = scalar_lea.vmem [#allocation4], 178
      %v6187 = vld [vmem:[%s6186] ss:$2 sm:$0xff]
      %s6188 = scalar_lea.vmem [#allocation4], 194
      %v6189 = vld [vmem:[%s6188] ss:$2 sm:$0xff]
      %s6190 = scalar_lea.vmem [#allocation4], 210
      %v6191 = vld [vmem:[%s6190] ss:$2 sm:$0xff]
      %s6192 = scalar_lea.vmem [#allocation4], 226
      %v6193 = vld [vmem:[%s6192] ss:$2 sm:$0xff]
      %s6194 = scalar_lea.vmem [#allocation4], 242
      %v6195 = vld [vmem:[%s6194] ss:$2 sm:$0xff]
      %s6196 = scalar_lea.vmem [#allocation4], 258
      %v6197 = vld [vmem:[%s6196] ss:$2 sm:$0xff]
      %s6198 = scalar_lea.vmem [#allocation4], 274
      %v6199 = vld [vmem:[%s6198] ss:$2 sm:$0xff]
      %s6200 = scalar_lea.vmem [#allocation4], 290
      %v6201 = vld [vmem:[%s6200] ss:$2 sm:$0xff]
      %v6202 = vmul.f32 %v6167, 0.375
      %v6203 = vmul.f32 %v6169, 0.375
      %v6204 = vmul.f32 %v6171, 0.375
      %v6205 = vmul.f32 %v6173, 0.375
      %v6206 = vmul.f32 %v6175, 0.375
      %v6207 = vmul.f32 %v6177, 0.375
      %v6208 = vmul.f32 %v6179, 0.375
      %v6209 = vmul.f32 %v6181, 0.375
      %v6210 = vmul.f32 %v6183, 0.375
      %v6211 = vmul.f32 %v6185, 0.375
      %v6212 = vmul.f32 %v6187, 0.375
      %v6213 = vmul.f32 %v6189, 0.375
      %v6214 = vmul.f32 %v6191, 0.375
      %v6215 = vmul.f32 %v6193, 0.375
      %v6216 = vmul.f32 %v6195, 0.375
      %v6217 = vmul.f32 %v6197, 0.375
      %v6218 = vmul.f32 %v6199, 0.375
      %v6219 = vmul.f32 %v6201, 0.375
      %v6220 = vadd.f32 %v6148, %v6202
      %v6221 = vadd.f32 %v6149, %v6203
      %v6222 = vadd.f32 %v6150, %v6204
      %v6223 = vadd.f32 %v6151, %v6205
      %v6224 = vadd.f32 %v6152, %v6206
      %v6225 = vadd.f32 %v6153, %v6207
      %v6226 = vadd.f32 %v6154, %v6208
      %v6227 = vadd.f32 %v6155, %v6209
      %v6228 = vadd.f32 %v6156, %v6210
      %v6229 = vadd.f32 %v6157, %v6211
      %v6230 = vadd.f32 %v6158, %v6212
      %v6231 = vadd.f32 %v6159, %v6213
      %v6232 = vadd.f32 %v6160, %v6214
      %v6233 = vadd.f32 %v6161, %v6215
      %v6234 = vadd.f32 %v6162, %v6216
      %v6235 = vadd.f32 %v6163, %v6217
      %v6236 = vadd.f32 %v6164, %v6218
      %v6237 = vadd.f32 %v6165, %v6219
      %s6238 = scalar_lea.vmem [#allocation4], 36
      %v6239 = vld [vmem:[%s6238] ss:$2 sm:$0xff]
      %s6240 = scalar_lea.vmem [#allocation4], 52
      %v6241 = vld [vmem:[%s6240] ss:$2 sm:$0xff]
      %s6242 = scalar_lea.vmem [#allocation4], 68
      %v6243 = vld [vmem:[%s6242] ss:$2 sm:$0xff]
      %s6244 = scalar_lea.vmem [#allocation4], 84
      %v6245 = vld [vmem:[%s6244] ss:$2 sm:$0xff]
      %s6246 = scalar_lea.vmem [#allocation4], 100
      %v6247 = vld [vmem:[%s6246] ss:$2 sm:$0xff]
      %s6248 = scalar_lea.vmem [#allocation4], 116
      %v6249 = vld [vmem:[%s6248] ss:$2 sm:$0xff]
      %s6250 = scalar_lea.vmem [#allocation4], 132
      %v6251 = vld [vmem:[%s6250] ss:$2 sm:$0xff]
      %s6252 = scalar_lea.vmem [#allocation4], 148
      %v6253 = vld [vmem:[%s6252] ss:$2 sm:$0xff]
      %s6254 = scalar_lea.vmem [#allocation4], 164
      %v6255 = vld [vmem:[%s6254] ss:$2 sm:$0xff]
      %s6256 = scalar_lea.vmem [#allocation4], 180
      %v6257 = vld [vmem:[%s6256] ss:$2 sm:$0xff]
      %s6258 = scalar_lea.vmem [#allocation4], 196
      %v6259 = vld [vmem:[%s6258] ss:$2 sm:$0xff]
      %s6260 = scalar_lea.vmem [#allocation4], 212
      %v6261 = vld [vmem:[%s6260] ss:$2 sm:$0xff]
      %s6262 = scalar_lea.vmem [#allocation4], 228
      %v6263 = vld [vmem:[%s6262] ss:$2 sm:$0xff]
      %s6264 = scalar_lea.vmem [#allocation4], 244
      %v6265 = vld [vmem:[%s6264] ss:$2 sm:$0xff]
      %s6266 = scalar_lea.vmem [#allocation4], 260
      %v6267 = vld [vmem:[%s6266] ss:$2 sm:$0xff]
      %s6268 = scalar_lea.vmem [#allocation4], 276
      %v6269 = vld [vmem:[%s6268] ss:$2 sm:$0xff]
      %s6270 = scalar_lea.vmem [#allocation4], 292
      %v6271 = vld [vmem:[%s6270] ss:$2 sm:$0xff]
      %s6272 = scalar_lea.vmem [#allocation4], 308
      %v6273 = vld [vmem:[%s6272] ss:$2 sm:$0xff]
      %v6274 = vmul.f32 %v6239, 0.375
      %v6275 = vmul.f32 %v6241, 0.375
      %v6276 = vmul.f32 %v6243, 0.375
      %v6277 = vmul.f32 %v6245, 0.375
      %v6278 = vmul.f32 %v6247, 0.375
      %v6279 = vmul.f32 %v6249, 0.375
      %v6280 = vmul.f32 %v6251, 0.375
      %v6281 = vmul.f32 %v6253, 0.375
      %v6282 = vmul.f32 %v6255, 0.375
      %v6283 = vmul.f32 %v6257, 0.375
      %v6284 = vmul.f32 %v6259, 0.375
      %v6285 = vmul.f32 %v6261, 0.375
      %v6286 = vmul.f32 %v6263, 0.375
      %v6287 = vmul.f32 %v6265, 0.375
      %v6288 = vmul.f32 %v6267, 0.375
      %v6289 = vmul.f32 %v6269, 0.375
      %v6290 = vmul.f32 %v6271, 0.375
      %v6291 = vmul.f32 %v6273, 0.375
      %v6292 = vadd.f32 %v6220, %v6274
      %v6293 = vadd.f32 %v6221, %v6275
      %v6294 = vadd.f32 %v6222, %v6276
      %v6295 = vadd.f32 %v6223, %v6277
      %v6296 = vadd.f32 %v6224, %v6278
      %v6297 = vadd.f32 %v6225, %v6279
      %v6298 = vadd.f32 %v6226, %v6280
      %v6299 = vadd.f32 %v6227, %v6281
      %v6300 = vadd.f32 %v6228, %v6282
      %v6301 = vadd.f32 %v6229, %v6283
      %v6302 = vadd.f32 %v6230, %v6284
      %v6303 = vadd.f32 %v6231, %v6285
      %v6304 = vadd.f32 %v6232, %v6286
      %v6305 = vadd.f32 %v6233, %v6287
      %v6306 = vadd.f32 %v6234, %v6288
      %v6307 = vadd.f32 %v6235, %v6289
      %v6308 = vadd.f32 %v6236, %v6290
      %v6309 = vadd.f32 %v6237, %v6291
      %s6310 = scalar_lea.vmem [#allocation4], 54
      %v6311 = vld [vmem:[%s6310] ss:$2 sm:$0xff]
      %s6312 = scalar_lea.vmem [#allocation4], 70
      %v6313 = vld [vmem:[%s6312] ss:$2 sm:$0xff]
      %s6314 = scalar_lea.vmem [#allocation4], 86
      %v6315 = vld [vmem:[%s6314] ss:$2 sm:$0xff]
      %s6316 = scalar_lea.vmem [#allocation4], 102
      %v6317 = vld [vmem:[%s6316] ss:$2 sm:$0xff]
      %s6318 = scalar_lea.vmem [#allocation4], 118
      %v6319 = vld [vmem:[%s6318] ss:$2 sm:$0xff]
      %s6320 = scalar_lea.vmem [#allocation4], 134
      %v6321 = vld [vmem:[%s6320] ss:$2 sm:$0xff]
      %s6322 = scalar_lea.vmem [#allocation4], 150
      %v6323 = vld [vmem:[%s6322] ss:$2 sm:$0xff]
      %s6324 = scalar_lea.vmem [#allocation4], 166
      %v6325 = vld [vmem:[%s6324] ss:$2 sm:$0xff]
      %s6326 = scalar_lea.vmem [#allocation4], 182
      %v6327 = vld [vmem:[%s6326] ss:$2 sm:$0xff]
      %s6328 = scalar_lea.vmem [#allocation4], 198
      %v6329 = vld [vmem:[%s6328] ss:$2 sm:$0xff]
      %s6330 = scalar_lea.vmem [#allocation4], 214
      %v6331 = vld [vmem:[%s6330] ss:$2 sm:$0xff]
      %s6332 = scalar_lea.vmem [#allocation4], 230
      %v6333 = vld [vmem:[%s6332] ss:$2 sm:$0xff]
      %s6334 = scalar_lea.vmem [#allocation4], 246
      %v6335 = vld [vmem:[%s6334] ss:$2 sm:$0xff]
      %s6336 = scalar_lea.vmem [#allocation4], 262
      %v6337 = vld [vmem:[%s6336] ss:$2 sm:$0xff]
      %s6338 = scalar_lea.vmem [#allocation4], 278
      %v6339 = vld [vmem:[%s6338] ss:$2 sm:$0xff]
      %s6340 = scalar_lea.vmem [#allocation4], 294
      %v6341 = vld [vmem:[%s6340] ss:$2 sm:$0xff]
      %s6342 = scalar_lea.vmem [#allocation4], 310
      %v6343 = vld [vmem:[%s6342] ss:$2 sm:$0xff]
      %s6344 = scalar_lea.vmem [#allocation4], 326
      %v6345 = vld [vmem:[%s6344] ss:$2 sm:$0xff]
      %v6346 = vmul.f32 %v6311, 0.125
      %v6347 = vmul.f32 %v6313, 0.125
      %v6348 = vmul.f32 %v6315, 0.125
      %v6349 = vmul.f32 %v6317, 0.125
      %v6350 = vmul.f32 %v6319, 0.125
      %v6351 = vmul.f32 %v6321, 0.125
      %v6352 = vmul.f32 %v6323, 0.125
      %v6353 = vmul.f32 %v6325, 0.125
      %v6354 = vmul.f32 %v6327, 0.125
      %v6355 = vmul.f32 %v6329, 0.125
      %v6356 = vmul.f32 %v6331, 0.125
      %v6357 = vmul.f32 %v6333, 0.125
      %v6358 = vmul.f32 %v6335, 0.125
      %v6359 = vmul.f32 %v6337, 0.125
      %v6360 = vmul.f32 %v6339, 0.125
      %v6361 = vmul.f32 %v6341, 0.125
      %v6362 = vmul.f32 %v6343, 0.125
      %v6363 = vmul.f32 %v6345, 0.125
      %v6364 = vadd.f32 %v6292, %v6346
      %v6365 = vadd.f32 %v6293, %v6347
      %v6366 = vadd.f32 %v6294, %v6348
      %v6367 = vadd.f32 %v6295, %v6349
      %v6368 = vadd.f32 %v6296, %v6350
      %v6369 = vadd.f32 %v6297, %v6351
      %v6370 = vadd.f32 %v6298, %v6352
      %v6371 = vadd.f32 %v6299, %v6353
      %v6372 = vadd.f32 %v6300, %v6354
      %v6373 = vadd.f32 %v6301, %v6355
      %v6374 = vadd.f32 %v6302, %v6356
      %v6375 = vadd.f32 %v6303, %v6357
      %v6376 = vadd.f32 %v6304, %v6358
      %v6377 = vadd.f32 %v6305, %v6359
      %v6378 = vadd.f32 %v6306, %v6360
      %v6379 = vadd.f32 %v6307, %v6361
      %v6380 = vadd.f32 %v6308, %v6362
      %v6381 = vadd.f32 %v6309, %v6363
      %v6382 = vpack.c.bf16 %v6365, %v6364
      %v6383 = vpack.c.bf16 %v6367, %v6366
      %v6384 = vpack.c.bf16 %v6369, %v6368
      %v6385 = vpack.c.bf16 %v6371, %v6370
      %v6386 = vpack.c.bf16 %v6373, %v6372
      %v6387 = vpack.c.bf16 %v6375, %v6374
      %v6388 = vpack.c.bf16 %v6377, %v6376
      %v6389 = vpack.c.bf16 %v6379, %v6378
      %v6390 = vpack.c.bf16 %v6381, %v6380
      %v6391 = vld [vmem:[%s3] sm:$0x3]
      %v6393 = vsel %vm197, %v6382, 0
      %v6396 = vsel %vm197, %v6383, 0
      %v6399 = vsel %vm197, %v6384, 0
      %v6402 = vsel %vm197, %v6385, 0
      %v6405 = vsel %vm197, %v6386, 0
      %v6408 = vsel %vm197, %v6387, 0
      %v6411 = vsel %vm197, %v6388, 0
      %v6414 = vsel %vm197, %v6389, 0
      %v6417 = vsel %vm197, %v6390, 0
      %v6420 = vsel %vm2160, %v6391, 0
      %6422 = vmatprep.subr.bf16.mxu0 0
      %6423 = vmatpush1.bf16.msra.mxu0 %v6420
      %6424 = vmatprep.subr.bf16.mxu0 0
      %6425 = vmatpush1.bf16.msra.mxu0 0
      %6426 = vmatprep.subr.bf16.mxu0 0
      %6427 = vmatpush1.bf16.msra.mxu0 0
      %6428 = vmatprep.subr.bf16.mxu0 0
      %6429 = vmatpush1.bf16.msra.mxu0 0
      %6430 = vmatprep.subr.bf16.mxu0 0
      %6431 = vmatpush1.bf16.msra.mxu0 0
      %6432 = vmatprep.subr.bf16.mxu0 0
      %6433 = vmatpush1.bf16.msra.mxu0 0
      %6434 = vmatprep.subr.bf16.mxu0 0
      %6435 = vmatpush1.bf16.msra.mxu0 0
      %6436 = vmatprep.subr.bf16.mxu0 0
      %6437 = vmatpush1.bf16.msra.mxu0 0
      %6438 = vmatprep.subr.bf16.mxu0 0
      %6439 = vmatpush1.bf16.msra.mxu0 0
      %6440 = vmatprep.subr.bf16.mxu0 0
      %6441 = vmatpush1.bf16.msra.mxu0 0
      %6442 = vmatprep.subr.bf16.mxu0 0
      %6443 = vmatpush1.bf16.msra.mxu0 0
      %6444 = vmatprep.subr.bf16.mxu0 0
      %6445 = vmatpush1.bf16.msra.mxu0 0
      %6446 = vmatprep.subr.bf16.mxu0 0
      %6447 = vmatpush1.bf16.msra.mxu0 0
      %6448 = vmatprep.subr.bf16.mxu0 0
      %6449 = vmatpush1.bf16.msra.mxu0 0
      %6450 = vmatprep.subr.bf16.mxu0 0
      %6451 = vmatpush1.bf16.msra.mxu0 0
      %6452 = vmatprep.subr.bf16.mxu0 0
      %6453 = vmatpush1.bf16.msra.mxu0 0
      %6454 = vmatprep.mubr.bf16.mxu0 0
      %6455 = vmatmul.mubr.bf16.gmra.mrb[0].mxu0 %v6393
      %v6456 = vpop.f32.mrb[0].mxu0
      %v6457 = vadd.f32 0.0, %v6456
      %v6458 = vpop.f32.mrb[0].mxu0
      %v6459 = vpop.f32.mrb[0].mxu0
      %v6460 = vadd.f32 0.0, %v6459
      %v6461 = vpop.f32.mrb[0].mxu0
      %6462 = vmatprep.mubr.bf16.mxu0 0
      %6463 = vmatmul.mubr.bf16.gmra.mrb[0].mxu0 %v6396
      %v6464 = vpop.f32.mrb[0].mxu0
      %v6465 = vadd.f32 0.0, %v6464
      %v6466 = vpop.f32.mrb[0].mxu0
      %v6467 = vpop.f32.mrb[0].mxu0
      %v6468 = vadd.f32 0.0, %v6467
      %v6469 = vpop.f32.mrb[0].mxu0
      %6470 = vmatprep.mubr.bf16.mxu0 0
      %6471 = vmatmul.mubr.bf16.gmra.mrb[0].mxu0 %v6399
      %v6472 = vpop.f32.mrb[0].mxu0
      %v6473 = vadd.f32 0.0, %v6472
      %v6474 = vpop.f32.mrb[0].mxu0
      %v6475 = vpop.f32.mrb[0].mxu0
      %v6476 = vadd.f32 0.0, %v6475
      %v6477 = vpop.f32.mrb[0].mxu0
      %6478 = vmatprep.mubr.bf16.mxu0 0
      %6479 = vmatmul.mubr.bf16.gmra.mrb[0].mxu0 %v6402
      %v6480 = vpop.f32.mrb[0].mxu0
      %v6481 = vadd.f32 0.0, %v6480
      %v6482 = vpop.f32.mrb[0].mxu0
      %v6483 = vpop.f32.mrb[0].mxu0
      %v6484 = vadd.f32 0.0, %v6483
      %v6485 = vpop.f32.mrb[0].mxu0
      %6486 = vmatprep.mubr.bf16.mxu0 0
      %6487 = vmatmul.mubr.bf16.gmra.mrb[0].mxu0 %v6405
      %v6488 = vpop.f32.mrb[0].mxu0
      %v6489 = vadd.f32 0.0, %v6488
      %v6490 = vpop.f32.mrb[0].mxu0
      %v6491 = vpop.f32.mrb[0].mxu0
      %v6492 = vadd.f32 0.0, %v6491
      %v6493 = vpop.f32.mrb[0].mxu0
      %6494 = vmatprep.mubr.bf16.mxu0 0
      %6495 = vmatmul.mubr.bf16.gmra.mrb[0].mxu0 %v6408
      %v6496 = vpop.f32.mrb[0].mxu0
      %v6497 = vadd.f32 0.0, %v6496
      %v6498 = vpop.f32.mrb[0].mxu0
      %v6499 = vpop.f32.mrb[0].mxu0
      %v6500 = vadd.f32 0.0, %v6499
      %v6501 = vpop.f32.mrb[0].mxu0
      %6502 = vmatprep.mubr.bf16.mxu0 0
      %6503 = vmatmul.mubr.bf16.gmra.mrb[0].mxu0 %v6411
      %v6504 = vpop.f32.mrb[0].mxu0
      %v6505 = vadd.f32 0.0, %v6504
      %v6506 = vpop.f32.mrb[0].mxu0
      %v6507 = vpop.f32.mrb[0].mxu0
      %v6508 = vadd.f32 0.0, %v6507
      %v6509 = vpop.f32.mrb[0].mxu0
      %6510 = vmatprep.mubr.bf16.mxu0 0
      %6511 = vmatmul.mubr.bf16.gmra.mrb[0].mxu0 %v6414
      %v6512 = vpop.f32.mrb[0].mxu0
      %v6513 = vadd.f32 0.0, %v6512
      %v6514 = vpop.f32.mrb[0].mxu0
      %v6515 = vpop.f32.mrb[0].mxu0
      %v6516 = vadd.f32 0.0, %v6515
      %v6517 = vpop.f32.mrb[0].mxu0
      %6518 = vmatprep.mubr.bf16.mxu0 0
      %6519 = vmatmul.mubr.bf16.gmra.mrb[0].mxu0 %v6417
      %v6520 = vpop.f32.mrb[0].mxu0
      %v6521 = vadd.f32 0.0, %v6520
      %v6522 = vpop.f32.mrb[0].mxu0
      %v6523 = vpop.f32.mrb[0].mxu0
      %v6524 = vadd.f32 0.0, %v6523
      %v6525 = vpop.f32.mrb[0].mxu0
      %6526 = vdwg.mxu0
      %v6527 = vadd.f32 %v5579, %v6457
      %v6528 = vadd.f32 %v5580, %v6460
      %v6529 = vadd.f32 %v5581, %v6465
      %v6530 = vadd.f32 %v5582, %v6468
      %v6531 = vadd.f32 %v5583, %v6473
      %v6532 = vadd.f32 %v5584, %v6476
      %v6533 = vadd.f32 %v5585, %v6481
      %v6534 = vadd.f32 %v5586, %v6484
      %v6535 = vadd.f32 %v5587, %v6489
      %v6536 = vadd.f32 %v5588, %v6492
      %v6537 = vadd.f32 %v5589, %v6497
      %v6538 = vadd.f32 %v5590, %v6500
      %v6539 = vadd.f32 %v5591, %v6505
      %v6540 = vadd.f32 %v5592, %v6508
      %v6541 = vadd.f32 %v5593, %v6513
      %v6542 = vadd.f32 %v5594, %v6516
      %v6543 = vadd.f32 %v5595, %v6521
      %v6544 = vadd.f32 %v5596, %v6524
      %v6545 = vmul.f32 %v6527, 0.70710677
      %v6546 = vmul.f32 %v6528, 0.70710677
      %v6547 = vmul.f32 %v6529, 0.70710677
      %v6548 = vmul.f32 %v6530, 0.70710677
      %v6549 = vmul.f32 %v6531, 0.70710677
      %v6550 = vmul.f32 %v6532, 0.70710677
      %v6551 = vmul.f32 %v6533, 0.70710677
      %v6552 = vmul.f32 %v6534, 0.70710677
      %v6553 = vmul.f32 %v6535, 0.70710677
      %v6554 = vmul.f32 %v6536, 0.70710677
      %v6555 = vmul.f32 %v6537, 0.70710677
      %v6556 = vmul.f32 %v6538, 0.70710677
      %v6557 = vmul.f32 %v6539, 0.70710677
      %v6558 = vmul.f32 %v6540, 0.70710677
      %v6559 = vmul.f32 %v6541, 0.70710677
      %v6560 = vmul.f32 %v6542, 0.70710677
      %v6561 = vmul.f32 %v6543, 0.70710677
      %v6562 = vmul.f32 %v6544, 0.70710677
      %vm6563 = vcmask 64512
      %6564 = vst.msk [vmem:[#allocation5] sm:$0xff] %vm6563, %v6545
      %6565 = vst.msk [vmem:[#allocation5 + $0x8] sm:$0xff] %vm6563, %v6546
      %6566 = vst.msk [vmem:[#allocation5 + $0x10] sm:$0xff] %vm6563, %v6547
      %6567 = vst.msk [vmem:[#allocation5 + $0x18] sm:$0xff] %vm6563, %v6548
      %6568 = vst.msk [vmem:[#allocation5 + $0x20] sm:$0xff] %vm6563, %v6549
      %6569 = vst.msk [vmem:[#allocation5 + $0x28] sm:$0xff] %vm6563, %v6550
      %6570 = vst.msk [vmem:[#allocation5 + $0x30] sm:$0xff] %vm6563, %v6551
      %6571 = vst.msk [vmem:[#allocation5 + $0x38] sm:$0xff] %vm6563, %v6552
      %6572 = vst.msk [vmem:[#allocation5 + $0x40] sm:$0xff] %vm6563, %v6553
      %6573 = vst.msk [vmem:[#allocation5 + $0x48] sm:$0xff] %vm6563, %v6554
      %6574 = vst.msk [vmem:[#allocation5 + $0x50] sm:$0xff] %vm6563, %v6555
      %6575 = vst.msk [vmem:[#allocation5 + $0x58] sm:$0xff] %vm6563, %v6556
      %6576 = vst.msk [vmem:[#allocation5 + $0x60] sm:$0xff] %vm6563, %v6557
      %6577 = vst.msk [vmem:[#allocation5 + $0x68] sm:$0xff] %vm6563, %v6558
      %6578 = vst.msk [vmem:[#allocation5 + $0x70] sm:$0xff] %vm6563, %v6559
      %6579 = vst.msk [vmem:[#allocation5 + $0x78] sm:$0xff] %vm6563, %v6560
      %6580 = vst.msk [vmem:[#allocation5 + $0x80] sm:$0xff] %vm6563, %v6561
      %6581 = vst.msk [vmem:[#allocation5 + $0x88] sm:$0xff] %vm6563, %v6562
      %v6582 = vld [vmem:[#allocation5] ss:$18 sm:$0xff]
      %6583 = vst.msk [vmem:[%s195] sm:$0xff] %vm6563, %v6582
      %s6584 = scalar_lea.vmem [#allocation5], 1
      %v6585 = vld [vmem:[%s6584] ss:$18 sm:$0xff]
      %6587 = vrot.lane.b32.xlu0 %v6585, 8
      %v6588 = vpop.permute.xlu0 %6587
      %vm6590 = vcmask 130112
      %6591 = vst.msk [vmem:[%s195] sm:$0xff] %vm6590, %v6588
      %s6592 = scalar_lea.vmem [#allocation5], 2
      %v6593 = vld [vmem:[%s6592] ss:$18 sm:$0xff]
      %6595 = vrot.lane.b32.xlu0 %v6593, 16
      %v6596 = vpop.permute.xlu0 %6595
      %vm6598 = vcmask 195712
      %6599 = vst.msk [vmem:[%s195] sm:$0xff] %vm6598, %v6596
      %s6600 = scalar_lea.vmem [#allocation5], 3
      %v6601 = vld [vmem:[%s6600] ss:$18 sm:$0xff]
      %6603 = vrot.lane.b32.xlu0 %v6601, 24
      %v6604 = vpop.permute.xlu0 %6603
      %vm6606 = vcmask 261312
      %6607 = vst.msk [vmem:[%s195] sm:$0xff] %vm6606, %v6604
      %s6608 = scalar_lea.vmem [#allocation5], 4
      %v6609 = vld [vmem:[%s6608] ss:$18 sm:$0xff]
      %6611 = vrot.lane.b32.xlu0 %v6609, 32
      %v6612 = vpop.permute.xlu0 %6611
      %vm6614 = vcmask 326912
      %6615 = vst.msk [vmem:[%s195] sm:$0xff] %vm6614, %v6612
      %s6616 = scalar_lea.vmem [#allocation5], 5
      %v6617 = vld [vmem:[%s6616] ss:$18 sm:$0xff]
      %6619 = vrot.lane.b32.xlu0 %v6617, 40
      %v6620 = vpop.permute.xlu0 %6619
      %vm6622 = vcmask 392512
      %6623 = vst.msk [vmem:[%s195] sm:$0xff] %vm6622, %v6620
      %s6624 = scalar_lea.vmem [#allocation5], 6
      %v6625 = vld [vmem:[%s6624] ss:$18 sm:$0xff]
      %6627 = vrot.lane.b32.xlu0 %v6625, 48
      %v6628 = vpop.permute.xlu0 %6627
      %vm6630 = vcmask 458112
      %6631 = vst.msk [vmem:[%s195] sm:$0xff] %vm6630, %v6628
      %s6632 = scalar_lea.vmem [#allocation5], 7
      %v6633 = vld [vmem:[%s6632] ss:$18 sm:$0xff]
      %6635 = vrot.lane.b32.xlu0 %v6633, 56
      %v6636 = vpop.permute.xlu0 %6635
      %vm6638 = vcmask 523712
      %6639 = vst.msk [vmem:[%s195] sm:$0xff] %vm6638, %v6636
      %p6640 = scmp.lt.s32.totalorder %s15, 1
      %s6641 = scalar_select %p6640, %s15, 1
      %s6642 = smul.addr %s6641, 8
      %s6643 = scalar_lea.vmem %s4, %s6642
      // Predicated region
      $region37: #{resblock_forward.1} parent=35 // pred_check
        %p6644 = pneg %p122
      $region38: #{resblock_forward.1} parent=35 // pred_check_branch
        %6646 = sbr.rel (%p6644) target = $region40
      $region39: #{resblock_forward.1} parent=35 // pred_region
        _
      $region40: #{resblock_forward.1} parent=35 // pred_fallthru
        _
    $region36: #{resblock_forward.1} parent=5 // pred_fallthru
      _
    %p6647 = scmp.le.s32.totalorder 2, %s10
    // Predicated region
    $region41: #{resblock_forward.1} parent=5 // pred_check
      %p6648 = pneg %p6647
    $region42: #{resblock_forward.1} parent=5 // pred_check_branch
      %6650 = sbr.rel (%p6648) target = $region44
    $region43: #{resblock_forward.1} parent=5 // pred_region
      %s6651 = ssub.s32 %s10, 2
      // Predicated region
      $region45: #{resblock_forward.1} parent=43 // pred_check
        %p6652 = pneg %p128
      $region46: #{resblock_forward.1} parent=43 // pred_check_branch
        %6654 = sbr.rel (%p6652) target = $region48
      $region47: #{resblock_forward.1} parent=43 // pred_region
        %p6655 = scmp.lt.s32.totalorder %s16, 1
        %s6656 = scalar_select %p6655, %s16, 1
        %s6657 = smul.addr %s6656, 8
        %s6658 = scalar_lea.vmem %s4, %s6657
      $region48: #{resblock_forward.1} parent=43 // pred_fallthru
        _
    $region44: #{resblock_forward.1} parent=5 // pred_fallthru
      _
  $region6: #{resblock_forward.1} parent=0 // loop_footer
    %s14 = sadd.s32 1, %s10
  $region7: #{resblock_forward.1} parent=0 // loop_footer_branch
    %9 = sbr.rel target = $region3
  $region8: #{resblock_forward.1} parent=0 // loop_exit
    _

</llo_original>
